<compile_context>
chip_gen: v6e
topology: v6e:2x2x1
jax: 0.10.0
libtpu: 0.0.40
codegen_flags: <defaults>
</compile_context>

<pallas_src>
import numpy as np
import jax
import jax.numpy as jnp
from jax import lax
from jax.experimental import pallas as pl
from jax.experimental.pallas import tpu as pltpu


def _leaky(x, slope=0.1):
    return jnp.where(x >= 0, x, slope * x)


# ---------------------------------------------------------------------------
# host-side helper: 0/1 shift matrices implementing the KxK conv taps
# (with zero padding) on the flattened (C, B*H*W) layout:  tap_t = act @ S[t]
# ---------------------------------------------------------------------------
def _build_shift_mats(B, H, W, K):
    pad = (K - 1) // 2
    HW = H * W
    N = B * HW
    S = np.zeros((K * K, N, N), np.float32)
    for di in range(K):
        for dj in range(K):
            t = di * K + dj
            for b in range(B):
                for h in range(H):
                    for w in range(W):
                        hh, ww = h + di - pad, w + dj - pad
                        if 0 <= hh < H and 0 <= ww < W:
                            S[t, b * HW + hh * W + ww, b * HW + h * W + w] = 1.0
    return jnp.asarray(S)


PARAM_ORDER = (
    "da1_w1", "da1_w2", "da1_w1x1", "da1_b1x1",
    "da2_w1", "da2_w2", "da2_w1x1", "da2_b1x1",
    "conv1_w", "conv1_b", "conv2_w", "conv2_b",
)


# ---------------------------------------------------------------------------
# fused RDAG kernel (grid over RDAB blocks, activation resident in VMEM)
# ---------------------------------------------------------------------------
def _make_rdag_kernel(B, C, H, W, K, n_blocks):
    KK = K * K
    HW = H * W
    N = B * HW

    def dot16(a, b):
        # bf16 MXU matmul, f32 accumulate.
        return jnp.dot(a.astype(jnp.bfloat16), b.astype(jnp.bfloat16),
                       preferred_element_type=jnp.float32)

    def kernel(x_ref, dT_ref, smat_ref,
               da1_w1, da1_w2, da1_m, da1_mb,
               da2_w1, da2_w2, da2_m, da2_mb,
               c1_w, c1_b, c2_w, c2_b,
               o_ref, act_ref):
        blk = pl.program_id(0)

        @pl.when(blk == 0)
        def _():
            act_ref[...] = x_ref[...].astype(jnp.float32)

        res_in = act_ref[...]                                   # (C, N) f32
        dT = dT_ref[...].astype(jnp.float32)                    # (64, B)
        smats = [smat_ref[t].astype(jnp.bfloat16) for t in range(KK)]

        def taps(a):
            # KK spatially shifted (zero padded) copies of a, each (C, N).
            return [dot16(a, smats[t]) for t in range(KK)]

        def dense_conv(a, w_ref, b_ref):
            cols = jnp.concatenate(taps(a), axis=0)             # (C*KK, N)
            out = dot16(w_ref[...], cols)                       # (C, N)
            return out + b_ref[...].astype(jnp.float32)

        def da_conv(a, w1_ref, w2_ref, m_ref, mb_ref):
            # dynamic per-(batch, channel) KxK kernels from the degradation rep
            hT = _leaky(dot16(w1_ref[...], dT))                 # (64, B)
            dkT = dot16(w2_ref[...], hT)                        # (C*KK, B), rows tap-major
            tp = taps(a)
            accs = [jnp.zeros((C, HW), jnp.float32) for _ in range(B)]
            for t in range(KK):
                slab = dkT[t * C:(t + 1) * C, :]                # (C, B)
                for b in range(B):
                    accs[b] = accs[b] + slab[:, b:b + 1] * tp[t][:, b * HW:(b + 1) * HW]
            dw = _leaky(jnp.concatenate(accs, axis=-1))         # (C, N)
            gate = dot16(m_ref[...], a) + mb_ref[...].astype(jnp.float32)
            gate = jax.nn.sigmoid(gate)                         # (1, N)
            return dw * gate + a

        a = _leaky(da_conv(res_in, da1_w1, da1_w2, da1_m, da1_mb))
        a = _leaky(dense_conv(a, c1_w, c1_b))
        a = _leaky(da_conv(a, da2_w1, da2_w2, da2_m, da2_mb))
        a = dense_conv(a, c2_w, c2_b) + res_in

        act_ref[...] = a

        @pl.when(blk == n_blocks - 1)
        def _():
            o_ref[...] = a.astype(o_ref.dtype)

    return kernel


def rdag_forward(x, d, params):
    B, C, H, W = x.shape
    K = int(round((params["conv1_w"].shape[-1] // C) ** 0.5))
    n_blocks = params["conv1_w"].shape[0]
    KK = K * K
    N = B * H * W

    # lane-dense layout plumbing (done once in the wrapper)
    x2 = jnp.transpose(x, (1, 0, 2, 3)).reshape(C, N)           # (C, B*H*W)
    dT = jnp.transpose(d)                                       # (64, B)
    smat = _build_shift_mats(B, H, W, K)                        # (KK, N, N)

    def _pspec(arr):
        nd = arr.ndim - 1
        return pl.BlockSpec((None,) + arr.shape[1:],
                            lambda i, nd=nd: (i,) + (0,) * nd)

    in_specs = [
        pl.BlockSpec((C, N), lambda i: (0, 0)),
        pl.BlockSpec(dT.shape, lambda i: (0, 0)),
        pl.BlockSpec((KK, N, N), lambda i: (0, 0, 0)),
    ] + [_pspec(params[name]) for name in PARAM_ORDER]

    kern = _make_rdag_kernel(B, C, H, W, K, n_blocks)
    out2 = pl.pallas_call(
        kern,
        out_shape=jax.ShapeDtypeStruct((C, N), jnp.float32),
        grid=(n_blocks,),
        in_specs=in_specs,
        out_specs=pl.BlockSpec((C, N), lambda i: (0, 0)),
        scratch_shapes=[pltpu.VMEM((C, N), jnp.float32)],
        compiler_params=pltpu.CompilerParams(
            dimension_semantics=("arbitrary",)),
    )(x2, dT, smat, *[params[name] for name in PARAM_ORDER])
    # TODO(synk): blocks are sequentially dependent, so there is no parallel
    # grid axis for v7x's 2nd TensorCore at this toy size.

    return jnp.transpose(out2.reshape(C, B, H, W), (1, 0, 2, 3))


# ---------------------------------------------------------------------------
# Pure-JAX f32 reference (same weight conventions) for correctness check
# ---------------------------------------------------------------------------
def _ref_da_conv(x, d, w1, w2, w1x1, b1x1, K):
    B, C, H, W = x.shape
    KK = K * K
    h = _leaky(d @ w1.T)                                        # (B, 64)
    dk = h @ w2.T                                               # (B, C*KK), cols tap-major
    dk_k = dk.reshape(B, KK, C).transpose(0, 2, 1).reshape(B * C, 1, K, K)
    pad = (K - 1) // 2
    out = lax.conv_general_dilated(
        x.reshape(1, B * C, H, W), dk_k, (1, 1), [(pad, pad), (pad, pad)],
        dimension_numbers=("NCHW", "OIHW", "NCHW"),
        feature_group_count=B * C, precision=lax.Precision.HIGHEST)
    out = _leaky(out.reshape(B, C, H, W))
    m = jnp.einsum("oc,bchw->bohw", w1x1, x, precision=lax.Precision.HIGHEST)
    m = jax.nn.sigmoid(m + b1x1.reshape(1, 1, 1, 1))
    return out * m + x


def _ref_dense_conv(x, w, b, K):
    B, C, H, W = x.shape
    Cout = w.shape[0]
    KK = K * K
    w_oihw = w.reshape(Cout, KK, C).transpose(0, 2, 1).reshape(Cout, C, K, K)
    pad = (K - 1) // 2
    out = lax.conv_general_dilated(
        x, w_oihw, (1, 1), [(pad, pad), (pad, pad)],
        dimension_numbers=("NCHW", "OIHW", "NCHW"),
        precision=lax.Precision.HIGHEST)
    return out + b.reshape(1, Cout, 1, 1)


def rdag_ref(x, d, params, K):
    n_blocks = params["conv1_w"].shape[0]
    res = x
    for i in range(n_blocks):
        p = {k: v[i] for k, v in params.items()}
        out = _leaky(_ref_da_conv(res, d, p["da1_w1"], p["da1_w2"],
                                  p["da1_w1x1"], p["da1_b1x1"], K))
        out = _leaky(_ref_dense_conv(out, p["conv1_w"], p["conv1_b"], K))
        out = _leaky(_ref_da_conv(out, d, p["da2_w1"], p["da2_w2"],
                                  p["da2_w1x1"], p["da2_b1x1"], K))
        res = _ref_dense_conv(out, p["conv2_w"], p["conv2_b"], K) + res
    return res


# ---------------------------------------------------------------------------
# Deterministic synthetic parameters (mirrors the nn module shapes)
# ---------------------------------------------------------------------------
def init_params(key, C, K, n_blocks):
    KK = K * K

    def u(k, shape, bound):
        return jax.random.uniform(k, shape, jnp.float32, -bound, bound)

    keys = jax.random.split(key, 12)
    cb = 1.0 / ((C * KK) ** 0.5)
    cm = 1.0 / (C ** 0.5)
    return {
        "da1_w1":   u(keys[0], (n_blocks, 64, 64), 1.0 / 8.0),
        "da1_w2":   u(keys[1], (n_blocks, C * KK, 64), 1.0 / 8.0),
        "da1_w1x1": u(keys[2], (n_blocks, 1, C), cm),
        "da1_b1x1": u(keys[3], (n_blocks, 1, 1), cm),
        "da2_w1":   u(keys[4], (n_blocks, 64, 64), 1.0 / 8.0),
        "da2_w2":   u(keys[5], (n_blocks, C * KK, 64), 1.0 / 8.0),
        "da2_w1x1": u(keys[6], (n_blocks, 1, C), cm),
        "da2_b1x1": u(keys[7], (n_blocks, 1, 1), cm),
        "conv1_w":  u(keys[8], (n_blocks, C, C * KK), cb),
        "conv1_b":  u(keys[9], (n_blocks, C, 1), cb),
        "conv2_w":  u(keys[10], (n_blocks, C, C * KK), cb),
        "conv2_b":  u(keys[11], (n_blocks, C, 1), cb),
    }


# ---------------------------------------------------------------------------
# main
# ---------------------------------------------------------------------------
if __name__ == "__main__":
    # C must be 64 (RDA_conv hardcodes Linear(64, ...)); B*H*W = 128 exactly
    # fills the 128-lane axis.
    B, C, H, W = 2, 64, 8, 8
    K, n_blocks = 3, 2

    key = jax.random.PRNGKey(0)
    kx, kd, kp = jax.random.split(key, 3)
    x = jax.random.normal(kx, (B, C, H, W), jnp.float32) * 0.5
    d = jax.random.normal(kd, (B, C), jnp.float32) * 0.5
    params = init_params(kp, C, K, n_blocks)

    fwd = jax.jit(rdag_forward)
    out = jax.block_until_ready(fwd(x, d, params))
    assert out.shape == (B, C, H, W), out.shape

    ref = rdag_ref(x, d, params, K)
    max_err = float(jnp.max(jnp.abs(out - ref)))
    assert max_err < 3e-2, f"max abs err vs reference: {max_err}"

    print("KERNEL_OK")
</pallas_src>

<mosaic_0001>
module attributes {stable_mosaic.version = 11 : i64} {
  func.func @kernel(%arg0: i32, %arg1: memref<64x128xf32, #tpu.memory_space<vmem>>, %arg2: memref<64x2xf32, #tpu.memory_space<vmem>>, %arg3: memref<9x128x128xf32, #tpu.memory_space<vmem>>, %arg4: memref<1x64x64xf32, #tpu.memory_space<vmem>>, %arg5: memref<1x576x64xf32, #tpu.memory_space<vmem>>, %arg6: memref<1x1x64xf32, #tpu.memory_space<vmem>>, %arg7: memref<1x1x1xf32, #tpu.memory_space<vmem>>, %arg8: memref<1x64x64xf32, #tpu.memory_space<vmem>>, %arg9: memref<1x576x64xf32, #tpu.memory_space<vmem>>, %arg10: memref<1x1x64xf32, #tpu.memory_space<vmem>>, %arg11: memref<1x1x1xf32, #tpu.memory_space<vmem>>, %arg12: memref<1x64x576xf32, #tpu.memory_space<vmem>>, %arg13: memref<1x64x1xf32, #tpu.memory_space<vmem>>, %arg14: memref<1x64x576xf32, #tpu.memory_space<vmem>>, %arg15: memref<1x64x1xf32, #tpu.memory_space<vmem>>, %arg16: memref<64x128xf32, #tpu.memory_space<vmem>>, %arg17: memref<64x128xf32, #tpu.memory_space<vmem>>) attributes {dimension_semantics = [#tpu.dimension_semantics<arbitrary>], iteration_bounds = array<i64: 2>, scalar_prefetch = 0 : i64, scratch_operands = 1 : i64, tpu.core_type = #tpu.core_type<tc>, window_params = [{pipeline_mode = #tpu.pipeline_mode<synchronous>, transform_indices = @transform_0, window_bounds = array<i64: 64, 128>}, {pipeline_mode = #tpu.pipeline_mode<synchronous>, transform_indices = @transform_1, window_bounds = array<i64: 64, 2>}, {pipeline_mode = #tpu.pipeline_mode<synchronous>, transform_indices = @transform_2, window_bounds = array<i64: 9, 128, 128>}, {transform_indices = @transform_3, window_bounds = array<i64: 1, 64, 64>}, {transform_indices = @transform_4, window_bounds = array<i64: 1, 576, 64>}, {transform_indices = @transform_5, window_bounds = array<i64: 1, 1, 64>}, {transform_indices = @transform_6, window_bounds = array<i64: 1, 1, 1>}, {transform_indices = @transform_7, window_bounds = array<i64: 1, 64, 64>}, {transform_indices = @transform_8, window_bounds = array<i64: 1, 576, 64>}, {transform_indices = @transform_9, window_bounds = array<i64: 1, 1, 64>}, {transform_indices = @transform_10, window_bounds = array<i64: 1, 1, 1>}, {transform_indices = @transform_11, window_bounds = array<i64: 1, 64, 576>}, {transform_indices = @transform_12, window_bounds = array<i64: 1, 64, 1>}, {transform_indices = @transform_13, window_bounds = array<i64: 1, 64, 576>}, {transform_indices = @transform_14, window_bounds = array<i64: 1, 64, 1>}, {pipeline_mode = #tpu.pipeline_mode<synchronous>, transform_indices = @transform_15, window_bounds = array<i64: 64, 128>}]} {
    %c0_i32 = arith.constant 0 : i32
    %0 = arith.cmpi eq, %arg0, %c0_i32 : i32
    %1 = arith.extui %0 : i1 to i32
    %c0_i32_0 = arith.constant 0 : i32
    %2 = arith.cmpi ne, %1, %c0_i32_0 : i32
    scf.if %2 {
      %c0_125 = arith.constant 0 : index
      %c0_126 = arith.constant 0 : index
      %422 = vector.load %arg1[%c0_125, %c0_126] : memref<64x128xf32, #tpu.memory_space<vmem>>, vector<64x128xf32>
      %c0_127 = arith.constant 0 : index
      %c0_128 = arith.constant 0 : index
      %423 = vector.load %arg17[%c0_127, %c0_128] : memref<64x128xf32, #tpu.memory_space<vmem>>, vector<64x128xf32>
      tpu.vector_store %arg17[%c0_127, %c0_128], %422 {strides = array<i32>} : memref<64x128xf32, #tpu.memory_space<vmem>>, vector<64x128xf32>,
    } else {
    }
    %c0 = arith.constant 0 : index
    %c0_1 = arith.constant 0 : index
    %3 = vector.load %arg17[%c0, %c0_1] : memref<64x128xf32, #tpu.memory_space<vmem>>, vector<64x128xf32>
    %c0_2 = arith.constant 0 : index
    %c0_3 = arith.constant 0 : index
    %4 = vector.load %arg2[%c0_2, %c0_3] : memref<64x2xf32, #tpu.memory_space<vmem>>, vector<64x2xf32>
    %c0_4 = arith.constant 0 : index
    %c0_5 = arith.constant 0 : index
    %c0_6 = arith.constant 0 : index
    %5 = vector.load %arg3[%c0_4, %c0_5, %c0_6] : memref<9x128x128xf32, #tpu.memory_space<vmem>>, vector<1x128x128xf32>
    %6 = vector.shape_cast %5 : vector<1x128x128xf32> to vector<128x128xf32>
    %7 = arith.truncf %6 : vector<128x128xf32> to vector<128x128xbf16>
    %c1 = arith.constant 1 : index
    %c0_7 = arith.constant 0 : index
    %c0_8 = arith.constant 0 : index
    %8 = vector.load %arg3[%c1, %c0_7, %c0_8] : memref<9x128x128xf32, #tpu.memory_space<vmem>>, vector<1x128x128xf32>
    %9 = vector.shape_cast %8 : vector<1x128x128xf32> to vector<128x128xf32>
    %10 = arith.truncf %9 : vector<128x128xf32> to vector<128x128xbf16>
    %c2 = arith.constant 2 : index
    %c0_9 = arith.constant 0 : index
    %c0_10 = arith.constant 0 : index
    %11 = vector.load %arg3[%c2, %c0_9, %c0_10] : memref<9x128x128xf32, #tpu.memory_space<vmem>>, vector<1x128x128xf32>
    %12 = vector.shape_cast %11 : vector<1x128x128xf32> to vector<128x128xf32>
    %13 = arith.truncf %12 : vector<128x128xf32> to vector<128x128xbf16>
    %c3 = arith.constant 3 : index
    %c0_11 = arith.constant 0 : index
    %c0_12 = arith.constant 0 : index
    %14 = vector.load %arg3[%c3, %c0_11, %c0_12] : memref<9x128x128xf32, #tpu.memory_space<vmem>>, vector<1x128x128xf32>
    %15 = vector.shape_cast %14 : vector<1x128x128xf32> to vector<128x128xf32>
    %16 = arith.truncf %15 : vector<128x128xf32> to vector<128x128xbf16>
    %c4 = arith.constant 4 : index
    %c0_13 = arith.constant 0 : index
    %c0_14 = arith.constant 0 : index
    %17 = vector.load %arg3[%c4, %c0_13, %c0_14] : memref<9x128x128xf32, #tpu.memory_space<vmem>>, vector<1x128x128xf32>
    %18 = vector.shape_cast %17 : vector<1x128x128xf32> to vector<128x128xf32>
    %19 = arith.truncf %18 : vector<128x128xf32> to vector<128x128xbf16>
    %c5 = arith.constant 5 : index
    %c0_15 = arith.constant 0 : index
    %c0_16 = arith.constant 0 : index
    %20 = vector.load %arg3[%c5, %c0_15, %c0_16] : memref<9x128x128xf32, #tpu.memory_space<vmem>>, vector<1x128x128xf32>
    %21 = vector.shape_cast %20 : vector<1x128x128xf32> to vector<128x128xf32>
    %22 = arith.truncf %21 : vector<128x128xf32> to vector<128x128xbf16>
    %c6 = arith.constant 6 : index
    %c0_17 = arith.constant 0 : index
    %c0_18 = arith.constant 0 : index
    %23 = vector.load %arg3[%c6, %c0_17, %c0_18] : memref<9x128x128xf32, #tpu.memory_space<vmem>>, vector<1x128x128xf32>
    %24 = vector.shape_cast %23 : vector<1x128x128xf32> to vector<128x128xf32>
    %25 = arith.truncf %24 : vector<128x128xf32> to vector<128x128xbf16>
    %c7 = arith.constant 7 : index
    %c0_19 = arith.constant 0 : index
    %c0_20 = arith.constant 0 : index
    %26 = vector.load %arg3[%c7, %c0_19, %c0_20] : memref<9x128x128xf32, #tpu.memory_space<vmem>>, vector<1x128x128xf32>
    %27 = vector.shape_cast %26 : vector<1x128x128xf32> to vector<128x128xf32>
    %28 = arith.truncf %27 : vector<128x128xf32> to vector<128x128xbf16>
    %c8 = arith.constant 8 : index
    %c0_21 = arith.constant 0 : index
    %c0_22 = arith.constant 0 : index
    %29 = vector.load %arg3[%c8, %c0_21, %c0_22] : memref<9x128x128xf32, #tpu.memory_space<vmem>>, vector<1x128x128xf32>
    %30 = vector.shape_cast %29 : vector<1x128x128xf32> to vector<128x128xf32>
    %31 = arith.truncf %30 : vector<128x128xf32> to vector<128x128xbf16>
    %c0_23 = arith.constant 0 : index
    %c0_24 = arith.constant 0 : index
    %c0_25 = arith.constant 0 : index
    %32 = vector.load %arg4[%c0_23, %c0_24, %c0_25] : memref<1x64x64xf32, #tpu.memory_space<vmem>>, vector<1x64x64xf32>
    %33 = vector.shape_cast %32 : vector<1x64x64xf32> to vector<64x64xf32>
    %34 = arith.truncf %33 : vector<64x64xf32> to vector<64x64xbf16>
    %35 = arith.truncf %4 : vector<64x2xf32> to vector<64x2xbf16>
    %cst = arith.constant dense<0.000000e+00> : vector<64x2xf32>
    %36 = tpu.matmul %34, %35, %cst {dimension_numbers = #tpu.dot_dimension_numbers<[1], [0], [0], [1], [0, 0, 1, 1], [], []>} : vector<64x64xbf16>, vector<64x2xbf16>, vector<64x2xf32> -> vector<64x2xf32>
    %cst_26 = arith.constant 0.000000e+00 : f32
    %37 = vector.broadcast %cst_26 : f32 to vector<64x2xf32>
    %38 = arith.cmpf oge, %36, %37 : vector<64x2xf32>
    %cst_27 = arith.constant 1.000000e-01 : f32
    %39 = vector.broadcast %cst_27 : f32 to vector<64x2xf32>
    %40 = arith.mulf %39, %36 : vector<64x2xf32>
    %41 = arith.select %38, %36, %40 : vector<64x2xi1>, vector<64x2xf32>
    %c0_28 = arith.constant 0 : index
    %c0_29 = arith.constant 0 : index
    %c0_30 = arith.constant 0 : index
    %42 = vector.load %arg5[%c0_28, %c0_29, %c0_30] : memref<1x576x64xf32, #tpu.memory_space<vmem>>, vector<1x576x64xf32>
    %43 = vector.shape_cast %42 : vector<1x576x64xf32> to vector<576x64xf32>
    %44 = arith.truncf %43 : vector<576x64xf32> to vector<576x64xbf16>
    %45 = arith.truncf %41 : vector<64x2xf32> to vector<64x2xbf16>
    %cst_31 = arith.constant dense<0.000000e+00> : vector<576x2xf32>
    %46 = tpu.matmul %44, %45, %cst_31 {dimension_numbers = #tpu.dot_dimension_numbers<[1], [0], [0], [1], [0, 0, 1, 1], [], []>} : vector<576x64xbf16>, vector<64x2xbf16>, vector<576x2xf32> -> vector<576x2xf32>
    %47 = arith.truncf %3 : vector<64x128xf32> to vector<64x128xbf16>
    %cst_32 = arith.constant dense<0.000000e+00> : vector<64x128xf32>
    %48 = tpu.matmul %47, %7, %cst_32 {dimension_numbers = #tpu.dot_dimension_numbers<[1], [0], [0], [1], [0, 0, 1, 1], [], []>} : vector<64x128xbf16>, vector<128x128xbf16>, vector<64x128xf32> -> vector<64x128xf32>
    %49 = arith.truncf %3 : vector<64x128xf32> to vector<64x128xbf16>
    %cst_33 = arith.constant dense<0.000000e+00> : vector<64x128xf32>
    %50 = tpu.matmul %49, %10, %cst_33 {dimension_numbers = #tpu.dot_dimension_numbers<[1], [0], [0], [1], [0, 0, 1, 1], [], []>} : vector<64x128xbf16>, vector<128x128xbf16>, vector<64x128xf32> -> vector<64x128xf32>
    %51 = arith.truncf %3 : vector<64x128xf32> to vector<64x128xbf16>
    %cst_34 = arith.constant dense<0.000000e+00> : vector<64x128xf32>
    %52 = tpu.matmul %51, %13, %cst_34 {dimension_numbers = #tpu.dot_dimension_numbers<[1], [0], [0], [1], [0, 0, 1, 1], [], []>} : vector<64x128xbf16>, vector<128x128xbf16>, vector<64x128xf32> -> vector<64x128xf32>
    %53 = arith.truncf %3 : vector<64x128xf32> to vector<64x128xbf16>
    %cst_35 = arith.constant dense<0.000000e+00> : vector<64x128xf32>
    %54 = tpu.matmul %53, %16, %cst_35 {dimension_numbers = #tpu.dot_dimension_numbers<[1], [0], [0], [1], [0, 0, 1, 1], [], []>} : vector<64x128xbf16>, vector<128x128xbf16>, vector<64x128xf32> -> vector<64x128xf32>
    %55 = arith.truncf %3 : vector<64x128xf32> to vector<64x128xbf16>
    %cst_36 = arith.constant dense<0.000000e+00> : vector<64x128xf32>
    %56 = tpu.matmul %55, %19, %cst_36 {dimension_numbers = #tpu.dot_dimension_numbers<[1], [0], [0], [1], [0, 0, 1, 1], [], []>} : vector<64x128xbf16>, vector<128x128xbf16>, vector<64x128xf32> -> vector<64x128xf32>
    %57 = arith.truncf %3 : vector<64x128xf32> to vector<64x128xbf16>
    %cst_37 = arith.constant dense<0.000000e+00> : vector<64x128xf32>
    %58 = tpu.matmul %57, %22, %cst_37 {dimension_numbers = #tpu.dot_dimension_numbers<[1], [0], [0], [1], [0, 0, 1, 1], [], []>} : vector<64x128xbf16>, vector<128x128xbf16>, vector<64x128xf32> -> vector<64x128xf32>
    %59 = arith.truncf %3 : vector<64x128xf32> to vector<64x128xbf16>
    %cst_38 = arith.constant dense<0.000000e+00> : vector<64x128xf32>
    %60 = tpu.matmul %59, %25, %cst_38 {dimension_numbers = #tpu.dot_dimension_numbers<[1], [0], [0], [1], [0, 0, 1, 1], [], []>} : vector<64x128xbf16>, vector<128x128xbf16>, vector<64x128xf32> -> vector<64x128xf32>
    %61 = arith.truncf %3 : vector<64x128xf32> to vector<64x128xbf16>
    %cst_39 = arith.constant dense<0.000000e+00> : vector<64x128xf32>
    %62 = tpu.matmul %61, %28, %cst_39 {dimension_numbers = #tpu.dot_dimension_numbers<[1], [0], [0], [1], [0, 0, 1, 1], [], []>} : vector<64x128xbf16>, vector<128x128xbf16>, vector<64x128xf32> -> vector<64x128xf32>
    %63 = arith.truncf %3 : vector<64x128xf32> to vector<64x128xbf16>
    %cst_40 = arith.constant dense<0.000000e+00> : vector<64x128xf32>
    %64 = tpu.matmul %63, %31, %cst_40 {dimension_numbers = #tpu.dot_dimension_numbers<[1], [0], [0], [1], [0, 0, 1, 1], [], []>} : vector<64x128xbf16>, vector<128x128xbf16>, vector<64x128xf32> -> vector<64x128xf32>
    %cst_41 = arith.constant 0.000000e+00 : f32
    %65 = vector.broadcast %cst_41 : f32 to vector<64x64xf32>
    %cst_42 = arith.constant 0.000000e+00 : f32
    %66 = vector.broadcast %cst_42 : f32 to vector<64x64xf32>
    %67 = vector.extract_strided_slice %46 {offsets = [0, 0], sizes = [64, 2], strides = [1, 1]} : vector<576x2xf32> to vector<64x2xf32>
    %68 = vector.extract_strided_slice %67 {offsets = [0, 0], sizes = [64, 1], strides = [1, 1]} : vector<64x2xf32> to vector<64x1xf32>
    %69 = vector.extract_strided_slice %48 {offsets = [0, 0], sizes = [64, 64], strides = [1, 1]} : vector<64x128xf32> to vector<64x64xf32>
    %70 = vector.broadcast %68 : vector<64x1xf32> to vector<64x64xf32>
    %71 = arith.mulf %70, %69 : vector<64x64xf32>
    %72 = arith.addf %65, %71 : vector<64x64xf32>
    %73 = vector.extract_strided_slice %67 {offsets = [0, 1], sizes = [64, 1], strides = [1, 1]} : vector<64x2xf32> to vector<64x1xf32>
    %74 = vector.extract_strided_slice %48 {offsets = [0, 64], sizes = [64, 64], strides = [1, 1]} : vector<64x128xf32> to vector<64x64xf32>
    %75 = vector.broadcast %73 : vector<64x1xf32> to vector<64x64xf32>
    %76 = arith.mulf %75, %74 : vector<64x64xf32>
    %77 = arith.addf %66, %76 : vector<64x64xf32>
    %78 = vector.extract_strided_slice %46 {offsets = [64, 0], sizes = [64, 2], strides = [1, 1]} : vector<576x2xf32> to vector<64x2xf32>
    %79 = vector.extract_strided_slice %78 {offsets = [0, 0], sizes = [64, 1], strides = [1, 1]} : vector<64x2xf32> to vector<64x1xf32>
    %80 = vector.extract_strided_slice %50 {offsets = [0, 0], sizes = [64, 64], strides = [1, 1]} : vector<64x128xf32> to vector<64x64xf32>
    %81 = vector.broadcast %79 : vector<64x1xf32> to vector<64x64xf32>
    %82 = arith.mulf %81, %80 : vector<64x64xf32>
    %83 = arith.addf %72, %82 : vector<64x64xf32>
    %84 = vector.extract_strided_slice %78 {offsets = [0, 1], sizes = [64, 1], strides = [1, 1]} : vector<64x2xf32> to vector<64x1xf32>
    %85 = vector.extract_strided_slice %50 {offsets = [0, 64], sizes = [64, 64], strides = [1, 1]} : vector<64x128xf32> to vector<64x64xf32>
    %86 = vector.broadcast %84 : vector<64x1xf32> to vector<64x64xf32>
    %87 = arith.mulf %86, %85 : vector<64x64xf32>
    %88 = arith.addf %77, %87 : vector<64x64xf32>
    %89 = vector.extract_strided_slice %46 {offsets = [128, 0], sizes = [64, 2], strides = [1, 1]} : vector<576x2xf32> to vector<64x2xf32>
    %90 = vector.extract_strided_slice %89 {offsets = [0, 0], sizes = [64, 1], strides = [1, 1]} : vector<64x2xf32> to vector<64x1xf32>
    %91 = vector.extract_strided_slice %52 {offsets = [0, 0], sizes = [64, 64], strides = [1, 1]} : vector<64x128xf32> to vector<64x64xf32>
    %92 = vector.broadcast %90 : vector<64x1xf32> to vector<64x64xf32>
    %93 = arith.mulf %92, %91 : vector<64x64xf32>
    %94 = arith.addf %83, %93 : vector<64x64xf32>
    %95 = vector.extract_strided_slice %89 {offsets = [0, 1], sizes = [64, 1], strides = [1, 1]} : vector<64x2xf32> to vector<64x1xf32>
    %96 = vector.extract_strided_slice %52 {offsets = [0, 64], sizes = [64, 64], strides = [1, 1]} : vector<64x128xf32> to vector<64x64xf32>
    %97 = vector.broadcast %95 : vector<64x1xf32> to vector<64x64xf32>
    %98 = arith.mulf %97, %96 : vector<64x64xf32>
    %99 = arith.addf %88, %98 : vector<64x64xf32>
    %100 = vector.extract_strided_slice %46 {offsets = [192, 0], sizes = [64, 2], strides = [1, 1]} : vector<576x2xf32> to vector<64x2xf32>
    %101 = vector.extract_strided_slice %100 {offsets = [0, 0], sizes = [64, 1], strides = [1, 1]} : vector<64x2xf32> to vector<64x1xf32>
    %102 = vector.extract_strided_slice %54 {offsets = [0, 0], sizes = [64, 64], strides = [1, 1]} : vector<64x128xf32> to vector<64x64xf32>
    %103 = vector.broadcast %101 : vector<64x1xf32> to vector<64x64xf32>
    %104 = arith.mulf %103, %102 : vector<64x64xf32>
    %105 = arith.addf %94, %104 : vector<64x64xf32>
    %106 = vector.extract_strided_slice %100 {offsets = [0, 1], sizes = [64, 1], strides = [1, 1]} : vector<64x2xf32> to vector<64x1xf32>
    %107 = vector.extract_strided_slice %54 {offsets = [0, 64], sizes = [64, 64], strides = [1, 1]} : vector<64x128xf32> to vector<64x64xf32>
    %108 = vector.broadcast %106 : vector<64x1xf32> to vector<64x64xf32>
    %109 = arith.mulf %108, %107 : vector<64x64xf32>
    %110 = arith.addf %99, %109 : vector<64x64xf32>
    %111 = vector.extract_strided_slice %46 {offsets = [256, 0], sizes = [64, 2], strides = [1, 1]} : vector<576x2xf32> to vector<64x2xf32>
    %112 = vector.extract_strided_slice %111 {offsets = [0, 0], sizes = [64, 1], strides = [1, 1]} : vector<64x2xf32> to vector<64x1xf32>
    %113 = vector.extract_strided_slice %56 {offsets = [0, 0], sizes = [64, 64], strides = [1, 1]} : vector<64x128xf32> to vector<64x64xf32>
    %114 = vector.broadcast %112 : vector<64x1xf32> to vector<64x64xf32>
    %115 = arith.mulf %114, %113 : vector<64x64xf32>
    %116 = arith.addf %105, %115 : vector<64x64xf32>
    %117 = vector.extract_strided_slice %111 {offsets = [0, 1], sizes = [64, 1], strides = [1, 1]} : vector<64x2xf32> to vector<64x1xf32>
    %118 = vector.extract_strided_slice %56 {offsets = [0, 64], sizes = [64, 64], strides = [1, 1]} : vector<64x128xf32> to vector<64x64xf32>
    %119 = vector.broadcast %117 : vector<64x1xf32> to vector<64x64xf32>
    %120 = arith.mulf %119, %118 : vector<64x64xf32>
    %121 = arith.addf %110, %120 : vector<64x64xf32>
    %122 = vector.extract_strided_slice %46 {offsets = [320, 0], sizes = [64, 2], strides = [1, 1]} : vector<576x2xf32> to vector<64x2xf32>
    %123 = vector.extract_strided_slice %122 {offsets = [0, 0], sizes = [64, 1], strides = [1, 1]} : vector<64x2xf32> to vector<64x1xf32>
    %124 = vector.extract_strided_slice %58 {offsets = [0, 0], sizes = [64, 64], strides = [1, 1]} : vector<64x128xf32> to vector<64x64xf32>
    %125 = vector.broadcast %123 : vector<64x1xf32> to vector<64x64xf32>
    %126 = arith.mulf %125, %124 : vector<64x64xf32>
    %127 = arith.addf %116, %126 : vector<64x64xf32>
    %128 = vector.extract_strided_slice %122 {offsets = [0, 1], sizes = [64, 1], strides = [1, 1]} : vector<64x2xf32> to vector<64x1xf32>
    %129 = vector.extract_strided_slice %58 {offsets = [0, 64], sizes = [64, 64], strides = [1, 1]} : vector<64x128xf32> to vector<64x64xf32>
    %130 = vector.broadcast %128 : vector<64x1xf32> to vector<64x64xf32>
    %131 = arith.mulf %130, %129 : vector<64x64xf32>
    %132 = arith.addf %121, %131 : vector<64x64xf32>
    %133 = vector.extract_strided_slice %46 {offsets = [384, 0], sizes = [64, 2], strides = [1, 1]} : vector<576x2xf32> to vector<64x2xf32>
    %134 = vector.extract_strided_slice %133 {offsets = [0, 0], sizes = [64, 1], strides = [1, 1]} : vector<64x2xf32> to vector<64x1xf32>
    %135 = vector.extract_strided_slice %60 {offsets = [0, 0], sizes = [64, 64], strides = [1, 1]} : vector<64x128xf32> to vector<64x64xf32>
    %136 = vector.broadcast %134 : vector<64x1xf32> to vector<64x64xf32>
    %137 = arith.mulf %136, %135 : vector<64x64xf32>
    %138 = arith.addf %127, %137 : vector<64x64xf32>
    %139 = vector.extract_strided_slice %133 {offsets = [0, 1], sizes = [64, 1], strides = [1, 1]} : vector<64x2xf32> to vector<64x1xf32>
    %140 = vector.extract_strided_slice %60 {offsets = [0, 64], sizes = [64, 64], strides = [1, 1]} : vector<64x128xf32> to vector<64x64xf32>
    %141 = vector.broadcast %139 : vector<64x1xf32> to vector<64x64xf32>
    %142 = arith.mulf %141, %140 : vector<64x64xf32>
    %143 = arith.addf %132, %142 : vector<64x64xf32>
    %144 = vector.extract_strided_slice %46 {offsets = [448, 0], sizes = [64, 2], strides = [1, 1]} : vector<576x2xf32> to vector<64x2xf32>
    %145 = vector.extract_strided_slice %144 {offsets = [0, 0], sizes = [64, 1], strides = [1, 1]} : vector<64x2xf32> to vector<64x1xf32>
    %146 = vector.extract_strided_slice %62 {offsets = [0, 0], sizes = [64, 64], strides = [1, 1]} : vector<64x128xf32> to vector<64x64xf32>
    %147 = vector.broadcast %145 : vector<64x1xf32> to vector<64x64xf32>
    %148 = arith.mulf %147, %146 : vector<64x64xf32>
    %149 = arith.addf %138, %148 : vector<64x64xf32>
    %150 = vector.extract_strided_slice %144 {offsets = [0, 1], sizes = [64, 1], strides = [1, 1]} : vector<64x2xf32> to vector<64x1xf32>
    %151 = vector.extract_strided_slice %62 {offsets = [0, 64], sizes = [64, 64], strides = [1, 1]} : vector<64x128xf32> to vector<64x64xf32>
    %152 = vector.broadcast %150 : vector<64x1xf32> to vector<64x64xf32>
    %153 = arith.mulf %152, %151 : vector<64x64xf32>
    %154 = arith.addf %143, %153 : vector<64x64xf32>
    %155 = vector.extract_strided_slice %46 {offsets = [512, 0], sizes = [64, 2], strides = [1, 1]} : vector<576x2xf32> to vector<64x2xf32>
    %156 = vector.extract_strided_slice %155 {offsets = [0, 0], sizes = [64, 1], strides = [1, 1]} : vector<64x2xf32> to vector<64x1xf32>
    %157 = vector.extract_strided_slice %64 {offsets = [0, 0], sizes = [64, 64], strides = [1, 1]} : vector<64x128xf32> to vector<64x64xf32>
    %158 = vector.broadcast %156 : vector<64x1xf32> to vector<64x64xf32>
    %159 = arith.mulf %158, %157 : vector<64x64xf32>
    %160 = arith.addf %149, %159 : vector<64x64xf32>
    %161 = vector.extract_strided_slice %155 {offsets = [0, 1], sizes = [64, 1], strides = [1, 1]} : vector<64x2xf32> to vector<64x1xf32>
    %162 = vector.extract_strided_slice %64 {offsets = [0, 64], sizes = [64, 64], strides = [1, 1]} : vector<64x128xf32> to vector<64x64xf32>
    %163 = vector.broadcast %161 : vector<64x1xf32> to vector<64x64xf32>
    %164 = arith.mulf %163, %162 : vector<64x64xf32>
    %165 = arith.addf %154, %164 : vector<64x64xf32>
    %166 = tpu.concatenate %160, %165 in 1 : vector<64x64xf32>, vector<64x64xf32> -> vector<64x128xf32>
    %cst_43 = arith.constant 0.000000e+00 : f32
    %167 = vector.broadcast %cst_43 : f32 to vector<64x128xf32>
    %168 = arith.cmpf oge, %166, %167 : vector<64x128xf32>
    %cst_44 = arith.constant 1.000000e-01 : f32
    %169 = vector.broadcast %cst_44 : f32 to vector<64x128xf32>
    %170 = arith.mulf %169, %166 : vector<64x128xf32>
    %171 = arith.select %168, %166, %170 : vector<64x128xi1>, vector<64x128xf32>
    %c0_45 = arith.constant 0 : index
    %c0_46 = arith.constant 0 : index
    %c0_47 = arith.constant 0 : index
    %172 = vector.load %arg6[%c0_45, %c0_46, %c0_47] : memref<1x1x64xf32, #tpu.memory_space<vmem>>, vector<1x1x64xf32>
    %173 = vector.shape_cast %172 : vector<1x1x64xf32> to vector<1x64xf32>
    %174 = arith.truncf %173 : vector<1x64xf32> to vector<1x64xbf16>
    %175 = arith.truncf %3 : vector<64x128xf32> to vector<64x128xbf16>
    %cst_48 = arith.constant dense<0.000000e+00> : vector<1x128xf32>
    %176 = tpu.matmul %174, %175, %cst_48 {dimension_numbers = #tpu.dot_dimension_numbers<[1], [0], [0], [1], [0, 0, 1, 1], [], []>} : vector<1x64xbf16>, vector<64x128xbf16>, vector<1x128xf32> -> vector<1x128xf32>
    %c0_49 = arith.constant 0 : index
    %c0_50 = arith.constant 0 : index
    %c0_51 = arith.constant 0 : index
    %177 = vector.load %arg7[%c0_49, %c0_50, %c0_51] : memref<1x1x1xf32, #tpu.memory_space<vmem>>, vector<1x1x1xf32>
    %178 = vector.shape_cast %177 : vector<1x1x1xf32> to vector<1x1xf32>
    %179 = vector.broadcast %178 : vector<1x1xf32> to vector<1x128xf32>
    %180 = arith.addf %176, %179 : vector<1x128xf32>
    %181 = arith.negf %180 : vector<1x128xf32>
    %182 = math.exp %181 : vector<1x128xf32>
    %cst_52 = arith.constant 1.000000e+00 : f32
    %183 = vector.broadcast %cst_52 : f32 to vector<1x128xf32>
    %184 = arith.addf %183, %182 : vector<1x128xf32>
    %185 = arith.divf %183, %184 : vector<1x128xf32>
    %186 = vector.broadcast %185 : vector<1x128xf32> to vector<64x128xf32>
    %187 = arith.mulf %171, %186 : vector<64x128xf32>
    %188 = arith.addf %187, %3 : vector<64x128xf32>
    %cst_53 = arith.constant 0.000000e+00 : f32
    %189 = vector.broadcast %cst_53 : f32 to vector<64x128xf32>
    %190 = arith.cmpf oge, %188, %189 : vector<64x128xf32>
    %cst_54 = arith.constant 1.000000e-01 : f32
    %191 = vector.broadcast %cst_54 : f32 to vector<64x128xf32>
    %192 = arith.mulf %191, %188 : vector<64x128xf32>
    %193 = arith.select %190, %188, %192 : vector<64x128xi1>, vector<64x128xf32>
    %194 = arith.truncf %193 : vector<64x128xf32> to vector<64x128xbf16>
    %cst_55 = arith.constant dense<0.000000e+00> : vector<64x128xf32>
    %195 = tpu.matmul %194, %7, %cst_55 {dimension_numbers = #tpu.dot_dimension_numbers<[1], [0], [0], [1], [0, 0, 1, 1], [], []>} : vector<64x128xbf16>, vector<128x128xbf16>, vector<64x128xf32> -> vector<64x128xf32>
    %196 = arith.truncf %193 : vector<64x128xf32> to vector<64x128xbf16>
    %cst_56 = arith.constant dense<0.000000e+00> : vector<64x128xf32>
    %197 = tpu.matmul %196, %10, %cst_56 {dimension_numbers = #tpu.dot_dimension_numbers<[1], [0], [0], [1], [0, 0, 1, 1], [], []>} : vector<64x128xbf16>, vector<128x128xbf16>, vector<64x128xf32> -> vector<64x128xf32>
    %198 = arith.truncf %193 : vector<64x128xf32> to vector<64x128xbf16>
    %cst_57 = arith.constant dense<0.000000e+00> : vector<64x128xf32>
    %199 = tpu.matmul %198, %13, %cst_57 {dimension_numbers = #tpu.dot_dimension_numbers<[1], [0], [0], [1], [0, 0, 1, 1], [], []>} : vector<64x128xbf16>, vector<128x128xbf16>, vector<64x128xf32> -> vector<64x128xf32>
    %200 = arith.truncf %193 : vector<64x128xf32> to vector<64x128xbf16>
    %cst_58 = arith.constant dense<0.000000e+00> : vector<64x128xf32>
    %201 = tpu.matmul %200, %16, %cst_58 {dimension_numbers = #tpu.dot_dimension_numbers<[1], [0], [0], [1], [0, 0, 1, 1], [], []>} : vector<64x128xbf16>, vector<128x128xbf16>, vector<64x128xf32> -> vector<64x128xf32>
    %202 = arith.truncf %193 : vector<64x128xf32> to vector<64x128xbf16>
    %cst_59 = arith.constant dense<0.000000e+00> : vector<64x128xf32>
    %203 = tpu.matmul %202, %19, %cst_59 {dimension_numbers = #tpu.dot_dimension_numbers<[1], [0], [0], [1], [0, 0, 1, 1], [], []>} : vector<64x128xbf16>, vector<128x128xbf16>, vector<64x128xf32> -> vector<64x128xf32>
    %204 = arith.truncf %193 : vector<64x128xf32> to vector<64x128xbf16>
    %cst_60 = arith.constant dense<0.000000e+00> : vector<64x128xf32>
    %205 = tpu.matmul %204, %22, %cst_60 {dimension_numbers = #tpu.dot_dimension_numbers<[1], [0], [0], [1], [0, 0, 1, 1], [], []>} : vector<64x128xbf16>, vector<128x128xbf16>, vector<64x128xf32> -> vector<64x128xf32>
    %206 = arith.truncf %193 : vector<64x128xf32> to vector<64x128xbf16>
    %cst_61 = arith.constant dense<0.000000e+00> : vector<64x128xf32>
    %207 = tpu.matmul %206, %25, %cst_61 {dimension_numbers = #tpu.dot_dimension_numbers<[1], [0], [0], [1], [0, 0, 1, 1], [], []>} : vector<64x128xbf16>, vector<128x128xbf16>, vector<64x128xf32> -> vector<64x128xf32>
    %208 = arith.truncf %193 : vector<64x128xf32> to vector<64x128xbf16>
    %cst_62 = arith.constant dense<0.000000e+00> : vector<64x128xf32>
    %209 = tpu.matmul %208, %28, %cst_62 {dimension_numbers = #tpu.dot_dimension_numbers<[1], [0], [0], [1], [0, 0, 1, 1], [], []>} : vector<64x128xbf16>, vector<128x128xbf16>, vector<64x128xf32> -> vector<64x128xf32>
    %210 = arith.truncf %193 : vector<64x128xf32> to vector<64x128xbf16>
    %cst_63 = arith.constant dense<0.000000e+00> : vector<64x128xf32>
    %211 = tpu.matmul %210, %31, %cst_63 {dimension_numbers = #tpu.dot_dimension_numbers<[1], [0], [0], [1], [0, 0, 1, 1], [], []>} : vector<64x128xbf16>, vector<128x128xbf16>, vector<64x128xf32> -> vector<64x128xf32>
    %212 = tpu.concatenate %195, %197, %199, %201, %203, %205, %207, %209, %211 in 0 : vector<64x128xf32>, vector<64x128xf32>, vector<64x128xf32>, vector<64x128xf32>, vector<64x128xf32>, vector<64x128xf32>, vector<64x128xf32>, vector<64x128xf32>, vector<64x128xf32> -> vector<576x128xf32>
    %c0_64 = arith.constant 0 : index
    %c0_65 = arith.constant 0 : index
    %c0_66 = arith.constant 0 : index
    %213 = vector.load %arg12[%c0_64, %c0_65, %c0_66] : memref<1x64x576xf32, #tpu.memory_space<vmem>>, vector<1x64x576xf32>
    %214 = vector.shape_cast %213 : vector<1x64x576xf32> to vector<64x576xf32>
    %215 = arith.truncf %214 : vector<64x576xf32> to vector<64x576xbf16>
    %216 = arith.truncf %212 : vector<576x128xf32> to vector<576x128xbf16>
    %cst_67 = arith.constant dense<0.000000e+00> : vector<64x128xf32>
    %217 = tpu.matmul %215, %216, %cst_67 {dimension_numbers = #tpu.dot_dimension_numbers<[1], [0], [0], [1], [0, 0, 1, 1], [], []>} : vector<64x576xbf16>, vector<576x128xbf16>, vector<64x128xf32> -> vector<64x128xf32>
    %c0_68 = arith.constant 0 : index
    %c0_69 = arith.constant 0 : index
    %c0_70 = arith.constant 0 : index
    %218 = vector.load %arg13[%c0_68, %c0_69, %c0_70] : memref<1x64x1xf32, #tpu.memory_space<vmem>>, vector<1x64x1xf32>
    %219 = vector.shape_cast %218 : vector<1x64x1xf32> to vector<64x1xf32>
    %220 = vector.broadcast %219 : vector<64x1xf32> to vector<64x128xf32>
    %221 = arith.addf %217, %220 : vector<64x128xf32>
    %cst_71 = arith.constant 0.000000e+00 : f32
    %222 = vector.broadcast %cst_71 : f32 to vector<64x128xf32>
    %223 = arith.cmpf oge, %221, %222 : vector<64x128xf32>
    %cst_72 = arith.constant 1.000000e-01 : f32
    %224 = vector.broadcast %cst_72 : f32 to vector<64x128xf32>
    %225 = arith.mulf %224, %221 : vector<64x128xf32>
    %226 = arith.select %223, %221, %225 : vector<64x128xi1>, vector<64x128xf32>
    %c0_73 = arith.constant 0 : index
    %c0_74 = arith.constant 0 : index
    %c0_75 = arith.constant 0 : index
    %227 = vector.load %arg8[%c0_73, %c0_74, %c0_75] : memref<1x64x64xf32, #tpu.memory_space<vmem>>, vector<1x64x64xf32>
    %228 = vector.shape_cast %227 : vector<1x64x64xf32> to vector<64x64xf32>
    %229 = arith.truncf %228 : vector<64x64xf32> to vector<64x64xbf16>
    %230 = arith.truncf %4 : vector<64x2xf32> to vector<64x2xbf16>
    %cst_76 = arith.constant dense<0.000000e+00> : vector<64x2xf32>
    %231 = tpu.matmul %229, %230, %cst_76 {dimension_numbers = #tpu.dot_dimension_numbers<[1], [0], [0], [1], [0, 0, 1, 1], [], []>} : vector<64x64xbf16>, vector<64x2xbf16>, vector<64x2xf32> -> vector<64x2xf32>
    %cst_77 = arith.constant 0.000000e+00 : f32
    %232 = vector.broadcast %cst_77 : f32 to vector<64x2xf32>
    %233 = arith.cmpf oge, %231, %232 : vector<64x2xf32>
    %cst_78 = arith.constant 1.000000e-01 : f32
    %234 = vector.broadcast %cst_78 : f32 to vector<64x2xf32>
    %235 = arith.mulf %234, %231 : vector<64x2xf32>
    %236 = arith.select %233, %231, %235 : vector<64x2xi1>, vector<64x2xf32>
    %c0_79 = arith.constant 0 : index
    %c0_80 = arith.constant 0 : index
    %c0_81 = arith.constant 0 : index
    %237 = vector.load %arg9[%c0_79, %c0_80, %c0_81] : memref<1x576x64xf32, #tpu.memory_space<vmem>>, vector<1x576x64xf32>
    %238 = vector.shape_cast %237 : vector<1x576x64xf32> to vector<576x64xf32>
    %239 = arith.truncf %238 : vector<576x64xf32> to vector<576x64xbf16>
    %240 = arith.truncf %236 : vector<64x2xf32> to vector<64x2xbf16>
    %cst_82 = arith.constant dense<0.000000e+00> : vector<576x2xf32>
    %241 = tpu.matmul %239, %240, %cst_82 {dimension_numbers = #tpu.dot_dimension_numbers<[1], [0], [0], [1], [0, 0, 1, 1], [], []>} : vector<576x64xbf16>, vector<64x2xbf16>, vector<576x2xf32> -> vector<576x2xf32>
    %242 = arith.truncf %226 : vector<64x128xf32> to vector<64x128xbf16>
    %cst_83 = arith.constant dense<0.000000e+00> : vector<64x128xf32>
    %243 = tpu.matmul %242, %7, %cst_83 {dimension_numbers = #tpu.dot_dimension_numbers<[1], [0], [0], [1], [0, 0, 1, 1], [], []>} : vector<64x128xbf16>, vector<128x128xbf16>, vector<64x128xf32> -> vector<64x128xf32>
    %244 = arith.truncf %226 : vector<64x128xf32> to vector<64x128xbf16>
    %cst_84 = arith.constant dense<0.000000e+00> : vector<64x128xf32>
    %245 = tpu.matmul %244, %10, %cst_84 {dimension_numbers = #tpu.dot_dimension_numbers<[1], [0], [0], [1], [0, 0, 1, 1], [], []>} : vector<64x128xbf16>, vector<128x128xbf16>, vector<64x128xf32> -> vector<64x128xf32>
    %246 = arith.truncf %226 : vector<64x128xf32> to vector<64x128xbf16>
    %cst_85 = arith.constant dense<0.000000e+00> : vector<64x128xf32>
    %247 = tpu.matmul %246, %13, %cst_85 {dimension_numbers = #tpu.dot_dimension_numbers<[1], [0], [0], [1], [0, 0, 1, 1], [], []>} : vector<64x128xbf16>, vector<128x128xbf16>, vector<64x128xf32> -> vector<64x128xf32>
    %248 = arith.truncf %226 : vector<64x128xf32> to vector<64x128xbf16>
    %cst_86 = arith.constant dense<0.000000e+00> : vector<64x128xf32>
    %249 = tpu.matmul %248, %16, %cst_86 {dimension_numbers = #tpu.dot_dimension_numbers<[1], [0], [0], [1], [0, 0, 1, 1], [], []>} : vector<64x128xbf16>, vector<128x128xbf16>, vector<64x128xf32> -> vector<64x128xf32>
    %250 = arith.truncf %226 : vector<64x128xf32> to vector<64x128xbf16>
    %cst_87 = arith.constant dense<0.000000e+00> : vector<64x128xf32>
    %251 = tpu.matmul %250, %19, %cst_87 {dimension_numbers = #tpu.dot_dimension_numbers<[1], [0], [0], [1], [0, 0, 1, 1], [], []>} : vector<64x128xbf16>, vector<128x128xbf16>, vector<64x128xf32> -> vector<64x128xf32>
    %252 = arith.truncf %226 : vector<64x128xf32> to vector<64x128xbf16>
    %cst_88 = arith.constant dense<0.000000e+00> : vector<64x128xf32>
    %253 = tpu.matmul %252, %22, %cst_88 {dimension_numbers = #tpu.dot_dimension_numbers<[1], [0], [0], [1], [0, 0, 1, 1], [], []>} : vector<64x128xbf16>, vector<128x128xbf16>, vector<64x128xf32> -> vector<64x128xf32>
    %254 = arith.truncf %226 : vector<64x128xf32> to vector<64x128xbf16>
    %cst_89 = arith.constant dense<0.000000e+00> : vector<64x128xf32>
    %255 = tpu.matmul %254, %25, %cst_89 {dimension_numbers = #tpu.dot_dimension_numbers<[1], [0], [0], [1], [0, 0, 1, 1], [], []>} : vector<64x128xbf16>, vector<128x128xbf16>, vector<64x128xf32> -> vector<64x128xf32>
    %256 = arith.truncf %226 : vector<64x128xf32> to vector<64x128xbf16>
    %cst_90 = arith.constant dense<0.000000e+00> : vector<64x128xf32>
    %257 = tpu.matmul %256, %28, %cst_90 {dimension_numbers = #tpu.dot_dimension_numbers<[1], [0], [0], [1], [0, 0, 1, 1], [], []>} : vector<64x128xbf16>, vector<128x128xbf16>, vector<64x128xf32> -> vector<64x128xf32>
    %258 = arith.truncf %226 : vector<64x128xf32> to vector<64x128xbf16>
    %cst_91 = arith.constant dense<0.000000e+00> : vector<64x128xf32>
    %259 = tpu.matmul %258, %31, %cst_91 {dimension_numbers = #tpu.dot_dimension_numbers<[1], [0], [0], [1], [0, 0, 1, 1], [], []>} : vector<64x128xbf16>, vector<128x128xbf16>, vector<64x128xf32> -> vector<64x128xf32>
    %cst_92 = arith.constant 0.000000e+00 : f32
    %260 = vector.broadcast %cst_92 : f32 to vector<64x64xf32>
    %cst_93 = arith.constant 0.000000e+00 : f32
    %261 = vector.broadcast %cst_93 : f32 to vector<64x64xf32>
    %262 = vector.extract_strided_slice %241 {offsets = [0, 0], sizes = [64, 2], strides = [1, 1]} : vector<576x2xf32> to vector<64x2xf32>
    %263 = vector.extract_strided_slice %262 {offsets = [0, 0], sizes = [64, 1], strides = [1, 1]} : vector<64x2xf32> to vector<64x1xf32>
    %264 = vector.extract_strided_slice %243 {offsets = [0, 0], sizes = [64, 64], strides = [1, 1]} : vector<64x128xf32> to vector<64x64xf32>
    %265 = vector.broadcast %263 : vector<64x1xf32> to vector<64x64xf32>
    %266 = arith.mulf %265, %264 : vector<64x64xf32>
    %267 = arith.addf %260, %266 : vector<64x64xf32>
    %268 = vector.extract_strided_slice %262 {offsets = [0, 1], sizes = [64, 1], strides = [1, 1]} : vector<64x2xf32> to vector<64x1xf32>
    %269 = vector.extract_strided_slice %243 {offsets = [0, 64], sizes = [64, 64], strides = [1, 1]} : vector<64x128xf32> to vector<64x64xf32>
    %270 = vector.broadcast %268 : vector<64x1xf32> to vector<64x64xf32>
    %271 = arith.mulf %270, %269 : vector<64x64xf32>
    %272 = arith.addf %261, %271 : vector<64x64xf32>
    %273 = vector.extract_strided_slice %241 {offsets = [64, 0], sizes = [64, 2], strides = [1, 1]} : vector<576x2xf32> to vector<64x2xf32>
    %274 = vector.extract_strided_slice %273 {offsets = [0, 0], sizes = [64, 1], strides = [1, 1]} : vector<64x2xf32> to vector<64x1xf32>
    %275 = vector.extract_strided_slice %245 {offsets = [0, 0], sizes = [64, 64], strides = [1, 1]} : vector<64x128xf32> to vector<64x64xf32>
    %276 = vector.broadcast %274 : vector<64x1xf32> to vector<64x64xf32>
    %277 = arith.mulf %276, %275 : vector<64x64xf32>
    %278 = arith.addf %267, %277 : vector<64x64xf32>
    %279 = vector.extract_strided_slice %273 {offsets = [0, 1], sizes = [64, 1], strides = [1, 1]} : vector<64x2xf32> to vector<64x1xf32>
    %280 = vector.extract_strided_slice %245 {offsets = [0, 64], sizes = [64, 64], strides = [1, 1]} : vector<64x128xf32> to vector<64x64xf32>
    %281 = vector.broadcast %279 : vector<64x1xf32> to vector<64x64xf32>
    %282 = arith.mulf %281, %280 : vector<64x64xf32>
    %283 = arith.addf %272, %282 : vector<64x64xf32>
    %284 = vector.extract_strided_slice %241 {offsets = [128, 0], sizes = [64, 2], strides = [1, 1]} : vector<576x2xf32> to vector<64x2xf32>
    %285 = vector.extract_strided_slice %284 {offsets = [0, 0], sizes = [64, 1], strides = [1, 1]} : vector<64x2xf32> to vector<64x1xf32>
    %286 = vector.extract_strided_slice %247 {offsets = [0, 0], sizes = [64, 64], strides = [1, 1]} : vector<64x128xf32> to vector<64x64xf32>
    %287 = vector.broadcast %285 : vector<64x1xf32> to vector<64x64xf32>
    %288 = arith.mulf %287, %286 : vector<64x64xf32>
    %289 = arith.addf %278, %288 : vector<64x64xf32>
    %290 = vector.extract_strided_slice %284 {offsets = [0, 1], sizes = [64, 1], strides = [1, 1]} : vector<64x2xf32> to vector<64x1xf32>
    %291 = vector.extract_strided_slice %247 {offsets = [0, 64], sizes = [64, 64], strides = [1, 1]} : vector<64x128xf32> to vector<64x64xf32>
    %292 = vector.broadcast %290 : vector<64x1xf32> to vector<64x64xf32>
    %293 = arith.mulf %292, %291 : vector<64x64xf32>
    %294 = arith.addf %283, %293 : vector<64x64xf32>
    %295 = vector.extract_strided_slice %241 {offsets = [192, 0], sizes = [64, 2], strides = [1, 1]} : vector<576x2xf32> to vector<64x2xf32>
    %296 = vector.extract_strided_slice %295 {offsets = [0, 0], sizes = [64, 1], strides = [1, 1]} : vector<64x2xf32> to vector<64x1xf32>
    %297 = vector.extract_strided_slice %249 {offsets = [0, 0], sizes = [64, 64], strides = [1, 1]} : vector<64x128xf32> to vector<64x64xf32>
    %298 = vector.broadcast %296 : vector<64x1xf32> to vector<64x64xf32>
    %299 = arith.mulf %298, %297 : vector<64x64xf32>
    %300 = arith.addf %289, %299 : vector<64x64xf32>
    %301 = vector.extract_strided_slice %295 {offsets = [0, 1], sizes = [64, 1], strides = [1, 1]} : vector<64x2xf32> to vector<64x1xf32>
    %302 = vector.extract_strided_slice %249 {offsets = [0, 64], sizes = [64, 64], strides = [1, 1]} : vector<64x128xf32> to vector<64x64xf32>
    %303 = vector.broadcast %301 : vector<64x1xf32> to vector<64x64xf32>
    %304 = arith.mulf %303, %302 : vector<64x64xf32>
    %305 = arith.addf %294, %304 : vector<64x64xf32>
    %306 = vector.extract_strided_slice %241 {offsets = [256, 0], sizes = [64, 2], strides = [1, 1]} : vector<576x2xf32> to vector<64x2xf32>
    %307 = vector.extract_strided_slice %306 {offsets = [0, 0], sizes = [64, 1], strides = [1, 1]} : vector<64x2xf32> to vector<64x1xf32>
    %308 = vector.extract_strided_slice %251 {offsets = [0, 0], sizes = [64, 64], strides = [1, 1]} : vector<64x128xf32> to vector<64x64xf32>
    %309 = vector.broadcast %307 : vector<64x1xf32> to vector<64x64xf32>
    %310 = arith.mulf %309, %308 : vector<64x64xf32>
    %311 = arith.addf %300, %310 : vector<64x64xf32>
    %312 = vector.extract_strided_slice %306 {offsets = [0, 1], sizes = [64, 1], strides = [1, 1]} : vector<64x2xf32> to vector<64x1xf32>
    %313 = vector.extract_strided_slice %251 {offsets = [0, 64], sizes = [64, 64], strides = [1, 1]} : vector<64x128xf32> to vector<64x64xf32>
    %314 = vector.broadcast %312 : vector<64x1xf32> to vector<64x64xf32>
    %315 = arith.mulf %314, %313 : vector<64x64xf32>
    %316 = arith.addf %305, %315 : vector<64x64xf32>
    %317 = vector.extract_strided_slice %241 {offsets = [320, 0], sizes = [64, 2], strides = [1, 1]} : vector<576x2xf32> to vector<64x2xf32>
    %318 = vector.extract_strided_slice %317 {offsets = [0, 0], sizes = [64, 1], strides = [1, 1]} : vector<64x2xf32> to vector<64x1xf32>
    %319 = vector.extract_strided_slice %253 {offsets = [0, 0], sizes = [64, 64], strides = [1, 1]} : vector<64x128xf32> to vector<64x64xf32>
    %320 = vector.broadcast %318 : vector<64x1xf32> to vector<64x64xf32>
    %321 = arith.mulf %320, %319 : vector<64x64xf32>
    %322 = arith.addf %311, %321 : vector<64x64xf32>
    %323 = vector.extract_strided_slice %317 {offsets = [0, 1], sizes = [64, 1], strides = [1, 1]} : vector<64x2xf32> to vector<64x1xf32>
    %324 = vector.extract_strided_slice %253 {offsets = [0, 64], sizes = [64, 64], strides = [1, 1]} : vector<64x128xf32> to vector<64x64xf32>
    %325 = vector.broadcast %323 : vector<64x1xf32> to vector<64x64xf32>
    %326 = arith.mulf %325, %324 : vector<64x64xf32>
    %327 = arith.addf %316, %326 : vector<64x64xf32>
    %328 = vector.extract_strided_slice %241 {offsets = [384, 0], sizes = [64, 2], strides = [1, 1]} : vector<576x2xf32> to vector<64x2xf32>
    %329 = vector.extract_strided_slice %328 {offsets = [0, 0], sizes = [64, 1], strides = [1, 1]} : vector<64x2xf32> to vector<64x1xf32>
    %330 = vector.extract_strided_slice %255 {offsets = [0, 0], sizes = [64, 64], strides = [1, 1]} : vector<64x128xf32> to vector<64x64xf32>
    %331 = vector.broadcast %329 : vector<64x1xf32> to vector<64x64xf32>
    %332 = arith.mulf %331, %330 : vector<64x64xf32>
    %333 = arith.addf %322, %332 : vector<64x64xf32>
    %334 = vector.extract_strided_slice %328 {offsets = [0, 1], sizes = [64, 1], strides = [1, 1]} : vector<64x2xf32> to vector<64x1xf32>
    %335 = vector.extract_strided_slice %255 {offsets = [0, 64], sizes = [64, 64], strides = [1, 1]} : vector<64x128xf32> to vector<64x64xf32>
    %336 = vector.broadcast %334 : vector<64x1xf32> to vector<64x64xf32>
    %337 = arith.mulf %336, %335 : vector<64x64xf32>
    %338 = arith.addf %327, %337 : vector<64x64xf32>
    %339 = vector.extract_strided_slice %241 {offsets = [448, 0], sizes = [64, 2], strides = [1, 1]} : vector<576x2xf32> to vector<64x2xf32>
    %340 = vector.extract_strided_slice %339 {offsets = [0, 0], sizes = [64, 1], strides = [1, 1]} : vector<64x2xf32> to vector<64x1xf32>
    %341 = vector.extract_strided_slice %257 {offsets = [0, 0], sizes = [64, 64], strides = [1, 1]} : vector<64x128xf32> to vector<64x64xf32>
    %342 = vector.broadcast %340 : vector<64x1xf32> to vector<64x64xf32>
    %343 = arith.mulf %342, %341 : vector<64x64xf32>
    %344 = arith.addf %333, %343 : vector<64x64xf32>
    %345 = vector.extract_strided_slice %339 {offsets = [0, 1], sizes = [64, 1], strides = [1, 1]} : vector<64x2xf32> to vector<64x1xf32>
    %346 = vector.extract_strided_slice %257 {offsets = [0, 64], sizes = [64, 64], strides = [1, 1]} : vector<64x128xf32> to vector<64x64xf32>
    %347 = vector.broadcast %345 : vector<64x1xf32> to vector<64x64xf32>
    %348 = arith.mulf %347, %346 : vector<64x64xf32>
    %349 = arith.addf %338, %348 : vector<64x64xf32>
    %350 = vector.extract_strided_slice %241 {offsets = [512, 0], sizes = [64, 2], strides = [1, 1]} : vector<576x2xf32> to vector<64x2xf32>
    %351 = vector.extract_strided_slice %350 {offsets = [0, 0], sizes = [64, 1], strides = [1, 1]} : vector<64x2xf32> to vector<64x1xf32>
    %352 = vector.extract_strided_slice %259 {offsets = [0, 0], sizes = [64, 64], strides = [1, 1]} : vector<64x128xf32> to vector<64x64xf32>
    %353 = vector.broadcast %351 : vector<64x1xf32> to vector<64x64xf32>
    %354 = arith.mulf %353, %352 : vector<64x64xf32>
    %355 = arith.addf %344, %354 : vector<64x64xf32>
    %356 = vector.extract_strided_slice %350 {offsets = [0, 1], sizes = [64, 1], strides = [1, 1]} : vector<64x2xf32> to vector<64x1xf32>
    %357 = vector.extract_strided_slice %259 {offsets = [0, 64], sizes = [64, 64], strides = [1, 1]} : vector<64x128xf32> to vector<64x64xf32>
    %358 = vector.broadcast %356 : vector<64x1xf32> to vector<64x64xf32>
    %359 = arith.mulf %358, %357 : vector<64x64xf32>
    %360 = arith.addf %349, %359 : vector<64x64xf32>
    %361 = tpu.concatenate %355, %360 in 1 : vector<64x64xf32>, vector<64x64xf32> -> vector<64x128xf32>
    %cst_94 = arith.constant 0.000000e+00 : f32
    %362 = vector.broadcast %cst_94 : f32 to vector<64x128xf32>
    %363 = arith.cmpf oge, %361, %362 : vector<64x128xf32>
    %cst_95 = arith.constant 1.000000e-01 : f32
    %364 = vector.broadcast %cst_95 : f32 to vector<64x128xf32>
    %365 = arith.mulf %364, %361 : vector<64x128xf32>
    %366 = arith.select %363, %361, %365 : vector<64x128xi1>, vector<64x128xf32>
    %c0_96 = arith.constant 0 : index
    %c0_97 = arith.constant 0 : index
    %c0_98 = arith.constant 0 : index
    %367 = vector.load %arg10[%c0_96, %c0_97, %c0_98] : memref<1x1x64xf32, #tpu.memory_space<vmem>>, vector<1x1x64xf32>
    %368 = vector.shape_cast %367 : vector<1x1x64xf32> to vector<1x64xf32>
    %369 = arith.truncf %368 : vector<1x64xf32> to vector<1x64xbf16>
    %370 = arith.truncf %226 : vector<64x128xf32> to vector<64x128xbf16>
    %cst_99 = arith.constant dense<0.000000e+00> : vector<1x128xf32>
    %371 = tpu.matmul %369, %370, %cst_99 {dimension_numbers = #tpu.dot_dimension_numbers<[1], [0], [0], [1], [0, 0, 1, 1], [], []>} : vector<1x64xbf16>, vector<64x128xbf16>, vector<1x128xf32> -> vector<1x128xf32>
    %c0_100 = arith.constant 0 : index
    %c0_101 = arith.constant 0 : index
    %c0_102 = arith.constant 0 : index
    %372 = vector.load %arg11[%c0_100, %c0_101, %c0_102] : memref<1x1x1xf32, #tpu.memory_space<vmem>>, vector<1x1x1xf32>
    %373 = vector.shape_cast %372 : vector<1x1x1xf32> to vector<1x1xf32>
    %374 = vector.broadcast %373 : vector<1x1xf32> to vector<1x128xf32>
    %375 = arith.addf %371, %374 : vector<1x128xf32>
    %376 = arith.negf %375 : vector<1x128xf32>
    %377 = math.exp %376 : vector<1x128xf32>
    %cst_103 = arith.constant 1.000000e+00 : f32
    %378 = vector.broadcast %cst_103 : f32 to vector<1x128xf32>
    %379 = arith.addf %378, %377 : vector<1x128xf32>
    %380 = arith.divf %378, %379 : vector<1x128xf32>
    %381 = vector.broadcast %380 : vector<1x128xf32> to vector<64x128xf32>
    %382 = arith.mulf %366, %381 : vector<64x128xf32>
    %383 = arith.addf %382, %226 : vector<64x128xf32>
    %cst_104 = arith.constant 0.000000e+00 : f32
    %384 = vector.broadcast %cst_104 : f32 to vector<64x128xf32>
    %385 = arith.cmpf oge, %383, %384 : vector<64x128xf32>
    %cst_105 = arith.constant 1.000000e-01 : f32
    %386 = vector.broadcast %cst_105 : f32 to vector<64x128xf32>
    %387 = arith.mulf %386, %383 : vector<64x128xf32>
    %388 = arith.select %385, %383, %387 : vector<64x128xi1>, vector<64x128xf32>
    %389 = arith.truncf %388 : vector<64x128xf32> to vector<64x128xbf16>
    %cst_106 = arith.constant dense<0.000000e+00> : vector<64x128xf32>
    %390 = tpu.matmul %389, %7, %cst_106 {dimension_numbers = #tpu.dot_dimension_numbers<[1], [0], [0], [1], [0, 0, 1, 1], [], []>} : vector<64x128xbf16>, vector<128x128xbf16>, vector<64x128xf32> -> vector<64x128xf32>
    %391 = arith.truncf %388 : vector<64x128xf32> to vector<64x128xbf16>
    %cst_107 = arith.constant dense<0.000000e+00> : vector<64x128xf32>
    %392 = tpu.matmul %391, %10, %cst_107 {dimension_numbers = #tpu.dot_dimension_numbers<[1], [0], [0], [1], [0, 0, 1, 1], [], []>} : vector<64x128xbf16>, vector<128x128xbf16>, vector<64x128xf32> -> vector<64x128xf32>
    %393 = arith.truncf %388 : vector<64x128xf32> to vector<64x128xbf16>
    %cst_108 = arith.constant dense<0.000000e+00> : vector<64x128xf32>
    %394 = tpu.matmul %393, %13, %cst_108 {dimension_numbers = #tpu.dot_dimension_numbers<[1], [0], [0], [1], [0, 0, 1, 1], [], []>} : vector<64x128xbf16>, vector<128x128xbf16>, vector<64x128xf32> -> vector<64x128xf32>
    %395 = arith.truncf %388 : vector<64x128xf32> to vector<64x128xbf16>
    %cst_109 = arith.constant dense<0.000000e+00> : vector<64x128xf32>
    %396 = tpu.matmul %395, %16, %cst_109 {dimension_numbers = #tpu.dot_dimension_numbers<[1], [0], [0], [1], [0, 0, 1, 1], [], []>} : vector<64x128xbf16>, vector<128x128xbf16>, vector<64x128xf32> -> vector<64x128xf32>
    %397 = arith.truncf %388 : vector<64x128xf32> to vector<64x128xbf16>
    %cst_110 = arith.constant dense<0.000000e+00> : vector<64x128xf32>
    %398 = tpu.matmul %397, %19, %cst_110 {dimension_numbers = #tpu.dot_dimension_numbers<[1], [0], [0], [1], [0, 0, 1, 1], [], []>} : vector<64x128xbf16>, vector<128x128xbf16>, vector<64x128xf32> -> vector<64x128xf32>
    %399 = arith.truncf %388 : vector<64x128xf32> to vector<64x128xbf16>
    %cst_111 = arith.constant dense<0.000000e+00> : vector<64x128xf32>
    %400 = tpu.matmul %399, %22, %cst_111 {dimension_numbers = #tpu.dot_dimension_numbers<[1], [0], [0], [1], [0, 0, 1, 1], [], []>} : vector<64x128xbf16>, vector<128x128xbf16>, vector<64x128xf32> -> vector<64x128xf32>
    %401 = arith.truncf %388 : vector<64x128xf32> to vector<64x128xbf16>
    %cst_112 = arith.constant dense<0.000000e+00> : vector<64x128xf32>
    %402 = tpu.matmul %401, %25, %cst_112 {dimension_numbers = #tpu.dot_dimension_numbers<[1], [0], [0], [1], [0, 0, 1, 1], [], []>} : vector<64x128xbf16>, vector<128x128xbf16>, vector<64x128xf32> -> vector<64x128xf32>
    %403 = arith.truncf %388 : vector<64x128xf32> to vector<64x128xbf16>
    %cst_113 = arith.constant dense<0.000000e+00> : vector<64x128xf32>
    %404 = tpu.matmul %403, %28, %cst_113 {dimension_numbers = #tpu.dot_dimension_numbers<[1], [0], [0], [1], [0, 0, 1, 1], [], []>} : vector<64x128xbf16>, vector<128x128xbf16>, vector<64x128xf32> -> vector<64x128xf32>
    %405 = arith.truncf %388 : vector<64x128xf32> to vector<64x128xbf16>
    %cst_114 = arith.constant dense<0.000000e+00> : vector<64x128xf32>
    %406 = tpu.matmul %405, %31, %cst_114 {dimension_numbers = #tpu.dot_dimension_numbers<[1], [0], [0], [1], [0, 0, 1, 1], [], []>} : vector<64x128xbf16>, vector<128x128xbf16>, vector<64x128xf32> -> vector<64x128xf32>
    %407 = tpu.concatenate %390, %392, %394, %396, %398, %400, %402, %404, %406 in 0 : vector<64x128xf32>, vector<64x128xf32>, vector<64x128xf32>, vector<64x128xf32>, vector<64x128xf32>, vector<64x128xf32>, vector<64x128xf32>, vector<64x128xf32>, vector<64x128xf32> -> vector<576x128xf32>
    %c0_115 = arith.constant 0 : index
    %c0_116 = arith.constant 0 : index
    %c0_117 = arith.constant 0 : index
    %408 = vector.load %arg14[%c0_115, %c0_116, %c0_117] : memref<1x64x576xf32, #tpu.memory_space<vmem>>, vector<1x64x576xf32>
    %409 = vector.shape_cast %408 : vector<1x64x576xf32> to vector<64x576xf32>
    %410 = arith.truncf %409 : vector<64x576xf32> to vector<64x576xbf16>
    %411 = arith.truncf %407 : vector<576x128xf32> to vector<576x128xbf16>
    %cst_118 = arith.constant dense<0.000000e+00> : vector<64x128xf32>
    %412 = tpu.matmul %410, %411, %cst_118 {dimension_numbers = #tpu.dot_dimension_numbers<[1], [0], [0], [1], [0, 0, 1, 1], [], []>} : vector<64x576xbf16>, vector<576x128xbf16>, vector<64x128xf32> -> vector<64x128xf32>
    %c0_119 = arith.constant 0 : index
    %c0_120 = arith.constant 0 : index
    %c0_121 = arith.constant 0 : index
    %413 = vector.load %arg15[%c0_119, %c0_120, %c0_121] : memref<1x64x1xf32, #tpu.memory_space<vmem>>, vector<1x64x1xf32>
    %414 = vector.shape_cast %413 : vector<1x64x1xf32> to vector<64x1xf32>
    %415 = vector.broadcast %414 : vector<64x1xf32> to vector<64x128xf32>
    %416 = arith.addf %412, %415 : vector<64x128xf32>
    %417 = arith.addf %416, %3 : vector<64x128xf32>
    %c0_122 = arith.constant 0 : index
    %c0_123 = arith.constant 0 : index
    %418 = vector.load %arg17[%c0_122, %c0_123] : memref<64x128xf32, #tpu.memory_space<vmem>>, vector<64x128xf32>
    tpu.vector_store %arg17[%c0_122, %c0_123], %417 {strides = array<i32>} : memref<64x128xf32, #tpu.memory_space<vmem>>, vector<64x128xf32>,
    %c1_i32 = arith.constant 1 : i32
    %419 = arith.cmpi eq, %arg0, %c1_i32 : i32
    %420 = arith.extui %419 : i1 to i32
    %c0_i32_124 = arith.constant 0 : i32
    %421 = arith.cmpi ne, %420, %c0_i32_124 : i32
    scf.if %421 {
      %c0_125 = arith.constant 0 : index
      %c0_126 = arith.constant 0 : index
      %422 = vector.load %arg16[%c0_125, %c0_126] : memref<64x128xf32, #tpu.memory_space<vmem>>, vector<64x128xf32>
      tpu.vector_store %arg16[%c0_125, %c0_126], %417 {strides = array<i32>} : memref<64x128xf32, #tpu.memory_space<vmem>>, vector<64x128xf32>,
    } else {
    }
    return
  }
  func.func @transform_0(%arg0: i32) -> (i32, i32) {
    %c0_i32 = arith.constant 0 : i32
    %c0_i32_0 = arith.constant 0 : i32
    %c0_i32_1 = arith.constant 0 : i32
    return %c0_i32, %c0_i32_0 : i32, i32
  }
  func.func @transform_1(%arg0: i32) -> (i32, i32) {
    %c0_i32 = arith.constant 0 : i32
    %c0_i32_0 = arith.constant 0 : i32
    %c0_i32_1 = arith.constant 0 : i32
    return %c0_i32, %c0_i32_0 : i32, i32
  }
  func.func @transform_2(%arg0: i32) -> (i32, i32, i32) {
    %c0_i32 = arith.constant 0 : i32
    %c0_i32_0 = arith.constant 0 : i32
    %c0_i32_1 = arith.constant 0 : i32
    %c0_i32_2 = arith.constant 0 : i32
    return %c0_i32, %c0_i32_0, %c0_i32_1 : i32, i32, i32
  }
  func.func @transform_3(%arg0: i32) -> (i32, i32, i32) {
    %c0_i32 = arith.constant 0 : i32
    %c0_i32_0 = arith.constant 0 : i32
    %c0_i32_1 = arith.constant 0 : i32
    return %arg0, %c0_i32, %c0_i32_0 : i32, i32, i32
  }
  func.func @transform_4(%arg0: i32) -> (i32, i32, i32) {
    %c0_i32 = arith.constant 0 : i32
    %c0_i32_0 = arith.constant 0 : i32
    %c0_i32_1 = arith.constant 0 : i32
    return %arg0, %c0_i32, %c0_i32_0 : i32, i32, i32
  }
  func.func @transform_5(%arg0: i32) -> (i32, i32, i32) {
    %c0_i32 = arith.constant 0 : i32
    %c0_i32_0 = arith.constant 0 : i32
    %c0_i32_1 = arith.constant 0 : i32
    return %arg0, %c0_i32, %c0_i32_0 : i32, i32, i32
  }
  func.func @transform_6(%arg0: i32) -> (i32, i32, i32) {
    %c0_i32 = arith.constant 0 : i32
    %c0_i32_0 = arith.constant 0 : i32
    %c0_i32_1 = arith.constant 0 : i32
    return %arg0, %c0_i32, %c0_i32_0 : i32, i32, i32
  }
  func.func @transform_7(%arg0: i32) -> (i32, i32, i32) {
    %c0_i32 = arith.constant 0 : i32
    %c0_i32_0 = arith.constant 0 : i32
    %c0_i32_1 = arith.constant 0 : i32
    return %arg0, %c0_i32, %c0_i32_0 : i32, i32, i32
  }
  func.func @transform_8(%arg0: i32) -> (i32, i32, i32) {
    %c0_i32 = arith.constant 0 : i32
    %c0_i32_0 = arith.constant 0 : i32
    %c0_i32_1 = arith.constant 0 : i32
    return %arg0, %c0_i32, %c0_i32_0 : i32, i32, i32
  }
  func.func @transform_9(%arg0: i32) -> (i32, i32, i32) {
    %c0_i32 = arith.constant 0 : i32
    %c0_i32_0 = arith.constant 0 : i32
    %c0_i32_1 = arith.constant 0 : i32
    return %arg0, %c0_i32, %c0_i32_0 : i32, i32, i32
  }
  func.func @transform_10(%arg0: i32) -> (i32, i32, i32) {
    %c0_i32 = arith.constant 0 : i32
    %c0_i32_0 = arith.constant 0 : i32
    %c0_i32_1 = arith.constant 0 : i32
    return %arg0, %c0_i32, %c0_i32_0 : i32, i32, i32
  }
  func.func @transform_11(%arg0: i32) -> (i32, i32, i32) {
    %c0_i32 = arith.constant 0 : i32
    %c0_i32_0 = arith.constant 0 : i32
    %c0_i32_1 = arith.constant 0 : i32
    return %arg0, %c0_i32, %c0_i32_0 : i32, i32, i32
  }
  func.func @transform_12(%arg0: i32) -> (i32, i32, i32) {
    %c0_i32 = arith.constant 0 : i32
    %c0_i32_0 = arith.constant 0 : i32
    %c0_i32_1 = arith.constant 0 : i32
    return %arg0, %c0_i32, %c0_i32_0 : i32, i32, i32
  }
  func.func @transform_13(%arg0: i32) -> (i32, i32, i32) {
    %c0_i32 = arith.constant 0 : i32
    %c0_i32_0 = arith.constant 0 : i32
    %c0_i32_1 = arith.constant 0 : i32
    return %arg0, %c0_i32, %c0_i32_0 : i32, i32, i32
  }
  func.func @transform_14(%arg0: i32) -> (i32, i32, i32) {
    %c0_i32 = arith.constant 0 : i32
    %c0_i32_0 = arith.constant 0 : i32
    %c0_i32_1 = arith.constant 0 : i32
    return %arg0, %c0_i32, %c0_i32_0 : i32, i32, i32
  }
  func.func @transform_15(%arg0: i32) -> (i32, i32) {
    %c0_i32 = arith.constant 0 : i32
    %c0_i32_0 = arith.constant 0 : i32
    %c0_i32_1 = arith.constant 0 : i32
    return %c0_i32, %c0_i32_0 : i32, i32
  }
}

</mosaic_0001>

<llo_original>
// kernel: rdag_forward.1
$region0: #{rdag_forward.1}
  #allocation0 [shape = 'u32[]', space=smem, size = 0x4, offset = 0x4, fixed_abs, tag = 'smem constant byte address 0x4 - core index']
  #allocation1 [shape = 'u32[144,128]{1,0:T(1,128)}', space=vmem, size = 0x12000, scoped, tag = 'internal scratch']
  #allocation2 [shape = 'f32[64,128]{1,0:T(8,128)}', space=vmem, size = 0x8000, scoped, tag = 'scratch operand']
  %s0 = inlined_call_operand.vmem [shape: f32[64,128], index: 0, kind: input, shape index: {}]
  %s1 = inlined_call_operand.vmem [shape: f32[64,2], index: 1, kind: input, shape index: {}]
  %s2 = inlined_call_operand.vmem [shape: f32[9,128,128], index: 2, kind: input, shape index: {}]
  %s3 = inlined_call_operand.vmem [shape: f32[2,64,64], index: 3, kind: input, shape index: {}]
  %s4 = inlined_call_operand.vmem [shape: f32[2,576,64], index: 4, kind: input, shape index: {}]
  %s5 = inlined_call_operand.vmem [shape: f32[2,1,64], index: 5, kind: input, shape index: {}]
  %s6 = inlined_call_operand.vmem [shape: f32[2,1,1], index: 6, kind: input, shape index: {}]
  %s7 = inlined_call_operand.vmem [shape: f32[2,64,64], index: 7, kind: input, shape index: {}]
  %s8 = inlined_call_operand.vmem [shape: f32[2,576,64], index: 8, kind: input, shape index: {}]
  %s9 = inlined_call_operand.vmem [shape: f32[2,1,64], index: 9, kind: input, shape index: {}]
  %s10 = inlined_call_operand.vmem [shape: f32[2,1,1], index: 10, kind: input, shape index: {}]
  %s11 = inlined_call_operand.vmem [shape: f32[2,64,576], index: 11, kind: input, shape index: {}]
  %s12 = inlined_call_operand.vmem [shape: f32[2,64,1], index: 12, kind: input, shape index: {}]
  %s13 = inlined_call_operand.vmem [shape: f32[2,64,576], index: 13, kind: input, shape index: {}]
  %s14 = inlined_call_operand.vmem [shape: f32[2,64,1], index: 14, kind: input, shape index: {}]
  %s15 = inlined_call_operand.vmem [shape: f32[64,128], index: 15, kind: output, shape index: {}]
  %s16 = sld [smem:[#allocation0]]
  $region101: #{rdag_forward.1} parent=0
    _
  %s18 = ssub.s32 1, %s16
  %s19 = scalar_select 0, %s18, %s16
  loop: start=0, step=1, limit=4
  $region2: #{rdag_forward.1} parent=0 // loop_pre_header
    _
  $region3: #{rdag_forward.1} parent=0 // loop_header
    %s21 = sphi 0, %s25
    %p22 = scmp.ge.s32.totalorder %s21, 4
    %s29 = sphi 0, %s29
    %s31 = sphi 0, %s29
    %s32 = sphi 0, %s31
    %s46 = sphi 0, %s32
    %s50 = sphi 0, %s50
    %s52 = sphi 0, %s50
    %s53 = sphi 0, %s52
    %s67 = sphi 0, %s53
    %s71 = sphi 0, %s71
    %s73 = sphi 0, %s71
    %s74 = sphi 0, %s73
    %s88 = sphi 0, %s74
    %s94 = sphi 0, %s96
    %s97 = sphi 0, %s94
    %s98 = sphi 0, %s97
    %s114 = sphi 0, %s98
    %s120 = sphi 0, %s122
    %s123 = sphi 0, %s120
    %s124 = sphi 0, %s123
    %s140 = sphi 0, %s124
    %s146 = sphi 0, %s148
    %s149 = sphi 0, %s146
    %s150 = sphi 0, %s149
    %s166 = sphi 0, %s150
    %s172 = sphi 0, %s174
    %s175 = sphi 0, %s172
    %s176 = sphi 0, %s175
    %s192 = sphi 0, %s176
    %s198 = sphi 0, %s200
    %s201 = sphi 0, %s198
    %s202 = sphi 0, %s201
    %s218 = sphi 0, %s202
    %s224 = sphi 0, %s226
    %s227 = sphi 0, %s224
    %s228 = sphi 0, %s227
    %s244 = sphi 0, %s228
    %s250 = sphi 0, %s252
    %s253 = sphi 0, %s250
    %s254 = sphi 0, %s253
    %s270 = sphi 0, %s254
    %s276 = sphi 0, %s278
    %s279 = sphi 0, %s276
    %s280 = sphi 0, %s279
    %s296 = sphi 0, %s280
    %s302 = sphi 0, %s304
    %s305 = sphi 0, %s302
    %s306 = sphi 0, %s305
    %s322 = sphi 0, %s306
    %s328 = sphi 0, %s330
    %s331 = sphi 0, %s328
    %s332 = sphi 0, %s331
    %s348 = sphi 0, %s332
    %s354 = sphi 0, %s356
    %s357 = sphi 0, %s354
    %s358 = sphi 0, %s357
    %s374 = sphi 0, %s358
    %s380 = sphi 0, %s382
    %s383 = sphi 0, %s380
    %s384 = sphi 0, %s383
    %s400 = sphi 0, %s384
    %s404 = sphi 0, %s404
    %s406 = sphi 0, %s404
    %s407 = sphi 0, %s406
    %s421 = sphi 0, %s407
  $region4: #{rdag_forward.1} parent=0 // loop_header_branch
    %24 = sbr.rel (%p22) target = $region8
  $region5: #{rdag_forward.1} parent=0 // loop_body
    %s26 = ssub.s32 %s21, 1
    %s27 = ssub.s32 %s21, 2
    %s28 = sadd.s32 %s21, 1
    %s30 = sadd.s32 %s29, 1
    %p33 = scmp.eq.s32.totalorder %s21, 1
    %p34 = scmp.ne.s32.totalorder %s29, %s31
    %p35 = scmp.eq.s32.totalorder %s21, 0
    %p36 = por %p34, %p35
    %p37 = scmp.ne.s32.totalorder %s29, %s31
    %p38 = scmp.eq.s32.totalorder %s26, 1
    %p39 = por %p37, %p38
    %p40 = scmp.ne.s32.totalorder %s31, %s32
    %p41 = scmp.eq.s32.totalorder %s26, 0
    %p42 = por %p40, %p41
    %p43 = scmp.ne.s32.totalorder %s31, %s32
    %p44 = scmp.eq.s32.totalorder %s27, 1
    %p45 = por %p43, %p44
    %p47 = scmp.ne.s32.totalorder %s32, %s46
    %p48 = scmp.eq.s32.totalorder %s27, 0
    %p49 = por %p47, %p48
    %s51 = sadd.s32 %s50, 1
    %p54 = scmp.eq.s32.totalorder %s21, 1
    %p55 = scmp.ne.s32.totalorder %s50, %s52
    %p56 = scmp.eq.s32.totalorder %s21, 0
    %p57 = por %p55, %p56
    %p58 = scmp.ne.s32.totalorder %s50, %s52
    %p59 = scmp.eq.s32.totalorder %s26, 1
    %p60 = por %p58, %p59
    %p61 = scmp.ne.s32.totalorder %s52, %s53
    %p62 = scmp.eq.s32.totalorder %s26, 0
    %p63 = por %p61, %p62
    %p64 = scmp.ne.s32.totalorder %s52, %s53
    %p65 = scmp.eq.s32.totalorder %s27, 1
    %p66 = por %p64, %p65
    %p68 = scmp.ne.s32.totalorder %s53, %s67
    %p69 = scmp.eq.s32.totalorder %s27, 0
    %p70 = por %p68, %p69
    %s72 = sadd.s32 %s71, 1
    %p75 = scmp.eq.s32.totalorder %s21, 1
    %p76 = scmp.ne.s32.totalorder %s71, %s73
    %p77 = scmp.eq.s32.totalorder %s21, 0
    %p78 = por %p76, %p77
    %p79 = scmp.ne.s32.totalorder %s71, %s73
    %p80 = scmp.eq.s32.totalorder %s26, 1
    %p81 = por %p79, %p80
    %p82 = scmp.ne.s32.totalorder %s73, %s74
    %p83 = scmp.eq.s32.totalorder %s26, 0
    %p84 = por %p82, %p83
    %p85 = scmp.ne.s32.totalorder %s73, %s74
    %p86 = scmp.eq.s32.totalorder %s27, 1
    %p87 = por %p85, %p86
    %p89 = scmp.ne.s32.totalorder %s74, %s88
    %p90 = scmp.eq.s32.totalorder %s27, 0
    %p91 = por %p89, %p90
    %s92 = ssub.s32 %s21, %s28
    %p93 = scmp.eq.s32.totalorder %s92, 0
    %s95 = sadd.s32 %s94, 1
    %s96 = scalar_select %p93, %s94, %s95
    %p99 = pneg %p93
    %p100 = scmp.eq.s32.totalorder %s21, 1
    %p101 = por %p99, %p100
    %p102 = scmp.ne.s32.totalorder %s94, %s97
    %p103 = scmp.eq.s32.totalorder %s21, 0
    %p104 = por %p102, %p103
    %p105 = scmp.ne.s32.totalorder %s94, %s97
    %p106 = scmp.eq.s32.totalorder %s26, 1
    %p107 = por %p105, %p106
    %p108 = scmp.ne.s32.totalorder %s97, %s98
    %p109 = scmp.eq.s32.totalorder %s26, 0
    %p110 = por %p108, %p109
    %p111 = scmp.ne.s32.totalorder %s97, %s98
    %p112 = scmp.eq.s32.totalorder %s27, 1
    %p113 = por %p111, %p112
    %p115 = scmp.ne.s32.totalorder %s98, %s114
    %p116 = scmp.eq.s32.totalorder %s27, 0
    %p117 = por %p115, %p116
    %s118 = ssub.s32 %s21, %s28
    %p119 = scmp.eq.s32.totalorder %s118, 0
    %s121 = sadd.s32 %s120, 1
    %s122 = scalar_select %p119, %s120, %s121
    %p125 = pneg %p119
    %p126 = scmp.eq.s32.totalorder %s21, 1
    %p127 = por %p125, %p126
    %p128 = scmp.ne.s32.totalorder %s120, %s123
    %p129 = scmp.eq.s32.totalorder %s21, 0
    %p130 = por %p128, %p129
    %p131 = scmp.ne.s32.totalorder %s120, %s123
    %p132 = scmp.eq.s32.totalorder %s26, 1
    %p133 = por %p131, %p132
    %p134 = scmp.ne.s32.totalorder %s123, %s124
    %p135 = scmp.eq.s32.totalorder %s26, 0
    %p136 = por %p134, %p135
    %p137 = scmp.ne.s32.totalorder %s123, %s124
    %p138 = scmp.eq.s32.totalorder %s27, 1
    %p139 = por %p137, %p138
    %p141 = scmp.ne.s32.totalorder %s124, %s140
    %p142 = scmp.eq.s32.totalorder %s27, 0
    %p143 = por %p141, %p142
    %s144 = ssub.s32 %s21, %s28
    %p145 = scmp.eq.s32.totalorder %s144, 0
    %s147 = sadd.s32 %s146, 1
    %s148 = scalar_select %p145, %s146, %s147
    %p151 = pneg %p145
    %p152 = scmp.eq.s32.totalorder %s21, 1
    %p153 = por %p151, %p152
    %p154 = scmp.ne.s32.totalorder %s146, %s149
    %p155 = scmp.eq.s32.totalorder %s21, 0
    %p156 = por %p154, %p155
    %p157 = scmp.ne.s32.totalorder %s146, %s149
    %p158 = scmp.eq.s32.totalorder %s26, 1
    %p159 = por %p157, %p158
    %p160 = scmp.ne.s32.totalorder %s149, %s150
    %p161 = scmp.eq.s32.totalorder %s26, 0
    %p162 = por %p160, %p161
    %p163 = scmp.ne.s32.totalorder %s149, %s150
    %p164 = scmp.eq.s32.totalorder %s27, 1
    %p165 = por %p163, %p164
    %p167 = scmp.ne.s32.totalorder %s150, %s166
    %p168 = scmp.eq.s32.totalorder %s27, 0
    %p169 = por %p167, %p168
    %s170 = ssub.s32 %s21, %s28
    %p171 = scmp.eq.s32.totalorder %s170, 0
    %s173 = sadd.s32 %s172, 1
    %s174 = scalar_select %p171, %s172, %s173
    %p177 = pneg %p171
    %p178 = scmp.eq.s32.totalorder %s21, 1
    %p179 = por %p177, %p178
    %p180 = scmp.ne.s32.totalorder %s172, %s175
    %p181 = scmp.eq.s32.totalorder %s21, 0
    %p182 = por %p180, %p181
    %p183 = scmp.ne.s32.totalorder %s172, %s175
    %p184 = scmp.eq.s32.totalorder %s26, 1
    %p185 = por %p183, %p184
    %p186 = scmp.ne.s32.totalorder %s175, %s176
    %p187 = scmp.eq.s32.totalorder %s26, 0
    %p188 = por %p186, %p187
    %p189 = scmp.ne.s32.totalorder %s175, %s176
    %p190 = scmp.eq.s32.totalorder %s27, 1
    %p191 = por %p189, %p190
    %p193 = scmp.ne.s32.totalorder %s176, %s192
    %p194 = scmp.eq.s32.totalorder %s27, 0
    %p195 = por %p193, %p194
    %s196 = ssub.s32 %s21, %s28
    %p197 = scmp.eq.s32.totalorder %s196, 0
    %s199 = sadd.s32 %s198, 1
    %s200 = scalar_select %p197, %s198, %s199
    %p203 = pneg %p197
    %p204 = scmp.eq.s32.totalorder %s21, 1
    %p205 = por %p203, %p204
    %p206 = scmp.ne.s32.totalorder %s198, %s201
    %p207 = scmp.eq.s32.totalorder %s21, 0
    %p208 = por %p206, %p207
    %p209 = scmp.ne.s32.totalorder %s198, %s201
    %p210 = scmp.eq.s32.totalorder %s26, 1
    %p211 = por %p209, %p210
    %p212 = scmp.ne.s32.totalorder %s201, %s202
    %p213 = scmp.eq.s32.totalorder %s26, 0
    %p214 = por %p212, %p213
    %p215 = scmp.ne.s32.totalorder %s201, %s202
    %p216 = scmp.eq.s32.totalorder %s27, 1
    %p217 = por %p215, %p216
    %p219 = scmp.ne.s32.totalorder %s202, %s218
    %p220 = scmp.eq.s32.totalorder %s27, 0
    %p221 = por %p219, %p220
    %s222 = ssub.s32 %s21, %s28
    %p223 = scmp.eq.s32.totalorder %s222, 0
    %s225 = sadd.s32 %s224, 1
    %s226 = scalar_select %p223, %s224, %s225
    %p229 = pneg %p223
    %p230 = scmp.eq.s32.totalorder %s21, 1
    %p231 = por %p229, %p230
    %p232 = scmp.ne.s32.totalorder %s224, %s227
    %p233 = scmp.eq.s32.totalorder %s21, 0
    %p234 = por %p232, %p233
    %p235 = scmp.ne.s32.totalorder %s224, %s227
    %p236 = scmp.eq.s32.totalorder %s26, 1
    %p237 = por %p235, %p236
    %p238 = scmp.ne.s32.totalorder %s227, %s228
    %p239 = scmp.eq.s32.totalorder %s26, 0
    %p240 = por %p238, %p239
    %p241 = scmp.ne.s32.totalorder %s227, %s228
    %p242 = scmp.eq.s32.totalorder %s27, 1
    %p243 = por %p241, %p242
    %p245 = scmp.ne.s32.totalorder %s228, %s244
    %p246 = scmp.eq.s32.totalorder %s27, 0
    %p247 = por %p245, %p246
    %s248 = ssub.s32 %s21, %s28
    %p249 = scmp.eq.s32.totalorder %s248, 0
    %s251 = sadd.s32 %s250, 1
    %s252 = scalar_select %p249, %s250, %s251
    %p255 = pneg %p249
    %p256 = scmp.eq.s32.totalorder %s21, 1
    %p257 = por %p255, %p256
    %p258 = scmp.ne.s32.totalorder %s250, %s253
    %p259 = scmp.eq.s32.totalorder %s21, 0
    %p260 = por %p258, %p259
    %p261 = scmp.ne.s32.totalorder %s250, %s253
    %p262 = scmp.eq.s32.totalorder %s26, 1
    %p263 = por %p261, %p262
    %p264 = scmp.ne.s32.totalorder %s253, %s254
    %p265 = scmp.eq.s32.totalorder %s26, 0
    %p266 = por %p264, %p265
    %p267 = scmp.ne.s32.totalorder %s253, %s254
    %p268 = scmp.eq.s32.totalorder %s27, 1
    %p269 = por %p267, %p268
    %p271 = scmp.ne.s32.totalorder %s254, %s270
    %p272 = scmp.eq.s32.totalorder %s27, 0
    %p273 = por %p271, %p272
    %s274 = ssub.s32 %s21, %s28
    %p275 = scmp.eq.s32.totalorder %s274, 0
    %s277 = sadd.s32 %s276, 1
    %s278 = scalar_select %p275, %s276, %s277
    %p281 = pneg %p275
    %p282 = scmp.eq.s32.totalorder %s21, 1
    %p283 = por %p281, %p282
    %p284 = scmp.ne.s32.totalorder %s276, %s279
    %p285 = scmp.eq.s32.totalorder %s21, 0
    %p286 = por %p284, %p285
    %p287 = scmp.ne.s32.totalorder %s276, %s279
    %p288 = scmp.eq.s32.totalorder %s26, 1
    %p289 = por %p287, %p288
    %p290 = scmp.ne.s32.totalorder %s279, %s280
    %p291 = scmp.eq.s32.totalorder %s26, 0
    %p292 = por %p290, %p291
    %p293 = scmp.ne.s32.totalorder %s279, %s280
    %p294 = scmp.eq.s32.totalorder %s27, 1
    %p295 = por %p293, %p294
    %p297 = scmp.ne.s32.totalorder %s280, %s296
    %p298 = scmp.eq.s32.totalorder %s27, 0
    %p299 = por %p297, %p298
    %s300 = ssub.s32 %s21, %s28
    %p301 = scmp.eq.s32.totalorder %s300, 0
    %s303 = sadd.s32 %s302, 1
    %s304 = scalar_select %p301, %s302, %s303
    %p307 = pneg %p301
    %p308 = scmp.eq.s32.totalorder %s21, 1
    %p309 = por %p307, %p308
    %p310 = scmp.ne.s32.totalorder %s302, %s305
    %p311 = scmp.eq.s32.totalorder %s21, 0
    %p312 = por %p310, %p311
    %p313 = scmp.ne.s32.totalorder %s302, %s305
    %p314 = scmp.eq.s32.totalorder %s26, 1
    %p315 = por %p313, %p314
    %p316 = scmp.ne.s32.totalorder %s305, %s306
    %p317 = scmp.eq.s32.totalorder %s26, 0
    %p318 = por %p316, %p317
    %p319 = scmp.ne.s32.totalorder %s305, %s306
    %p320 = scmp.eq.s32.totalorder %s27, 1
    %p321 = por %p319, %p320
    %p323 = scmp.ne.s32.totalorder %s306, %s322
    %p324 = scmp.eq.s32.totalorder %s27, 0
    %p325 = por %p323, %p324
    %s326 = ssub.s32 %s21, %s28
    %p327 = scmp.eq.s32.totalorder %s326, 0
    %s329 = sadd.s32 %s328, 1
    %s330 = scalar_select %p327, %s328, %s329
    %p333 = pneg %p327
    %p334 = scmp.eq.s32.totalorder %s21, 1
    %p335 = por %p333, %p334
    %p336 = scmp.ne.s32.totalorder %s328, %s331
    %p337 = scmp.eq.s32.totalorder %s21, 0
    %p338 = por %p336, %p337
    %p339 = scmp.ne.s32.totalorder %s328, %s331
    %p340 = scmp.eq.s32.totalorder %s26, 1
    %p341 = por %p339, %p340
    %p342 = scmp.ne.s32.totalorder %s331, %s332
    %p343 = scmp.eq.s32.totalorder %s26, 0
    %p344 = por %p342, %p343
    %p345 = scmp.ne.s32.totalorder %s331, %s332
    %p346 = scmp.eq.s32.totalorder %s27, 1
    %p347 = por %p345, %p346
    %p349 = scmp.ne.s32.totalorder %s332, %s348
    %p350 = scmp.eq.s32.totalorder %s27, 0
    %p351 = por %p349, %p350
    %s352 = ssub.s32 %s21, %s28
    %p353 = scmp.eq.s32.totalorder %s352, 0
    %s355 = sadd.s32 %s354, 1
    %s356 = scalar_select %p353, %s354, %s355
    %p359 = pneg %p353
    %p360 = scmp.eq.s32.totalorder %s21, 1
    %p361 = por %p359, %p360
    %p362 = scmp.ne.s32.totalorder %s354, %s357
    %p363 = scmp.eq.s32.totalorder %s21, 0
    %p364 = por %p362, %p363
    %p365 = scmp.ne.s32.totalorder %s354, %s357
    %p366 = scmp.eq.s32.totalorder %s26, 1
    %p367 = por %p365, %p366
    %p368 = scmp.ne.s32.totalorder %s357, %s358
    %p369 = scmp.eq.s32.totalorder %s26, 0
    %p370 = por %p368, %p369
    %p371 = scmp.ne.s32.totalorder %s357, %s358
    %p372 = scmp.eq.s32.totalorder %s27, 1
    %p373 = por %p371, %p372
    %p375 = scmp.ne.s32.totalorder %s358, %s374
    %p376 = scmp.eq.s32.totalorder %s27, 0
    %p377 = por %p375, %p376
    %s378 = ssub.s32 %s21, %s28
    %p379 = scmp.eq.s32.totalorder %s378, 0
    %s381 = sadd.s32 %s380, 1
    %s382 = scalar_select %p379, %s380, %s381
    %p385 = pneg %p379
    %p386 = scmp.eq.s32.totalorder %s21, 1
    %p387 = por %p385, %p386
    %p388 = scmp.ne.s32.totalorder %s380, %s383
    %p389 = scmp.eq.s32.totalorder %s21, 0
    %p390 = por %p388, %p389
    %p391 = scmp.ne.s32.totalorder %s380, %s383
    %p392 = scmp.eq.s32.totalorder %s26, 1
    %p393 = por %p391, %p392
    %p394 = scmp.ne.s32.totalorder %s383, %s384
    %p395 = scmp.eq.s32.totalorder %s26, 0
    %p396 = por %p394, %p395
    %p397 = scmp.ne.s32.totalorder %s383, %s384
    %p398 = scmp.eq.s32.totalorder %s27, 1
    %p399 = por %p397, %p398
    %p401 = scmp.ne.s32.totalorder %s384, %s400
    %p402 = scmp.eq.s32.totalorder %s27, 0
    %p403 = por %p401, %p402
    %s405 = sadd.s32 %s404, 1
    %p408 = scmp.eq.s32.totalorder %s21, 1
    %p409 = scmp.ne.s32.totalorder %s404, %s406
    %p410 = scmp.eq.s32.totalorder %s21, 0
    %p411 = por %p409, %p410
    %p412 = scmp.ne.s32.totalorder %s404, %s406
    %p413 = scmp.eq.s32.totalorder %s26, 1
    %p414 = por %p412, %p413
    %p415 = scmp.ne.s32.totalorder %s406, %s407
    %p416 = scmp.eq.s32.totalorder %s26, 0
    %p417 = por %p415, %p416
    %p418 = scmp.ne.s32.totalorder %s406, %s407
    %p419 = scmp.eq.s32.totalorder %s27, 1
    %p420 = por %p418, %p419
    %p422 = scmp.ne.s32.totalorder %s407, %s421
    %p423 = scmp.eq.s32.totalorder %s27, 0
    %p424 = por %p422, %p423
    %p425 = scmp.le.s32.totalorder 1, %s21
    %p426 = scmp.lt.s32.totalorder %s21, 3
    %p427 = pnand %p425, %p426
    %p428 = pneg %p427
    // Predicated region
    $region9: #{rdag_forward.1} parent=5 // pred_check
      _
    $region10: #{rdag_forward.1} parent=5 // pred_check_branch
      %430 = sbr.rel (%p427) target = $region12
    $region11: #{rdag_forward.1} parent=5 // pred_region
      %s431 = ssub.s32 %s21, 1
      // Predicated region
      $region13: #{rdag_forward.1} parent=11 // pred_check
        %p432 = pneg %p42
      $region14: #{rdag_forward.1} parent=11 // pred_check_branch
        %434 = sbr.rel (%p432) target = $region16
      $region15: #{rdag_forward.1} parent=11 // pred_region
        _
      $region16: #{rdag_forward.1} parent=11 // pred_fallthru
        _
      // Predicated region
      $region17: #{rdag_forward.1} parent=11 // pred_check
        %p435 = pneg %p63
      $region18: #{rdag_forward.1} parent=11 // pred_check_branch
        %437 = sbr.rel (%p435) target = $region20
      $region19: #{rdag_forward.1} parent=11 // pred_region
        _
      $region20: #{rdag_forward.1} parent=11 // pred_fallthru
        _
      // Predicated region
      $region21: #{rdag_forward.1} parent=11 // pred_check
        %p438 = pneg %p84
      $region22: #{rdag_forward.1} parent=11 // pred_check_branch
        %440 = sbr.rel (%p438) target = $region24
      $region23: #{rdag_forward.1} parent=11 // pred_region
        _
      $region24: #{rdag_forward.1} parent=11 // pred_fallthru
        _
    $region12: #{rdag_forward.1} parent=5 // pred_fallthru
      _
    %p441 = scmp.lt.s32.totalorder %s21, 2
    // Predicated region
    $region25: #{rdag_forward.1} parent=5 // pred_check
      %p442 = pneg %p441
    $region26: #{rdag_forward.1} parent=5 // pred_check_branch
      %444 = sbr.rel (%p442) target = $region28
    $region27: #{rdag_forward.1} parent=5 // pred_region
      // Predicated region
      $region29: #{rdag_forward.1} parent=27 // pred_check
        %p445 = pneg %p104
      $region30: #{rdag_forward.1} parent=27 // pred_check_branch
        %447 = sbr.rel (%p445) target = $region32
      $region31: #{rdag_forward.1} parent=27 // pred_region
        %p448 = scmp.lt.s32.totalorder %s21, 1
        %s449 = scalar_select %p448, %s21, 1
        %s450 = smul.addr %s449, 8
        %s451 = smul.addr %s450, 8
        %s452 = scalar_lea.vmem %s3, %s451
      $region32: #{rdag_forward.1} parent=27 // pred_fallthru
        _
      // Predicated region
      $region33: #{rdag_forward.1} parent=27 // pred_check
        %p453 = pneg %p130
      $region34: #{rdag_forward.1} parent=27 // pred_check_branch
        %455 = sbr.rel (%p453) target = $region36
      $region35: #{rdag_forward.1} parent=27 // pred_region
        %p456 = scmp.lt.s32.totalorder %s21, 1
        %s457 = scalar_select %p456, %s21, 1
        %s458 = smul.addr %s457, 72
        %s459 = smul.addr %s458, 8
        %s460 = scalar_lea.vmem %s4, %s459
      $region36: #{rdag_forward.1} parent=27 // pred_fallthru
        _
      // Predicated region
      $region37: #{rdag_forward.1} parent=27 // pred_check
        %p461 = pneg %p156
      $region38: #{rdag_forward.1} parent=27 // pred_check_branch
        %463 = sbr.rel (%p461) target = $region40
      $region39: #{rdag_forward.1} parent=27 // pred_region
        %p464 = scmp.lt.s32.totalorder %s21, 1
        %s465 = scalar_select %p464, %s21, 1
        %s466 = scalar_lea.vmem %s5, %s465
      $region40: #{rdag_forward.1} parent=27 // pred_fallthru
        _
      // Predicated region
      $region41: #{rdag_forward.1} parent=27 // pred_check
        %p467 = pneg %p182
      $region42: #{rdag_forward.1} parent=27 // pred_check_branch
        %469 = sbr.rel (%p467) target = $region44
      $region43: #{rdag_forward.1} parent=27 // pred_region
        %p470 = scmp.lt.s32.totalorder %s21, 1
        %s471 = scalar_select %p470, %s21, 1
        %s472 = scalar_lea.vmem %s6, %s471
      $region44: #{rdag_forward.1} parent=27 // pred_fallthru
        _
      // Predicated region
      $region45: #{rdag_forward.1} parent=27 // pred_check
        %p473 = pneg %p208
      $region46: #{rdag_forward.1} parent=27 // pred_check_branch
        %475 = sbr.rel (%p473) target = $region48
      $region47: #{rdag_forward.1} parent=27 // pred_region
        %p476 = scmp.lt.s32.totalorder %s21, 1
        %s477 = scalar_select %p476, %s21, 1
        %s478 = smul.addr %s477, 8
        %s479 = smul.addr %s478, 8
        %s480 = scalar_lea.vmem %s7, %s479
      $region48: #{rdag_forward.1} parent=27 // pred_fallthru
        _
      // Predicated region
      $region49: #{rdag_forward.1} parent=27 // pred_check
        %p481 = pneg %p234
      $region50: #{rdag_forward.1} parent=27 // pred_check_branch
        %483 = sbr.rel (%p481) target = $region52
      $region51: #{rdag_forward.1} parent=27 // pred_region
        %p484 = scmp.lt.s32.totalorder %s21, 1
        %s485 = scalar_select %p484, %s21, 1
        %s486 = smul.addr %s485, 72
        %s487 = smul.addr %s486, 8
        %s488 = scalar_lea.vmem %s8, %s487
      $region52: #{rdag_forward.1} parent=27 // pred_fallthru
        _
      // Predicated region
      $region53: #{rdag_forward.1} parent=27 // pred_check
        %p489 = pneg %p260
      $region54: #{rdag_forward.1} parent=27 // pred_check_branch
        %491 = sbr.rel (%p489) target = $region56
      $region55: #{rdag_forward.1} parent=27 // pred_region
        %p492 = scmp.lt.s32.totalorder %s21, 1
        %s493 = scalar_select %p492, %s21, 1
        %s494 = scalar_lea.vmem %s9, %s493
      $region56: #{rdag_forward.1} parent=27 // pred_fallthru
        _
      // Predicated region
      $region57: #{rdag_forward.1} parent=27 // pred_check
        %p495 = pneg %p286
      $region58: #{rdag_forward.1} parent=27 // pred_check_branch
        %497 = sbr.rel (%p495) target = $region60
      $region59: #{rdag_forward.1} parent=27 // pred_region
        %p498 = scmp.lt.s32.totalorder %s21, 1
        %s499 = scalar_select %p498, %s21, 1
        %s500 = scalar_lea.vmem %s10, %s499
      $region60: #{rdag_forward.1} parent=27 // pred_fallthru
        _
      // Predicated region
      $region61: #{rdag_forward.1} parent=27 // pred_check
        %p501 = pneg %p312
      $region62: #{rdag_forward.1} parent=27 // pred_check_branch
        %503 = sbr.rel (%p501) target = $region64
      $region63: #{rdag_forward.1} parent=27 // pred_region
        %p504 = scmp.lt.s32.totalorder %s21, 1
        %s505 = scalar_select %p504, %s21, 1
        %s506 = smul.addr %s505, 40
        %s507 = smul.addr %s506, 8
        %s508 = scalar_lea.vmem %s11, %s507
      $region64: #{rdag_forward.1} parent=27 // pred_fallthru
        _
      // Predicated region
      $region65: #{rdag_forward.1} parent=27 // pred_check
        %p509 = pneg %p338
      $region66: #{rdag_forward.1} parent=27 // pred_check_branch
        %511 = sbr.rel (%p509) target = $region68
      $region67: #{rdag_forward.1} parent=27 // pred_region
        %p512 = scmp.lt.s32.totalorder %s21, 1
        %s513 = scalar_select %p512, %s21, 1
        %s514 = smul.addr %s513, 8
        %s515 = smul.addr %s514, 8
        %s516 = scalar_lea.vmem %s12, %s515
      $region68: #{rdag_forward.1} parent=27 // pred_fallthru
        _
      // Predicated region
      $region69: #{rdag_forward.1} parent=27 // pred_check
        %p517 = pneg %p364
      $region70: #{rdag_forward.1} parent=27 // pred_check_branch
        %519 = sbr.rel (%p517) target = $region72
      $region71: #{rdag_forward.1} parent=27 // pred_region
        %p520 = scmp.lt.s32.totalorder %s21, 1
        %s521 = scalar_select %p520, %s21, 1
        %s522 = smul.addr %s521, 40
        %s523 = smul.addr %s522, 8
        %s524 = scalar_lea.vmem %s13, %s523
      $region72: #{rdag_forward.1} parent=27 // pred_fallthru
        _
      // Predicated region
      $region73: #{rdag_forward.1} parent=27 // pred_check
        %p525 = pneg %p390
      $region74: #{rdag_forward.1} parent=27 // pred_check_branch
        %527 = sbr.rel (%p525) target = $region76
      $region75: #{rdag_forward.1} parent=27 // pred_region
        %p528 = scmp.lt.s32.totalorder %s21, 1
        %s529 = scalar_select %p528, %s21, 1
        %s530 = smul.addr %s529, 8
        %s531 = smul.addr %s530, 8
        %s532 = scalar_lea.vmem %s14, %s531
      $region76: #{rdag_forward.1} parent=27 // pred_fallthru
        _
    $region28: #{rdag_forward.1} parent=5 // pred_fallthru
      _
    %p533 = scmp.le.s32.totalorder 1, %s21
    %p534 = scmp.lt.s32.totalorder %s21, 3
    %p535 = pnand %p533, %p534
    %p536 = pneg %p535
    // Predicated region
    $region77: #{rdag_forward.1} parent=5 // pred_check
      _
    $region78: #{rdag_forward.1} parent=5 // pred_check_branch
      %538 = sbr.rel (%p535) target = $region80
    $region79: #{rdag_forward.1} parent=5 // pred_region
      %s539 = ssub.s32 %s21, 1
      %p540 = pneg %p42
      %p541 = pneg %p39
      %p542 = pneg %p63
      %p543 = pneg %p60
      %p544 = pneg %p84
      %p545 = pneg %p81
      %p546 = scmp.lt.s32.totalorder %s26, 1
      %s547 = scalar_select %p546, %s26, 1
      %s548 = smul.addr %s547, 8
      %s549 = smul.addr %s548, 8
      %s550 = scalar_lea.vmem %s3, %s549
      %p551 = pneg %p110
      %p552 = pneg %p107
      %p553 = scmp.lt.s32.totalorder %s26, 1
      %s554 = scalar_select %p553, %s26, 1
      %s555 = smul.addr %s554, 72
      %s556 = smul.addr %s555, 8
      %s557 = scalar_lea.vmem %s4, %s556
      %p558 = pneg %p136
      %p559 = pneg %p133
      %p560 = scmp.lt.s32.totalorder %s26, 1
      %s561 = scalar_select %p560, %s26, 1
      %s562 = scalar_lea.vmem %s5, %s561
      %p563 = pneg %p162
      %p564 = pneg %p159
      %p565 = scmp.lt.s32.totalorder %s26, 1
      %s566 = scalar_select %p565, %s26, 1
      %s567 = scalar_lea.vmem %s6, %s566
      %p568 = pneg %p188
      %p569 = pneg %p185
      %p570 = scmp.lt.s32.totalorder %s26, 1
      %s571 = scalar_select %p570, %s26, 1
      %s572 = smul.addr %s571, 8
      %s573 = smul.addr %s572, 8
      %s574 = scalar_lea.vmem %s7, %s573
      %p575 = pneg %p214
      %p576 = pneg %p211
      %p577 = scmp.lt.s32.totalorder %s26, 1
      %s578 = scalar_select %p577, %s26, 1
      %s579 = smul.addr %s578, 72
      %s580 = smul.addr %s579, 8
      %s581 = scalar_lea.vmem %s8, %s580
      %p582 = pneg %p240
      %p583 = pneg %p237
      %p584 = scmp.lt.s32.totalorder %s26, 1
      %s585 = scalar_select %p584, %s26, 1
      %s586 = scalar_lea.vmem %s9, %s585
      %p587 = pneg %p266
      %p588 = pneg %p263
      %p589 = scmp.lt.s32.totalorder %s26, 1
      %s590 = scalar_select %p589, %s26, 1
      %s591 = scalar_lea.vmem %s10, %s590
      %p592 = pneg %p292
      %p593 = pneg %p289
      %p594 = scmp.lt.s32.totalorder %s26, 1
      %s595 = scalar_select %p594, %s26, 1
      %s596 = smul.addr %s595, 40
      %s597 = smul.addr %s596, 8
      %s598 = scalar_lea.vmem %s11, %s597
      %p599 = pneg %p318
      %p600 = pneg %p315
      %p601 = scmp.lt.s32.totalorder %s26, 1
      %s602 = scalar_select %p601, %s26, 1
      %s603 = smul.addr %s602, 8
      %s604 = smul.addr %s603, 8
      %s605 = scalar_lea.vmem %s12, %s604
      %p606 = pneg %p344
      %p607 = pneg %p341
      %p608 = scmp.lt.s32.totalorder %s26, 1
      %s609 = scalar_select %p608, %s26, 1
      %s610 = smul.addr %s609, 40
      %s611 = smul.addr %s610, 8
      %s612 = scalar_lea.vmem %s13, %s611
      %p613 = pneg %p370
      %p614 = pneg %p367
      %p615 = scmp.lt.s32.totalorder %s26, 1
      %s616 = scalar_select %p615, %s26, 1
      %s617 = smul.addr %s616, 8
      %s618 = smul.addr %s617, 8
      %s619 = scalar_lea.vmem %s14, %s618
      %p620 = pneg %p396
      %p621 = pneg %p393
      %p622 = pneg %p417
      %p623 = pneg %p414
      %p624 = scmp.lt.s32.totalorder %s26, 1
      %s625 = scalar_select %p624, %s26, 1
      %s626 = smul.addr %s625, 8
      %s627 = smul.addr %s626, 8
      %s628 = scalar_lea.vmem %s3, %s627
      %p629 = scmp.lt.s32.totalorder %s26, 1
      %s630 = scalar_select %p629, %s26, 1
      %s631 = smul.addr %s630, 72
      %s632 = smul.addr %s631, 8
      %s633 = scalar_lea.vmem %s4, %s632
      %p634 = scmp.lt.s32.totalorder %s26, 1
      %s635 = scalar_select %p634, %s26, 1
      %s636 = scalar_lea.vmem %s5, %s635
      %p637 = scmp.lt.s32.totalorder %s26, 1
      %s638 = scalar_select %p637, %s26, 1
      %s639 = scalar_lea.vmem %s6, %s638
      %p640 = scmp.lt.s32.totalorder %s26, 1
      %s641 = scalar_select %p640, %s26, 1
      %s642 = smul.addr %s641, 8
      %s643 = smul.addr %s642, 8
      %s644 = scalar_lea.vmem %s7, %s643
      %p645 = scmp.lt.s32.totalorder %s26, 1
      %s646 = scalar_select %p645, %s26, 1
      %s647 = smul.addr %s646, 72
      %s648 = smul.addr %s647, 8
      %s649 = scalar_lea.vmem %s8, %s648
      %p650 = scmp.lt.s32.totalorder %s26, 1
      %s651 = scalar_select %p650, %s26, 1
      %s652 = scalar_lea.vmem %s9, %s651
      %p653 = scmp.lt.s32.totalorder %s26, 1
      %s654 = scalar_select %p653, %s26, 1
      %s655 = scalar_lea.vmem %s10, %s654
      %p656 = scmp.lt.s32.totalorder %s26, 1
      %s657 = scalar_select %p656, %s26, 1
      %s658 = smul.addr %s657, 40
      %s659 = smul.addr %s658, 8
      %s660 = scalar_lea.vmem %s11, %s659
      %p661 = scmp.lt.s32.totalorder %s26, 1
      %s662 = scalar_select %p661, %s26, 1
      %s663 = smul.addr %s662, 8
      %s664 = smul.addr %s663, 8
      %s665 = scalar_lea.vmem %s12, %s664
      %p666 = scmp.lt.s32.totalorder %s26, 1
      %s667 = scalar_select %p666, %s26, 1
      %s668 = smul.addr %s667, 40
      %s669 = smul.addr %s668, 8
      %s670 = scalar_lea.vmem %s13, %s669
      %p671 = scmp.lt.s32.totalorder %s26, 1
      %s672 = scalar_select %p671, %s26, 1
      %s673 = smul.addr %s672, 8
      %s674 = smul.addr %s673, 8
      %s675 = scalar_lea.vmem %s14, %s674
      %p677 = scmp.eq.s32.totalorder %s26, 0
      // Predicated region
      $region81: #{rdag_forward.1} parent=79 // pred_check
        %p678 = pneg %p677
      $region82: #{rdag_forward.1} parent=79 // pred_check_branch
        %680 = sbr.rel (%p678) target = $region84
      $region83: #{rdag_forward.1} parent=79 // pred_region
        %v681 = vld [vmem:[%s0] sm:$0xff]
        %v682 = vld [vmem:[%s0 + $0x8] sm:$0xff]
        %v683 = vld [vmem:[%s0 + $0x10] sm:$0xff]
        %v684 = vld [vmem:[%s0 + $0x18] sm:$0xff]
        %v685 = vld [vmem:[%s0 + $0x20] sm:$0xff]
        %v686 = vld [vmem:[%s0 + $0x28] sm:$0xff]
        %v687 = vld [vmem:[%s0 + $0x30] sm:$0xff]
        %v688 = vld [vmem:[%s0 + $0x38] sm:$0xff]
        %689 = vst [vmem:[#allocation2] sm:$0xff] %v681
        %690 = vst [vmem:[#allocation2 + $0x8] sm:$0xff] %v682
        %691 = vst [vmem:[#allocation2 + $0x10] sm:$0xff] %v683
        %692 = vst [vmem:[#allocation2 + $0x18] sm:$0xff] %v684
        %693 = vst [vmem:[#allocation2 + $0x20] sm:$0xff] %v685
        %694 = vst [vmem:[#allocation2 + $0x28] sm:$0xff] %v686
        %695 = vst [vmem:[#allocation2 + $0x30] sm:$0xff] %v687
        %696 = vst [vmem:[#allocation2 + $0x38] sm:$0xff] %v688
      $region84: #{rdag_forward.1} parent=79 // pred_fallthru
        _
      %v697 = vld [vmem:[#allocation2] sm:$0xff]
      %v698 = vld [vmem:[#allocation2 + $0x8] sm:$0xff]
      %v699 = vld [vmem:[#allocation2 + $0x10] sm:$0xff]
      %v700 = vld [vmem:[#allocation2 + $0x18] sm:$0xff]
      %v701 = vld [vmem:[#allocation2 + $0x20] sm:$0xff]
      %v702 = vld [vmem:[#allocation2 + $0x28] sm:$0xff]
      %v703 = vld [vmem:[#allocation2 + $0x30] sm:$0xff]
      %v704 = vld [vmem:[#allocation2 + $0x38] sm:$0xff]
      %v705 = vld [vmem:[%s1] sm:$0xff]
      %v706 = vld [vmem:[%s1 + $0x8] sm:$0xff]
      %v707 = vld [vmem:[%s1 + $0x10] sm:$0xff]
      %v708 = vld [vmem:[%s1 + $0x18] sm:$0xff]
      %v709 = vld [vmem:[%s1 + $0x20] sm:$0xff]
      %v710 = vld [vmem:[%s1 + $0x28] sm:$0xff]
      %v711 = vld [vmem:[%s1 + $0x30] sm:$0xff]
      %v712 = vld [vmem:[%s1 + $0x38] sm:$0xff]
      %v713 = vld [vmem:[%s2] sm:$0xff]
      %v714 = vld [vmem:[%s2 + $0x8] sm:$0xff]
      %v715 = vld [vmem:[%s2 + $0x10] sm:$0xff]
      %v716 = vld [vmem:[%s2 + $0x18] sm:$0xff]
      %v717 = vld [vmem:[%s2 + $0x20] sm:$0xff]
      %v718 = vld [vmem:[%s2 + $0x28] sm:$0xff]
      %v719 = vld [vmem:[%s2 + $0x30] sm:$0xff]
      %v720 = vld [vmem:[%s2 + $0x38] sm:$0xff]
      %v721 = vld [vmem:[%s2 + $0x40] sm:$0xff]
      %v722 = vld [vmem:[%s2 + $0x48] sm:$0xff]
      %v723 = vld [vmem:[%s2 + $0x50] sm:$0xff]
      %v724 = vld [vmem:[%s2 + $0x58] sm:$0xff]
      %v725 = vld [vmem:[%s2 + $0x60] sm:$0xff]
      %v726 = vld [vmem:[%s2 + $0x68] sm:$0xff]
      %v727 = vld [vmem:[%s2 + $0x70] sm:$0xff]
      %v728 = vld [vmem:[%s2 + $0x78] sm:$0xff]
      %v729 = vpack.c.bf16 %v714, %v713
      %v730 = vpack.c.bf16 %v716, %v715
      %v731 = vpack.c.bf16 %v718, %v717
      %v732 = vpack.c.bf16 %v720, %v719
      %v733 = vpack.c.bf16 %v722, %v721
      %v734 = vpack.c.bf16 %v724, %v723
      %v735 = vpack.c.bf16 %v726, %v725
      %v736 = vpack.c.bf16 %v728, %v727
      %s737 = scalar_lea.vmem %s2, 128
      %v738 = vld [vmem:[%s737] sm:$0xff]
      %v739 = vld [vmem:[%s737 + $0x8] sm:$0xff]
      %v740 = vld [vmem:[%s737 + $0x10] sm:$0xff]
      %v741 = vld [vmem:[%s737 + $0x18] sm:$0xff]
      %v742 = vld [vmem:[%s737 + $0x20] sm:$0xff]
      %v743 = vld [vmem:[%s737 + $0x28] sm:$0xff]
      %v744 = vld [vmem:[%s737 + $0x30] sm:$0xff]
      %v745 = vld [vmem:[%s737 + $0x38] sm:$0xff]
      %v746 = vld [vmem:[%s737 + $0x40] sm:$0xff]
      %v747 = vld [vmem:[%s737 + $0x48] sm:$0xff]
      %v748 = vld [vmem:[%s737 + $0x50] sm:$0xff]
      %v749 = vld [vmem:[%s737 + $0x58] sm:$0xff]
      %v750 = vld [vmem:[%s737 + $0x60] sm:$0xff]
      %v751 = vld [vmem:[%s737 + $0x68] sm:$0xff]
      %v752 = vld [vmem:[%s737 + $0x70] sm:$0xff]
      %v753 = vld [vmem:[%s737 + $0x78] sm:$0xff]
      %v754 = vpack.c.bf16 %v739, %v738
      %v755 = vpack.c.bf16 %v741, %v740
      %v756 = vpack.c.bf16 %v743, %v742
      %v757 = vpack.c.bf16 %v745, %v744
      %v758 = vpack.c.bf16 %v747, %v746
      %v759 = vpack.c.bf16 %v749, %v748
      %v760 = vpack.c.bf16 %v751, %v750
      %v761 = vpack.c.bf16 %v753, %v752
      %s762 = scalar_lea.vmem %s2, 256
      %v763 = vld [vmem:[%s762] sm:$0xff]
      %v764 = vld [vmem:[%s762 + $0x8] sm:$0xff]
      %v765 = vld [vmem:[%s762 + $0x10] sm:$0xff]
      %v766 = vld [vmem:[%s762 + $0x18] sm:$0xff]
      %v767 = vld [vmem:[%s762 + $0x20] sm:$0xff]
      %v768 = vld [vmem:[%s762 + $0x28] sm:$0xff]
      %v769 = vld [vmem:[%s762 + $0x30] sm:$0xff]
      %v770 = vld [vmem:[%s762 + $0x38] sm:$0xff]
      %v771 = vld [vmem:[%s762 + $0x40] sm:$0xff]
      %v772 = vld [vmem:[%s762 + $0x48] sm:$0xff]
      %v773 = vld [vmem:[%s762 + $0x50] sm:$0xff]
      %v774 = vld [vmem:[%s762 + $0x58] sm:$0xff]
      %v775 = vld [vmem:[%s762 + $0x60] sm:$0xff]
      %v776 = vld [vmem:[%s762 + $0x68] sm:$0xff]
      %v777 = vld [vmem:[%s762 + $0x70] sm:$0xff]
      %v778 = vld [vmem:[%s762 + $0x78] sm:$0xff]
      %v779 = vpack.c.bf16 %v764, %v763
      %v780 = vpack.c.bf16 %v766, %v765
      %v781 = vpack.c.bf16 %v768, %v767
      %v782 = vpack.c.bf16 %v770, %v769
      %v783 = vpack.c.bf16 %v772, %v771
      %v784 = vpack.c.bf16 %v774, %v773
      %v785 = vpack.c.bf16 %v776, %v775
      %v786 = vpack.c.bf16 %v778, %v777
      %s787 = scalar_lea.vmem %s2, 384
      %v788 = vld [vmem:[%s787] sm:$0xff]
      %v789 = vld [vmem:[%s787 + $0x8] sm:$0xff]
      %v790 = vld [vmem:[%s787 + $0x10] sm:$0xff]
      %v791 = vld [vmem:[%s787 + $0x18] sm:$0xff]
      %v792 = vld [vmem:[%s787 + $0x20] sm:$0xff]
      %v793 = vld [vmem:[%s787 + $0x28] sm:$0xff]
      %v794 = vld [vmem:[%s787 + $0x30] sm:$0xff]
      %v795 = vld [vmem:[%s787 + $0x38] sm:$0xff]
      %v796 = vld [vmem:[%s787 + $0x40] sm:$0xff]
      %v797 = vld [vmem:[%s787 + $0x48] sm:$0xff]
      %v798 = vld [vmem:[%s787 + $0x50] sm:$0xff]
      %v799 = vld [vmem:[%s787 + $0x58] sm:$0xff]
      %v800 = vld [vmem:[%s787 + $0x60] sm:$0xff]
      %v801 = vld [vmem:[%s787 + $0x68] sm:$0xff]
      %v802 = vld [vmem:[%s787 + $0x70] sm:$0xff]
      %v803 = vld [vmem:[%s787 + $0x78] sm:$0xff]
      %v804 = vpack.c.bf16 %v789, %v788
      %v805 = vpack.c.bf16 %v791, %v790
      %v806 = vpack.c.bf16 %v793, %v792
      %v807 = vpack.c.bf16 %v795, %v794
      %v808 = vpack.c.bf16 %v797, %v796
      %v809 = vpack.c.bf16 %v799, %v798
      %v810 = vpack.c.bf16 %v801, %v800
      %v811 = vpack.c.bf16 %v803, %v802
      %s812 = scalar_lea.vmem %s2, 512
      %v813 = vld [vmem:[%s812] sm:$0xff]
      %v814 = vld [vmem:[%s812 + $0x8] sm:$0xff]
      %v815 = vld [vmem:[%s812 + $0x10] sm:$0xff]
      %v816 = vld [vmem:[%s812 + $0x18] sm:$0xff]
      %v817 = vld [vmem:[%s812 + $0x20] sm:$0xff]
      %v818 = vld [vmem:[%s812 + $0x28] sm:$0xff]
      %v819 = vld [vmem:[%s812 + $0x30] sm:$0xff]
      %v820 = vld [vmem:[%s812 + $0x38] sm:$0xff]
      %v821 = vld [vmem:[%s812 + $0x40] sm:$0xff]
      %v822 = vld [vmem:[%s812 + $0x48] sm:$0xff]
      %v823 = vld [vmem:[%s812 + $0x50] sm:$0xff]
      %v824 = vld [vmem:[%s812 + $0x58] sm:$0xff]
      %v825 = vld [vmem:[%s812 + $0x60] sm:$0xff]
      %v826 = vld [vmem:[%s812 + $0x68] sm:$0xff]
      %v827 = vld [vmem:[%s812 + $0x70] sm:$0xff]
      %v828 = vld [vmem:[%s812 + $0x78] sm:$0xff]
      %v829 = vpack.c.bf16 %v814, %v813
      %v830 = vpack.c.bf16 %v816, %v815
      %v831 = vpack.c.bf16 %v818, %v817
      %v832 = vpack.c.bf16 %v820, %v819
      %v833 = vpack.c.bf16 %v822, %v821
      %v834 = vpack.c.bf16 %v824, %v823
      %v835 = vpack.c.bf16 %v826, %v825
      %v836 = vpack.c.bf16 %v828, %v827
      %s837 = scalar_lea.vmem %s2, 640
      %v838 = vld [vmem:[%s837] sm:$0xff]
      %v839 = vld [vmem:[%s837 + $0x8] sm:$0xff]
      %v840 = vld [vmem:[%s837 + $0x10] sm:$0xff]
      %v841 = vld [vmem:[%s837 + $0x18] sm:$0xff]
      %v842 = vld [vmem:[%s837 + $0x20] sm:$0xff]
      %v843 = vld [vmem:[%s837 + $0x28] sm:$0xff]
      %v844 = vld [vmem:[%s837 + $0x30] sm:$0xff]
      %v845 = vld [vmem:[%s837 + $0x38] sm:$0xff]
      %v846 = vld [vmem:[%s837 + $0x40] sm:$0xff]
      %v847 = vld [vmem:[%s837 + $0x48] sm:$0xff]
      %v848 = vld [vmem:[%s837 + $0x50] sm:$0xff]
      %v849 = vld [vmem:[%s837 + $0x58] sm:$0xff]
      %v850 = vld [vmem:[%s837 + $0x60] sm:$0xff]
      %v851 = vld [vmem:[%s837 + $0x68] sm:$0xff]
      %v852 = vld [vmem:[%s837 + $0x70] sm:$0xff]
      %v853 = vld [vmem:[%s837 + $0x78] sm:$0xff]
      %v854 = vpack.c.bf16 %v839, %v838
      %v855 = vpack.c.bf16 %v841, %v840
      %v856 = vpack.c.bf16 %v843, %v842
      %v857 = vpack.c.bf16 %v845, %v844
      %v858 = vpack.c.bf16 %v847, %v846
      %v859 = vpack.c.bf16 %v849, %v848
      %v860 = vpack.c.bf16 %v851, %v850
      %v861 = vpack.c.bf16 %v853, %v852
      %s862 = scalar_lea.vmem %s2, 768
      %v863 = vld [vmem:[%s862] sm:$0xff]
      %v864 = vld [vmem:[%s862 + $0x8] sm:$0xff]
      %v865 = vld [vmem:[%s862 + $0x10] sm:$0xff]
      %v866 = vld [vmem:[%s862 + $0x18] sm:$0xff]
      %v867 = vld [vmem:[%s862 + $0x20] sm:$0xff]
      %v868 = vld [vmem:[%s862 + $0x28] sm:$0xff]
      %v869 = vld [vmem:[%s862 + $0x30] sm:$0xff]
      %v870 = vld [vmem:[%s862 + $0x38] sm:$0xff]
      %v871 = vld [vmem:[%s862 + $0x40] sm:$0xff]
      %v872 = vld [vmem:[%s862 + $0x48] sm:$0xff]
      %v873 = vld [vmem:[%s862 + $0x50] sm:$0xff]
      %v874 = vld [vmem:[%s862 + $0x58] sm:$0xff]
      %v875 = vld [vmem:[%s862 + $0x60] sm:$0xff]
      %v876 = vld [vmem:[%s862 + $0x68] sm:$0xff]
      %v877 = vld [vmem:[%s862 + $0x70] sm:$0xff]
      %v878 = vld [vmem:[%s862 + $0x78] sm:$0xff]
      %v879 = vpack.c.bf16 %v864, %v863
      %v880 = vpack.c.bf16 %v866, %v865
      %v881 = vpack.c.bf16 %v868, %v867
      %v882 = vpack.c.bf16 %v870, %v869
      %v883 = vpack.c.bf16 %v872, %v871
      %v884 = vpack.c.bf16 %v874, %v873
      %v885 = vpack.c.bf16 %v876, %v875
      %v886 = vpack.c.bf16 %v878, %v877
      %s887 = scalar_lea.vmem %s2, 896
      %v888 = vld [vmem:[%s887] sm:$0xff]
      %v889 = vld [vmem:[%s887 + $0x8] sm:$0xff]
      %v890 = vld [vmem:[%s887 + $0x10] sm:$0xff]
      %v891 = vld [vmem:[%s887 + $0x18] sm:$0xff]
      %v892 = vld [vmem:[%s887 + $0x20] sm:$0xff]
      %v893 = vld [vmem:[%s887 + $0x28] sm:$0xff]
      %v894 = vld [vmem:[%s887 + $0x30] sm:$0xff]
      %v895 = vld [vmem:[%s887 + $0x38] sm:$0xff]
      %v896 = vld [vmem:[%s887 + $0x40] sm:$0xff]
      %v897 = vld [vmem:[%s887 + $0x48] sm:$0xff]
      %v898 = vld [vmem:[%s887 + $0x50] sm:$0xff]
      %v899 = vld [vmem:[%s887 + $0x58] sm:$0xff]
      %v900 = vld [vmem:[%s887 + $0x60] sm:$0xff]
      %v901 = vld [vmem:[%s887 + $0x68] sm:$0xff]
      %v902 = vld [vmem:[%s887 + $0x70] sm:$0xff]
      %v903 = vld [vmem:[%s887 + $0x78] sm:$0xff]
      %v904 = vpack.c.bf16 %v889, %v888
      %v905 = vpack.c.bf16 %v891, %v890
      %v906 = vpack.c.bf16 %v893, %v892
      %v907 = vpack.c.bf16 %v895, %v894
      %v908 = vpack.c.bf16 %v897, %v896
      %v909 = vpack.c.bf16 %v899, %v898
      %v910 = vpack.c.bf16 %v901, %v900
      %v911 = vpack.c.bf16 %v903, %v902
      %s912 = scalar_lea.vmem %s2, 1024
      %v913 = vld [vmem:[%s912] sm:$0xff]
      %v914 = vld [vmem:[%s912 + $0x8] sm:$0xff]
      %v915 = vld [vmem:[%s912 + $0x10] sm:$0xff]
      %v916 = vld [vmem:[%s912 + $0x18] sm:$0xff]
      %v917 = vld [vmem:[%s912 + $0x20] sm:$0xff]
      %v918 = vld [vmem:[%s912 + $0x28] sm:$0xff]
      %v919 = vld [vmem:[%s912 + $0x30] sm:$0xff]
      %v920 = vld [vmem:[%s912 + $0x38] sm:$0xff]
      %v921 = vld [vmem:[%s912 + $0x40] sm:$0xff]
      %v922 = vld [vmem:[%s912 + $0x48] sm:$0xff]
      %v923 = vld [vmem:[%s912 + $0x50] sm:$0xff]
      %v924 = vld [vmem:[%s912 + $0x58] sm:$0xff]
      %v925 = vld [vmem:[%s912 + $0x60] sm:$0xff]
      %v926 = vld [vmem:[%s912 + $0x68] sm:$0xff]
      %v927 = vld [vmem:[%s912 + $0x70] sm:$0xff]
      %v928 = vld [vmem:[%s912 + $0x78] sm:$0xff]
      %v929 = vpack.c.bf16 %v914, %v913
      %v930 = vpack.c.bf16 %v916, %v915
      %v931 = vpack.c.bf16 %v918, %v917
      %v932 = vpack.c.bf16 %v920, %v919
      %v933 = vpack.c.bf16 %v922, %v921
      %v934 = vpack.c.bf16 %v924, %v923
      %v935 = vpack.c.bf16 %v926, %v925
      %v936 = vpack.c.bf16 %v928, %v927
      %v937 = vld [vmem:[%s628] sm:$0xff]
      %v938 = vld [vmem:[%s628 + $0x8] sm:$0xff]
      %v939 = vld [vmem:[%s628 + $0x10] sm:$0xff]
      %v940 = vld [vmem:[%s628 + $0x18] sm:$0xff]
      %v941 = vld [vmem:[%s628 + $0x20] sm:$0xff]
      %v942 = vld [vmem:[%s628 + $0x28] sm:$0xff]
      %v943 = vld [vmem:[%s628 + $0x30] sm:$0xff]
      %v944 = vld [vmem:[%s628 + $0x38] sm:$0xff]
      %v945 = vpack.c.bf16 %v938, %v937
      %v946 = vpack.c.bf16 %v940, %v939
      %v947 = vpack.c.bf16 %v942, %v941
      %v948 = vpack.c.bf16 %v944, %v943
      %v949 = vpack.c.bf16 %v706, %v705
      %v950 = vpack.c.bf16 %v708, %v707
      %v951 = vpack.c.bf16 %v710, %v709
      %v952 = vpack.c.bf16 %v712, %v711
      %vm953 = vcmask 523264
      %v955 = vsel %vm953, %v945, 0
      %v958 = vsel %vm953, %v946, 0
      %v961 = vsel %vm953, %v947, 0
      %v964 = vsel %vm953, %v948, 0
      %966 = vmatprep.subr.bf16.mxu0 0
      %967 = vmatpush1.bf16.msra.mxu0 0
      %968 = vmatprep.subr.bf16.mxu0 0
      %969 = vmatpush1.bf16.msra.mxu0 0
      %970 = vmatprep.subr.bf16.mxu0 0
      %971 = vmatpush1.bf16.msra.mxu0 0
      %972 = vmatprep.subr.bf16.mxu0 0
      %973 = vmatpush1.bf16.msra.mxu0 0
      %974 = vmatprep.subr.bf16.mxu0 0
      %975 = vmatpush1.bf16.msra.mxu0 %v952
      %976 = vmatprep.subr.bf16.mxu0 0
      %977 = vmatpush1.bf16.msra.mxu0 %v951
      %978 = vmatprep.subr.bf16.mxu0 0
      %979 = vmatpush1.bf16.msra.mxu0 %v950
      %980 = vmatprep.subr.bf16.mxu0 0
      %981 = vmatpush1.bf16.msra.mxu0 %v949
      %982 = vmatprep.subr.bf16.mxu0 0
      %983 = vmatpush2.bf16.msra.mxu0 0
      %984 = vmatprep.subr.bf16.mxu0 0
      %985 = vmatpush2.bf16.msra.mxu0 0
      %986 = vmatprep.subr.bf16.mxu0 0
      %987 = vmatpush2.bf16.msra.mxu0 0
      %988 = vmatprep.subr.bf16.mxu0 0
      %989 = vmatpush2.bf16.msra.mxu0 0
      %990 = vmatprep.subr.bf16.mxu0 0
      %991 = vmatpush2.bf16.msra.mxu0 0
      %992 = vmatprep.subr.bf16.mxu0 0
      %993 = vmatpush2.bf16.msra.mxu0 0
      %994 = vmatprep.subr.bf16.mxu0 0
      %995 = vmatpush2.bf16.msra.mxu0 0
      %996 = vmatprep.subr.bf16.mxu0 0
      %997 = vmatpush2.bf16.msra.mxu0 0
      %998 = vmatprep.mubr.bf16.mxu0 0
      %999 = vmatmul.mubr.bf16.gmra.mxu0 %v955
      %v1000 = vpop.f32.mrf.mxu0
      %v1001 = vadd.f32 0.0, %v1000
      %v1002 = vpop.f32.mrf.mxu0
      %v1003 = vpop.f32.mrf.mxu0
      %v1004 = vadd.f32 0.0, %v1003
      %v1005 = vpop.f32.mrf.mxu0
      %1006 = vmatprep.mubr.bf16.mxu0 0
      %1007 = vmatmul.mubr.bf16.gmra.mxu0 %v958
      %v1008 = vpop.f32.mrf.mxu0
      %v1009 = vadd.f32 0.0, %v1008
      %v1010 = vpop.f32.mrf.mxu0
      %v1011 = vpop.f32.mrf.mxu0
      %v1012 = vadd.f32 0.0, %v1011
      %v1013 = vpop.f32.mrf.mxu0
      %1014 = vmatprep.mubr.bf16.mxu0 0
      %1015 = vmatmul.mubr.bf16.gmra.mxu0 %v961
      %v1016 = vpop.f32.mrf.mxu0
      %v1017 = vadd.f32 0.0, %v1016
      %v1018 = vpop.f32.mrf.mxu0
      %v1019 = vpop.f32.mrf.mxu0
      %v1020 = vadd.f32 0.0, %v1019
      %v1021 = vpop.f32.mrf.mxu0
      %1022 = vmatprep.mubr.bf16.mxu0 0
      %1023 = vmatmul.mubr.bf16.gmra.mxu0 %v964
      %v1024 = vpop.f32.mrf.mxu0
      %v1025 = vadd.f32 0.0, %v1024
      %v1026 = vpop.f32.mrf.mxu0
      %v1027 = vpop.f32.mrf.mxu0
      %v1028 = vadd.f32 0.0, %v1027
      %v1029 = vpop.f32.mrf.mxu0
      %1030 = vdwg.mxu0
      %vm1031 = vcmp.ge.f32.partialorder %v1001, 0.0
      %vm1032 = vcmp.ge.f32.partialorder %v1004, 0.0
      %vm1033 = vcmp.ge.f32.partialorder %v1009, 0.0
      %vm1034 = vcmp.ge.f32.partialorder %v1012, 0.0
      %vm1035 = vcmp.ge.f32.partialorder %v1017, 0.0
      %vm1036 = vcmp.ge.f32.partialorder %v1020, 0.0
      %vm1037 = vcmp.ge.f32.partialorder %v1025, 0.0
      %vm1038 = vcmp.ge.f32.partialorder %v1028, 0.0
      %v1039 = vmul.f32 %v1001, 0.1
      %v1040 = vmul.f32 %v1004, 0.1
      %v1041 = vmul.f32 %v1009, 0.1
      %v1042 = vmul.f32 %v1012, 0.1
      %v1043 = vmul.f32 %v1017, 0.1
      %v1044 = vmul.f32 %v1020, 0.1
      %v1045 = vmul.f32 %v1025, 0.1
      %v1046 = vmul.f32 %v1028, 0.1
      %v1047 = vsel %vm1031, %v1001, %v1039
      %v1048 = vsel %vm1032, %v1004, %v1040
      %v1049 = vsel %vm1033, %v1009, %v1041
      %v1050 = vsel %vm1034, %v1012, %v1042
      %v1051 = vsel %vm1035, %v1017, %v1043
      %v1052 = vsel %vm1036, %v1020, %v1044
      %v1053 = vsel %vm1037, %v1025, %v1045
      %v1054 = vsel %vm1038, %v1028, %v1046
      %v1055 = vld [vmem:[%s633] sm:$0xff]
      %v1056 = vld [vmem:[%s633 + $0x8] sm:$0xff]
      %v1057 = vld [vmem:[%s633 + $0x10] sm:$0xff]
      %v1058 = vld [vmem:[%s633 + $0x18] sm:$0xff]
      %v1059 = vld [vmem:[%s633 + $0x20] sm:$0xff]
      %v1060 = vld [vmem:[%s633 + $0x28] sm:$0xff]
      %v1061 = vld [vmem:[%s633 + $0x30] sm:$0xff]
      %v1062 = vld [vmem:[%s633 + $0x38] sm:$0xff]
      %v1063 = vld [vmem:[%s633 + $0x40] sm:$0xff]
      %v1064 = vld [vmem:[%s633 + $0x48] sm:$0xff]
      %v1065 = vld [vmem:[%s633 + $0x50] sm:$0xff]
      %v1066 = vld [vmem:[%s633 + $0x58] sm:$0xff]
      %v1067 = vld [vmem:[%s633 + $0x60] sm:$0xff]
      %v1068 = vld [vmem:[%s633 + $0x68] sm:$0xff]
      %v1069 = vld [vmem:[%s633 + $0x70] sm:$0xff]
      %v1070 = vld [vmem:[%s633 + $0x78] sm:$0xff]
      %v1071 = vld [vmem:[%s633 + $0x80] sm:$0xff]
      %v1072 = vld [vmem:[%s633 + $0x88] sm:$0xff]
      %v1073 = vld [vmem:[%s633 + $0x90] sm:$0xff]
      %v1074 = vld [vmem:[%s633 + $0x98] sm:$0xff]
      %v1075 = vld [vmem:[%s633 + $0xa0] sm:$0xff]
      %v1076 = vld [vmem:[%s633 + $0xa8] sm:$0xff]
      %v1077 = vld [vmem:[%s633 + $0xb0] sm:$0xff]
      %v1078 = vld [vmem:[%s633 + $0xb8] sm:$0xff]
      %v1079 = vld [vmem:[%s633 + $0xc0] sm:$0xff]
      %v1080 = vld [vmem:[%s633 + $0xc8] sm:$0xff]
      %v1081 = vld [vmem:[%s633 + $0xd0] sm:$0xff]
      %v1082 = vld [vmem:[%s633 + $0xd8] sm:$0xff]
      %v1083 = vld [vmem:[%s633 + $0xe0] sm:$0xff]
      %v1084 = vld [vmem:[%s633 + $0xe8] sm:$0xff]
      %v1085 = vld [vmem:[%s633 + $0xf0] sm:$0xff]
      %v1086 = vld [vmem:[%s633 + $0xf8] sm:$0xff]
      %v1087 = vld [vmem:[%s633 + $0x100] sm:$0xff]
      %v1088 = vld [vmem:[%s633 + $0x108] sm:$0xff]
      %v1089 = vld [vmem:[%s633 + $0x110] sm:$0xff]
      %v1090 = vld [vmem:[%s633 + $0x118] sm:$0xff]
      %v1091 = vld [vmem:[%s633 + $0x120] sm:$0xff]
      %v1092 = vld [vmem:[%s633 + $0x128] sm:$0xff]
      %v1093 = vld [vmem:[%s633 + $0x130] sm:$0xff]
      %v1094 = vld [vmem:[%s633 + $0x138] sm:$0xff]
      %v1095 = vld [vmem:[%s633 + $0x140] sm:$0xff]
      %v1096 = vld [vmem:[%s633 + $0x148] sm:$0xff]
      %v1097 = vld [vmem:[%s633 + $0x150] sm:$0xff]
      %v1098 = vld [vmem:[%s633 + $0x158] sm:$0xff]
      %v1099 = vld [vmem:[%s633 + $0x160] sm:$0xff]
      %v1100 = vld [vmem:[%s633 + $0x168] sm:$0xff]
      %v1101 = vld [vmem:[%s633 + $0x170] sm:$0xff]
      %v1102 = vld [vmem:[%s633 + $0x178] sm:$0xff]
      %v1103 = vld [vmem:[%s633 + $0x180] sm:$0xff]
      %v1104 = vld [vmem:[%s633 + $0x188] sm:$0xff]
      %v1105 = vld [vmem:[%s633 + $0x190] sm:$0xff]
      %v1106 = vld [vmem:[%s633 + $0x198] sm:$0xff]
      %v1107 = vld [vmem:[%s633 + $0x1a0] sm:$0xff]
      %v1108 = vld [vmem:[%s633 + $0x1a8] sm:$0xff]
      %v1109 = vld [vmem:[%s633 + $0x1b0] sm:$0xff]
      %v1110 = vld [vmem:[%s633 + $0x1b8] sm:$0xff]
      %v1111 = vld [vmem:[%s633 + $0x1c0] sm:$0xff]
      %v1112 = vld [vmem:[%s633 + $0x1c8] sm:$0xff]
      %v1113 = vld [vmem:[%s633 + $0x1d0] sm:$0xff]
      %v1114 = vld [vmem:[%s633 + $0x1d8] sm:$0xff]
      %v1115 = vld [vmem:[%s633 + $0x1e0] sm:$0xff]
      %v1116 = vld [vmem:[%s633 + $0x1e8] sm:$0xff]
      %v1117 = vld [vmem:[%s633 + $0x1f0] sm:$0xff]
      %v1118 = vld [vmem:[%s633 + $0x1f8] sm:$0xff]
      %v1119 = vld [vmem:[%s633 + $0x200] sm:$0xff]
      %v1120 = vld [vmem:[%s633 + $0x208] sm:$0xff]
      %v1121 = vld [vmem:[%s633 + $0x210] sm:$0xff]
      %v1122 = vld [vmem:[%s633 + $0x218] sm:$0xff]
      %v1123 = vld [vmem:[%s633 + $0x220] sm:$0xff]
      %v1124 = vld [vmem:[%s633 + $0x228] sm:$0xff]
      %v1125 = vld [vmem:[%s633 + $0x230] sm:$0xff]
      %v1126 = vld [vmem:[%s633 + $0x238] sm:$0xff]
      %v1127 = vpack.c.bf16 %v1056, %v1055
      %v1128 = vpack.c.bf16 %v1058, %v1057
      %v1129 = vpack.c.bf16 %v1060, %v1059
      %v1130 = vpack.c.bf16 %v1062, %v1061
      %v1131 = vpack.c.bf16 %v1064, %v1063
      %v1132 = vpack.c.bf16 %v1066, %v1065
      %v1133 = vpack.c.bf16 %v1068, %v1067
      %v1134 = vpack.c.bf16 %v1070, %v1069
      %v1135 = vpack.c.bf16 %v1072, %v1071
      %v1136 = vpack.c.bf16 %v1074, %v1073
      %v1137 = vpack.c.bf16 %v1076, %v1075
      %v1138 = vpack.c.bf16 %v1078, %v1077
      %v1139 = vpack.c.bf16 %v1080, %v1079
      %v1140 = vpack.c.bf16 %v1082, %v1081
      %v1141 = vpack.c.bf16 %v1084, %v1083
      %v1142 = vpack.c.bf16 %v1086, %v1085
      %v1143 = vpack.c.bf16 %v1088, %v1087
      %v1144 = vpack.c.bf16 %v1090, %v1089
      %v1145 = vpack.c.bf16 %v1092, %v1091
      %v1146 = vpack.c.bf16 %v1094, %v1093
      %v1147 = vpack.c.bf16 %v1096, %v1095
      %v1148 = vpack.c.bf16 %v1098, %v1097
      %v1149 = vpack.c.bf16 %v1100, %v1099
      %v1150 = vpack.c.bf16 %v1102, %v1101
      %v1151 = vpack.c.bf16 %v1104, %v1103
      %v1152 = vpack.c.bf16 %v1106, %v1105
      %v1153 = vpack.c.bf16 %v1108, %v1107
      %v1154 = vpack.c.bf16 %v1110, %v1109
      %v1155 = vpack.c.bf16 %v1112, %v1111
      %v1156 = vpack.c.bf16 %v1114, %v1113
      %v1157 = vpack.c.bf16 %v1116, %v1115
      %v1158 = vpack.c.bf16 %v1118, %v1117
      %v1159 = vpack.c.bf16 %v1120, %v1119
      %v1160 = vpack.c.bf16 %v1122, %v1121
      %v1161 = vpack.c.bf16 %v1124, %v1123
      %v1162 = vpack.c.bf16 %v1126, %v1125
      %v1163 = vpack.c.bf16 %v1048, %v1047
      %v1164 = vpack.c.bf16 %v1050, %v1049
      %v1165 = vpack.c.bf16 %v1052, %v1051
      %v1166 = vpack.c.bf16 %v1054, %v1053
      %v1168 = vsel %vm953, %v1127, 0
      %v1171 = vsel %vm953, %v1128, 0
      %v1174 = vsel %vm953, %v1129, 0
      %v1177 = vsel %vm953, %v1130, 0
      %v1180 = vsel %vm953, %v1131, 0
      %v1183 = vsel %vm953, %v1132, 0
      %v1186 = vsel %vm953, %v1133, 0
      %v1189 = vsel %vm953, %v1134, 0
      %v1192 = vsel %vm953, %v1135, 0
      %v1195 = vsel %vm953, %v1136, 0
      %v1198 = vsel %vm953, %v1137, 0
      %v1201 = vsel %vm953, %v1138, 0
      %v1204 = vsel %vm953, %v1139, 0
      %v1207 = vsel %vm953, %v1140, 0
      %v1210 = vsel %vm953, %v1141, 0
      %v1213 = vsel %vm953, %v1142, 0
      %v1216 = vsel %vm953, %v1143, 0
      %v1219 = vsel %vm953, %v1144, 0
      %v1222 = vsel %vm953, %v1145, 0
      %v1225 = vsel %vm953, %v1146, 0
      %v1228 = vsel %vm953, %v1147, 0
      %v1231 = vsel %vm953, %v1148, 0
      %v1234 = vsel %vm953, %v1149, 0
      %v1237 = vsel %vm953, %v1150, 0
      %v1240 = vsel %vm953, %v1151, 0
      %v1243 = vsel %vm953, %v1152, 0
      %v1246 = vsel %vm953, %v1153, 0
      %v1249 = vsel %vm953, %v1154, 0
      %v1252 = vsel %vm953, %v1155, 0
      %v1255 = vsel %vm953, %v1156, 0
      %v1258 = vsel %vm953, %v1157, 0
      %v1261 = vsel %vm953, %v1158, 0
      %v1264 = vsel %vm953, %v1159, 0
      %v1267 = vsel %vm953, %v1160, 0
      %v1270 = vsel %vm953, %v1161, 0
      %v1273 = vsel %vm953, %v1162, 0
      %1275 = vmatprep.subr.bf16.mxu0 0
      %1276 = vmatpush1.bf16.msra.mxu0 0
      %1277 = vmatprep.subr.bf16.mxu0 0
      %1278 = vmatpush1.bf16.msra.mxu0 0
      %1279 = vmatprep.subr.bf16.mxu0 0
      %1280 = vmatpush1.bf16.msra.mxu0 0
      %1281 = vmatprep.subr.bf16.mxu0 0
      %1282 = vmatpush1.bf16.msra.mxu0 0
      %1283 = vmatprep.subr.bf16.mxu0 0
      %1284 = vmatpush1.bf16.msra.mxu0 %v1166
      %1285 = vmatprep.subr.bf16.mxu0 0
      %1286 = vmatpush1.bf16.msra.mxu0 %v1165
      %1287 = vmatprep.subr.bf16.mxu0 0
      %1288 = vmatpush1.bf16.msra.mxu0 %v1164
      %1289 = vmatprep.subr.bf16.mxu0 0
      %1290 = vmatpush1.bf16.msra.mxu0 %v1163
      %1291 = vmatprep.subr.bf16.mxu0 0
      %1292 = vmatpush2.bf16.msra.mxu0 0
      %1293 = vmatprep.subr.bf16.mxu0 0
      %1294 = vmatpush2.bf16.msra.mxu0 0
      %1295 = vmatprep.subr.bf16.mxu0 0
      %1296 = vmatpush2.bf16.msra.mxu0 0
      %1297 = vmatprep.subr.bf16.mxu0 0
      %1298 = vmatpush2.bf16.msra.mxu0 0
      %1299 = vmatprep.subr.bf16.mxu0 0
      %1300 = vmatpush2.bf16.msra.mxu0 0
      %1301 = vmatprep.subr.bf16.mxu0 0
      %1302 = vmatpush2.bf16.msra.mxu0 0
      %1303 = vmatprep.subr.bf16.mxu0 0
      %1304 = vmatpush2.bf16.msra.mxu0 0
      %1305 = vmatprep.subr.bf16.mxu0 0
      %1306 = vmatpush2.bf16.msra.mxu0 0
      %1307 = vmatprep.mubr.bf16.mxu0 0
      %1308 = vmatmul.mubr.bf16.gmra.mxu0 %v1168
      %v1309 = vpop.f32.mrf.mxu0
      %v1310 = vadd.f32 0.0, %v1309
      %v1311 = vpop.f32.mrf.mxu0
      %v1312 = vpop.f32.mrf.mxu0
      %v1313 = vadd.f32 0.0, %v1312
      %v1314 = vpop.f32.mrf.mxu0
      %1315 = vmatprep.mubr.bf16.mxu0 0
      %1316 = vmatmul.mubr.bf16.gmra.mxu0 %v1171
      %v1317 = vpop.f32.mrf.mxu0
      %v1318 = vadd.f32 0.0, %v1317
      %v1319 = vpop.f32.mrf.mxu0
      %v1320 = vpop.f32.mrf.mxu0
      %v1321 = vadd.f32 0.0, %v1320
      %v1322 = vpop.f32.mrf.mxu0
      %1323 = vmatprep.mubr.bf16.mxu0 0
      %1324 = vmatmul.mubr.bf16.gmra.mxu0 %v1174
      %v1325 = vpop.f32.mrf.mxu0
      %v1326 = vadd.f32 0.0, %v1325
      %v1327 = vpop.f32.mrf.mxu0
      %v1328 = vpop.f32.mrf.mxu0
      %v1329 = vadd.f32 0.0, %v1328
      %v1330 = vpop.f32.mrf.mxu0
      %1331 = vmatprep.mubr.bf16.mxu0 0
      %1332 = vmatmul.mubr.bf16.gmra.mxu0 %v1177
      %v1333 = vpop.f32.mrf.mxu0
      %v1334 = vadd.f32 0.0, %v1333
      %v1335 = vpop.f32.mrf.mxu0
      %v1336 = vpop.f32.mrf.mxu0
      %v1337 = vadd.f32 0.0, %v1336
      %v1338 = vpop.f32.mrf.mxu0
      %1339 = vmatprep.mubr.bf16.mxu0 0
      %1340 = vmatmul.mubr.bf16.gmra.mxu0 %v1180
      %v1341 = vpop.f32.mrf.mxu0
      %v1342 = vadd.f32 0.0, %v1341
      %v1343 = vpop.f32.mrf.mxu0
      %v1344 = vpop.f32.mrf.mxu0
      %v1345 = vadd.f32 0.0, %v1344
      %v1346 = vpop.f32.mrf.mxu0
      %1347 = vmatprep.mubr.bf16.mxu0 0
      %1348 = vmatmul.mubr.bf16.gmra.mxu0 %v1183
      %v1349 = vpop.f32.mrf.mxu0
      %v1350 = vadd.f32 0.0, %v1349
      %v1351 = vpop.f32.mrf.mxu0
      %v1352 = vpop.f32.mrf.mxu0
      %v1353 = vadd.f32 0.0, %v1352
      %v1354 = vpop.f32.mrf.mxu0
      %1355 = vmatprep.mubr.bf16.mxu0 0
      %1356 = vmatmul.mubr.bf16.gmra.mxu0 %v1186
      %v1357 = vpop.f32.mrf.mxu0
      %v1358 = vadd.f32 0.0, %v1357
      %v1359 = vpop.f32.mrf.mxu0
      %v1360 = vpop.f32.mrf.mxu0
      %v1361 = vadd.f32 0.0, %v1360
      %v1362 = vpop.f32.mrf.mxu0
      %1363 = vmatprep.mubr.bf16.mxu0 0
      %1364 = vmatmul.mubr.bf16.gmra.mxu0 %v1189
      %v1365 = vpop.f32.mrf.mxu0
      %v1366 = vadd.f32 0.0, %v1365
      %v1367 = vpop.f32.mrf.mxu0
      %v1368 = vpop.f32.mrf.mxu0
      %v1369 = vadd.f32 0.0, %v1368
      %v1370 = vpop.f32.mrf.mxu0
      %1371 = vmatprep.mubr.bf16.mxu0 0
      %1372 = vmatmul.mubr.bf16.gmra.mxu0 %v1192
      %v1373 = vpop.f32.mrf.mxu0
      %v1374 = vadd.f32 0.0, %v1373
      %v1375 = vpop.f32.mrf.mxu0
      %v1376 = vpop.f32.mrf.mxu0
      %v1377 = vadd.f32 0.0, %v1376
      %v1378 = vpop.f32.mrf.mxu0
      %1379 = vmatprep.mubr.bf16.mxu0 0
      %1380 = vmatmul.mubr.bf16.gmra.mxu0 %v1195
      %v1381 = vpop.f32.mrf.mxu0
      %v1382 = vadd.f32 0.0, %v1381
      %v1383 = vpop.f32.mrf.mxu0
      %v1384 = vpop.f32.mrf.mxu0
      %v1385 = vadd.f32 0.0, %v1384
      %v1386 = vpop.f32.mrf.mxu0
      %1387 = vmatprep.mubr.bf16.mxu0 0
      %1388 = vmatmul.mubr.bf16.gmra.mxu0 %v1198
      %v1389 = vpop.f32.mrf.mxu0
      %v1390 = vadd.f32 0.0, %v1389
      %v1391 = vpop.f32.mrf.mxu0
      %v1392 = vpop.f32.mrf.mxu0
      %v1393 = vadd.f32 0.0, %v1392
      %v1394 = vpop.f32.mrf.mxu0
      %1395 = vmatprep.mubr.bf16.mxu0 0
      %1396 = vmatmul.mubr.bf16.gmra.mxu0 %v1201
      %v1397 = vpop.f32.mrf.mxu0
      %v1398 = vadd.f32 0.0, %v1397
      %v1399 = vpop.f32.mrf.mxu0
      %v1400 = vpop.f32.mrf.mxu0
      %v1401 = vadd.f32 0.0, %v1400
      %v1402 = vpop.f32.mrf.mxu0
      %1403 = vmatprep.mubr.bf16.mxu0 0
      %1404 = vmatmul.mubr.bf16.gmra.mxu0 %v1204
      %v1405 = vpop.f32.mrf.mxu0
      %v1406 = vadd.f32 0.0, %v1405
      %v1407 = vpop.f32.mrf.mxu0
      %v1408 = vpop.f32.mrf.mxu0
      %v1409 = vadd.f32 0.0, %v1408
      %v1410 = vpop.f32.mrf.mxu0
      %1411 = vmatprep.mubr.bf16.mxu0 0
      %1412 = vmatmul.mubr.bf16.gmra.mxu0 %v1207
      %v1413 = vpop.f32.mrf.mxu0
      %v1414 = vadd.f32 0.0, %v1413
      %v1415 = vpop.f32.mrf.mxu0
      %v1416 = vpop.f32.mrf.mxu0
      %v1417 = vadd.f32 0.0, %v1416
      %v1418 = vpop.f32.mrf.mxu0
      %1419 = vmatprep.mubr.bf16.mxu0 0
      %1420 = vmatmul.mubr.bf16.gmra.mxu0 %v1210
      %v1421 = vpop.f32.mrf.mxu0
      %v1422 = vadd.f32 0.0, %v1421
      %v1423 = vpop.f32.mrf.mxu0
      %v1424 = vpop.f32.mrf.mxu0
      %v1425 = vadd.f32 0.0, %v1424
      %v1426 = vpop.f32.mrf.mxu0
      %1427 = vmatprep.mubr.bf16.mxu0 0
      %1428 = vmatmul.mubr.bf16.gmra.mxu0 %v1213
      %v1429 = vpop.f32.mrf.mxu0
      %v1430 = vadd.f32 0.0, %v1429
      %v1431 = vpop.f32.mrf.mxu0
      %v1432 = vpop.f32.mrf.mxu0
      %v1433 = vadd.f32 0.0, %v1432
      %v1434 = vpop.f32.mrf.mxu0
      %1435 = vmatprep.mubr.bf16.mxu0 0
      %1436 = vmatmul.mubr.bf16.gmra.mxu0 %v1216
      %v1437 = vpop.f32.mrf.mxu0
      %v1438 = vadd.f32 0.0, %v1437
      %v1439 = vpop.f32.mrf.mxu0
      %v1440 = vpop.f32.mrf.mxu0
      %v1441 = vadd.f32 0.0, %v1440
      %v1442 = vpop.f32.mrf.mxu0
      %1443 = vmatprep.mubr.bf16.mxu0 0
      %1444 = vmatmul.mubr.bf16.gmra.mxu0 %v1219
      %v1445 = vpop.f32.mrf.mxu0
      %v1446 = vadd.f32 0.0, %v1445
      %v1447 = vpop.f32.mrf.mxu0
      %v1448 = vpop.f32.mrf.mxu0
      %v1449 = vadd.f32 0.0, %v1448
      %v1450 = vpop.f32.mrf.mxu0
      %1451 = vmatprep.mubr.bf16.mxu0 0
      %1452 = vmatmul.mubr.bf16.gmra.mxu0 %v1222
      %v1453 = vpop.f32.mrf.mxu0
      %v1454 = vadd.f32 0.0, %v1453
      %v1455 = vpop.f32.mrf.mxu0
      %v1456 = vpop.f32.mrf.mxu0
      %v1457 = vadd.f32 0.0, %v1456
      %v1458 = vpop.f32.mrf.mxu0
      %1459 = vmatprep.mubr.bf16.mxu0 0
      %1460 = vmatmul.mubr.bf16.gmra.mxu0 %v1225
      %v1461 = vpop.f32.mrf.mxu0
      %v1462 = vadd.f32 0.0, %v1461
      %v1463 = vpop.f32.mrf.mxu0
      %v1464 = vpop.f32.mrf.mxu0
      %v1465 = vadd.f32 0.0, %v1464
      %v1466 = vpop.f32.mrf.mxu0
      %1467 = vmatprep.mubr.bf16.mxu0 0
      %1468 = vmatmul.mubr.bf16.gmra.mxu0 %v1228
      %v1469 = vpop.f32.mrf.mxu0
      %v1470 = vadd.f32 0.0, %v1469
      %v1471 = vpop.f32.mrf.mxu0
      %v1472 = vpop.f32.mrf.mxu0
      %v1473 = vadd.f32 0.0, %v1472
      %v1474 = vpop.f32.mrf.mxu0
      %1475 = vmatprep.mubr.bf16.mxu0 0
      %1476 = vmatmul.mubr.bf16.gmra.mxu0 %v1231
      %v1477 = vpop.f32.mrf.mxu0
      %v1478 = vadd.f32 0.0, %v1477
      %v1479 = vpop.f32.mrf.mxu0
      %v1480 = vpop.f32.mrf.mxu0
      %v1481 = vadd.f32 0.0, %v1480
      %v1482 = vpop.f32.mrf.mxu0
      %1483 = vmatprep.mubr.bf16.mxu0 0
      %1484 = vmatmul.mubr.bf16.gmra.mxu0 %v1234
      %v1485 = vpop.f32.mrf.mxu0
      %v1486 = vadd.f32 0.0, %v1485
      %v1487 = vpop.f32.mrf.mxu0
      %v1488 = vpop.f32.mrf.mxu0
      %v1489 = vadd.f32 0.0, %v1488
      %v1490 = vpop.f32.mrf.mxu0
      %1491 = vmatprep.mubr.bf16.mxu0 0
      %1492 = vmatmul.mubr.bf16.gmra.mxu0 %v1237
      %v1493 = vpop.f32.mrf.mxu0
      %v1494 = vadd.f32 0.0, %v1493
      %v1495 = vpop.f32.mrf.mxu0
      %v1496 = vpop.f32.mrf.mxu0
      %v1497 = vadd.f32 0.0, %v1496
      %v1498 = vpop.f32.mrf.mxu0
      %1499 = vmatprep.mubr.bf16.mxu0 0
      %1500 = vmatmul.mubr.bf16.gmra.mxu0 %v1240
      %v1501 = vpop.f32.mrf.mxu0
      %v1502 = vadd.f32 0.0, %v1501
      %v1503 = vpop.f32.mrf.mxu0
      %v1504 = vpop.f32.mrf.mxu0
      %v1505 = vadd.f32 0.0, %v1504
      %v1506 = vpop.f32.mrf.mxu0
      %1507 = vmatprep.mubr.bf16.mxu0 0
      %1508 = vmatmul.mubr.bf16.gmra.mxu0 %v1243
      %v1509 = vpop.f32.mrf.mxu0
      %v1510 = vadd.f32 0.0, %v1509
      %v1511 = vpop.f32.mrf.mxu0
      %v1512 = vpop.f32.mrf.mxu0
      %v1513 = vadd.f32 0.0, %v1512
      %v1514 = vpop.f32.mrf.mxu0
      %1515 = vmatprep.mubr.bf16.mxu0 0
      %1516 = vmatmul.mubr.bf16.gmra.mxu0 %v1246
      %v1517 = vpop.f32.mrf.mxu0
      %v1518 = vadd.f32 0.0, %v1517
      %v1519 = vpop.f32.mrf.mxu0
      %v1520 = vpop.f32.mrf.mxu0
      %v1521 = vadd.f32 0.0, %v1520
      %v1522 = vpop.f32.mrf.mxu0
      %1523 = vmatprep.mubr.bf16.mxu0 0
      %1524 = vmatmul.mubr.bf16.gmra.mxu0 %v1249
      %v1525 = vpop.f32.mrf.mxu0
      %v1526 = vadd.f32 0.0, %v1525
      %v1527 = vpop.f32.mrf.mxu0
      %v1528 = vpop.f32.mrf.mxu0
      %v1529 = vadd.f32 0.0, %v1528
      %v1530 = vpop.f32.mrf.mxu0
      %1531 = vmatprep.mubr.bf16.mxu0 0
      %1532 = vmatmul.mubr.bf16.gmra.mxu0 %v1252
      %v1533 = vpop.f32.mrf.mxu0
      %v1534 = vadd.f32 0.0, %v1533
      %v1535 = vpop.f32.mrf.mxu0
      %v1536 = vpop.f32.mrf.mxu0
      %v1537 = vadd.f32 0.0, %v1536
      %v1538 = vpop.f32.mrf.mxu0
      %1539 = vmatprep.mubr.bf16.mxu0 0
      %1540 = vmatmul.mubr.bf16.gmra.mxu0 %v1255
      %v1541 = vpop.f32.mrf.mxu0
      %v1542 = vadd.f32 0.0, %v1541
      %v1543 = vpop.f32.mrf.mxu0
      %v1544 = vpop.f32.mrf.mxu0
      %v1545 = vadd.f32 0.0, %v1544
      %v1546 = vpop.f32.mrf.mxu0
      %1547 = vmatprep.mubr.bf16.mxu0 0
      %1548 = vmatmul.mubr.bf16.gmra.mxu0 %v1258
      %v1549 = vpop.f32.mrf.mxu0
      %v1550 = vadd.f32 0.0, %v1549
      %v1551 = vpop.f32.mrf.mxu0
      %v1552 = vpop.f32.mrf.mxu0
      %v1553 = vadd.f32 0.0, %v1552
      %v1554 = vpop.f32.mrf.mxu0
      %1555 = vmatprep.mubr.bf16.mxu0 0
      %1556 = vmatmul.mubr.bf16.gmra.mxu0 %v1261
      %v1557 = vpop.f32.mrf.mxu0
      %v1558 = vadd.f32 0.0, %v1557
      %v1559 = vpop.f32.mrf.mxu0
      %v1560 = vpop.f32.mrf.mxu0
      %v1561 = vadd.f32 0.0, %v1560
      %v1562 = vpop.f32.mrf.mxu0
      %1563 = vmatprep.mubr.bf16.mxu0 0
      %1564 = vmatmul.mubr.bf16.gmra.mxu0 %v1264
      %v1565 = vpop.f32.mrf.mxu0
      %v1566 = vadd.f32 0.0, %v1565
      %v1567 = vpop.f32.mrf.mxu0
      %v1568 = vpop.f32.mrf.mxu0
      %v1569 = vadd.f32 0.0, %v1568
      %v1570 = vpop.f32.mrf.mxu0
      %1571 = vmatprep.mubr.bf16.mxu0 0
      %1572 = vmatmul.mubr.bf16.gmra.mxu0 %v1267
      %v1573 = vpop.f32.mrf.mxu0
      %v1574 = vadd.f32 0.0, %v1573
      %v1575 = vpop.f32.mrf.mxu0
      %v1576 = vpop.f32.mrf.mxu0
      %v1577 = vadd.f32 0.0, %v1576
      %v1578 = vpop.f32.mrf.mxu0
      %1579 = vmatprep.mubr.bf16.mxu0 0
      %1580 = vmatmul.mubr.bf16.gmra.mxu0 %v1270
      %v1581 = vpop.f32.mrf.mxu0
      %v1582 = vadd.f32 0.0, %v1581
      %v1583 = vpop.f32.mrf.mxu0
      %v1584 = vpop.f32.mrf.mxu0
      %v1585 = vadd.f32 0.0, %v1584
      %v1586 = vpop.f32.mrf.mxu0
      %1587 = vmatprep.mubr.bf16.mxu0 0
      %1588 = vmatmul.mubr.bf16.gmra.mxu0 %v1273
      %v1589 = vpop.f32.mrf.mxu0
      %v1590 = vadd.f32 0.0, %v1589
      %v1591 = vpop.f32.mrf.mxu0
      %v1592 = vpop.f32.mrf.mxu0
      %v1593 = vadd.f32 0.0, %v1592
      %v1594 = vpop.f32.mrf.mxu0
      %1595 = vdwg.mxu0
      %v1596 = vpack.c.bf16 %v698, %v697
      %v1597 = vpack.c.bf16 %v700, %v699
      %v1598 = vpack.c.bf16 %v702, %v701
      %v1599 = vpack.c.bf16 %v704, %v703
      %1600 = vmatprep.subr.bf16.mxu0 0
      %1601 = vmatpush1.bf16.msra.mxu0 %v736
      %1602 = vmatprep.subr.bf16.mxu0 0
      %1603 = vmatpush1.bf16.msra.mxu0 %v735
      %1604 = vmatprep.subr.bf16.mxu0 0
      %1605 = vmatpush1.bf16.msra.mxu0 %v734
      %1606 = vmatprep.subr.bf16.mxu0 0
      %1607 = vmatpush1.bf16.msra.mxu0 %v733
      %1608 = vmatprep.subr.bf16.mxu0 0
      %1609 = vmatpush1.bf16.msra.mxu0 %v732
      %1610 = vmatprep.subr.bf16.mxu0 0
      %1611 = vmatpush1.bf16.msra.mxu0 %v731
      %1612 = vmatprep.subr.bf16.mxu0 0
      %1613 = vmatpush1.bf16.msra.mxu0 %v730
      %1614 = vmatprep.subr.bf16.mxu0 0
      %1615 = vmatpush1.bf16.msra.mxu0 %v729
      %1616 = vmatprep.subr.bf16.mxu0 0
      %1617 = vmatpush2.bf16.msra.mxu0 0
      %1618 = vmatprep.subr.bf16.mxu0 0
      %1619 = vmatpush2.bf16.msra.mxu0 0
      %1620 = vmatprep.subr.bf16.mxu0 0
      %1621 = vmatpush2.bf16.msra.mxu0 0
      %1622 = vmatprep.subr.bf16.mxu0 0
      %1623 = vmatpush2.bf16.msra.mxu0 0
      %1624 = vmatprep.subr.bf16.mxu0 0
      %1625 = vmatpush2.bf16.msra.mxu0 0
      %1626 = vmatprep.subr.bf16.mxu0 0
      %1627 = vmatpush2.bf16.msra.mxu0 0
      %1628 = vmatprep.subr.bf16.mxu0 0
      %1629 = vmatpush2.bf16.msra.mxu0 0
      %1630 = vmatprep.subr.bf16.mxu0 0
      %1631 = vmatpush2.bf16.msra.mxu0 0
      %1632 = vmatprep.mubr.bf16.mxu0 0
      %1633 = vmatmul.mubr.bf16.gmra.mxu0 %v1596
      %v1634 = vpop.f32.mrf.mxu0
      %v1635 = vadd.f32 0.0, %v1634
      %v1636 = vpop.f32.mrf.mxu0
      %v1637 = vpop.f32.mrf.mxu0
      %v1638 = vadd.f32 0.0, %v1637
      %v1639 = vpop.f32.mrf.mxu0
      %1640 = vmatprep.mubr.bf16.mxu0 0
      %1641 = vmatmul.mubr.bf16.gmra.mxu0 %v1597
      %v1642 = vpop.f32.mrf.mxu0
      %v1643 = vadd.f32 0.0, %v1642
      %v1644 = vpop.f32.mrf.mxu0
      %v1645 = vpop.f32.mrf.mxu0
      %v1646 = vadd.f32 0.0, %v1645
      %v1647 = vpop.f32.mrf.mxu0
      %1648 = vmatprep.mubr.bf16.mxu0 0
      %1649 = vmatmul.mubr.bf16.gmra.mxu0 %v1598
      %v1650 = vpop.f32.mrf.mxu0
      %v1651 = vadd.f32 0.0, %v1650
      %v1652 = vpop.f32.mrf.mxu0
      %v1653 = vpop.f32.mrf.mxu0
      %v1654 = vadd.f32 0.0, %v1653
      %v1655 = vpop.f32.mrf.mxu0
      %1656 = vmatprep.mubr.bf16.mxu0 0
      %1657 = vmatmul.mubr.bf16.gmra.mxu0 %v1599
      %v1658 = vpop.f32.mrf.mxu0
      %v1659 = vadd.f32 0.0, %v1658
      %v1660 = vpop.f32.mrf.mxu0
      %v1661 = vpop.f32.mrf.mxu0
      %v1662 = vadd.f32 0.0, %v1661
      %v1663 = vpop.f32.mrf.mxu0
      %1664 = vdwg.mxu0
      %1665 = vmatprep.subr.bf16.mxu0 0
      %1666 = vmatpush1.bf16.msra.mxu0 %v761
      %1667 = vmatprep.subr.bf16.mxu0 0
      %1668 = vmatpush1.bf16.msra.mxu0 %v760
      %1669 = vmatprep.subr.bf16.mxu0 0
      %1670 = vmatpush1.bf16.msra.mxu0 %v759
      %1671 = vmatprep.subr.bf16.mxu0 0
      %1672 = vmatpush1.bf16.msra.mxu0 %v758
      %1673 = vmatprep.subr.bf16.mxu0 0
      %1674 = vmatpush1.bf16.msra.mxu0 %v757
      %1675 = vmatprep.subr.bf16.mxu0 0
      %1676 = vmatpush1.bf16.msra.mxu0 %v756
      %1677 = vmatprep.subr.bf16.mxu0 0
      %1678 = vmatpush1.bf16.msra.mxu0 %v755
      %1679 = vmatprep.subr.bf16.mxu0 0
      %1680 = vmatpush1.bf16.msra.mxu0 %v754
      %1681 = vmatprep.subr.bf16.mxu0 0
      %1682 = vmatpush2.bf16.msra.mxu0 0
      %1683 = vmatprep.subr.bf16.mxu0 0
      %1684 = vmatpush2.bf16.msra.mxu0 0
      %1685 = vmatprep.subr.bf16.mxu0 0
      %1686 = vmatpush2.bf16.msra.mxu0 0
      %1687 = vmatprep.subr.bf16.mxu0 0
      %1688 = vmatpush2.bf16.msra.mxu0 0
      %1689 = vmatprep.subr.bf16.mxu0 0
      %1690 = vmatpush2.bf16.msra.mxu0 0
      %1691 = vmatprep.subr.bf16.mxu0 0
      %1692 = vmatpush2.bf16.msra.mxu0 0
      %1693 = vmatprep.subr.bf16.mxu0 0
      %1694 = vmatpush2.bf16.msra.mxu0 0
      %1695 = vmatprep.subr.bf16.mxu0 0
      %1696 = vmatpush2.bf16.msra.mxu0 0
      %1697 = vmatprep.mubr.bf16.mxu0 0
      %1698 = vmatmul.mubr.bf16.gmra.mxu0 %v1596
      %v1699 = vpop.f32.mrf.mxu0
      %v1700 = vadd.f32 0.0, %v1699
      %v1701 = vpop.f32.mrf.mxu0
      %v1702 = vpop.f32.mrf.mxu0
      %v1703 = vadd.f32 0.0, %v1702
      %v1704 = vpop.f32.mrf.mxu0
      %1705 = vmatprep.mubr.bf16.mxu0 0
      %1706 = vmatmul.mubr.bf16.gmra.mxu0 %v1597
      %v1707 = vpop.f32.mrf.mxu0
      %v1708 = vadd.f32 0.0, %v1707
      %v1709 = vpop.f32.mrf.mxu0
      %v1710 = vpop.f32.mrf.mxu0
      %v1711 = vadd.f32 0.0, %v1710
      %v1712 = vpop.f32.mrf.mxu0
      %1713 = vmatprep.mubr.bf16.mxu0 0
      %1714 = vmatmul.mubr.bf16.gmra.mxu0 %v1598
      %v1715 = vpop.f32.mrf.mxu0
      %v1716 = vadd.f32 0.0, %v1715
      %v1717 = vpop.f32.mrf.mxu0
      %v1718 = vpop.f32.mrf.mxu0
      %v1719 = vadd.f32 0.0, %v1718
      %v1720 = vpop.f32.mrf.mxu0
      %1721 = vmatprep.mubr.bf16.mxu0 0
      %1722 = vmatmul.mubr.bf16.gmra.mxu0 %v1599
      %v1723 = vpop.f32.mrf.mxu0
      %v1724 = vadd.f32 0.0, %v1723
      %v1725 = vpop.f32.mrf.mxu0
      %v1726 = vpop.f32.mrf.mxu0
      %v1727 = vadd.f32 0.0, %v1726
      %v1728 = vpop.f32.mrf.mxu0
      %1729 = vdwg.mxu0
      %1730 = vmatprep.subr.bf16.mxu0 0
      %1731 = vmatpush1.bf16.msra.mxu0 %v786
      %1732 = vmatprep.subr.bf16.mxu0 0
      %1733 = vmatpush1.bf16.msra.mxu0 %v785
      %1734 = vmatprep.subr.bf16.mxu0 0
      %1735 = vmatpush1.bf16.msra.mxu0 %v784
      %1736 = vmatprep.subr.bf16.mxu0 0
      %1737 = vmatpush1.bf16.msra.mxu0 %v783
      %1738 = vmatprep.subr.bf16.mxu0 0
      %1739 = vmatpush1.bf16.msra.mxu0 %v782
      %1740 = vmatprep.subr.bf16.mxu0 0
      %1741 = vmatpush1.bf16.msra.mxu0 %v781
      %1742 = vmatprep.subr.bf16.mxu0 0
      %1743 = vmatpush1.bf16.msra.mxu0 %v780
      %1744 = vmatprep.subr.bf16.mxu0 0
      %1745 = vmatpush1.bf16.msra.mxu0 %v779
      %1746 = vmatprep.subr.bf16.mxu0 0
      %1747 = vmatpush2.bf16.msra.mxu0 0
      %1748 = vmatprep.subr.bf16.mxu0 0
      %1749 = vmatpush2.bf16.msra.mxu0 0
      %1750 = vmatprep.subr.bf16.mxu0 0
      %1751 = vmatpush2.bf16.msra.mxu0 0
      %1752 = vmatprep.subr.bf16.mxu0 0
      %1753 = vmatpush2.bf16.msra.mxu0 0
      %1754 = vmatprep.subr.bf16.mxu0 0
      %1755 = vmatpush2.bf16.msra.mxu0 0
      %1756 = vmatprep.subr.bf16.mxu0 0
      %1757 = vmatpush2.bf16.msra.mxu0 0
      %1758 = vmatprep.subr.bf16.mxu0 0
      %1759 = vmatpush2.bf16.msra.mxu0 0
      %1760 = vmatprep.subr.bf16.mxu0 0
      %1761 = vmatpush2.bf16.msra.mxu0 0
      %1762 = vmatprep.mubr.bf16.mxu0 0
      %1763 = vmatmul.mubr.bf16.gmra.mxu0 %v1596
      %v1764 = vpop.f32.mrf.mxu0
      %v1765 = vadd.f32 0.0, %v1764
      %v1766 = vpop.f32.mrf.mxu0
      %v1767 = vpop.f32.mrf.mxu0
      %v1768 = vadd.f32 0.0, %v1767
      %v1769 = vpop.f32.mrf.mxu0
      %1770 = vmatprep.mubr.bf16.mxu0 0
      %1771 = vmatmul.mubr.bf16.gmra.mxu0 %v1597
      %v1772 = vpop.f32.mrf.mxu0
      %v1773 = vadd.f32 0.0, %v1772
      %v1774 = vpop.f32.mrf.mxu0
      %v1775 = vpop.f32.mrf.mxu0
      %v1776 = vadd.f32 0.0, %v1775
      %v1777 = vpop.f32.mrf.mxu0
      %1778 = vmatprep.mubr.bf16.mxu0 0
      %1779 = vmatmul.mubr.bf16.gmra.mxu0 %v1598
      %v1780 = vpop.f32.mrf.mxu0
      %v1781 = vadd.f32 0.0, %v1780
      %v1782 = vpop.f32.mrf.mxu0
      %v1783 = vpop.f32.mrf.mxu0
      %v1784 = vadd.f32 0.0, %v1783
      %v1785 = vpop.f32.mrf.mxu0
      %1786 = vmatprep.mubr.bf16.mxu0 0
      %1787 = vmatmul.mubr.bf16.gmra.mxu0 %v1599
      %v1788 = vpop.f32.mrf.mxu0
      %v1789 = vadd.f32 0.0, %v1788
      %v1790 = vpop.f32.mrf.mxu0
      %v1791 = vpop.f32.mrf.mxu0
      %v1792 = vadd.f32 0.0, %v1791
      %v1793 = vpop.f32.mrf.mxu0
      %1794 = vdwg.mxu0
      %1795 = vmatprep.subr.bf16.mxu0 0
      %1796 = vmatpush1.bf16.msra.mxu0 %v811
      %1797 = vmatprep.subr.bf16.mxu0 0
      %1798 = vmatpush1.bf16.msra.mxu0 %v810
      %1799 = vmatprep.subr.bf16.mxu0 0
      %1800 = vmatpush1.bf16.msra.mxu0 %v809
      %1801 = vmatprep.subr.bf16.mxu0 0
      %1802 = vmatpush1.bf16.msra.mxu0 %v808
      %1803 = vmatprep.subr.bf16.mxu0 0
      %1804 = vmatpush1.bf16.msra.mxu0 %v807
      %1805 = vmatprep.subr.bf16.mxu0 0
      %1806 = vmatpush1.bf16.msra.mxu0 %v806
      %1807 = vmatprep.subr.bf16.mxu0 0
      %1808 = vmatpush1.bf16.msra.mxu0 %v805
      %1809 = vmatprep.subr.bf16.mxu0 0
      %1810 = vmatpush1.bf16.msra.mxu0 %v804
      %1811 = vmatprep.subr.bf16.mxu0 0
      %1812 = vmatpush2.bf16.msra.mxu0 0
      %1813 = vmatprep.subr.bf16.mxu0 0
      %1814 = vmatpush2.bf16.msra.mxu0 0
      %1815 = vmatprep.subr.bf16.mxu0 0
      %1816 = vmatpush2.bf16.msra.mxu0 0
      %1817 = vmatprep.subr.bf16.mxu0 0
      %1818 = vmatpush2.bf16.msra.mxu0 0
      %1819 = vmatprep.subr.bf16.mxu0 0
      %1820 = vmatpush2.bf16.msra.mxu0 0
      %1821 = vmatprep.subr.bf16.mxu0 0
      %1822 = vmatpush2.bf16.msra.mxu0 0
      %1823 = vmatprep.subr.bf16.mxu0 0
      %1824 = vmatpush2.bf16.msra.mxu0 0
      %1825 = vmatprep.subr.bf16.mxu0 0
      %1826 = vmatpush2.bf16.msra.mxu0 0
      %1827 = vmatprep.mubr.bf16.mxu0 0
      %1828 = vmatmul.mubr.bf16.gmra.mxu0 %v1596
      %v1829 = vpop.f32.mrf.mxu0
      %v1830 = vadd.f32 0.0, %v1829
      %v1831 = vpop.f32.mrf.mxu0
      %v1832 = vpop.f32.mrf.mxu0
      %v1833 = vadd.f32 0.0, %v1832
      %v1834 = vpop.f32.mrf.mxu0
      %1835 = vmatprep.mubr.bf16.mxu0 0
      %1836 = vmatmul.mubr.bf16.gmra.mxu0 %v1597
      %v1837 = vpop.f32.mrf.mxu0
      %v1838 = vadd.f32 0.0, %v1837
      %v1839 = vpop.f32.mrf.mxu0
      %v1840 = vpop.f32.mrf.mxu0
      %v1841 = vadd.f32 0.0, %v1840
      %v1842 = vpop.f32.mrf.mxu0
      %1843 = vmatprep.mubr.bf16.mxu0 0
      %1844 = vmatmul.mubr.bf16.gmra.mxu0 %v1598
      %v1845 = vpop.f32.mrf.mxu0
      %v1846 = vadd.f32 0.0, %v1845
      %v1847 = vpop.f32.mrf.mxu0
      %v1848 = vpop.f32.mrf.mxu0
      %v1849 = vadd.f32 0.0, %v1848
      %v1850 = vpop.f32.mrf.mxu0
      %1851 = vmatprep.mubr.bf16.mxu0 0
      %1852 = vmatmul.mubr.bf16.gmra.mxu0 %v1599
      %v1853 = vpop.f32.mrf.mxu0
      %v1854 = vadd.f32 0.0, %v1853
      %v1855 = vpop.f32.mrf.mxu0
      %v1856 = vpop.f32.mrf.mxu0
      %v1857 = vadd.f32 0.0, %v1856
      %v1858 = vpop.f32.mrf.mxu0
      %1859 = vdwg.mxu0
      %1860 = vmatprep.subr.bf16.mxu0 0
      %1861 = vmatpush1.bf16.msra.mxu0 %v836
      %1862 = vmatprep.subr.bf16.mxu0 0
      %1863 = vmatpush1.bf16.msra.mxu0 %v835
      %1864 = vmatprep.subr.bf16.mxu0 0
      %1865 = vmatpush1.bf16.msra.mxu0 %v834
      %1866 = vmatprep.subr.bf16.mxu0 0
      %1867 = vmatpush1.bf16.msra.mxu0 %v833
      %1868 = vmatprep.subr.bf16.mxu0 0
      %1869 = vmatpush1.bf16.msra.mxu0 %v832
      %1870 = vmatprep.subr.bf16.mxu0 0
      %1871 = vmatpush1.bf16.msra.mxu0 %v831
      %1872 = vmatprep.subr.bf16.mxu0 0
      %1873 = vmatpush1.bf16.msra.mxu0 %v830
      %1874 = vmatprep.subr.bf16.mxu0 0
      %1875 = vmatpush1.bf16.msra.mxu0 %v829
      %1876 = vmatprep.subr.bf16.mxu0 0
      %1877 = vmatpush2.bf16.msra.mxu0 0
      %1878 = vmatprep.subr.bf16.mxu0 0
      %1879 = vmatpush2.bf16.msra.mxu0 0
      %1880 = vmatprep.subr.bf16.mxu0 0
      %1881 = vmatpush2.bf16.msra.mxu0 0
      %1882 = vmatprep.subr.bf16.mxu0 0
      %1883 = vmatpush2.bf16.msra.mxu0 0
      %1884 = vmatprep.subr.bf16.mxu0 0
      %1885 = vmatpush2.bf16.msra.mxu0 0
      %1886 = vmatprep.subr.bf16.mxu0 0
      %1887 = vmatpush2.bf16.msra.mxu0 0
      %1888 = vmatprep.subr.bf16.mxu0 0
      %1889 = vmatpush2.bf16.msra.mxu0 0
      %1890 = vmatprep.subr.bf16.mxu0 0
      %1891 = vmatpush2.bf16.msra.mxu0 0
      %1892 = vmatprep.mubr.bf16.mxu0 0
      %1893 = vmatmul.mubr.bf16.gmra.mxu0 %v1596
      %v1894 = vpop.f32.mrf.mxu0
      %v1895 = vadd.f32 0.0, %v1894
      %v1896 = vpop.f32.mrf.mxu0
      %v1897 = vpop.f32.mrf.mxu0
      %v1898 = vadd.f32 0.0, %v1897
      %v1899 = vpop.f32.mrf.mxu0
      %1900 = vmatprep.mubr.bf16.mxu0 0
      %1901 = vmatmul.mubr.bf16.gmra.mxu0 %v1597
      %v1902 = vpop.f32.mrf.mxu0
      %v1903 = vadd.f32 0.0, %v1902
      %v1904 = vpop.f32.mrf.mxu0
      %v1905 = vpop.f32.mrf.mxu0
      %v1906 = vadd.f32 0.0, %v1905
      %v1907 = vpop.f32.mrf.mxu0
      %1908 = vmatprep.mubr.bf16.mxu0 0
      %1909 = vmatmul.mubr.bf16.gmra.mxu0 %v1598
      %v1910 = vpop.f32.mrf.mxu0
      %v1911 = vadd.f32 0.0, %v1910
      %v1912 = vpop.f32.mrf.mxu0
      %v1913 = vpop.f32.mrf.mxu0
      %v1914 = vadd.f32 0.0, %v1913
      %v1915 = vpop.f32.mrf.mxu0
      %1916 = vmatprep.mubr.bf16.mxu0 0
      %1917 = vmatmul.mubr.bf16.gmra.mxu0 %v1599
      %v1918 = vpop.f32.mrf.mxu0
      %v1919 = vadd.f32 0.0, %v1918
      %v1920 = vpop.f32.mrf.mxu0
      %v1921 = vpop.f32.mrf.mxu0
      %v1922 = vadd.f32 0.0, %v1921
      %v1923 = vpop.f32.mrf.mxu0
      %1924 = vdwg.mxu0
      %1925 = vmatprep.subr.bf16.mxu0 0
      %1926 = vmatpush1.bf16.msra.mxu0 %v861
      %1927 = vmatprep.subr.bf16.mxu0 0
      %1928 = vmatpush1.bf16.msra.mxu0 %v860
      %1929 = vmatprep.subr.bf16.mxu0 0
      %1930 = vmatpush1.bf16.msra.mxu0 %v859
      %1931 = vmatprep.subr.bf16.mxu0 0
      %1932 = vmatpush1.bf16.msra.mxu0 %v858
      %1933 = vmatprep.subr.bf16.mxu0 0
      %1934 = vmatpush1.bf16.msra.mxu0 %v857
      %1935 = vmatprep.subr.bf16.mxu0 0
      %1936 = vmatpush1.bf16.msra.mxu0 %v856
      %1937 = vmatprep.subr.bf16.mxu0 0
      %1938 = vmatpush1.bf16.msra.mxu0 %v855
      %1939 = vmatprep.subr.bf16.mxu0 0
      %1940 = vmatpush1.bf16.msra.mxu0 %v854
      %1941 = vmatprep.subr.bf16.mxu0 0
      %1942 = vmatpush2.bf16.msra.mxu0 0
      %1943 = vmatprep.subr.bf16.mxu0 0
      %1944 = vmatpush2.bf16.msra.mxu0 0
      %1945 = vmatprep.subr.bf16.mxu0 0
      %1946 = vmatpush2.bf16.msra.mxu0 0
      %1947 = vmatprep.subr.bf16.mxu0 0
      %1948 = vmatpush2.bf16.msra.mxu0 0
      %1949 = vmatprep.subr.bf16.mxu0 0
      %1950 = vmatpush2.bf16.msra.mxu0 0
      %1951 = vmatprep.subr.bf16.mxu0 0
      %1952 = vmatpush2.bf16.msra.mxu0 0
      %1953 = vmatprep.subr.bf16.mxu0 0
      %1954 = vmatpush2.bf16.msra.mxu0 0
      %1955 = vmatprep.subr.bf16.mxu0 0
      %1956 = vmatpush2.bf16.msra.mxu0 0
      %1957 = vmatprep.mubr.bf16.mxu0 0
      %1958 = vmatmul.mubr.bf16.gmra.mxu0 %v1596
      %v1959 = vpop.f32.mrf.mxu0
      %v1960 = vadd.f32 0.0, %v1959
      %v1961 = vpop.f32.mrf.mxu0
      %v1962 = vpop.f32.mrf.mxu0
      %v1963 = vadd.f32 0.0, %v1962
      %v1964 = vpop.f32.mrf.mxu0
      %1965 = vmatprep.mubr.bf16.mxu0 0
      %1966 = vmatmul.mubr.bf16.gmra.mxu0 %v1597
      %v1967 = vpop.f32.mrf.mxu0
      %v1968 = vadd.f32 0.0, %v1967
      %v1969 = vpop.f32.mrf.mxu0
      %v1970 = vpop.f32.mrf.mxu0
      %v1971 = vadd.f32 0.0, %v1970
      %v1972 = vpop.f32.mrf.mxu0
      %1973 = vmatprep.mubr.bf16.mxu0 0
      %1974 = vmatmul.mubr.bf16.gmra.mxu0 %v1598
      %v1975 = vpop.f32.mrf.mxu0
      %v1976 = vadd.f32 0.0, %v1975
      %v1977 = vpop.f32.mrf.mxu0
      %v1978 = vpop.f32.mrf.mxu0
      %v1979 = vadd.f32 0.0, %v1978
      %v1980 = vpop.f32.mrf.mxu0
      %1981 = vmatprep.mubr.bf16.mxu0 0
      %1982 = vmatmul.mubr.bf16.gmra.mxu0 %v1599
      %v1983 = vpop.f32.mrf.mxu0
      %v1984 = vadd.f32 0.0, %v1983
      %v1985 = vpop.f32.mrf.mxu0
      %v1986 = vpop.f32.mrf.mxu0
      %v1987 = vadd.f32 0.0, %v1986
      %v1988 = vpop.f32.mrf.mxu0
      %1989 = vdwg.mxu0
      %1990 = vmatprep.subr.bf16.mxu0 0
      %1991 = vmatpush1.bf16.msra.mxu0 %v886
      %1992 = vmatprep.subr.bf16.mxu0 0
      %1993 = vmatpush1.bf16.msra.mxu0 %v885
      %1994 = vmatprep.subr.bf16.mxu0 0
      %1995 = vmatpush1.bf16.msra.mxu0 %v884
      %1996 = vmatprep.subr.bf16.mxu0 0
      %1997 = vmatpush1.bf16.msra.mxu0 %v883
      %1998 = vmatprep.subr.bf16.mxu0 0
      %1999 = vmatpush1.bf16.msra.mxu0 %v882
      %2000 = vmatprep.subr.bf16.mxu0 0
      %2001 = vmatpush1.bf16.msra.mxu0 %v881
      %2002 = vmatprep.subr.bf16.mxu0 0
      %2003 = vmatpush1.bf16.msra.mxu0 %v880
      %2004 = vmatprep.subr.bf16.mxu0 0
      %2005 = vmatpush1.bf16.msra.mxu0 %v879
      %2006 = vmatprep.subr.bf16.mxu0 0
      %2007 = vmatpush2.bf16.msra.mxu0 0
      %2008 = vmatprep.subr.bf16.mxu0 0
      %2009 = vmatpush2.bf16.msra.mxu0 0
      %2010 = vmatprep.subr.bf16.mxu0 0
      %2011 = vmatpush2.bf16.msra.mxu0 0
      %2012 = vmatprep.subr.bf16.mxu0 0
      %2013 = vmatpush2.bf16.msra.mxu0 0
      %2014 = vmatprep.subr.bf16.mxu0 0
      %2015 = vmatpush2.bf16.msra.mxu0 0
      %2016 = vmatprep.subr.bf16.mxu0 0
      %2017 = vmatpush2.bf16.msra.mxu0 0
      %2018 = vmatprep.subr.bf16.mxu0 0
      %2019 = vmatpush2.bf16.msra.mxu0 0
      %2020 = vmatprep.subr.bf16.mxu0 0
      %2021 = vmatpush2.bf16.msra.mxu0 0
      %2022 = vmatprep.mubr.bf16.mxu0 0
      %2023 = vmatmul.mubr.bf16.gmra.mxu0 %v1596
      %v2024 = vpop.f32.mrf.mxu0
      %v2025 = vadd.f32 0.0, %v2024
      %v2026 = vpop.f32.mrf.mxu0
      %v2027 = vpop.f32.mrf.mxu0
      %v2028 = vadd.f32 0.0, %v2027
      %v2029 = vpop.f32.mrf.mxu0
      %2030 = vmatprep.mubr.bf16.mxu0 0
      %2031 = vmatmul.mubr.bf16.gmra.mxu0 %v1597
      %v2032 = vpop.f32.mrf.mxu0
      %v2033 = vadd.f32 0.0, %v2032
      %v2034 = vpop.f32.mrf.mxu0
      %v2035 = vpop.f32.mrf.mxu0
      %v2036 = vadd.f32 0.0, %v2035
      %v2037 = vpop.f32.mrf.mxu0
      %2038 = vmatprep.mubr.bf16.mxu0 0
      %2039 = vmatmul.mubr.bf16.gmra.mxu0 %v1598
      %v2040 = vpop.f32.mrf.mxu0
      %v2041 = vadd.f32 0.0, %v2040
      %v2042 = vpop.f32.mrf.mxu0
      %v2043 = vpop.f32.mrf.mxu0
      %v2044 = vadd.f32 0.0, %v2043
      %v2045 = vpop.f32.mrf.mxu0
      %2046 = vmatprep.mubr.bf16.mxu0 0
      %2047 = vmatmul.mubr.bf16.gmra.mxu0 %v1599
      %v2048 = vpop.f32.mrf.mxu0
      %v2049 = vadd.f32 0.0, %v2048
      %v2050 = vpop.f32.mrf.mxu0
      %v2051 = vpop.f32.mrf.mxu0
      %v2052 = vadd.f32 0.0, %v2051
      %v2053 = vpop.f32.mrf.mxu0
      %2054 = vdwg.mxu0
      %2055 = vmatprep.subr.bf16.mxu0 0
      %2056 = vmatpush1.bf16.msra.mxu0 %v911
      %2057 = vmatprep.subr.bf16.mxu0 0
      %2058 = vmatpush1.bf16.msra.mxu0 %v910
      %2059 = vmatprep.subr.bf16.mxu0 0
      %2060 = vmatpush1.bf16.msra.mxu0 %v909
      %2061 = vmatprep.subr.bf16.mxu0 0
      %2062 = vmatpush1.bf16.msra.mxu0 %v908
      %2063 = vmatprep.subr.bf16.mxu0 0
      %2064 = vmatpush1.bf16.msra.mxu0 %v907
      %2065 = vmatprep.subr.bf16.mxu0 0
      %2066 = vmatpush1.bf16.msra.mxu0 %v906
      %2067 = vmatprep.subr.bf16.mxu0 0
      %2068 = vmatpush1.bf16.msra.mxu0 %v905
      %2069 = vmatprep.subr.bf16.mxu0 0
      %2070 = vmatpush1.bf16.msra.mxu0 %v904
      %2071 = vmatprep.subr.bf16.mxu0 0
      %2072 = vmatpush2.bf16.msra.mxu0 0
      %2073 = vmatprep.subr.bf16.mxu0 0
      %2074 = vmatpush2.bf16.msra.mxu0 0
      %2075 = vmatprep.subr.bf16.mxu0 0
      %2076 = vmatpush2.bf16.msra.mxu0 0
      %2077 = vmatprep.subr.bf16.mxu0 0
      %2078 = vmatpush2.bf16.msra.mxu0 0
      %2079 = vmatprep.subr.bf16.mxu0 0
      %2080 = vmatpush2.bf16.msra.mxu0 0
      %2081 = vmatprep.subr.bf16.mxu0 0
      %2082 = vmatpush2.bf16.msra.mxu0 0
      %2083 = vmatprep.subr.bf16.mxu0 0
      %2084 = vmatpush2.bf16.msra.mxu0 0
      %2085 = vmatprep.subr.bf16.mxu0 0
      %2086 = vmatpush2.bf16.msra.mxu0 0
      %2087 = vmatprep.mubr.bf16.mxu0 0
      %2088 = vmatmul.mubr.bf16.gmra.mxu0 %v1596
      %v2089 = vpop.f32.mrf.mxu0
      %v2090 = vadd.f32 0.0, %v2089
      %v2091 = vpop.f32.mrf.mxu0
      %v2092 = vpop.f32.mrf.mxu0
      %v2093 = vadd.f32 0.0, %v2092
      %v2094 = vpop.f32.mrf.mxu0
      %2095 = vmatprep.mubr.bf16.mxu0 0
      %2096 = vmatmul.mubr.bf16.gmra.mxu0 %v1597
      %v2097 = vpop.f32.mrf.mxu0
      %v2098 = vadd.f32 0.0, %v2097
      %v2099 = vpop.f32.mrf.mxu0
      %v2100 = vpop.f32.mrf.mxu0
      %v2101 = vadd.f32 0.0, %v2100
      %v2102 = vpop.f32.mrf.mxu0
      %2103 = vmatprep.mubr.bf16.mxu0 0
      %2104 = vmatmul.mubr.bf16.gmra.mxu0 %v1598
      %v2105 = vpop.f32.mrf.mxu0
      %v2106 = vadd.f32 0.0, %v2105
      %v2107 = vpop.f32.mrf.mxu0
      %v2108 = vpop.f32.mrf.mxu0
      %v2109 = vadd.f32 0.0, %v2108
      %v2110 = vpop.f32.mrf.mxu0
      %2111 = vmatprep.mubr.bf16.mxu0 0
      %2112 = vmatmul.mubr.bf16.gmra.mxu0 %v1599
      %v2113 = vpop.f32.mrf.mxu0
      %v2114 = vadd.f32 0.0, %v2113
      %v2115 = vpop.f32.mrf.mxu0
      %v2116 = vpop.f32.mrf.mxu0
      %v2117 = vadd.f32 0.0, %v2116
      %v2118 = vpop.f32.mrf.mxu0
      %2119 = vdwg.mxu0
      %2120 = vmatprep.subr.bf16.mxu0 0
      %2121 = vmatpush1.bf16.msra.mxu0 %v936
      %2122 = vmatprep.subr.bf16.mxu0 0
      %2123 = vmatpush1.bf16.msra.mxu0 %v935
      %2124 = vmatprep.subr.bf16.mxu0 0
      %2125 = vmatpush1.bf16.msra.mxu0 %v934
      %2126 = vmatprep.subr.bf16.mxu0 0
      %2127 = vmatpush1.bf16.msra.mxu0 %v933
      %2128 = vmatprep.subr.bf16.mxu0 0
      %2129 = vmatpush1.bf16.msra.mxu0 %v932
      %2130 = vmatprep.subr.bf16.mxu0 0
      %2131 = vmatpush1.bf16.msra.mxu0 %v931
      %2132 = vmatprep.subr.bf16.mxu0 0
      %2133 = vmatpush1.bf16.msra.mxu0 %v930
      %2134 = vmatprep.subr.bf16.mxu0 0
      %2135 = vmatpush1.bf16.msra.mxu0 %v929
      %2136 = vmatprep.subr.bf16.mxu0 0
      %2137 = vmatpush2.bf16.msra.mxu0 0
      %2138 = vmatprep.subr.bf16.mxu0 0
      %2139 = vmatpush2.bf16.msra.mxu0 0
      %2140 = vmatprep.subr.bf16.mxu0 0
      %2141 = vmatpush2.bf16.msra.mxu0 0
      %2142 = vmatprep.subr.bf16.mxu0 0
      %2143 = vmatpush2.bf16.msra.mxu0 0
      %2144 = vmatprep.subr.bf16.mxu0 0
      %2145 = vmatpush2.bf16.msra.mxu0 0
      %2146 = vmatprep.subr.bf16.mxu0 0
      %2147 = vmatpush2.bf16.msra.mxu0 0
      %2148 = vmatprep.subr.bf16.mxu0 0
      %2149 = vmatpush2.bf16.msra.mxu0 0
      %2150 = vmatprep.subr.bf16.mxu0 0
      %2151 = vmatpush2.bf16.msra.mxu0 0
      %2152 = vmatprep.mubr.bf16.mxu0 0
      %2153 = vmatmul.mubr.bf16.gmra.mxu0 %v1596
      %v2154 = vpop.f32.mrf.mxu0
      %v2155 = vadd.f32 0.0, %v2154
      %v2156 = vpop.f32.mrf.mxu0
      %v2157 = vpop.f32.mrf.mxu0
      %v2158 = vadd.f32 0.0, %v2157
      %v2159 = vpop.f32.mrf.mxu0
      %2160 = vmatprep.mubr.bf16.mxu0 0
      %2161 = vmatmul.mubr.bf16.gmra.mxu0 %v1597
      %v2162 = vpop.f32.mrf.mxu0
      %v2163 = vadd.f32 0.0, %v2162
      %v2164 = vpop.f32.mrf.mxu0
      %v2165 = vpop.f32.mrf.mxu0
      %v2166 = vadd.f32 0.0, %v2165
      %v2167 = vpop.f32.mrf.mxu0
      %2168 = vmatprep.mubr.bf16.mxu0 0
      %2169 = vmatmul.mubr.bf16.gmra.mxu0 %v1598
      %v2170 = vpop.f32.mrf.mxu0
      %v2171 = vadd.f32 0.0, %v2170
      %v2172 = vpop.f32.mrf.mxu0
      %v2173 = vpop.f32.mrf.mxu0
      %v2174 = vadd.f32 0.0, %v2173
      %v2175 = vpop.f32.mrf.mxu0
      %2176 = vmatprep.mubr.bf16.mxu0 0
      %2177 = vmatmul.mubr.bf16.gmra.mxu0 %v1599
      %v2178 = vpop.f32.mrf.mxu0
      %v2179 = vadd.f32 0.0, %v2178
      %v2180 = vpop.f32.mrf.mxu0
      %v2181 = vpop.f32.mrf.mxu0
      %v2182 = vadd.f32 0.0, %v2181
      %v2183 = vpop.f32.mrf.mxu0
      %2184 = vdwg.mxu0
      %2186 = vset.pattern.permute.xlu0 0
      %2187 = vperm.xlu0 %2186, %v1310
      %v2188 = vpop.permute.xlu0 %2187
      %2191 = vset.pattern.permute.xlu0 0
      %2192 = vperm.xlu0 %2191, %v1313
      %v2193 = vpop.permute.xlu0 %2192
      %2196 = vset.pattern.permute.xlu0 0
      %2197 = vperm.xlu0 %2196, %v1318
      %v2198 = vpop.permute.xlu0 %2197
      %2201 = vset.pattern.permute.xlu0 0
      %2202 = vperm.xlu0 %2201, %v1321
      %v2203 = vpop.permute.xlu0 %2202
      %2206 = vset.pattern.permute.xlu0 0
      %2207 = vperm.xlu0 %2206, %v1326
      %v2208 = vpop.permute.xlu0 %2207
      %2211 = vset.pattern.permute.xlu0 0
      %2212 = vperm.xlu0 %2211, %v1329
      %v2213 = vpop.permute.xlu0 %2212
      %2216 = vset.pattern.permute.xlu0 0
      %2217 = vperm.xlu0 %2216, %v1334
      %v2218 = vpop.permute.xlu0 %2217
      %2221 = vset.pattern.permute.xlu0 0
      %2222 = vperm.xlu0 %2221, %v1337
      %v2223 = vpop.permute.xlu0 %2222
      %v2225 = vmul.f32 %v2188, %v1635
      %v2226 = vmul.f32 %v2193, %v1638
      %v2227 = vmul.f32 %v2198, %v1643
      %v2228 = vmul.f32 %v2203, %v1646
      %v2229 = vmul.f32 %v2208, %v1651
      %v2230 = vmul.f32 %v2213, %v1654
      %v2231 = vmul.f32 %v2218, %v1659
      %v2232 = vmul.f32 %v2223, %v1662
      %v2233 = vadd.f32 %v2225, 0.0
      %v2234 = vadd.f32 %v2226, 0.0
      %v2235 = vadd.f32 %v2227, 0.0
      %v2236 = vadd.f32 %v2228, 0.0
      %v2237 = vadd.f32 %v2229, 0.0
      %v2238 = vadd.f32 %v2230, 0.0
      %v2239 = vadd.f32 %v2231, 0.0
      %v2240 = vadd.f32 %v2232, 0.0
      %2241 = vset.pattern.permute.xlu0 1
      %2242 = vperm.xlu0 %2241, %v1310
      %v2243 = vpop.permute.xlu0 %2242
      %2245 = vset.pattern.permute.xlu0 1
      %2246 = vperm.xlu0 %2245, %v1313
      %v2247 = vpop.permute.xlu0 %2246
      %2249 = vset.pattern.permute.xlu0 1
      %2250 = vperm.xlu0 %2249, %v1318
      %v2251 = vpop.permute.xlu0 %2250
      %2253 = vset.pattern.permute.xlu0 1
      %2254 = vperm.xlu0 %2253, %v1321
      %v2255 = vpop.permute.xlu0 %2254
      %2257 = vset.pattern.permute.xlu0 1
      %2258 = vperm.xlu0 %2257, %v1326
      %v2259 = vpop.permute.xlu0 %2258
      %2261 = vset.pattern.permute.xlu0 1
      %2262 = vperm.xlu0 %2261, %v1329
      %v2263 = vpop.permute.xlu0 %2262
      %2265 = vset.pattern.permute.xlu0 1
      %2266 = vperm.xlu0 %2265, %v1334
      %v2267 = vpop.permute.xlu0 %2266
      %2269 = vset.pattern.permute.xlu0 1
      %2270 = vperm.xlu0 %2269, %v1337
      %v2271 = vpop.permute.xlu0 %2270
      %v2273 = vmul.f32 %v2243, %v1635
      %v2274 = vmul.f32 %v2247, %v1638
      %v2275 = vmul.f32 %v2251, %v1643
      %v2276 = vmul.f32 %v2255, %v1646
      %v2277 = vmul.f32 %v2259, %v1651
      %v2278 = vmul.f32 %v2263, %v1654
      %v2279 = vmul.f32 %v2267, %v1659
      %v2280 = vmul.f32 %v2271, %v1662
      %v2281 = vadd.f32 %v2273, 0.0
      %v2282 = vadd.f32 %v2274, 0.0
      %v2283 = vadd.f32 %v2275, 0.0
      %v2284 = vadd.f32 %v2276, 0.0
      %v2285 = vadd.f32 %v2277, 0.0
      %v2286 = vadd.f32 %v2278, 0.0
      %v2287 = vadd.f32 %v2279, 0.0
      %v2288 = vadd.f32 %v2280, 0.0
      %2290 = vset.pattern.permute.xlu0 0
      %2291 = vperm.xlu0 %2290, %v1342
      %v2292 = vpop.permute.xlu0 %2291
      %2295 = vset.pattern.permute.xlu0 0
      %2296 = vperm.xlu0 %2295, %v1345
      %v2297 = vpop.permute.xlu0 %2296
      %2300 = vset.pattern.permute.xlu0 0
      %2301 = vperm.xlu0 %2300, %v1350
      %v2302 = vpop.permute.xlu0 %2301
      %2305 = vset.pattern.permute.xlu0 0
      %2306 = vperm.xlu0 %2305, %v1353
      %v2307 = vpop.permute.xlu0 %2306
      %2310 = vset.pattern.permute.xlu0 0
      %2311 = vperm.xlu0 %2310, %v1358
      %v2312 = vpop.permute.xlu0 %2311
      %2315 = vset.pattern.permute.xlu0 0
      %2316 = vperm.xlu0 %2315, %v1361
      %v2317 = vpop.permute.xlu0 %2316
      %2320 = vset.pattern.permute.xlu0 0
      %2321 = vperm.xlu0 %2320, %v1366
      %v2322 = vpop.permute.xlu0 %2321
      %2325 = vset.pattern.permute.xlu0 0
      %2326 = vperm.xlu0 %2325, %v1369
      %v2327 = vpop.permute.xlu0 %2326
      %v2329 = vmul.f32 %v2292, %v1700
      %v2330 = vmul.f32 %v2297, %v1703
      %v2331 = vmul.f32 %v2302, %v1708
      %v2332 = vmul.f32 %v2307, %v1711
      %v2333 = vmul.f32 %v2312, %v1716
      %v2334 = vmul.f32 %v2317, %v1719
      %v2335 = vmul.f32 %v2322, %v1724
      %v2336 = vmul.f32 %v2327, %v1727
      %v2337 = vadd.f32 %v2233, %v2329
      %v2338 = vadd.f32 %v2234, %v2330
      %v2339 = vadd.f32 %v2235, %v2331
      %v2340 = vadd.f32 %v2236, %v2332
      %v2341 = vadd.f32 %v2237, %v2333
      %v2342 = vadd.f32 %v2238, %v2334
      %v2343 = vadd.f32 %v2239, %v2335
      %v2344 = vadd.f32 %v2240, %v2336
      %2345 = vset.pattern.permute.xlu0 1
      %2346 = vperm.xlu0 %2345, %v1342
      %v2347 = vpop.permute.xlu0 %2346
      %2349 = vset.pattern.permute.xlu0 1
      %2350 = vperm.xlu0 %2349, %v1345
      %v2351 = vpop.permute.xlu0 %2350
      %2353 = vset.pattern.permute.xlu0 1
      %2354 = vperm.xlu0 %2353, %v1350
      %v2355 = vpop.permute.xlu0 %2354
      %2357 = vset.pattern.permute.xlu0 1
      %2358 = vperm.xlu0 %2357, %v1353
      %v2359 = vpop.permute.xlu0 %2358
      %2361 = vset.pattern.permute.xlu0 1
      %2362 = vperm.xlu0 %2361, %v1358
      %v2363 = vpop.permute.xlu0 %2362
      %2365 = vset.pattern.permute.xlu0 1
      %2366 = vperm.xlu0 %2365, %v1361
      %v2367 = vpop.permute.xlu0 %2366
      %2369 = vset.pattern.permute.xlu0 1
      %2370 = vperm.xlu0 %2369, %v1366
      %v2371 = vpop.permute.xlu0 %2370
      %2373 = vset.pattern.permute.xlu0 1
      %2374 = vperm.xlu0 %2373, %v1369
      %v2375 = vpop.permute.xlu0 %2374
      %v2377 = vmul.f32 %v2347, %v1700
      %v2378 = vmul.f32 %v2351, %v1703
      %v2379 = vmul.f32 %v2355, %v1708
      %v2380 = vmul.f32 %v2359, %v1711
      %v2381 = vmul.f32 %v2363, %v1716
      %v2382 = vmul.f32 %v2367, %v1719
      %v2383 = vmul.f32 %v2371, %v1724
      %v2384 = vmul.f32 %v2375, %v1727
      %v2385 = vadd.f32 %v2281, %v2377
      %v2386 = vadd.f32 %v2282, %v2378
      %v2387 = vadd.f32 %v2283, %v2379
      %v2388 = vadd.f32 %v2284, %v2380
      %v2389 = vadd.f32 %v2285, %v2381
      %v2390 = vadd.f32 %v2286, %v2382
      %v2391 = vadd.f32 %v2287, %v2383
      %v2392 = vadd.f32 %v2288, %v2384
      %2394 = vset.pattern.permute.xlu0 0
      %2395 = vperm.xlu0 %2394, %v1374
      %v2396 = vpop.permute.xlu0 %2395
      %2399 = vset.pattern.permute.xlu0 0
      %2400 = vperm.xlu0 %2399, %v1377
      %v2401 = vpop.permute.xlu0 %2400
      %2404 = vset.pattern.permute.xlu0 0
      %2405 = vperm.xlu0 %2404, %v1382
      %v2406 = vpop.permute.xlu0 %2405
      %2409 = vset.pattern.permute.xlu0 0
      %2410 = vperm.xlu0 %2409, %v1385
      %v2411 = vpop.permute.xlu0 %2410
      %2414 = vset.pattern.permute.xlu0 0
      %2415 = vperm.xlu0 %2414, %v1390
      %v2416 = vpop.permute.xlu0 %2415
      %2419 = vset.pattern.permute.xlu0 0
      %2420 = vperm.xlu0 %2419, %v1393
      %v2421 = vpop.permute.xlu0 %2420
      %2424 = vset.pattern.permute.xlu0 0
      %2425 = vperm.xlu0 %2424, %v1398
      %v2426 = vpop.permute.xlu0 %2425
      %2429 = vset.pattern.permute.xlu0 0
      %2430 = vperm.xlu0 %2429, %v1401
      %v2431 = vpop.permute.xlu0 %2430
      %v2433 = vmul.f32 %v2396, %v1765
      %v2434 = vmul.f32 %v2401, %v1768
      %v2435 = vmul.f32 %v2406, %v1773
      %v2436 = vmul.f32 %v2411, %v1776
      %v2437 = vmul.f32 %v2416, %v1781
      %v2438 = vmul.f32 %v2421, %v1784
      %v2439 = vmul.f32 %v2426, %v1789
      %v2440 = vmul.f32 %v2431, %v1792
      %v2441 = vadd.f32 %v2337, %v2433
      %v2442 = vadd.f32 %v2338, %v2434
      %v2443 = vadd.f32 %v2339, %v2435
      %v2444 = vadd.f32 %v2340, %v2436
      %v2445 = vadd.f32 %v2341, %v2437
      %v2446 = vadd.f32 %v2342, %v2438
      %v2447 = vadd.f32 %v2343, %v2439
      %v2448 = vadd.f32 %v2344, %v2440
      %2449 = vset.pattern.permute.xlu0 1
      %2450 = vperm.xlu0 %2449, %v1374
      %v2451 = vpop.permute.xlu0 %2450
      %2453 = vset.pattern.permute.xlu0 1
      %2454 = vperm.xlu0 %2453, %v1377
      %v2455 = vpop.permute.xlu0 %2454
      %2457 = vset.pattern.permute.xlu0 1
      %2458 = vperm.xlu0 %2457, %v1382
      %v2459 = vpop.permute.xlu0 %2458
      %2461 = vset.pattern.permute.xlu0 1
      %2462 = vperm.xlu0 %2461, %v1385
      %v2463 = vpop.permute.xlu0 %2462
      %2465 = vset.pattern.permute.xlu0 1
      %2466 = vperm.xlu0 %2465, %v1390
      %v2467 = vpop.permute.xlu0 %2466
      %2469 = vset.pattern.permute.xlu0 1
      %2470 = vperm.xlu0 %2469, %v1393
      %v2471 = vpop.permute.xlu0 %2470
      %2473 = vset.pattern.permute.xlu0 1
      %2474 = vperm.xlu0 %2473, %v1398
      %v2475 = vpop.permute.xlu0 %2474
      %2477 = vset.pattern.permute.xlu0 1
      %2478 = vperm.xlu0 %2477, %v1401
      %v2479 = vpop.permute.xlu0 %2478
      %v2481 = vmul.f32 %v2451, %v1765
      %v2482 = vmul.f32 %v2455, %v1768
      %v2483 = vmul.f32 %v2459, %v1773
      %v2484 = vmul.f32 %v2463, %v1776
      %v2485 = vmul.f32 %v2467, %v1781
      %v2486 = vmul.f32 %v2471, %v1784
      %v2487 = vmul.f32 %v2475, %v1789
      %v2488 = vmul.f32 %v2479, %v1792
      %v2489 = vadd.f32 %v2385, %v2481
      %v2490 = vadd.f32 %v2386, %v2482
      %v2491 = vadd.f32 %v2387, %v2483
      %v2492 = vadd.f32 %v2388, %v2484
      %v2493 = vadd.f32 %v2389, %v2485
      %v2494 = vadd.f32 %v2390, %v2486
      %v2495 = vadd.f32 %v2391, %v2487
      %v2496 = vadd.f32 %v2392, %v2488
      %2498 = vset.pattern.permute.xlu0 0
      %2499 = vperm.xlu0 %2498, %v1406
      %v2500 = vpop.permute.xlu0 %2499
      %2503 = vset.pattern.permute.xlu0 0
      %2504 = vperm.xlu0 %2503, %v1409
      %v2505 = vpop.permute.xlu0 %2504
      %2508 = vset.pattern.permute.xlu0 0
      %2509 = vperm.xlu0 %2508, %v1414
      %v2510 = vpop.permute.xlu0 %2509
      %2513 = vset.pattern.permute.xlu0 0
      %2514 = vperm.xlu0 %2513, %v1417
      %v2515 = vpop.permute.xlu0 %2514
      %2518 = vset.pattern.permute.xlu0 0
      %2519 = vperm.xlu0 %2518, %v1422
      %v2520 = vpop.permute.xlu0 %2519
      %2523 = vset.pattern.permute.xlu0 0
      %2524 = vperm.xlu0 %2523, %v1425
      %v2525 = vpop.permute.xlu0 %2524
      %2528 = vset.pattern.permute.xlu0 0
      %2529 = vperm.xlu0 %2528, %v1430
      %v2530 = vpop.permute.xlu0 %2529
      %2533 = vset.pattern.permute.xlu0 0
      %2534 = vperm.xlu0 %2533, %v1433
      %v2535 = vpop.permute.xlu0 %2534
      %v2537 = vmul.f32 %v2500, %v1830
      %v2538 = vmul.f32 %v2505, %v1833
      %v2539 = vmul.f32 %v2510, %v1838
      %v2540 = vmul.f32 %v2515, %v1841
      %v2541 = vmul.f32 %v2520, %v1846
      %v2542 = vmul.f32 %v2525, %v1849
      %v2543 = vmul.f32 %v2530, %v1854
      %v2544 = vmul.f32 %v2535, %v1857
      %v2545 = vadd.f32 %v2441, %v2537
      %v2546 = vadd.f32 %v2442, %v2538
      %v2547 = vadd.f32 %v2443, %v2539
      %v2548 = vadd.f32 %v2444, %v2540
      %v2549 = vadd.f32 %v2445, %v2541
      %v2550 = vadd.f32 %v2446, %v2542
      %v2551 = vadd.f32 %v2447, %v2543
      %v2552 = vadd.f32 %v2448, %v2544
      %2553 = vset.pattern.permute.xlu0 1
      %2554 = vperm.xlu0 %2553, %v1406
      %v2555 = vpop.permute.xlu0 %2554
      %2557 = vset.pattern.permute.xlu0 1
      %2558 = vperm.xlu0 %2557, %v1409
      %v2559 = vpop.permute.xlu0 %2558
      %2561 = vset.pattern.permute.xlu0 1
      %2562 = vperm.xlu0 %2561, %v1414
      %v2563 = vpop.permute.xlu0 %2562
      %2565 = vset.pattern.permute.xlu0 1
      %2566 = vperm.xlu0 %2565, %v1417
      %v2567 = vpop.permute.xlu0 %2566
      %2569 = vset.pattern.permute.xlu0 1
      %2570 = vperm.xlu0 %2569, %v1422
      %v2571 = vpop.permute.xlu0 %2570
      %2573 = vset.pattern.permute.xlu0 1
      %2574 = vperm.xlu0 %2573, %v1425
      %v2575 = vpop.permute.xlu0 %2574
      %2577 = vset.pattern.permute.xlu0 1
      %2578 = vperm.xlu0 %2577, %v1430
      %v2579 = vpop.permute.xlu0 %2578
      %2581 = vset.pattern.permute.xlu0 1
      %2582 = vperm.xlu0 %2581, %v1433
      %v2583 = vpop.permute.xlu0 %2582
      %v2585 = vmul.f32 %v2555, %v1830
      %v2586 = vmul.f32 %v2559, %v1833
      %v2587 = vmul.f32 %v2563, %v1838
      %v2588 = vmul.f32 %v2567, %v1841
      %v2589 = vmul.f32 %v2571, %v1846
      %v2590 = vmul.f32 %v2575, %v1849
      %v2591 = vmul.f32 %v2579, %v1854
      %v2592 = vmul.f32 %v2583, %v1857
      %v2593 = vadd.f32 %v2489, %v2585
      %v2594 = vadd.f32 %v2490, %v2586
      %v2595 = vadd.f32 %v2491, %v2587
      %v2596 = vadd.f32 %v2492, %v2588
      %v2597 = vadd.f32 %v2493, %v2589
      %v2598 = vadd.f32 %v2494, %v2590
      %v2599 = vadd.f32 %v2495, %v2591
      %v2600 = vadd.f32 %v2496, %v2592
      %2602 = vset.pattern.permute.xlu0 0
      %2603 = vperm.xlu0 %2602, %v1438
      %v2604 = vpop.permute.xlu0 %2603
      %2607 = vset.pattern.permute.xlu0 0
      %2608 = vperm.xlu0 %2607, %v1441
      %v2609 = vpop.permute.xlu0 %2608
      %2612 = vset.pattern.permute.xlu0 0
      %2613 = vperm.xlu0 %2612, %v1446
      %v2614 = vpop.permute.xlu0 %2613
      %2617 = vset.pattern.permute.xlu0 0
      %2618 = vperm.xlu0 %2617, %v1449
      %v2619 = vpop.permute.xlu0 %2618
      %2622 = vset.pattern.permute.xlu0 0
      %2623 = vperm.xlu0 %2622, %v1454
      %v2624 = vpop.permute.xlu0 %2623
      %2627 = vset.pattern.permute.xlu0 0
      %2628 = vperm.xlu0 %2627, %v1457
      %v2629 = vpop.permute.xlu0 %2628
      %2632 = vset.pattern.permute.xlu0 0
      %2633 = vperm.xlu0 %2632, %v1462
      %v2634 = vpop.permute.xlu0 %2633
      %2637 = vset.pattern.permute.xlu0 0
      %2638 = vperm.xlu0 %2637, %v1465
      %v2639 = vpop.permute.xlu0 %2638
      %v2641 = vmul.f32 %v2604, %v1895
      %v2642 = vmul.f32 %v2609, %v1898
      %v2643 = vmul.f32 %v2614, %v1903
      %v2644 = vmul.f32 %v2619, %v1906
      %v2645 = vmul.f32 %v2624, %v1911
      %v2646 = vmul.f32 %v2629, %v1914
      %v2647 = vmul.f32 %v2634, %v1919
      %v2648 = vmul.f32 %v2639, %v1922
      %v2649 = vadd.f32 %v2545, %v2641
      %v2650 = vadd.f32 %v2546, %v2642
      %v2651 = vadd.f32 %v2547, %v2643
      %v2652 = vadd.f32 %v2548, %v2644
      %v2653 = vadd.f32 %v2549, %v2645
      %v2654 = vadd.f32 %v2550, %v2646
      %v2655 = vadd.f32 %v2551, %v2647
      %v2656 = vadd.f32 %v2552, %v2648
      %2657 = vset.pattern.permute.xlu0 1
      %2658 = vperm.xlu0 %2657, %v1438
      %v2659 = vpop.permute.xlu0 %2658
      %2661 = vset.pattern.permute.xlu0 1
      %2662 = vperm.xlu0 %2661, %v1441
      %v2663 = vpop.permute.xlu0 %2662
      %2665 = vset.pattern.permute.xlu0 1
      %2666 = vperm.xlu0 %2665, %v1446
      %v2667 = vpop.permute.xlu0 %2666
      %2669 = vset.pattern.permute.xlu0 1
      %2670 = vperm.xlu0 %2669, %v1449
      %v2671 = vpop.permute.xlu0 %2670
      %2673 = vset.pattern.permute.xlu0 1
      %2674 = vperm.xlu0 %2673, %v1454
      %v2675 = vpop.permute.xlu0 %2674
      %2677 = vset.pattern.permute.xlu0 1
      %2678 = vperm.xlu0 %2677, %v1457
      %v2679 = vpop.permute.xlu0 %2678
      %2681 = vset.pattern.permute.xlu0 1
      %2682 = vperm.xlu0 %2681, %v1462
      %v2683 = vpop.permute.xlu0 %2682
      %2685 = vset.pattern.permute.xlu0 1
      %2686 = vperm.xlu0 %2685, %v1465
      %v2687 = vpop.permute.xlu0 %2686
      %v2689 = vmul.f32 %v2659, %v1895
      %v2690 = vmul.f32 %v2663, %v1898
      %v2691 = vmul.f32 %v2667, %v1903
      %v2692 = vmul.f32 %v2671, %v1906
      %v2693 = vmul.f32 %v2675, %v1911
      %v2694 = vmul.f32 %v2679, %v1914
      %v2695 = vmul.f32 %v2683, %v1919
      %v2696 = vmul.f32 %v2687, %v1922
      %v2697 = vadd.f32 %v2593, %v2689
      %v2698 = vadd.f32 %v2594, %v2690
      %v2699 = vadd.f32 %v2595, %v2691
      %v2700 = vadd.f32 %v2596, %v2692
      %v2701 = vadd.f32 %v2597, %v2693
      %v2702 = vadd.f32 %v2598, %v2694
      %v2703 = vadd.f32 %v2599, %v2695
      %v2704 = vadd.f32 %v2600, %v2696
      %2706 = vset.pattern.permute.xlu0 0
      %2707 = vperm.xlu0 %2706, %v1470
      %v2708 = vpop.permute.xlu0 %2707
      %2711 = vset.pattern.permute.xlu0 0
      %2712 = vperm.xlu0 %2711, %v1473
      %v2713 = vpop.permute.xlu0 %2712
      %2716 = vset.pattern.permute.xlu0 0
      %2717 = vperm.xlu0 %2716, %v1478
      %v2718 = vpop.permute.xlu0 %2717
      %2721 = vset.pattern.permute.xlu0 0
      %2722 = vperm.xlu0 %2721, %v1481
      %v2723 = vpop.permute.xlu0 %2722
      %2726 = vset.pattern.permute.xlu0 0
      %2727 = vperm.xlu0 %2726, %v1486
      %v2728 = vpop.permute.xlu0 %2727
      %2731 = vset.pattern.permute.xlu0 0
      %2732 = vperm.xlu0 %2731, %v1489
      %v2733 = vpop.permute.xlu0 %2732
      %2736 = vset.pattern.permute.xlu0 0
      %2737 = vperm.xlu0 %2736, %v1494
      %v2738 = vpop.permute.xlu0 %2737
      %2741 = vset.pattern.permute.xlu0 0
      %2742 = vperm.xlu0 %2741, %v1497
      %v2743 = vpop.permute.xlu0 %2742
      %v2745 = vmul.f32 %v2708, %v1960
      %v2746 = vmul.f32 %v2713, %v1963
      %v2747 = vmul.f32 %v2718, %v1968
      %v2748 = vmul.f32 %v2723, %v1971
      %v2749 = vmul.f32 %v2728, %v1976
      %v2750 = vmul.f32 %v2733, %v1979
      %v2751 = vmul.f32 %v2738, %v1984
      %v2752 = vmul.f32 %v2743, %v1987
      %v2753 = vadd.f32 %v2649, %v2745
      %v2754 = vadd.f32 %v2650, %v2746
      %v2755 = vadd.f32 %v2651, %v2747
      %v2756 = vadd.f32 %v2652, %v2748
      %v2757 = vadd.f32 %v2653, %v2749
      %v2758 = vadd.f32 %v2654, %v2750
      %v2759 = vadd.f32 %v2655, %v2751
      %v2760 = vadd.f32 %v2656, %v2752
      %2761 = vset.pattern.permute.xlu0 1
      %2762 = vperm.xlu0 %2761, %v1470
      %v2763 = vpop.permute.xlu0 %2762
      %2765 = vset.pattern.permute.xlu0 1
      %2766 = vperm.xlu0 %2765, %v1473
      %v2767 = vpop.permute.xlu0 %2766
      %2769 = vset.pattern.permute.xlu0 1
      %2770 = vperm.xlu0 %2769, %v1478
      %v2771 = vpop.permute.xlu0 %2770
      %2773 = vset.pattern.permute.xlu0 1
      %2774 = vperm.xlu0 %2773, %v1481
      %v2775 = vpop.permute.xlu0 %2774
      %2777 = vset.pattern.permute.xlu0 1
      %2778 = vperm.xlu0 %2777, %v1486
      %v2779 = vpop.permute.xlu0 %2778
      %2781 = vset.pattern.permute.xlu0 1
      %2782 = vperm.xlu0 %2781, %v1489
      %v2783 = vpop.permute.xlu0 %2782
      %2785 = vset.pattern.permute.xlu0 1
      %2786 = vperm.xlu0 %2785, %v1494
      %v2787 = vpop.permute.xlu0 %2786
      %2789 = vset.pattern.permute.xlu0 1
      %2790 = vperm.xlu0 %2789, %v1497
      %v2791 = vpop.permute.xlu0 %2790
      %v2793 = vmul.f32 %v2763, %v1960
      %v2794 = vmul.f32 %v2767, %v1963
      %v2795 = vmul.f32 %v2771, %v1968
      %v2796 = vmul.f32 %v2775, %v1971
      %v2797 = vmul.f32 %v2779, %v1976
      %v2798 = vmul.f32 %v2783, %v1979
      %v2799 = vmul.f32 %v2787, %v1984
      %v2800 = vmul.f32 %v2791, %v1987
      %v2801 = vadd.f32 %v2697, %v2793
      %v2802 = vadd.f32 %v2698, %v2794
      %v2803 = vadd.f32 %v2699, %v2795
      %v2804 = vadd.f32 %v2700, %v2796
      %v2805 = vadd.f32 %v2701, %v2797
      %v2806 = vadd.f32 %v2702, %v2798
      %v2807 = vadd.f32 %v2703, %v2799
      %v2808 = vadd.f32 %v2704, %v2800
      %2810 = vset.pattern.permute.xlu0 0
      %2811 = vperm.xlu0 %2810, %v1502
      %v2812 = vpop.permute.xlu0 %2811
      %2815 = vset.pattern.permute.xlu0 0
      %2816 = vperm.xlu0 %2815, %v1505
      %v2817 = vpop.permute.xlu0 %2816
      %2820 = vset.pattern.permute.xlu0 0
      %2821 = vperm.xlu0 %2820, %v1510
      %v2822 = vpop.permute.xlu0 %2821
      %2825 = vset.pattern.permute.xlu0 0
      %2826 = vperm.xlu0 %2825, %v1513
      %v2827 = vpop.permute.xlu0 %2826
      %2830 = vset.pattern.permute.xlu0 0
      %2831 = vperm.xlu0 %2830, %v1518
      %v2832 = vpop.permute.xlu0 %2831
      %2835 = vset.pattern.permute.xlu0 0
      %2836 = vperm.xlu0 %2835, %v1521
      %v2837 = vpop.permute.xlu0 %2836
      %2840 = vset.pattern.permute.xlu0 0
      %2841 = vperm.xlu0 %2840, %v1526
      %v2842 = vpop.permute.xlu0 %2841
      %2845 = vset.pattern.permute.xlu0 0
      %2846 = vperm.xlu0 %2845, %v1529
      %v2847 = vpop.permute.xlu0 %2846
      %v2849 = vmul.f32 %v2812, %v2025
      %v2850 = vmul.f32 %v2817, %v2028
      %v2851 = vmul.f32 %v2822, %v2033
      %v2852 = vmul.f32 %v2827, %v2036
      %v2853 = vmul.f32 %v2832, %v2041
      %v2854 = vmul.f32 %v2837, %v2044
      %v2855 = vmul.f32 %v2842, %v2049
      %v2856 = vmul.f32 %v2847, %v2052
      %v2857 = vadd.f32 %v2753, %v2849
      %v2858 = vadd.f32 %v2754, %v2850
      %v2859 = vadd.f32 %v2755, %v2851
      %v2860 = vadd.f32 %v2756, %v2852
      %v2861 = vadd.f32 %v2757, %v2853
      %v2862 = vadd.f32 %v2758, %v2854
      %v2863 = vadd.f32 %v2759, %v2855
      %v2864 = vadd.f32 %v2760, %v2856
      %2865 = vset.pattern.permute.xlu0 1
      %2866 = vperm.xlu0 %2865, %v1502
      %v2867 = vpop.permute.xlu0 %2866
      %2869 = vset.pattern.permute.xlu0 1
      %2870 = vperm.xlu0 %2869, %v1505
      %v2871 = vpop.permute.xlu0 %2870
      %2873 = vset.pattern.permute.xlu0 1
      %2874 = vperm.xlu0 %2873, %v1510
      %v2875 = vpop.permute.xlu0 %2874
      %2877 = vset.pattern.permute.xlu0 1
      %2878 = vperm.xlu0 %2877, %v1513
      %v2879 = vpop.permute.xlu0 %2878
      %2881 = vset.pattern.permute.xlu0 1
      %2882 = vperm.xlu0 %2881, %v1518
      %v2883 = vpop.permute.xlu0 %2882
      %2885 = vset.pattern.permute.xlu0 1
      %2886 = vperm.xlu0 %2885, %v1521
      %v2887 = vpop.permute.xlu0 %2886
      %2889 = vset.pattern.permute.xlu0 1
      %2890 = vperm.xlu0 %2889, %v1526
      %v2891 = vpop.permute.xlu0 %2890
      %2893 = vset.pattern.permute.xlu0 1
      %2894 = vperm.xlu0 %2893, %v1529
      %v2895 = vpop.permute.xlu0 %2894
      %v2897 = vmul.f32 %v2867, %v2025
      %v2898 = vmul.f32 %v2871, %v2028
      %v2899 = vmul.f32 %v2875, %v2033
      %v2900 = vmul.f32 %v2879, %v2036
      %v2901 = vmul.f32 %v2883, %v2041
      %v2902 = vmul.f32 %v2887, %v2044
      %v2903 = vmul.f32 %v2891, %v2049
      %v2904 = vmul.f32 %v2895, %v2052
      %v2905 = vadd.f32 %v2801, %v2897
      %v2906 = vadd.f32 %v2802, %v2898
      %v2907 = vadd.f32 %v2803, %v2899
      %v2908 = vadd.f32 %v2804, %v2900
      %v2909 = vadd.f32 %v2805, %v2901
      %v2910 = vadd.f32 %v2806, %v2902
      %v2911 = vadd.f32 %v2807, %v2903
      %v2912 = vadd.f32 %v2808, %v2904
      %2914 = vset.pattern.permute.xlu0 0
      %2915 = vperm.xlu0 %2914, %v1534
      %v2916 = vpop.permute.xlu0 %2915
      %2919 = vset.pattern.permute.xlu0 0
      %2920 = vperm.xlu0 %2919, %v1537
      %v2921 = vpop.permute.xlu0 %2920
      %2924 = vset.pattern.permute.xlu0 0
      %2925 = vperm.xlu0 %2924, %v1542
      %v2926 = vpop.permute.xlu0 %2925
      %2929 = vset.pattern.permute.xlu0 0
      %2930 = vperm.xlu0 %2929, %v1545
      %v2931 = vpop.permute.xlu0 %2930
      %2934 = vset.pattern.permute.xlu0 0
      %2935 = vperm.xlu0 %2934, %v1550
      %v2936 = vpop.permute.xlu0 %2935
      %2939 = vset.pattern.permute.xlu0 0
      %2940 = vperm.xlu0 %2939, %v1553
      %v2941 = vpop.permute.xlu0 %2940
      %2944 = vset.pattern.permute.xlu0 0
      %2945 = vperm.xlu0 %2944, %v1558
      %v2946 = vpop.permute.xlu0 %2945
      %2949 = vset.pattern.permute.xlu0 0
      %2950 = vperm.xlu0 %2949, %v1561
      %v2951 = vpop.permute.xlu0 %2950
      %v2953 = vmul.f32 %v2916, %v2090
      %v2954 = vmul.f32 %v2921, %v2093
      %v2955 = vmul.f32 %v2926, %v2098
      %v2956 = vmul.f32 %v2931, %v2101
      %v2957 = vmul.f32 %v2936, %v2106
      %v2958 = vmul.f32 %v2941, %v2109
      %v2959 = vmul.f32 %v2946, %v2114
      %v2960 = vmul.f32 %v2951, %v2117
      %v2961 = vadd.f32 %v2857, %v2953
      %v2962 = vadd.f32 %v2858, %v2954
      %v2963 = vadd.f32 %v2859, %v2955
      %v2964 = vadd.f32 %v2860, %v2956
      %v2965 = vadd.f32 %v2861, %v2957
      %v2966 = vadd.f32 %v2862, %v2958
      %v2967 = vadd.f32 %v2863, %v2959
      %v2968 = vadd.f32 %v2864, %v2960
      %2969 = vset.pattern.permute.xlu0 1
      %2970 = vperm.xlu0 %2969, %v1534
      %v2971 = vpop.permute.xlu0 %2970
      %2973 = vset.pattern.permute.xlu0 1
      %2974 = vperm.xlu0 %2973, %v1537
      %v2975 = vpop.permute.xlu0 %2974
      %2977 = vset.pattern.permute.xlu0 1
      %2978 = vperm.xlu0 %2977, %v1542
      %v2979 = vpop.permute.xlu0 %2978
      %2981 = vset.pattern.permute.xlu0 1
      %2982 = vperm.xlu0 %2981, %v1545
      %v2983 = vpop.permute.xlu0 %2982
      %2985 = vset.pattern.permute.xlu0 1
      %2986 = vperm.xlu0 %2985, %v1550
      %v2987 = vpop.permute.xlu0 %2986
      %2989 = vset.pattern.permute.xlu0 1
      %2990 = vperm.xlu0 %2989, %v1553
      %v2991 = vpop.permute.xlu0 %2990
      %2993 = vset.pattern.permute.xlu0 1
      %2994 = vperm.xlu0 %2993, %v1558
      %v2995 = vpop.permute.xlu0 %2994
      %2997 = vset.pattern.permute.xlu0 1
      %2998 = vperm.xlu0 %2997, %v1561
      %v2999 = vpop.permute.xlu0 %2998
      %v3001 = vmul.f32 %v2971, %v2090
      %v3002 = vmul.f32 %v2975, %v2093
      %v3003 = vmul.f32 %v2979, %v2098
      %v3004 = vmul.f32 %v2983, %v2101
      %v3005 = vmul.f32 %v2987, %v2106
      %v3006 = vmul.f32 %v2991, %v2109
      %v3007 = vmul.f32 %v2995, %v2114
      %v3008 = vmul.f32 %v2999, %v2117
      %v3009 = vadd.f32 %v2905, %v3001
      %v3010 = vadd.f32 %v2906, %v3002
      %v3011 = vadd.f32 %v2907, %v3003
      %v3012 = vadd.f32 %v2908, %v3004
      %v3013 = vadd.f32 %v2909, %v3005
      %v3014 = vadd.f32 %v2910, %v3006
      %v3015 = vadd.f32 %v2911, %v3007
      %v3016 = vadd.f32 %v2912, %v3008
      %3018 = vset.pattern.permute.xlu0 0
      %3019 = vperm.xlu0 %3018, %v1566
      %v3020 = vpop.permute.xlu0 %3019
      %3023 = vset.pattern.permute.xlu0 0
      %3024 = vperm.xlu0 %3023, %v1569
      %v3025 = vpop.permute.xlu0 %3024
      %3028 = vset.pattern.permute.xlu0 0
      %3029 = vperm.xlu0 %3028, %v1574
      %v3030 = vpop.permute.xlu0 %3029
      %3033 = vset.pattern.permute.xlu0 0
      %3034 = vperm.xlu0 %3033, %v1577
      %v3035 = vpop.permute.xlu0 %3034
      %3038 = vset.pattern.permute.xlu0 0
      %3039 = vperm.xlu0 %3038, %v1582
      %v3040 = vpop.permute.xlu0 %3039
      %3043 = vset.pattern.permute.xlu0 0
      %3044 = vperm.xlu0 %3043, %v1585
      %v3045 = vpop.permute.xlu0 %3044
      %3048 = vset.pattern.permute.xlu0 0
      %3049 = vperm.xlu0 %3048, %v1590
      %v3050 = vpop.permute.xlu0 %3049
      %3053 = vset.pattern.permute.xlu0 0
      %3054 = vperm.xlu0 %3053, %v1593
      %v3055 = vpop.permute.xlu0 %3054
      %v3057 = vmul.f32 %v3020, %v2155
      %v3058 = vmul.f32 %v3025, %v2158
      %v3059 = vmul.f32 %v3030, %v2163
      %v3060 = vmul.f32 %v3035, %v2166
      %v3061 = vmul.f32 %v3040, %v2171
      %v3062 = vmul.f32 %v3045, %v2174
      %v3063 = vmul.f32 %v3050, %v2179
      %v3064 = vmul.f32 %v3055, %v2182
      %v3065 = vadd.f32 %v2961, %v3057
      %v3066 = vadd.f32 %v2962, %v3058
      %v3067 = vadd.f32 %v2963, %v3059
      %v3068 = vadd.f32 %v2964, %v3060
      %v3069 = vadd.f32 %v2965, %v3061
      %v3070 = vadd.f32 %v2966, %v3062
      %v3071 = vadd.f32 %v2967, %v3063
      %v3072 = vadd.f32 %v2968, %v3064
      %3073 = vset.pattern.permute.xlu0 1
      %3074 = vperm.xlu0 %3073, %v1566
      %v3075 = vpop.permute.xlu0 %3074
      %3077 = vset.pattern.permute.xlu0 1
      %3078 = vperm.xlu0 %3077, %v1569
      %v3079 = vpop.permute.xlu0 %3078
      %3081 = vset.pattern.permute.xlu0 1
      %3082 = vperm.xlu0 %3081, %v1574
      %v3083 = vpop.permute.xlu0 %3082
      %3085 = vset.pattern.permute.xlu0 1
      %3086 = vperm.xlu0 %3085, %v1577
      %v3087 = vpop.permute.xlu0 %3086
      %3089 = vset.pattern.permute.xlu0 1
      %3090 = vperm.xlu0 %3089, %v1582
      %v3091 = vpop.permute.xlu0 %3090
      %3093 = vset.pattern.permute.xlu0 1
      %3094 = vperm.xlu0 %3093, %v1585
      %v3095 = vpop.permute.xlu0 %3094
      %3097 = vset.pattern.permute.xlu0 1
      %3098 = vperm.xlu0 %3097, %v1590
      %v3099 = vpop.permute.xlu0 %3098
      %3101 = vset.pattern.permute.xlu0 1
      %3102 = vperm.xlu0 %3101, %v1593
      %v3103 = vpop.permute.xlu0 %3102
      %v3105 = vmul.f32 %v3075, %v2155
      %v3106 = vmul.f32 %v3079, %v2158
      %v3107 = vmul.f32 %v3083, %v2163
      %v3108 = vmul.f32 %v3087, %v2166
      %v3109 = vmul.f32 %v3091, %v2171
      %v3110 = vmul.f32 %v3095, %v2174
      %v3111 = vmul.f32 %v3099, %v2179
      %v3112 = vmul.f32 %v3103, %v2182
      %v3113 = vadd.f32 %v3009, %v3105
      %v3114 = vadd.f32 %v3010, %v3106
      %v3115 = vadd.f32 %v3011, %v3107
      %v3116 = vadd.f32 %v3012, %v3108
      %v3117 = vadd.f32 %v3013, %v3109
      %v3118 = vadd.f32 %v3014, %v3110
      %v3119 = vadd.f32 %v3015, %v3111
      %v3120 = vadd.f32 %v3016, %v3112
      %v3121 = vsel %vm953, %v3065, %v3113
      %v3122 = vsel %vm953, %v3066, %v3114
      %v3123 = vsel %vm953, %v3067, %v3115
      %v3124 = vsel %vm953, %v3068, %v3116
      %v3125 = vsel %vm953, %v3069, %v3117
      %v3126 = vsel %vm953, %v3070, %v3118
      %v3127 = vsel %vm953, %v3071, %v3119
      %v3128 = vsel %vm953, %v3072, %v3120
      %vm3129 = vcmp.ge.f32.partialorder %v3121, 0.0
      %vm3130 = vcmp.ge.f32.partialorder %v3122, 0.0
      %vm3131 = vcmp.ge.f32.partialorder %v3123, 0.0
      %vm3132 = vcmp.ge.f32.partialorder %v3124, 0.0
      %vm3133 = vcmp.ge.f32.partialorder %v3125, 0.0
      %vm3134 = vcmp.ge.f32.partialorder %v3126, 0.0
      %vm3135 = vcmp.ge.f32.partialorder %v3127, 0.0
      %vm3136 = vcmp.ge.f32.partialorder %v3128, 0.0
      %v3137 = vmul.f32 %v3121, 0.1
      %v3138 = vmul.f32 %v3122, 0.1
      %v3139 = vmul.f32 %v3123, 0.1
      %v3140 = vmul.f32 %v3124, 0.1
      %v3141 = vmul.f32 %v3125, 0.1
      %v3142 = vmul.f32 %v3126, 0.1
      %v3143 = vmul.f32 %v3127, 0.1
      %v3144 = vmul.f32 %v3128, 0.1
      %v3145 = vsel %vm3129, %v3121, %v3137
      %v3146 = vsel %vm3130, %v3122, %v3138
      %v3147 = vsel %vm3131, %v3123, %v3139
      %v3148 = vsel %vm3132, %v3124, %v3140
      %v3149 = vsel %vm3133, %v3125, %v3141
      %v3150 = vsel %vm3134, %v3126, %v3142
      %v3151 = vsel %vm3135, %v3127, %v3143
      %v3152 = vsel %vm3136, %v3128, %v3144
      %v3153 = vld [vmem:[%s636] sm:$0x1]
      %v3154 = vpack.c.bf16 %v3153, %v3153
      %v3155 = vld [vmem:[%s639] sm:$0x1]
      %3157 = vset.pattern.permute.xlu0 0
      %3158 = vperm.xlu0 %3157, %v3155
      %v3159 = vpop.permute.xlu0 %3158
      %v3161 = vlaneseq
      %v3162 = vshrl.u32 %v3161, 7
      %v3163 = vsub.s32 0, %v3162
      %v3164 = vrot.slane %v3159, %v3163
      %v3166 = vsel %vm953, %v3154, 0
      %3168 = vmatprep.subr.bf16.mxu0 0
      %3169 = vmatpush1.bf16.msra.mxu0 0
      %3170 = vmatprep.subr.bf16.mxu0 0
      %3171 = vmatpush1.bf16.msra.mxu0 0
      %3172 = vmatprep.subr.bf16.mxu0 0
      %3173 = vmatpush1.bf16.msra.mxu0 0
      %3174 = vmatprep.subr.bf16.mxu0 0
      %3175 = vmatpush1.bf16.msra.mxu0 0
      %3176 = vmatprep.subr.bf16.mxu0 0
      %3177 = vmatpush1.bf16.msra.mxu0 %v1599
      %3178 = vmatprep.subr.bf16.mxu0 0
      %3179 = vmatpush1.bf16.msra.mxu0 %v1598
      %3180 = vmatprep.subr.bf16.mxu0 0
      %3181 = vmatpush1.bf16.msra.mxu0 %v1597
      %3182 = vmatprep.subr.bf16.mxu0 0
      %3183 = vmatpush1.bf16.msra.mxu0 %v1596
      %3184 = vmatprep.subr.bf16.mxu0 0
      %3185 = vmatpush2.bf16.msra.mxu0 0
      %3186 = vmatprep.subr.bf16.mxu0 0
      %3187 = vmatpush2.bf16.msra.mxu0 0
      %3188 = vmatprep.subr.bf16.mxu0 0
      %3189 = vmatpush2.bf16.msra.mxu0 0
      %3190 = vmatprep.subr.bf16.mxu0 0
      %3191 = vmatpush2.bf16.msra.mxu0 0
      %3192 = vmatprep.subr.bf16.mxu0 0
      %3193 = vmatpush2.bf16.msra.mxu0 0
      %3194 = vmatprep.subr.bf16.mxu0 0
      %3195 = vmatpush2.bf16.msra.mxu0 0
      %3196 = vmatprep.subr.bf16.mxu0 0
      %3197 = vmatpush2.bf16.msra.mxu0 0
      %3198 = vmatprep.subr.bf16.mxu0 0
      %3199 = vmatpush2.bf16.msra.mxu0 0
      %3200 = vmatprep.mubr.bf16.mxu0 0
      %3201 = vmatmul.mubr.bf16.gmra.mxu0 %v3166
      %v3202 = vpop.f32.mrf.mxu0
      %v3203 = vadd.f32 %v3164, %v3202
      %v3204 = vpop.f32.mrf.mxu0
      %v3205 = vpop.f32.mrf.mxu0
      %v3206 = vpop.f32.mrf.mxu0
      %3207 = vdwg.mxu0
      %v3208 = vxor.u32 %v3203, 2147483648
      %v3209 = vmul.f32 %v3208, 1.442695
      %v3210 = vpow.pop %v3209
      %v3211 = vadd.f32 %v3210, 1.0
      %v3212 = vrcp.pop %v3211
      %v3213 = vmul.f32 1.0, %v3212
      %v3214 = vlaneseq
      %v3215 = vshrl.u32 %v3214, 7
      %v3216 = vsub.s32 0, %v3215
      %v3217 = vrot.slane %v3213, %v3216
      %v3218 = vmul.f32 %v3145, %v3217
      %v3219 = vmul.f32 %v3146, %v3217
      %v3220 = vmul.f32 %v3147, %v3217
      %v3221 = vmul.f32 %v3148, %v3217
      %v3222 = vmul.f32 %v3149, %v3217
      %v3223 = vmul.f32 %v3150, %v3217
      %v3224 = vmul.f32 %v3151, %v3217
      %v3225 = vmul.f32 %v3152, %v3217
      %v3226 = vadd.f32 %v3218, %v697
      %v3227 = vadd.f32 %v3219, %v698
      %v3228 = vadd.f32 %v3220, %v699
      %v3229 = vadd.f32 %v3221, %v700
      %v3230 = vadd.f32 %v3222, %v701
      %v3231 = vadd.f32 %v3223, %v702
      %v3232 = vadd.f32 %v3224, %v703
      %v3233 = vadd.f32 %v3225, %v704
      %vm3234 = vcmp.ge.f32.partialorder %v3226, 0.0
      %vm3235 = vcmp.ge.f32.partialorder %v3227, 0.0
      %vm3236 = vcmp.ge.f32.partialorder %v3228, 0.0
      %vm3237 = vcmp.ge.f32.partialorder %v3229, 0.0
      %vm3238 = vcmp.ge.f32.partialorder %v3230, 0.0
      %vm3239 = vcmp.ge.f32.partialorder %v3231, 0.0
      %vm3240 = vcmp.ge.f32.partialorder %v3232, 0.0
      %vm3241 = vcmp.ge.f32.partialorder %v3233, 0.0
      %v3242 = vmul.f32 %v3226, 0.1
      %v3243 = vmul.f32 %v3227, 0.1
      %v3244 = vmul.f32 %v3228, 0.1
      %v3245 = vmul.f32 %v3229, 0.1
      %v3246 = vmul.f32 %v3230, 0.1
      %v3247 = vmul.f32 %v3231, 0.1
      %v3248 = vmul.f32 %v3232, 0.1
      %v3249 = vmul.f32 %v3233, 0.1
      %v3250 = vsel %vm3234, %v3226, %v3242
      %v3251 = vsel %vm3235, %v3227, %v3243
      %v3252 = vsel %vm3236, %v3228, %v3244
      %v3253 = vsel %vm3237, %v3229, %v3245
      %v3254 = vsel %vm3238, %v3230, %v3246
      %v3255 = vsel %vm3239, %v3231, %v3247
      %v3256 = vsel %vm3240, %v3232, %v3248
      %v3257 = vsel %vm3241, %v3233, %v3249
      %v3258 = vpack.c.bf16 %v3251, %v3250
      %v3259 = vpack.c.bf16 %v3253, %v3252
      %v3260 = vpack.c.bf16 %v3255, %v3254
      %v3261 = vpack.c.bf16 %v3257, %v3256
      %3262 = vmatprep.subr.bf16.mxu0 0
      %3263 = vmatpush1.bf16.msra.mxu0 %v736
      %3264 = vmatprep.subr.bf16.mxu0 0
      %3265 = vmatpush1.bf16.msra.mxu0 %v735
      %3266 = vmatprep.subr.bf16.mxu0 0
      %3267 = vmatpush1.bf16.msra.mxu0 %v734
      %3268 = vmatprep.subr.bf16.mxu0 0
      %3269 = vmatpush1.bf16.msra.mxu0 %v733
      %3270 = vmatprep.subr.bf16.mxu0 0
      %3271 = vmatpush1.bf16.msra.mxu0 %v732
      %3272 = vmatprep.subr.bf16.mxu0 0
      %3273 = vmatpush1.bf16.msra.mxu0 %v731
      %3274 = vmatprep.subr.bf16.mxu0 0
      %3275 = vmatpush1.bf16.msra.mxu0 %v730
      %3276 = vmatprep.subr.bf16.mxu0 0
      %3277 = vmatpush1.bf16.msra.mxu0 %v729
      %3278 = vmatprep.subr.bf16.mxu0 0
      %3279 = vmatpush2.bf16.msra.mxu0 0
      %3280 = vmatprep.subr.bf16.mxu0 0
      %3281 = vmatpush2.bf16.msra.mxu0 0
      %3282 = vmatprep.subr.bf16.mxu0 0
      %3283 = vmatpush2.bf16.msra.mxu0 0
      %3284 = vmatprep.subr.bf16.mxu0 0
      %3285 = vmatpush2.bf16.msra.mxu0 0
      %3286 = vmatprep.subr.bf16.mxu0 0
      %3287 = vmatpush2.bf16.msra.mxu0 0
      %3288 = vmatprep.subr.bf16.mxu0 0
      %3289 = vmatpush2.bf16.msra.mxu0 0
      %3290 = vmatprep.subr.bf16.mxu0 0
      %3291 = vmatpush2.bf16.msra.mxu0 0
      %3292 = vmatprep.subr.bf16.mxu0 0
      %3293 = vmatpush2.bf16.msra.mxu0 0
      %3294 = vmatprep.mubr.bf16.mxu0 0
      %3295 = vmatmul.mubr.bf16.gmra.mxu0 %v3258
      %v3296 = vpop.f32.mrf.mxu0
      %v3297 = vadd.f32 0.0, %v3296
      %v3298 = vpop.f32.mrf.mxu0
      %v3299 = vpop.f32.mrf.mxu0
      %v3300 = vadd.f32 0.0, %v3299
      %v3301 = vpop.f32.mrf.mxu0
      %3302 = vmatprep.mubr.bf16.mxu0 0
      %3303 = vmatmul.mubr.bf16.gmra.mxu0 %v3259
      %v3304 = vpop.f32.mrf.mxu0
      %v3305 = vadd.f32 0.0, %v3304
      %v3306 = vpop.f32.mrf.mxu0
      %v3307 = vpop.f32.mrf.mxu0
      %v3308 = vadd.f32 0.0, %v3307
      %v3309 = vpop.f32.mrf.mxu0
      %3310 = vmatprep.mubr.bf16.mxu0 0
      %3311 = vmatmul.mubr.bf16.gmra.mxu0 %v3260
      %v3312 = vpop.f32.mrf.mxu0
      %v3313 = vadd.f32 0.0, %v3312
      %v3314 = vpop.f32.mrf.mxu0
      %v3315 = vpop.f32.mrf.mxu0
      %v3316 = vadd.f32 0.0, %v3315
      %v3317 = vpop.f32.mrf.mxu0
      %3318 = vmatprep.mubr.bf16.mxu0 0
      %3319 = vmatmul.mubr.bf16.gmra.mxu0 %v3261
      %v3320 = vpop.f32.mrf.mxu0
      %v3321 = vadd.f32 0.0, %v3320
      %v3322 = vpop.f32.mrf.mxu0
      %v3323 = vpop.f32.mrf.mxu0
      %v3324 = vadd.f32 0.0, %v3323
      %v3325 = vpop.f32.mrf.mxu0
      %3326 = vdwg.mxu0
      %3327 = vmatprep.subr.bf16.mxu0 0
      %3328 = vmatpush1.bf16.msra.mxu0 %v761
      %3329 = vmatprep.subr.bf16.mxu0 0
      %3330 = vmatpush1.bf16.msra.mxu0 %v760
      %3331 = vmatprep.subr.bf16.mxu0 0
      %3332 = vmatpush1.bf16.msra.mxu0 %v759
      %3333 = vmatprep.subr.bf16.mxu0 0
      %3334 = vmatpush1.bf16.msra.mxu0 %v758
      %3335 = vmatprep.subr.bf16.mxu0 0
      %3336 = vmatpush1.bf16.msra.mxu0 %v757
      %3337 = vmatprep.subr.bf16.mxu0 0
      %3338 = vmatpush1.bf16.msra.mxu0 %v756
      %3339 = vmatprep.subr.bf16.mxu0 0
      %3340 = vmatpush1.bf16.msra.mxu0 %v755
      %3341 = vmatprep.subr.bf16.mxu0 0
      %3342 = vmatpush1.bf16.msra.mxu0 %v754
      %3343 = vmatprep.subr.bf16.mxu0 0
      %3344 = vmatpush2.bf16.msra.mxu0 0
      %3345 = vmatprep.subr.bf16.mxu0 0
      %3346 = vmatpush2.bf16.msra.mxu0 0
      %3347 = vmatprep.subr.bf16.mxu0 0
      %3348 = vmatpush2.bf16.msra.mxu0 0
      %3349 = vmatprep.subr.bf16.mxu0 0
      %3350 = vmatpush2.bf16.msra.mxu0 0
      %3351 = vmatprep.subr.bf16.mxu0 0
      %3352 = vmatpush2.bf16.msra.mxu0 0
      %3353 = vmatprep.subr.bf16.mxu0 0
      %3354 = vmatpush2.bf16.msra.mxu0 0
      %3355 = vmatprep.subr.bf16.mxu0 0
      %3356 = vmatpush2.bf16.msra.mxu0 0
      %3357 = vmatprep.subr.bf16.mxu0 0
      %3358 = vmatpush2.bf16.msra.mxu0 0
      %3359 = vmatprep.mubr.bf16.mxu0 0
      %3360 = vmatmul.mubr.bf16.gmra.mxu0 %v3258
      %v3361 = vpop.f32.mrf.mxu0
      %v3362 = vadd.f32 0.0, %v3361
      %v3363 = vpop.f32.mrf.mxu0
      %v3364 = vpop.f32.mrf.mxu0
      %v3365 = vadd.f32 0.0, %v3364
      %v3366 = vpop.f32.mrf.mxu0
      %3367 = vmatprep.mubr.bf16.mxu0 0
      %3368 = vmatmul.mubr.bf16.gmra.mxu0 %v3259
      %v3369 = vpop.f32.mrf.mxu0
      %v3370 = vadd.f32 0.0, %v3369
      %v3371 = vpop.f32.mrf.mxu0
      %v3372 = vpop.f32.mrf.mxu0
      %v3373 = vadd.f32 0.0, %v3372
      %v3374 = vpop.f32.mrf.mxu0
      %3375 = vmatprep.mubr.bf16.mxu0 0
      %3376 = vmatmul.mubr.bf16.gmra.mxu0 %v3260
      %v3377 = vpop.f32.mrf.mxu0
      %v3378 = vadd.f32 0.0, %v3377
      %v3379 = vpop.f32.mrf.mxu0
      %v3380 = vpop.f32.mrf.mxu0
      %v3381 = vadd.f32 0.0, %v3380
      %v3382 = vpop.f32.mrf.mxu0
      %3383 = vmatprep.mubr.bf16.mxu0 0
      %3384 = vmatmul.mubr.bf16.gmra.mxu0 %v3261
      %v3385 = vpop.f32.mrf.mxu0
      %v3386 = vadd.f32 0.0, %v3385
      %v3387 = vpop.f32.mrf.mxu0
      %v3388 = vpop.f32.mrf.mxu0
      %v3389 = vadd.f32 0.0, %v3388
      %v3390 = vpop.f32.mrf.mxu0
      %3391 = vdwg.mxu0
      %3392 = vmatprep.subr.bf16.mxu0 0
      %3393 = vmatpush1.bf16.msra.mxu0 %v786
      %3394 = vmatprep.subr.bf16.mxu0 0
      %3395 = vmatpush1.bf16.msra.mxu0 %v785
      %3396 = vmatprep.subr.bf16.mxu0 0
      %3397 = vmatpush1.bf16.msra.mxu0 %v784
      %3398 = vmatprep.subr.bf16.mxu0 0
      %3399 = vmatpush1.bf16.msra.mxu0 %v783
      %3400 = vmatprep.subr.bf16.mxu0 0
      %3401 = vmatpush1.bf16.msra.mxu0 %v782
      %3402 = vmatprep.subr.bf16.mxu0 0
      %3403 = vmatpush1.bf16.msra.mxu0 %v781
      %3404 = vmatprep.subr.bf16.mxu0 0
      %3405 = vmatpush1.bf16.msra.mxu0 %v780
      %3406 = vmatprep.subr.bf16.mxu0 0
      %3407 = vmatpush1.bf16.msra.mxu0 %v779
      %3408 = vmatprep.subr.bf16.mxu0 0
      %3409 = vmatpush2.bf16.msra.mxu0 0
      %3410 = vmatprep.subr.bf16.mxu0 0
      %3411 = vmatpush2.bf16.msra.mxu0 0
      %3412 = vmatprep.subr.bf16.mxu0 0
      %3413 = vmatpush2.bf16.msra.mxu0 0
      %3414 = vmatprep.subr.bf16.mxu0 0
      %3415 = vmatpush2.bf16.msra.mxu0 0
      %3416 = vmatprep.subr.bf16.mxu0 0
      %3417 = vmatpush2.bf16.msra.mxu0 0
      %3418 = vmatprep.subr.bf16.mxu0 0
      %3419 = vmatpush2.bf16.msra.mxu0 0
      %3420 = vmatprep.subr.bf16.mxu0 0
      %3421 = vmatpush2.bf16.msra.mxu0 0
      %3422 = vmatprep.subr.bf16.mxu0 0
      %3423 = vmatpush2.bf16.msra.mxu0 0
      %3424 = vmatprep.mubr.bf16.mxu0 0
      %3425 = vmatmul.mubr.bf16.gmra.mxu0 %v3258
      %v3426 = vpop.f32.mrf.mxu0
      %v3427 = vadd.f32 0.0, %v3426
      %v3428 = vpop.f32.mrf.mxu0
      %v3429 = vpop.f32.mrf.mxu0
      %v3430 = vadd.f32 0.0, %v3429
      %v3431 = vpop.f32.mrf.mxu0
      %3432 = vmatprep.mubr.bf16.mxu0 0
      %3433 = vmatmul.mubr.bf16.gmra.mxu0 %v3259
      %v3434 = vpop.f32.mrf.mxu0
      %v3435 = vadd.f32 0.0, %v3434
      %v3436 = vpop.f32.mrf.mxu0
      %v3437 = vpop.f32.mrf.mxu0
      %v3438 = vadd.f32 0.0, %v3437
      %v3439 = vpop.f32.mrf.mxu0
      %3440 = vmatprep.mubr.bf16.mxu0 0
      %3441 = vmatmul.mubr.bf16.gmra.mxu0 %v3260
      %v3442 = vpop.f32.mrf.mxu0
      %v3443 = vadd.f32 0.0, %v3442
      %v3444 = vpop.f32.mrf.mxu0
      %v3445 = vpop.f32.mrf.mxu0
      %v3446 = vadd.f32 0.0, %v3445
      %v3447 = vpop.f32.mrf.mxu0
      %3448 = vmatprep.mubr.bf16.mxu0 0
      %3449 = vmatmul.mubr.bf16.gmra.mxu0 %v3261
      %v3450 = vpop.f32.mrf.mxu0
      %v3451 = vadd.f32 0.0, %v3450
      %v3452 = vpop.f32.mrf.mxu0
      %v3453 = vpop.f32.mrf.mxu0
      %v3454 = vadd.f32 0.0, %v3453
      %v3455 = vpop.f32.mrf.mxu0
      %3456 = vdwg.mxu0
      %3457 = vmatprep.subr.bf16.mxu0 0
      %3458 = vmatpush1.bf16.msra.mxu0 %v811
      %3459 = vmatprep.subr.bf16.mxu0 0
      %3460 = vmatpush1.bf16.msra.mxu0 %v810
      %3461 = vmatprep.subr.bf16.mxu0 0
      %3462 = vmatpush1.bf16.msra.mxu0 %v809
      %3463 = vmatprep.subr.bf16.mxu0 0
      %3464 = vmatpush1.bf16.msra.mxu0 %v808
      %3465 = vmatprep.subr.bf16.mxu0 0
      %3466 = vmatpush1.bf16.msra.mxu0 %v807
      %3467 = vmatprep.subr.bf16.mxu0 0
      %3468 = vmatpush1.bf16.msra.mxu0 %v806
      %3469 = vmatprep.subr.bf16.mxu0 0
      %3470 = vmatpush1.bf16.msra.mxu0 %v805
      %3471 = vmatprep.subr.bf16.mxu0 0
      %3472 = vmatpush1.bf16.msra.mxu0 %v804
      %3473 = vmatprep.subr.bf16.mxu0 0
      %3474 = vmatpush2.bf16.msra.mxu0 0
      %3475 = vmatprep.subr.bf16.mxu0 0
      %3476 = vmatpush2.bf16.msra.mxu0 0
      %3477 = vmatprep.subr.bf16.mxu0 0
      %3478 = vmatpush2.bf16.msra.mxu0 0
      %3479 = vmatprep.subr.bf16.mxu0 0
      %3480 = vmatpush2.bf16.msra.mxu0 0
      %3481 = vmatprep.subr.bf16.mxu0 0
      %3482 = vmatpush2.bf16.msra.mxu0 0
      %3483 = vmatprep.subr.bf16.mxu0 0
      %3484 = vmatpush2.bf16.msra.mxu0 0
      %3485 = vmatprep.subr.bf16.mxu0 0
      %3486 = vmatpush2.bf16.msra.mxu0 0
      %3487 = vmatprep.subr.bf16.mxu0 0
      %3488 = vmatpush2.bf16.msra.mxu0 0
      %3489 = vmatprep.mubr.bf16.mxu0 0
      %3490 = vmatmul.mubr.bf16.gmra.mxu0 %v3258
      %v3491 = vpop.f32.mrf.mxu0
      %v3492 = vadd.f32 0.0, %v3491
      %v3493 = vpop.f32.mrf.mxu0
      %v3494 = vpop.f32.mrf.mxu0
      %v3495 = vadd.f32 0.0, %v3494
      %v3496 = vpop.f32.mrf.mxu0
      %3497 = vmatprep.mubr.bf16.mxu0 0
      %3498 = vmatmul.mubr.bf16.gmra.mxu0 %v3259
      %v3499 = vpop.f32.mrf.mxu0
      %v3500 = vadd.f32 0.0, %v3499
      %v3501 = vpop.f32.mrf.mxu0
      %v3502 = vpop.f32.mrf.mxu0
      %v3503 = vadd.f32 0.0, %v3502
      %v3504 = vpop.f32.mrf.mxu0
      %3505 = vmatprep.mubr.bf16.mxu0 0
      %3506 = vmatmul.mubr.bf16.gmra.mxu0 %v3260
      %v3507 = vpop.f32.mrf.mxu0
      %v3508 = vadd.f32 0.0, %v3507
      %v3509 = vpop.f32.mrf.mxu0
      %v3510 = vpop.f32.mrf.mxu0
      %v3511 = vadd.f32 0.0, %v3510
      %v3512 = vpop.f32.mrf.mxu0
      %3513 = vmatprep.mubr.bf16.mxu0 0
      %3514 = vmatmul.mubr.bf16.gmra.mxu0 %v3261
      %v3515 = vpop.f32.mrf.mxu0
      %v3516 = vadd.f32 0.0, %v3515
      %v3517 = vpop.f32.mrf.mxu0
      %v3518 = vpop.f32.mrf.mxu0
      %v3519 = vadd.f32 0.0, %v3518
      %v3520 = vpop.f32.mrf.mxu0
      %3521 = vdwg.mxu0
      %3522 = vmatprep.subr.bf16.mxu0 0
      %3523 = vmatpush1.bf16.msra.mxu0 %v836
      %3524 = vmatprep.subr.bf16.mxu0 0
      %3525 = vmatpush1.bf16.msra.mxu0 %v835
      %3526 = vmatprep.subr.bf16.mxu0 0
      %3527 = vmatpush1.bf16.msra.mxu0 %v834
      %3528 = vmatprep.subr.bf16.mxu0 0
      %3529 = vmatpush1.bf16.msra.mxu0 %v833
      %3530 = vmatprep.subr.bf16.mxu0 0
      %3531 = vmatpush1.bf16.msra.mxu0 %v832
      %3532 = vmatprep.subr.bf16.mxu0 0
      %3533 = vmatpush1.bf16.msra.mxu0 %v831
      %3534 = vmatprep.subr.bf16.mxu0 0
      %3535 = vmatpush1.bf16.msra.mxu0 %v830
      %3536 = vmatprep.subr.bf16.mxu0 0
      %3537 = vmatpush1.bf16.msra.mxu0 %v829
      %3538 = vmatprep.subr.bf16.mxu0 0
      %3539 = vmatpush2.bf16.msra.mxu0 0
      %3540 = vmatprep.subr.bf16.mxu0 0
      %3541 = vmatpush2.bf16.msra.mxu0 0
      %3542 = vmatprep.subr.bf16.mxu0 0
      %3543 = vmatpush2.bf16.msra.mxu0 0
      %3544 = vmatprep.subr.bf16.mxu0 0
      %3545 = vmatpush2.bf16.msra.mxu0 0
      %3546 = vmatprep.subr.bf16.mxu0 0
      %3547 = vmatpush2.bf16.msra.mxu0 0
      %3548 = vmatprep.subr.bf16.mxu0 0
      %3549 = vmatpush2.bf16.msra.mxu0 0
      %3550 = vmatprep.subr.bf16.mxu0 0
      %3551 = vmatpush2.bf16.msra.mxu0 0
      %3552 = vmatprep.subr.bf16.mxu0 0
      %3553 = vmatpush2.bf16.msra.mxu0 0
      %3554 = vmatprep.mubr.bf16.mxu0 0
      %3555 = vmatmul.mubr.bf16.gmra.mxu0 %v3258
      %v3556 = vpop.f32.mrf.mxu0
      %v3557 = vadd.f32 0.0, %v3556
      %v3558 = vpop.f32.mrf.mxu0
      %v3559 = vpop.f32.mrf.mxu0
      %v3560 = vadd.f32 0.0, %v3559
      %v3561 = vpop.f32.mrf.mxu0
      %3562 = vmatprep.mubr.bf16.mxu0 0
      %3563 = vmatmul.mubr.bf16.gmra.mxu0 %v3259
      %v3564 = vpop.f32.mrf.mxu0
      %v3565 = vadd.f32 0.0, %v3564
      %v3566 = vpop.f32.mrf.mxu0
      %v3567 = vpop.f32.mrf.mxu0
      %v3568 = vadd.f32 0.0, %v3567
      %v3569 = vpop.f32.mrf.mxu0
      %3570 = vmatprep.mubr.bf16.mxu0 0
      %3571 = vmatmul.mubr.bf16.gmra.mxu0 %v3260
      %v3572 = vpop.f32.mrf.mxu0
      %v3573 = vadd.f32 0.0, %v3572
      %v3574 = vpop.f32.mrf.mxu0
      %v3575 = vpop.f32.mrf.mxu0
      %v3576 = vadd.f32 0.0, %v3575
      %v3577 = vpop.f32.mrf.mxu0
      %3578 = vmatprep.mubr.bf16.mxu0 0
      %3579 = vmatmul.mubr.bf16.gmra.mxu0 %v3261
      %v3580 = vpop.f32.mrf.mxu0
      %v3581 = vadd.f32 0.0, %v3580
      %v3582 = vpop.f32.mrf.mxu0
      %v3583 = vpop.f32.mrf.mxu0
      %v3584 = vadd.f32 0.0, %v3583
      %v3585 = vpop.f32.mrf.mxu0
      %3586 = vdwg.mxu0
      %3587 = vmatprep.subr.bf16.mxu0 0
      %3588 = vmatpush1.bf16.msra.mxu0 %v861
      %3589 = vmatprep.subr.bf16.mxu0 0
      %3590 = vmatpush1.bf16.msra.mxu0 %v860
      %3591 = vmatprep.subr.bf16.mxu0 0
      %3592 = vmatpush1.bf16.msra.mxu0 %v859
      %3593 = vmatprep.subr.bf16.mxu0 0
      %3594 = vmatpush1.bf16.msra.mxu0 %v858
      %3595 = vmatprep.subr.bf16.mxu0 0
      %3596 = vmatpush1.bf16.msra.mxu0 %v857
      %3597 = vmatprep.subr.bf16.mxu0 0
      %3598 = vmatpush1.bf16.msra.mxu0 %v856
      %3599 = vmatprep.subr.bf16.mxu0 0
      %3600 = vmatpush1.bf16.msra.mxu0 %v855
      %3601 = vmatprep.subr.bf16.mxu0 0
      %3602 = vmatpush1.bf16.msra.mxu0 %v854
      %3603 = vmatprep.subr.bf16.mxu0 0
      %3604 = vmatpush2.bf16.msra.mxu0 0
      %3605 = vmatprep.subr.bf16.mxu0 0
      %3606 = vmatpush2.bf16.msra.mxu0 0
      %3607 = vmatprep.subr.bf16.mxu0 0
      %3608 = vmatpush2.bf16.msra.mxu0 0
      %3609 = vmatprep.subr.bf16.mxu0 0
      %3610 = vmatpush2.bf16.msra.mxu0 0
      %3611 = vmatprep.subr.bf16.mxu0 0
      %3612 = vmatpush2.bf16.msra.mxu0 0
      %3613 = vmatprep.subr.bf16.mxu0 0
      %3614 = vmatpush2.bf16.msra.mxu0 0
      %3615 = vmatprep.subr.bf16.mxu0 0
      %3616 = vmatpush2.bf16.msra.mxu0 0
      %3617 = vmatprep.subr.bf16.mxu0 0
      %3618 = vmatpush2.bf16.msra.mxu0 0
      %3619 = vmatprep.mubr.bf16.mxu0 0
      %3620 = vmatmul.mubr.bf16.gmra.mxu0 %v3258
      %v3621 = vpop.f32.mrf.mxu0
      %v3622 = vadd.f32 0.0, %v3621
      %v3623 = vpop.f32.mrf.mxu0
      %v3624 = vpop.f32.mrf.mxu0
      %v3625 = vadd.f32 0.0, %v3624
      %v3626 = vpop.f32.mrf.mxu0
      %3627 = vmatprep.mubr.bf16.mxu0 0
      %3628 = vmatmul.mubr.bf16.gmra.mxu0 %v3259
      %v3629 = vpop.f32.mrf.mxu0
      %v3630 = vadd.f32 0.0, %v3629
      %v3631 = vpop.f32.mrf.mxu0
      %v3632 = vpop.f32.mrf.mxu0
      %v3633 = vadd.f32 0.0, %v3632
      %v3634 = vpop.f32.mrf.mxu0
      %3635 = vmatprep.mubr.bf16.mxu0 0
      %3636 = vmatmul.mubr.bf16.gmra.mxu0 %v3260
      %v3637 = vpop.f32.mrf.mxu0
      %v3638 = vadd.f32 0.0, %v3637
      %v3639 = vpop.f32.mrf.mxu0
      %v3640 = vpop.f32.mrf.mxu0
      %v3641 = vadd.f32 0.0, %v3640
      %v3642 = vpop.f32.mrf.mxu0
      %3643 = vmatprep.mubr.bf16.mxu0 0
      %3644 = vmatmul.mubr.bf16.gmra.mxu0 %v3261
      %v3645 = vpop.f32.mrf.mxu0
      %v3646 = vadd.f32 0.0, %v3645
      %v3647 = vpop.f32.mrf.mxu0
      %v3648 = vpop.f32.mrf.mxu0
      %v3649 = vadd.f32 0.0, %v3648
      %v3650 = vpop.f32.mrf.mxu0
      %3651 = vdwg.mxu0
      %3652 = vmatprep.subr.bf16.mxu0 0
      %3653 = vmatpush1.bf16.msra.mxu0 %v886
      %3654 = vmatprep.subr.bf16.mxu0 0
      %3655 = vmatpush1.bf16.msra.mxu0 %v885
      %3656 = vmatprep.subr.bf16.mxu0 0
      %3657 = vmatpush1.bf16.msra.mxu0 %v884
      %3658 = vmatprep.subr.bf16.mxu0 0
      %3659 = vmatpush1.bf16.msra.mxu0 %v883
      %3660 = vmatprep.subr.bf16.mxu0 0
      %3661 = vmatpush1.bf16.msra.mxu0 %v882
      %3662 = vmatprep.subr.bf16.mxu0 0
      %3663 = vmatpush1.bf16.msra.mxu0 %v881
      %3664 = vmatprep.subr.bf16.mxu0 0
      %3665 = vmatpush1.bf16.msra.mxu0 %v880
      %3666 = vmatprep.subr.bf16.mxu0 0
      %3667 = vmatpush1.bf16.msra.mxu0 %v879
      %3668 = vmatprep.subr.bf16.mxu0 0
      %3669 = vmatpush2.bf16.msra.mxu0 0
      %3670 = vmatprep.subr.bf16.mxu0 0
      %3671 = vmatpush2.bf16.msra.mxu0 0
      %3672 = vmatprep.subr.bf16.mxu0 0
      %3673 = vmatpush2.bf16.msra.mxu0 0
      %3674 = vmatprep.subr.bf16.mxu0 0
      %3675 = vmatpush2.bf16.msra.mxu0 0
      %3676 = vmatprep.subr.bf16.mxu0 0
      %3677 = vmatpush2.bf16.msra.mxu0 0
      %3678 = vmatprep.subr.bf16.mxu0 0
      %3679 = vmatpush2.bf16.msra.mxu0 0
      %3680 = vmatprep.subr.bf16.mxu0 0
      %3681 = vmatpush2.bf16.msra.mxu0 0
      %3682 = vmatprep.subr.bf16.mxu0 0
      %3683 = vmatpush2.bf16.msra.mxu0 0
      %3684 = vmatprep.mubr.bf16.mxu0 0
      %3685 = vmatmul.mubr.bf16.gmra.mxu0 %v3258
      %v3686 = vpop.f32.mrf.mxu0
      %v3687 = vadd.f32 0.0, %v3686
      %v3688 = vpop.f32.mrf.mxu0
      %v3689 = vpop.f32.mrf.mxu0
      %v3690 = vadd.f32 0.0, %v3689
      %v3691 = vpop.f32.mrf.mxu0
      %3692 = vmatprep.mubr.bf16.mxu0 0
      %3693 = vmatmul.mubr.bf16.gmra.mxu0 %v3259
      %v3694 = vpop.f32.mrf.mxu0
      %v3695 = vadd.f32 0.0, %v3694
      %v3696 = vpop.f32.mrf.mxu0
      %v3697 = vpop.f32.mrf.mxu0
      %v3698 = vadd.f32 0.0, %v3697
      %v3699 = vpop.f32.mrf.mxu0
      %3700 = vmatprep.mubr.bf16.mxu0 0
      %3701 = vmatmul.mubr.bf16.gmra.mxu0 %v3260
      %v3702 = vpop.f32.mrf.mxu0
      %v3703 = vadd.f32 0.0, %v3702
      %v3704 = vpop.f32.mrf.mxu0
      %v3705 = vpop.f32.mrf.mxu0
      %v3706 = vadd.f32 0.0, %v3705
      %v3707 = vpop.f32.mrf.mxu0
      %3708 = vmatprep.mubr.bf16.mxu0 0
      %3709 = vmatmul.mubr.bf16.gmra.mxu0 %v3261
      %v3710 = vpop.f32.mrf.mxu0
      %v3711 = vadd.f32 0.0, %v3710
      %v3712 = vpop.f32.mrf.mxu0
      %v3713 = vpop.f32.mrf.mxu0
      %v3714 = vadd.f32 0.0, %v3713
      %v3715 = vpop.f32.mrf.mxu0
      %3716 = vdwg.mxu0
      %3717 = vmatprep.subr.bf16.mxu0 0
      %3718 = vmatpush1.bf16.msra.mxu0 %v911
      %3719 = vmatprep.subr.bf16.mxu0 0
      %3720 = vmatpush1.bf16.msra.mxu0 %v910
      %3721 = vmatprep.subr.bf16.mxu0 0
      %3722 = vmatpush1.bf16.msra.mxu0 %v909
      %3723 = vmatprep.subr.bf16.mxu0 0
      %3724 = vmatpush1.bf16.msra.mxu0 %v908
      %3725 = vmatprep.subr.bf16.mxu0 0
      %3726 = vmatpush1.bf16.msra.mxu0 %v907
      %3727 = vmatprep.subr.bf16.mxu0 0
      %3728 = vmatpush1.bf16.msra.mxu0 %v906
      %3729 = vmatprep.subr.bf16.mxu0 0
      %3730 = vmatpush1.bf16.msra.mxu0 %v905
      %3731 = vmatprep.subr.bf16.mxu0 0
      %3732 = vmatpush1.bf16.msra.mxu0 %v904
      %3733 = vmatprep.subr.bf16.mxu0 0
      %3734 = vmatpush2.bf16.msra.mxu0 0
      %3735 = vmatprep.subr.bf16.mxu0 0
      %3736 = vmatpush2.bf16.msra.mxu0 0
      %3737 = vmatprep.subr.bf16.mxu0 0
      %3738 = vmatpush2.bf16.msra.mxu0 0
      %3739 = vmatprep.subr.bf16.mxu0 0
      %3740 = vmatpush2.bf16.msra.mxu0 0
      %3741 = vmatprep.subr.bf16.mxu0 0
      %3742 = vmatpush2.bf16.msra.mxu0 0
      %3743 = vmatprep.subr.bf16.mxu0 0
      %3744 = vmatpush2.bf16.msra.mxu0 0
      %3745 = vmatprep.subr.bf16.mxu0 0
      %3746 = vmatpush2.bf16.msra.mxu0 0
      %3747 = vmatprep.subr.bf16.mxu0 0
      %3748 = vmatpush2.bf16.msra.mxu0 0
      %3749 = vmatprep.mubr.bf16.mxu0 0
      %3750 = vmatmul.mubr.bf16.gmra.mxu0 %v3258
      %v3751 = vpop.f32.mrf.mxu0
      %v3752 = vadd.f32 0.0, %v3751
      %v3753 = vpop.f32.mrf.mxu0
      %v3754 = vpop.f32.mrf.mxu0
      %v3755 = vadd.f32 0.0, %v3754
      %v3756 = vpop.f32.mrf.mxu0
      %3757 = vmatprep.mubr.bf16.mxu0 0
      %3758 = vmatmul.mubr.bf16.gmra.mxu0 %v3259
      %v3759 = vpop.f32.mrf.mxu0
      %v3760 = vadd.f32 0.0, %v3759
      %v3761 = vpop.f32.mrf.mxu0
      %v3762 = vpop.f32.mrf.mxu0
      %v3763 = vadd.f32 0.0, %v3762
      %v3764 = vpop.f32.mrf.mxu0
      %3765 = vmatprep.mubr.bf16.mxu0 0
      %3766 = vmatmul.mubr.bf16.gmra.mxu0 %v3260
      %v3767 = vpop.f32.mrf.mxu0
      %v3768 = vadd.f32 0.0, %v3767
      %v3769 = vpop.f32.mrf.mxu0
      %v3770 = vpop.f32.mrf.mxu0
      %v3771 = vadd.f32 0.0, %v3770
      %v3772 = vpop.f32.mrf.mxu0
      %3773 = vmatprep.mubr.bf16.mxu0 0
      %3774 = vmatmul.mubr.bf16.gmra.mxu0 %v3261
      %v3775 = vpop.f32.mrf.mxu0
      %v3776 = vadd.f32 0.0, %v3775
      %v3777 = vpop.f32.mrf.mxu0
      %v3778 = vpop.f32.mrf.mxu0
      %v3779 = vadd.f32 0.0, %v3778
      %v3780 = vpop.f32.mrf.mxu0
      %3781 = vdwg.mxu0
      %3782 = vmatprep.subr.bf16.mxu0 0
      %3783 = vmatpush1.bf16.msra.mxu0 %v936
      %3784 = vmatprep.subr.bf16.mxu0 0
      %3785 = vmatpush1.bf16.msra.mxu0 %v935
      %3786 = vmatprep.subr.bf16.mxu0 0
      %3787 = vmatpush1.bf16.msra.mxu0 %v934
      %3788 = vmatprep.subr.bf16.mxu0 0
      %3789 = vmatpush1.bf16.msra.mxu0 %v933
      %3790 = vmatprep.subr.bf16.mxu0 0
      %3791 = vmatpush1.bf16.msra.mxu0 %v932
      %3792 = vmatprep.subr.bf16.mxu0 0
      %3793 = vmatpush1.bf16.msra.mxu0 %v931
      %3794 = vmatprep.subr.bf16.mxu0 0
      %3795 = vmatpush1.bf16.msra.mxu0 %v930
      %3796 = vmatprep.subr.bf16.mxu0 0
      %3797 = vmatpush1.bf16.msra.mxu0 %v929
      %3798 = vmatprep.subr.bf16.mxu0 0
      %3799 = vmatpush2.bf16.msra.mxu0 0
      %3800 = vmatprep.subr.bf16.mxu0 0
      %3801 = vmatpush2.bf16.msra.mxu0 0
      %3802 = vmatprep.subr.bf16.mxu0 0
      %3803 = vmatpush2.bf16.msra.mxu0 0
      %3804 = vmatprep.subr.bf16.mxu0 0
      %3805 = vmatpush2.bf16.msra.mxu0 0
      %3806 = vmatprep.subr.bf16.mxu0 0
      %3807 = vmatpush2.bf16.msra.mxu0 0
      %3808 = vmatprep.subr.bf16.mxu0 0
      %3809 = vmatpush2.bf16.msra.mxu0 0
      %3810 = vmatprep.subr.bf16.mxu0 0
      %3811 = vmatpush2.bf16.msra.mxu0 0
      %3812 = vmatprep.subr.bf16.mxu0 0
      %3813 = vmatpush2.bf16.msra.mxu0 0
      %3814 = vmatprep.mubr.bf16.mxu0 0
      %3815 = vmatmul.mubr.bf16.gmra.mxu0 %v3258
      %v3816 = vpop.f32.mrf.mxu0
      %v3817 = vadd.f32 0.0, %v3816
      %v3818 = vpop.f32.mrf.mxu0
      %v3819 = vpop.f32.mrf.mxu0
      %v3820 = vadd.f32 0.0, %v3819
      %v3821 = vpop.f32.mrf.mxu0
      %3822 = vmatprep.mubr.bf16.mxu0 0
      %3823 = vmatmul.mubr.bf16.gmra.mxu0 %v3259
      %v3824 = vpop.f32.mrf.mxu0
      %v3825 = vadd.f32 0.0, %v3824
      %v3826 = vpop.f32.mrf.mxu0
      %v3827 = vpop.f32.mrf.mxu0
      %v3828 = vadd.f32 0.0, %v3827
      %v3829 = vpop.f32.mrf.mxu0
      %3830 = vmatprep.mubr.bf16.mxu0 0
      %3831 = vmatmul.mubr.bf16.gmra.mxu0 %v3260
      %v3832 = vpop.f32.mrf.mxu0
      %v3833 = vadd.f32 0.0, %v3832
      %v3834 = vpop.f32.mrf.mxu0
      %v3835 = vpop.f32.mrf.mxu0
      %v3836 = vadd.f32 0.0, %v3835
      %v3837 = vpop.f32.mrf.mxu0
      %3838 = vmatprep.mubr.bf16.mxu0 0
      %3839 = vmatmul.mubr.bf16.gmra.mxu0 %v3261
      %v3840 = vpop.f32.mrf.mxu0
      %v3841 = vadd.f32 0.0, %v3840
      %v3842 = vpop.f32.mrf.mxu0
      %v3843 = vpop.f32.mrf.mxu0
      %v3844 = vadd.f32 0.0, %v3843
      %v3845 = vpop.f32.mrf.mxu0
      %3846 = vdwg.mxu0
      %v3847 = vld [vmem:[%s660] sm:$0xff]
      %v3848 = vld [vmem:[%s660 + $0x8] sm:$0xff]
      %v3849 = vld [vmem:[%s660 + $0x10] sm:$0xff]
      %v3850 = vld [vmem:[%s660 + $0x18] sm:$0xff]
      %v3851 = vld [vmem:[%s660 + $0x20] sm:$0xff]
      %v3852 = vld [vmem:[%s660 + $0x28] sm:$0xff]
      %v3853 = vld [vmem:[%s660 + $0x30] sm:$0xff]
      %v3854 = vld [vmem:[%s660 + $0x38] sm:$0xff]
      %v3855 = vld [vmem:[%s660 + $0x40] sm:$0xff]
      %v3856 = vld [vmem:[%s660 + $0x48] sm:$0xff]
      %v3857 = vld [vmem:[%s660 + $0x50] sm:$0xff]
      %v3858 = vld [vmem:[%s660 + $0x58] sm:$0xff]
      %v3859 = vld [vmem:[%s660 + $0x60] sm:$0xff]
      %v3860 = vld [vmem:[%s660 + $0x68] sm:$0xff]
      %v3861 = vld [vmem:[%s660 + $0x70] sm:$0xff]
      %v3862 = vld [vmem:[%s660 + $0x78] sm:$0xff]
      %v3863 = vld [vmem:[%s660 + $0x80] sm:$0xff]
      %v3864 = vld [vmem:[%s660 + $0x88] sm:$0xff]
      %v3865 = vld [vmem:[%s660 + $0x90] sm:$0xff]
      %v3866 = vld [vmem:[%s660 + $0x98] sm:$0xff]
      %v3867 = vld [vmem:[%s660 + $0xa0] sm:$0xff]
      %v3868 = vld [vmem:[%s660 + $0xa8] sm:$0xff]
      %v3869 = vld [vmem:[%s660 + $0xb0] sm:$0xff]
      %v3870 = vld [vmem:[%s660 + $0xb8] sm:$0xff]
      %v3871 = vld [vmem:[%s660 + $0xc0] sm:$0xff]
      %v3872 = vld [vmem:[%s660 + $0xc8] sm:$0xff]
      %v3873 = vld [vmem:[%s660 + $0xd0] sm:$0xff]
      %v3874 = vld [vmem:[%s660 + $0xd8] sm:$0xff]
      %v3875 = vld [vmem:[%s660 + $0xe0] sm:$0xff]
      %v3876 = vld [vmem:[%s660 + $0xe8] sm:$0xff]
      %v3877 = vld [vmem:[%s660 + $0xf0] sm:$0xff]
      %v3878 = vld [vmem:[%s660 + $0xf8] sm:$0xff]
      %v3879 = vld [vmem:[%s660 + $0x100] sm:$0xff]
      %v3880 = vld [vmem:[%s660 + $0x108] sm:$0xff]
      %v3881 = vld [vmem:[%s660 + $0x110] sm:$0xff]
      %v3882 = vld [vmem:[%s660 + $0x118] sm:$0xff]
      %v3883 = vld [vmem:[%s660 + $0x120] sm:$0xff]
      %v3884 = vld [vmem:[%s660 + $0x128] sm:$0xff]
      %v3885 = vld [vmem:[%s660 + $0x130] sm:$0xff]
      %v3886 = vld [vmem:[%s660 + $0x138] sm:$0xff]
      %v3887 = vpack.c.bf16 %v3852, %v3847
      %v3888 = vpack.c.bf16 %v3853, %v3848
      %v3889 = vpack.c.bf16 %v3854, %v3849
      %v3890 = vpack.c.bf16 %v3855, %v3850
      %v3891 = vpack.c.bf16 %v3856, %v3851
      %v3892 = vpack.c.bf16 %v3862, %v3857
      %v3893 = vpack.c.bf16 %v3863, %v3858
      %v3894 = vpack.c.bf16 %v3864, %v3859
      %v3895 = vpack.c.bf16 %v3865, %v3860
      %v3896 = vpack.c.bf16 %v3866, %v3861
      %v3897 = vpack.c.bf16 %v3872, %v3867
      %v3898 = vpack.c.bf16 %v3873, %v3868
      %v3899 = vpack.c.bf16 %v3874, %v3869
      %v3900 = vpack.c.bf16 %v3875, %v3870
      %v3901 = vpack.c.bf16 %v3876, %v3871
      %v3902 = vpack.c.bf16 %v3882, %v3877
      %v3903 = vpack.c.bf16 %v3883, %v3878
      %v3904 = vpack.c.bf16 %v3884, %v3879
      %v3905 = vpack.c.bf16 %v3885, %v3880
      %v3906 = vpack.c.bf16 %v3886, %v3881
      %v3907 = vpack.c.bf16 %v3300, %v3297
      %v3908 = vpack.c.bf16 %v3308, %v3305
      %v3909 = vpack.c.bf16 %v3316, %v3313
      %v3910 = vpack.c.bf16 %v3324, %v3321
      %v3911 = vpack.c.bf16 %v3365, %v3362
      %v3912 = vpack.c.bf16 %v3373, %v3370
      %v3913 = vpack.c.bf16 %v3381, %v3378
      %v3914 = vpack.c.bf16 %v3389, %v3386
      %v3915 = vpack.c.bf16 %v3430, %v3427
      %v3916 = vpack.c.bf16 %v3438, %v3435
      %v3917 = vpack.c.bf16 %v3446, %v3443
      %v3918 = vpack.c.bf16 %v3454, %v3451
      %v3919 = vpack.c.bf16 %v3495, %v3492
      %v3920 = vpack.c.bf16 %v3503, %v3500
      %v3921 = vpack.c.bf16 %v3511, %v3508
      %v3922 = vpack.c.bf16 %v3519, %v3516
      %v3923 = vpack.c.bf16 %v3560, %v3557
      %v3924 = vpack.c.bf16 %v3568, %v3565
      %v3925 = vpack.c.bf16 %v3576, %v3573
      %v3926 = vpack.c.bf16 %v3584, %v3581
      %v3927 = vpack.c.bf16 %v3625, %v3622
      %v3928 = vpack.c.bf16 %v3633, %v3630
      %v3929 = vpack.c.bf16 %v3641, %v3638
      %v3930 = vpack.c.bf16 %v3649, %v3646
      %v3931 = vpack.c.bf16 %v3690, %v3687
      %v3932 = vpack.c.bf16 %v3698, %v3695
      %v3933 = vpack.c.bf16 %v3706, %v3703
      %v3934 = vpack.c.bf16 %v3714, %v3711
      %v3935 = vpack.c.bf16 %v3755, %v3752
      %v3936 = vpack.c.bf16 %v3763, %v3760
      %v3937 = vpack.c.bf16 %v3771, %v3768
      %v3938 = vpack.c.bf16 %v3779, %v3776
      %v3939 = vpack.c.bf16 %v3820, %v3817
      %v3940 = vpack.c.bf16 %v3828, %v3825
      %v3941 = vpack.c.bf16 %v3836, %v3833
      %v3942 = vpack.c.bf16 %v3844, %v3841
      %v3943 = vld [vmem:[%s665] sm:$0xff]
      %v3944 = vld [vmem:[%s665 + $0x8] sm:$0xff]
      %v3945 = vld [vmem:[%s665 + $0x10] sm:$0xff]
      %v3946 = vld [vmem:[%s665 + $0x18] sm:$0xff]
      %v3947 = vld [vmem:[%s665 + $0x20] sm:$0xff]
      %v3948 = vld [vmem:[%s665 + $0x28] sm:$0xff]
      %v3949 = vld [vmem:[%s665 + $0x30] sm:$0xff]
      %v3950 = vld [vmem:[%s665 + $0x38] sm:$0xff]
      %3952 = vset.pattern.permute.xlu0 0
      %3953 = vperm.xlu0 %3952, %v3943
      %v3954 = vpop.permute.xlu0 %3953
      %3957 = vset.pattern.permute.xlu0 0
      %3958 = vperm.xlu0 %3957, %v3944
      %v3959 = vpop.permute.xlu0 %3958
      %3962 = vset.pattern.permute.xlu0 0
      %3963 = vperm.xlu0 %3962, %v3945
      %v3964 = vpop.permute.xlu0 %3963
      %3967 = vset.pattern.permute.xlu0 0
      %3968 = vperm.xlu0 %3967, %v3946
      %v3969 = vpop.permute.xlu0 %3968
      %3972 = vset.pattern.permute.xlu0 0
      %3973 = vperm.xlu0 %3972, %v3947
      %v3974 = vpop.permute.xlu0 %3973
      %3977 = vset.pattern.permute.xlu0 0
      %3978 = vperm.xlu0 %3977, %v3948
      %v3979 = vpop.permute.xlu0 %3978
      %3982 = vset.pattern.permute.xlu0 0
      %3983 = vperm.xlu0 %3982, %v3949
      %v3984 = vpop.permute.xlu0 %3983
      %3987 = vset.pattern.permute.xlu0 0
      %3988 = vperm.xlu0 %3987, %v3950
      %v3989 = vpop.permute.xlu0 %3988
      %v3992 = vsel %vm953, %v3891, 0
      %v3995 = vsel %vm953, %v3896, 0
      %v3998 = vsel %vm953, %v3901, 0
      %v4001 = vsel %vm953, %v3906, 0
      %4003 = vmatprep.subr.bf16.mxu0 0
      %4004 = vmatpush1.bf16.msra.mxu0 %v3914
      %4005 = vmatprep.subr.bf16.mxu0 0
      %4006 = vmatpush1.bf16.msra.mxu0 %v3913
      %4007 = vmatprep.subr.bf16.mxu0 0
      %4008 = vmatpush1.bf16.msra.mxu0 %v3912
      %4009 = vmatprep.subr.bf16.mxu0 0
      %4010 = vmatpush1.bf16.msra.mxu0 %v3911
      %4011 = vmatprep.subr.bf16.mxu0 0
      %4012 = vmatpush1.bf16.msra.mxu0 %v3910
      %4013 = vmatprep.subr.bf16.mxu0 0
      %4014 = vmatpush1.bf16.msra.mxu0 %v3909
      %4015 = vmatprep.subr.bf16.mxu0 0
      %4016 = vmatpush1.bf16.msra.mxu0 %v3908
      %4017 = vmatprep.subr.bf16.mxu0 0
      %4018 = vmatpush1.bf16.msra.mxu0 %v3907
      %4019 = vmatprep.subr.bf16.mxu0 0
      %4020 = vmatpush2.bf16.msra.mxu0 %v3922
      %4021 = vmatprep.subr.bf16.mxu0 0
      %4022 = vmatpush2.bf16.msra.mxu0 %v3921
      %4023 = vmatprep.subr.bf16.mxu0 0
      %4024 = vmatpush2.bf16.msra.mxu0 %v3920
      %4025 = vmatprep.subr.bf16.mxu0 0
      %4026 = vmatpush2.bf16.msra.mxu0 %v3919
      %4027 = vmatprep.subr.bf16.mxu0 0
      %4028 = vmatpush2.bf16.msra.mxu0 %v3918
      %4029 = vmatprep.subr.bf16.mxu0 0
      %4030 = vmatpush2.bf16.msra.mxu0 %v3917
      %4031 = vmatprep.subr.bf16.mxu0 0
      %4032 = vmatpush2.bf16.msra.mxu0 %v3916
      %4033 = vmatprep.subr.bf16.mxu0 0
      %4034 = vmatpush2.bf16.msra.mxu0 %v3915
      %4035 = vmatprep.mubr.bf16.mxu0 %v3888
      %4036 = vmatmul.mubr.bf16.gmra.mxu0 %v3887
      %v4037 = vpop.f32.mrf.mxu0
      %v4038 = vadd.f32 %v3954, %v4037
      %v4039 = vpop.f32.mrf.mxu0
      %v4040 = vpop.f32.mrf.mxu0
      %v4041 = vadd.f32 %v3959, %v4040
      %v4042 = vpop.f32.mrf.mxu0
      %4043 = vmatprep.mubr.bf16.mxu0 %v3893
      %4044 = vmatmul.mubr.bf16.gmra.mxu0 %v3892
      %v4045 = vpop.f32.mrf.mxu0
      %v4046 = vadd.f32 %v3964, %v4045
      %v4047 = vpop.f32.mrf.mxu0
      %v4048 = vpop.f32.mrf.mxu0
      %v4049 = vadd.f32 %v3969, %v4048
      %v4050 = vpop.f32.mrf.mxu0
      %4051 = vmatprep.mubr.bf16.mxu0 %v3898
      %4052 = vmatmul.mubr.bf16.gmra.mxu0 %v3897
      %v4053 = vpop.f32.mrf.mxu0
      %v4054 = vadd.f32 %v3974, %v4053
      %v4055 = vpop.f32.mrf.mxu0
      %v4056 = vpop.f32.mrf.mxu0
      %v4057 = vadd.f32 %v3979, %v4056
      %v4058 = vpop.f32.mrf.mxu0
      %4059 = vmatprep.mubr.bf16.mxu0 %v3903
      %4060 = vmatmul.mubr.bf16.gmra.mxu0 %v3902
      %v4061 = vpop.f32.mrf.mxu0
      %v4062 = vadd.f32 %v3984, %v4061
      %v4063 = vpop.f32.mrf.mxu0
      %v4064 = vpop.f32.mrf.mxu0
      %v4065 = vadd.f32 %v3989, %v4064
      %v4066 = vpop.f32.mrf.mxu0
      %4067 = vdwg.mxu0
      %4068 = vmatprep.subr.bf16.mxu0 0
      %4069 = vmatpush1.bf16.msra.mxu0 %v3930
      %4070 = vmatprep.subr.bf16.mxu0 0
      %4071 = vmatpush1.bf16.msra.mxu0 %v3929
      %4072 = vmatprep.subr.bf16.mxu0 0
      %4073 = vmatpush1.bf16.msra.mxu0 %v3928
      %4074 = vmatprep.subr.bf16.mxu0 0
      %4075 = vmatpush1.bf16.msra.mxu0 %v3927
      %4076 = vmatprep.subr.bf16.mxu0 0
      %4077 = vmatpush1.bf16.msra.mxu0 %v3926
      %4078 = vmatprep.subr.bf16.mxu0 0
      %4079 = vmatpush1.bf16.msra.mxu0 %v3925
      %4080 = vmatprep.subr.bf16.mxu0 0
      %4081 = vmatpush1.bf16.msra.mxu0 %v3924
      %4082 = vmatprep.subr.bf16.mxu0 0
      %4083 = vmatpush1.bf16.msra.mxu0 %v3923
      %4084 = vmatprep.subr.bf16.mxu0 0
      %4085 = vmatpush2.bf16.msra.mxu0 %v3938
      %4086 = vmatprep.subr.bf16.mxu0 0
      %4087 = vmatpush2.bf16.msra.mxu0 %v3937
      %4088 = vmatprep.subr.bf16.mxu0 0
      %4089 = vmatpush2.bf16.msra.mxu0 %v3936
      %4090 = vmatprep.subr.bf16.mxu0 0
      %4091 = vmatpush2.bf16.msra.mxu0 %v3935
      %4092 = vmatprep.subr.bf16.mxu0 0
      %4093 = vmatpush2.bf16.msra.mxu0 %v3934
      %4094 = vmatprep.subr.bf16.mxu0 0
      %4095 = vmatpush2.bf16.msra.mxu0 %v3933
      %4096 = vmatprep.subr.bf16.mxu0 0
      %4097 = vmatpush2.bf16.msra.mxu0 %v3932
      %4098 = vmatprep.subr.bf16.mxu0 0
      %4099 = vmatpush2.bf16.msra.mxu0 %v3931
      %4100 = vmatprep.mubr.bf16.mxu0 %v3890
      %4101 = vmatmul.mubr.bf16.gmra.mxu0 %v3889
      %v4102 = vpop.f32.mrf.mxu0
      %v4103 = vadd.f32 %v4038, %v4102
      %v4104 = vpop.f32.mrf.mxu0
      %v4105 = vpop.f32.mrf.mxu0
      %v4106 = vadd.f32 %v4041, %v4105
      %v4107 = vpop.f32.mrf.mxu0
      %4108 = vmatprep.mubr.bf16.mxu0 %v3895
      %4109 = vmatmul.mubr.bf16.gmra.mxu0 %v3894
      %v4110 = vpop.f32.mrf.mxu0
      %v4111 = vadd.f32 %v4046, %v4110
      %v4112 = vpop.f32.mrf.mxu0
      %v4113 = vpop.f32.mrf.mxu0
      %v4114 = vadd.f32 %v4049, %v4113
      %v4115 = vpop.f32.mrf.mxu0
      %4116 = vmatprep.mubr.bf16.mxu0 %v3900
      %4117 = vmatmul.mubr.bf16.gmra.mxu0 %v3899
      %v4118 = vpop.f32.mrf.mxu0
      %v4119 = vadd.f32 %v4054, %v4118
      %v4120 = vpop.f32.mrf.mxu0
      %v4121 = vpop.f32.mrf.mxu0
      %v4122 = vadd.f32 %v4057, %v4121
      %v4123 = vpop.f32.mrf.mxu0
      %4124 = vmatprep.mubr.bf16.mxu0 %v3905
      %4125 = vmatmul.mubr.bf16.gmra.mxu0 %v3904
      %v4126 = vpop.f32.mrf.mxu0
      %v4127 = vadd.f32 %v4062, %v4126
      %v4128 = vpop.f32.mrf.mxu0
      %v4129 = vpop.f32.mrf.mxu0
      %v4130 = vadd.f32 %v4065, %v4129
      %v4131 = vpop.f32.mrf.mxu0
      %4132 = vdwg.mxu0
      %4133 = vmatprep.subr.bf16.mxu0 0
      %4134 = vmatpush1.bf16.msra.mxu0 0
      %4135 = vmatprep.subr.bf16.mxu0 0
      %4136 = vmatpush1.bf16.msra.mxu0 0
      %4137 = vmatprep.subr.bf16.mxu0 0
      %4138 = vmatpush1.bf16.msra.mxu0 0
      %4139 = vmatprep.subr.bf16.mxu0 0
      %4140 = vmatpush1.bf16.msra.mxu0 0
      %4141 = vmatprep.subr.bf16.mxu0 0
      %4142 = vmatpush1.bf16.msra.mxu0 %v3942
      %4143 = vmatprep.subr.bf16.mxu0 0
      %4144 = vmatpush1.bf16.msra.mxu0 %v3941
      %4145 = vmatprep.subr.bf16.mxu0 0
      %4146 = vmatpush1.bf16.msra.mxu0 %v3940
      %4147 = vmatprep.subr.bf16.mxu0 0
      %4148 = vmatpush1.bf16.msra.mxu0 %v3939
      %4149 = vmatprep.subr.bf16.mxu0 0
      %4150 = vmatpush2.bf16.msra.mxu0 0
      %4151 = vmatprep.subr.bf16.mxu0 0
      %4152 = vmatpush2.bf16.msra.mxu0 0
      %4153 = vmatprep.subr.bf16.mxu0 0
      %4154 = vmatpush2.bf16.msra.mxu0 0
      %4155 = vmatprep.subr.bf16.mxu0 0
      %4156 = vmatpush2.bf16.msra.mxu0 0
      %4157 = vmatprep.subr.bf16.mxu0 0
      %4158 = vmatpush2.bf16.msra.mxu0 0
      %4159 = vmatprep.subr.bf16.mxu0 0
      %4160 = vmatpush2.bf16.msra.mxu0 0
      %4161 = vmatprep.subr.bf16.mxu0 0
      %4162 = vmatpush2.bf16.msra.mxu0 0
      %4163 = vmatprep.subr.bf16.mxu0 0
      %4164 = vmatpush2.bf16.msra.mxu0 0
      %4165 = vmatprep.mubr.bf16.mxu0 0
      %4166 = vmatmul.mubr.bf16.gmra.mxu0 %v3992
      %v4167 = vpop.f32.mrf.mxu0
      %v4168 = vadd.f32 %v4103, %v4167
      %v4169 = vpop.f32.mrf.mxu0
      %v4170 = vpop.f32.mrf.mxu0
      %v4171 = vadd.f32 %v4106, %v4170
      %v4172 = vpop.f32.mrf.mxu0
      %4173 = vmatprep.mubr.bf16.mxu0 0
      %4174 = vmatmul.mubr.bf16.gmra.mxu0 %v3995
      %v4175 = vpop.f32.mrf.mxu0
      %v4176 = vadd.f32 %v4111, %v4175
      %v4177 = vpop.f32.mrf.mxu0
      %v4178 = vpop.f32.mrf.mxu0
      %v4179 = vadd.f32 %v4114, %v4178
      %v4180 = vpop.f32.mrf.mxu0
      %4181 = vmatprep.mubr.bf16.mxu0 0
      %4182 = vmatmul.mubr.bf16.gmra.mxu0 %v3998
      %v4183 = vpop.f32.mrf.mxu0
      %v4184 = vadd.f32 %v4119, %v4183
      %v4185 = vpop.f32.mrf.mxu0
      %v4186 = vpop.f32.mrf.mxu0
      %v4187 = vadd.f32 %v4122, %v4186
      %v4188 = vpop.f32.mrf.mxu0
      %4189 = vmatprep.mubr.bf16.mxu0 0
      %4190 = vmatmul.mubr.bf16.gmra.mxu0 %v4001
      %v4191 = vpop.f32.mrf.mxu0
      %v4192 = vadd.f32 %v4127, %v4191
      %v4193 = vpop.f32.mrf.mxu0
      %v4194 = vpop.f32.mrf.mxu0
      %v4195 = vadd.f32 %v4130, %v4194
      %v4196 = vpop.f32.mrf.mxu0
      %4197 = vdwg.mxu0
      %vm4198 = vcmp.ge.f32.partialorder %v4168, 0.0
      %vm4199 = vcmp.ge.f32.partialorder %v4171, 0.0
      %vm4200 = vcmp.ge.f32.partialorder %v4176, 0.0
      %vm4201 = vcmp.ge.f32.partialorder %v4179, 0.0
      %vm4202 = vcmp.ge.f32.partialorder %v4184, 0.0
      %vm4203 = vcmp.ge.f32.partialorder %v4187, 0.0
      %vm4204 = vcmp.ge.f32.partialorder %v4192, 0.0
      %vm4205 = vcmp.ge.f32.partialorder %v4195, 0.0
      %v4206 = vmul.f32 %v4168, 0.1
      %v4207 = vmul.f32 %v4171, 0.1
      %v4208 = vmul.f32 %v4176, 0.1
      %v4209 = vmul.f32 %v4179, 0.1
      %v4210 = vmul.f32 %v4184, 0.1
      %v4211 = vmul.f32 %v4187, 0.1
      %v4212 = vmul.f32 %v4192, 0.1
      %v4213 = vmul.f32 %v4195, 0.1
      %v4214 = vsel %vm4198, %v4168, %v4206
      %v4215 = vsel %vm4199, %v4171, %v4207
      %v4216 = vsel %vm4200, %v4176, %v4208
      %v4217 = vsel %vm4201, %v4179, %v4209
      %v4218 = vsel %vm4202, %v4184, %v4210
      %v4219 = vsel %vm4203, %v4187, %v4211
      %v4220 = vsel %vm4204, %v4192, %v4212
      %v4221 = vsel %vm4205, %v4195, %v4213
      %v4222 = vld [vmem:[%s644] sm:$0xff]
      %v4223 = vld [vmem:[%s644 + $0x8] sm:$0xff]
      %v4224 = vld [vmem:[%s644 + $0x10] sm:$0xff]
      %v4225 = vld [vmem:[%s644 + $0x18] sm:$0xff]
      %v4226 = vld [vmem:[%s644 + $0x20] sm:$0xff]
      %v4227 = vld [vmem:[%s644 + $0x28] sm:$0xff]
      %v4228 = vld [vmem:[%s644 + $0x30] sm:$0xff]
      %v4229 = vld [vmem:[%s644 + $0x38] sm:$0xff]
      %v4230 = vpack.c.bf16 %v4223, %v4222
      %v4231 = vpack.c.bf16 %v4225, %v4224
      %v4232 = vpack.c.bf16 %v4227, %v4226
      %v4233 = vpack.c.bf16 %v4229, %v4228
      %v4235 = vsel %vm953, %v4230, 0
      %v4238 = vsel %vm953, %v4231, 0
      %v4241 = vsel %vm953, %v4232, 0
      %v4244 = vsel %vm953, %v4233, 0
      %4246 = vmatprep.subr.bf16.mxu0 0
      %4247 = vmatpush1.bf16.msra.mxu0 0
      %4248 = vmatprep.subr.bf16.mxu0 0
      %4249 = vmatpush1.bf16.msra.mxu0 0
      %4250 = vmatprep.subr.bf16.mxu0 0
      %4251 = vmatpush1.bf16.msra.mxu0 0
      %4252 = vmatprep.subr.bf16.mxu0 0
      %4253 = vmatpush1.bf16.msra.mxu0 0
      %4254 = vmatprep.subr.bf16.mxu0 0
      %4255 = vmatpush1.bf16.msra.mxu0 %v952
      %4256 = vmatprep.subr.bf16.mxu0 0
      %4257 = vmatpush1.bf16.msra.mxu0 %v951
      %4258 = vmatprep.subr.bf16.mxu0 0
      %4259 = vmatpush1.bf16.msra.mxu0 %v950
      %4260 = vmatprep.subr.bf16.mxu0 0
      %4261 = vmatpush1.bf16.msra.mxu0 %v949
      %4262 = vmatprep.subr.bf16.mxu0 0
      %4263 = vmatpush2.bf16.msra.mxu0 0
      %4264 = vmatprep.subr.bf16.mxu0 0
      %4265 = vmatpush2.bf16.msra.mxu0 0
      %4266 = vmatprep.subr.bf16.mxu0 0
      %4267 = vmatpush2.bf16.msra.mxu0 0
      %4268 = vmatprep.subr.bf16.mxu0 0
      %4269 = vmatpush2.bf16.msra.mxu0 0
      %4270 = vmatprep.subr.bf16.mxu0 0
      %4271 = vmatpush2.bf16.msra.mxu0 0
      %4272 = vmatprep.subr.bf16.mxu0 0
      %4273 = vmatpush2.bf16.msra.mxu0 0
      %4274 = vmatprep.subr.bf16.mxu0 0
      %4275 = vmatpush2.bf16.msra.mxu0 0
      %4276 = vmatprep.subr.bf16.mxu0 0
      %4277 = vmatpush2.bf16.msra.mxu0 0
      %4278 = vmatprep.mubr.bf16.mxu0 0
      %4279 = vmatmul.mubr.bf16.gmra.mxu0 %v4235
      %v4280 = vpop.f32.mrf.mxu0
      %v4281 = vadd.f32 0.0, %v4280
      %v4282 = vpop.f32.mrf.mxu0
      %v4283 = vpop.f32.mrf.mxu0
      %v4284 = vadd.f32 0.0, %v4283
      %v4285 = vpop.f32.mrf.mxu0
      %4286 = vmatprep.mubr.bf16.mxu0 0
      %4287 = vmatmul.mubr.bf16.gmra.mxu0 %v4238
      %v4288 = vpop.f32.mrf.mxu0
      %v4289 = vadd.f32 0.0, %v4288
      %v4290 = vpop.f32.mrf.mxu0
      %v4291 = vpop.f32.mrf.mxu0
      %v4292 = vadd.f32 0.0, %v4291
      %v4293 = vpop.f32.mrf.mxu0
      %4294 = vmatprep.mubr.bf16.mxu0 0
      %4295 = vmatmul.mubr.bf16.gmra.mxu0 %v4241
      %v4296 = vpop.f32.mrf.mxu0
      %v4297 = vadd.f32 0.0, %v4296
      %v4298 = vpop.f32.mrf.mxu0
      %v4299 = vpop.f32.mrf.mxu0
      %v4300 = vadd.f32 0.0, %v4299
      %v4301 = vpop.f32.mrf.mxu0
      %4302 = vmatprep.mubr.bf16.mxu0 0
      %4303 = vmatmul.mubr.bf16.gmra.mxu0 %v4244
      %v4304 = vpop.f32.mrf.mxu0
      %v4305 = vadd.f32 0.0, %v4304
      %v4306 = vpop.f32.mrf.mxu0
      %v4307 = vpop.f32.mrf.mxu0
      %v4308 = vadd.f32 0.0, %v4307
      %v4309 = vpop.f32.mrf.mxu0
      %4310 = vdwg.mxu0
      %vm4311 = vcmp.ge.f32.partialorder %v4281, 0.0
      %vm4312 = vcmp.ge.f32.partialorder %v4284, 0.0
      %vm4313 = vcmp.ge.f32.partialorder %v4289, 0.0
      %vm4314 = vcmp.ge.f32.partialorder %v4292, 0.0
      %vm4315 = vcmp.ge.f32.partialorder %v4297, 0.0
      %vm4316 = vcmp.ge.f32.partialorder %v4300, 0.0
      %vm4317 = vcmp.ge.f32.partialorder %v4305, 0.0
      %vm4318 = vcmp.ge.f32.partialorder %v4308, 0.0
      %v4319 = vmul.f32 %v4281, 0.1
      %v4320 = vmul.f32 %v4284, 0.1
      %v4321 = vmul.f32 %v4289, 0.1
      %v4322 = vmul.f32 %v4292, 0.1
      %v4323 = vmul.f32 %v4297, 0.1
      %v4324 = vmul.f32 %v4300, 0.1
      %v4325 = vmul.f32 %v4305, 0.1
      %v4326 = vmul.f32 %v4308, 0.1
      %v4327 = vsel %vm4311, %v4281, %v4319
      %v4328 = vsel %vm4312, %v4284, %v4320
      %v4329 = vsel %vm4313, %v4289, %v4321
      %v4330 = vsel %vm4314, %v4292, %v4322
      %v4331 = vsel %vm4315, %v4297, %v4323
      %v4332 = vsel %vm4316, %v4300, %v4324
      %v4333 = vsel %vm4317, %v4305, %v4325
      %v4334 = vsel %vm4318, %v4308, %v4326
      %v4335 = vld [vmem:[%s649] sm:$0xff]
      %v4336 = vld [vmem:[%s649 + $0x8] sm:$0xff]
      %v4337 = vld [vmem:[%s649 + $0x10] sm:$0xff]
      %v4338 = vld [vmem:[%s649 + $0x18] sm:$0xff]
      %v4339 = vld [vmem:[%s649 + $0x20] sm:$0xff]
      %v4340 = vld [vmem:[%s649 + $0x28] sm:$0xff]
      %v4341 = vld [vmem:[%s649 + $0x30] sm:$0xff]
      %v4342 = vld [vmem:[%s649 + $0x38] sm:$0xff]
      %v4343 = vld [vmem:[%s649 + $0x40] sm:$0xff]
      %v4344 = vld [vmem:[%s649 + $0x48] sm:$0xff]
      %v4345 = vld [vmem:[%s649 + $0x50] sm:$0xff]
      %v4346 = vld [vmem:[%s649 + $0x58] sm:$0xff]
      %v4347 = vld [vmem:[%s649 + $0x60] sm:$0xff]
      %v4348 = vld [vmem:[%s649 + $0x68] sm:$0xff]
      %v4349 = vld [vmem:[%s649 + $0x70] sm:$0xff]
      %v4350 = vld [vmem:[%s649 + $0x78] sm:$0xff]
      %v4351 = vld [vmem:[%s649 + $0x80] sm:$0xff]
      %v4352 = vld [vmem:[%s649 + $0x88] sm:$0xff]
      %v4353 = vld [vmem:[%s649 + $0x90] sm:$0xff]
      %v4354 = vld [vmem:[%s649 + $0x98] sm:$0xff]
      %v4355 = vld [vmem:[%s649 + $0xa0] sm:$0xff]
      %v4356 = vld [vmem:[%s649 + $0xa8] sm:$0xff]
      %v4357 = vld [vmem:[%s649 + $0xb0] sm:$0xff]
      %v4358 = vld [vmem:[%s649 + $0xb8] sm:$0xff]
      %v4359 = vld [vmem:[%s649 + $0xc0] sm:$0xff]
      %v4360 = vld [vmem:[%s649 + $0xc8] sm:$0xff]
      %v4361 = vld [vmem:[%s649 + $0xd0] sm:$0xff]
      %v4362 = vld [vmem:[%s649 + $0xd8] sm:$0xff]
      %v4363 = vld [vmem:[%s649 + $0xe0] sm:$0xff]
      %v4364 = vld [vmem:[%s649 + $0xe8] sm:$0xff]
      %v4365 = vld [vmem:[%s649 + $0xf0] sm:$0xff]
      %v4366 = vld [vmem:[%s649 + $0xf8] sm:$0xff]
      %v4367 = vld [vmem:[%s649 + $0x100] sm:$0xff]
      %v4368 = vld [vmem:[%s649 + $0x108] sm:$0xff]
      %v4369 = vld [vmem:[%s649 + $0x110] sm:$0xff]
      %v4370 = vld [vmem:[%s649 + $0x118] sm:$0xff]
      %v4371 = vld [vmem:[%s649 + $0x120] sm:$0xff]
      %v4372 = vld [vmem:[%s649 + $0x128] sm:$0xff]
      %v4373 = vld [vmem:[%s649 + $0x130] sm:$0xff]
      %v4374 = vld [vmem:[%s649 + $0x138] sm:$0xff]
      %v4375 = vld [vmem:[%s649 + $0x140] sm:$0xff]
      %v4376 = vld [vmem:[%s649 + $0x148] sm:$0xff]
      %v4377 = vld [vmem:[%s649 + $0x150] sm:$0xff]
      %v4378 = vld [vmem:[%s649 + $0x158] sm:$0xff]
      %v4379 = vld [vmem:[%s649 + $0x160] sm:$0xff]
      %v4380 = vld [vmem:[%s649 + $0x168] sm:$0xff]
      %v4381 = vld [vmem:[%s649 + $0x170] sm:$0xff]
      %v4382 = vld [vmem:[%s649 + $0x178] sm:$0xff]
      %v4383 = vld [vmem:[%s649 + $0x180] sm:$0xff]
      %v4384 = vld [vmem:[%s649 + $0x188] sm:$0xff]
      %v4385 = vld [vmem:[%s649 + $0x190] sm:$0xff]
      %v4386 = vld [vmem:[%s649 + $0x198] sm:$0xff]
      %v4387 = vld [vmem:[%s649 + $0x1a0] sm:$0xff]
      %v4388 = vld [vmem:[%s649 + $0x1a8] sm:$0xff]
      %v4389 = vld [vmem:[%s649 + $0x1b0] sm:$0xff]
      %v4390 = vld [vmem:[%s649 + $0x1b8] sm:$0xff]
      %v4391 = vld [vmem:[%s649 + $0x1c0] sm:$0xff]
      %v4392 = vld [vmem:[%s649 + $0x1c8] sm:$0xff]
      %v4393 = vld [vmem:[%s649 + $0x1d0] sm:$0xff]
      %v4394 = vld [vmem:[%s649 + $0x1d8] sm:$0xff]
      %v4395 = vld [vmem:[%s649 + $0x1e0] sm:$0xff]
      %v4396 = vld [vmem:[%s649 + $0x1e8] sm:$0xff]
      %v4397 = vld [vmem:[%s649 + $0x1f0] sm:$0xff]
      %v4398 = vld [vmem:[%s649 + $0x1f8] sm:$0xff]
      %v4399 = vld [vmem:[%s649 + $0x200] sm:$0xff]
      %v4400 = vld [vmem:[%s649 + $0x208] sm:$0xff]
      %v4401 = vld [vmem:[%s649 + $0x210] sm:$0xff]
      %v4402 = vld [vmem:[%s649 + $0x218] sm:$0xff]
      %v4403 = vld [vmem:[%s649 + $0x220] sm:$0xff]
      %v4404 = vld [vmem:[%s649 + $0x228] sm:$0xff]
      %v4405 = vld [vmem:[%s649 + $0x230] sm:$0xff]
      %v4406 = vld [vmem:[%s649 + $0x238] sm:$0xff]
      %v4407 = vpack.c.bf16 %v4336, %v4335
      %v4408 = vpack.c.bf16 %v4338, %v4337
      %v4409 = vpack.c.bf16 %v4340, %v4339
      %v4410 = vpack.c.bf16 %v4342, %v4341
      %v4411 = vpack.c.bf16 %v4344, %v4343
      %v4412 = vpack.c.bf16 %v4346, %v4345
      %v4413 = vpack.c.bf16 %v4348, %v4347
      %v4414 = vpack.c.bf16 %v4350, %v4349
      %v4415 = vpack.c.bf16 %v4352, %v4351
      %v4416 = vpack.c.bf16 %v4354, %v4353
      %v4417 = vpack.c.bf16 %v4356, %v4355
      %v4418 = vpack.c.bf16 %v4358, %v4357
      %v4419 = vpack.c.bf16 %v4360, %v4359
      %v4420 = vpack.c.bf16 %v4362, %v4361
      %v4421 = vpack.c.bf16 %v4364, %v4363
      %v4422 = vpack.c.bf16 %v4366, %v4365
      %v4423 = vpack.c.bf16 %v4368, %v4367
      %v4424 = vpack.c.bf16 %v4370, %v4369
      %v4425 = vpack.c.bf16 %v4372, %v4371
      %v4426 = vpack.c.bf16 %v4374, %v4373
      %v4427 = vpack.c.bf16 %v4376, %v4375
      %v4428 = vpack.c.bf16 %v4378, %v4377
      %v4429 = vpack.c.bf16 %v4380, %v4379
      %v4430 = vpack.c.bf16 %v4382, %v4381
      %v4431 = vpack.c.bf16 %v4384, %v4383
      %v4432 = vpack.c.bf16 %v4386, %v4385
      %v4433 = vpack.c.bf16 %v4388, %v4387
      %v4434 = vpack.c.bf16 %v4390, %v4389
      %v4435 = vpack.c.bf16 %v4392, %v4391
      %v4436 = vpack.c.bf16 %v4394, %v4393
      %v4437 = vpack.c.bf16 %v4396, %v4395
      %v4438 = vpack.c.bf16 %v4398, %v4397
      %v4439 = vpack.c.bf16 %v4400, %v4399
      %v4440 = vpack.c.bf16 %v4402, %v4401
      %v4441 = vpack.c.bf16 %v4404, %v4403
      %v4442 = vpack.c.bf16 %v4406, %v4405
      %v4443 = vpack.c.bf16 %v4328, %v4327
      %v4444 = vpack.c.bf16 %v4330, %v4329
      %v4445 = vpack.c.bf16 %v4332, %v4331
      %v4446 = vpack.c.bf16 %v4334, %v4333
      %v4448 = vsel %vm953, %v4407, 0
      %v4451 = vsel %vm953, %v4408, 0
      %v4454 = vsel %vm953, %v4409, 0
      %v4457 = vsel %vm953, %v4410, 0
      %v4460 = vsel %vm953, %v4411, 0
      %v4463 = vsel %vm953, %v4412, 0
      %v4466 = vsel %vm953, %v4413, 0
      %v4469 = vsel %vm953, %v4414, 0
      %v4472 = vsel %vm953, %v4415, 0
      %v4475 = vsel %vm953, %v4416, 0
      %v4478 = vsel %vm953, %v4417, 0
      %v4481 = vsel %vm953, %v4418, 0
      %v4484 = vsel %vm953, %v4419, 0
      %v4487 = vsel %vm953, %v4420, 0
      %v4490 = vsel %vm953, %v4421, 0
      %v4493 = vsel %vm953, %v4422, 0
      %v4496 = vsel %vm953, %v4423, 0
      %v4499 = vsel %vm953, %v4424, 0
      %v4502 = vsel %vm953, %v4425, 0
      %v4505 = vsel %vm953, %v4426, 0
      %v4508 = vsel %vm953, %v4427, 0
      %v4511 = vsel %vm953, %v4428, 0
      %v4514 = vsel %vm953, %v4429, 0
      %v4517 = vsel %vm953, %v4430, 0
      %v4520 = vsel %vm953, %v4431, 0
      %v4523 = vsel %vm953, %v4432, 0
      %v4526 = vsel %vm953, %v4433, 0
      %v4529 = vsel %vm953, %v4434, 0
      %v4532 = vsel %vm953, %v4435, 0
      %v4535 = vsel %vm953, %v4436, 0
      %v4538 = vsel %vm953, %v4437, 0
      %v4541 = vsel %vm953, %v4438, 0
      %v4544 = vsel %vm953, %v4439, 0
      %v4547 = vsel %vm953, %v4440, 0
      %v4550 = vsel %vm953, %v4441, 0
      %v4553 = vsel %vm953, %v4442, 0
      %4555 = vmatprep.subr.bf16.mxu0 0
      %4556 = vmatpush1.bf16.msra.mxu0 0
      %4557 = vmatprep.subr.bf16.mxu0 0
      %4558 = vmatpush1.bf16.msra.mxu0 0
      %4559 = vmatprep.subr.bf16.mxu0 0
      %4560 = vmatpush1.bf16.msra.mxu0 0
      %4561 = vmatprep.subr.bf16.mxu0 0
      %4562 = vmatpush1.bf16.msra.mxu0 0
      %4563 = vmatprep.subr.bf16.mxu0 0
      %4564 = vmatpush1.bf16.msra.mxu0 %v4446
      %4565 = vmatprep.subr.bf16.mxu0 0
      %4566 = vmatpush1.bf16.msra.mxu0 %v4445
      %4567 = vmatprep.subr.bf16.mxu0 0
      %4568 = vmatpush1.bf16.msra.mxu0 %v4444
      %4569 = vmatprep.subr.bf16.mxu0 0
      %4570 = vmatpush1.bf16.msra.mxu0 %v4443
      %4571 = vmatprep.subr.bf16.mxu0 0
      %4572 = vmatpush2.bf16.msra.mxu0 0
      %4573 = vmatprep.subr.bf16.mxu0 0
      %4574 = vmatpush2.bf16.msra.mxu0 0
      %4575 = vmatprep.subr.bf16.mxu0 0
      %4576 = vmatpush2.bf16.msra.mxu0 0
      %4577 = vmatprep.subr.bf16.mxu0 0
      %4578 = vmatpush2.bf16.msra.mxu0 0
      %4579 = vmatprep.subr.bf16.mxu0 0
      %4580 = vmatpush2.bf16.msra.mxu0 0
      %4581 = vmatprep.subr.bf16.mxu0 0
      %4582 = vmatpush2.bf16.msra.mxu0 0
      %4583 = vmatprep.subr.bf16.mxu0 0
      %4584 = vmatpush2.bf16.msra.mxu0 0
      %4585 = vmatprep.subr.bf16.mxu0 0
      %4586 = vmatpush2.bf16.msra.mxu0 0
      %4587 = vmatprep.mubr.bf16.mxu0 0
      %4588 = vmatmul.mubr.bf16.gmra.mxu0 %v4448
      %v4589 = vpop.f32.mrf.mxu0
      %v4590 = vadd.f32 0.0, %v4589
      %v4591 = vpop.f32.mrf.mxu0
      %v4592 = vpop.f32.mrf.mxu0
      %v4593 = vadd.f32 0.0, %v4592
      %v4594 = vpop.f32.mrf.mxu0
      %4595 = vmatprep.mubr.bf16.mxu0 0
      %4596 = vmatmul.mubr.bf16.gmra.mxu0 %v4451
      %v4597 = vpop.f32.mrf.mxu0
      %v4598 = vadd.f32 0.0, %v4597
      %v4599 = vpop.f32.mrf.mxu0
      %v4600 = vpop.f32.mrf.mxu0
      %v4601 = vadd.f32 0.0, %v4600
      %v4602 = vpop.f32.mrf.mxu0
      %4603 = vmatprep.mubr.bf16.mxu0 0
      %4604 = vmatmul.mubr.bf16.gmra.mxu0 %v4454
      %v4605 = vpop.f32.mrf.mxu0
      %v4606 = vadd.f32 0.0, %v4605
      %v4607 = vpop.f32.mrf.mxu0
      %v4608 = vpop.f32.mrf.mxu0
      %v4609 = vadd.f32 0.0, %v4608
      %v4610 = vpop.f32.mrf.mxu0
      %4611 = vmatprep.mubr.bf16.mxu0 0
      %4612 = vmatmul.mubr.bf16.gmra.mxu0 %v4457
      %v4613 = vpop.f32.mrf.mxu0
      %v4614 = vadd.f32 0.0, %v4613
      %v4615 = vpop.f32.mrf.mxu0
      %v4616 = vpop.f32.mrf.mxu0
      %v4617 = vadd.f32 0.0, %v4616
      %v4618 = vpop.f32.mrf.mxu0
      %4619 = vmatprep.mubr.bf16.mxu0 0
      %4620 = vmatmul.mubr.bf16.gmra.mxu0 %v4460
      %v4621 = vpop.f32.mrf.mxu0
      %v4622 = vadd.f32 0.0, %v4621
      %v4623 = vpop.f32.mrf.mxu0
      %v4624 = vpop.f32.mrf.mxu0
      %v4625 = vadd.f32 0.0, %v4624
      %v4626 = vpop.f32.mrf.mxu0
      %4627 = vmatprep.mubr.bf16.mxu0 0
      %4628 = vmatmul.mubr.bf16.gmra.mxu0 %v4463
      %v4629 = vpop.f32.mrf.mxu0
      %v4630 = vadd.f32 0.0, %v4629
      %v4631 = vpop.f32.mrf.mxu0
      %v4632 = vpop.f32.mrf.mxu0
      %v4633 = vadd.f32 0.0, %v4632
      %v4634 = vpop.f32.mrf.mxu0
      %4635 = vmatprep.mubr.bf16.mxu0 0
      %4636 = vmatmul.mubr.bf16.gmra.mxu0 %v4466
      %v4637 = vpop.f32.mrf.mxu0
      %v4638 = vadd.f32 0.0, %v4637
      %v4639 = vpop.f32.mrf.mxu0
      %v4640 = vpop.f32.mrf.mxu0
      %v4641 = vadd.f32 0.0, %v4640
      %v4642 = vpop.f32.mrf.mxu0
      %4643 = vmatprep.mubr.bf16.mxu0 0
      %4644 = vmatmul.mubr.bf16.gmra.mxu0 %v4469
      %v4645 = vpop.f32.mrf.mxu0
      %v4646 = vadd.f32 0.0, %v4645
      %v4647 = vpop.f32.mrf.mxu0
      %v4648 = vpop.f32.mrf.mxu0
      %v4649 = vadd.f32 0.0, %v4648
      %v4650 = vpop.f32.mrf.mxu0
      %4651 = vmatprep.mubr.bf16.mxu0 0
      %4652 = vmatmul.mubr.bf16.gmra.mxu0 %v4472
      %v4653 = vpop.f32.mrf.mxu0
      %v4654 = vadd.f32 0.0, %v4653
      %v4655 = vpop.f32.mrf.mxu0
      %v4656 = vpop.f32.mrf.mxu0
      %v4657 = vadd.f32 0.0, %v4656
      %v4658 = vpop.f32.mrf.mxu0
      %4659 = vmatprep.mubr.bf16.mxu0 0
      %4660 = vmatmul.mubr.bf16.gmra.mxu0 %v4475
      %v4661 = vpop.f32.mrf.mxu0
      %v4662 = vadd.f32 0.0, %v4661
      %v4663 = vpop.f32.mrf.mxu0
      %v4664 = vpop.f32.mrf.mxu0
      %v4665 = vadd.f32 0.0, %v4664
      %v4666 = vpop.f32.mrf.mxu0
      %4667 = vmatprep.mubr.bf16.mxu0 0
      %4668 = vmatmul.mubr.bf16.gmra.mxu0 %v4478
      %v4669 = vpop.f32.mrf.mxu0
      %v4670 = vadd.f32 0.0, %v4669
      %v4671 = vpop.f32.mrf.mxu0
      %v4672 = vpop.f32.mrf.mxu0
      %v4673 = vadd.f32 0.0, %v4672
      %v4674 = vpop.f32.mrf.mxu0
      %4675 = vmatprep.mubr.bf16.mxu0 0
      %4676 = vmatmul.mubr.bf16.gmra.mxu0 %v4481
      %v4677 = vpop.f32.mrf.mxu0
      %v4678 = vadd.f32 0.0, %v4677
      %v4679 = vpop.f32.mrf.mxu0
      %v4680 = vpop.f32.mrf.mxu0
      %v4681 = vadd.f32 0.0, %v4680
      %v4682 = vpop.f32.mrf.mxu0
      %4683 = vmatprep.mubr.bf16.mxu0 0
      %4684 = vmatmul.mubr.bf16.gmra.mxu0 %v4484
      %v4685 = vpop.f32.mrf.mxu0
      %v4686 = vadd.f32 0.0, %v4685
      %v4687 = vpop.f32.mrf.mxu0
      %v4688 = vpop.f32.mrf.mxu0
      %v4689 = vadd.f32 0.0, %v4688
      %v4690 = vpop.f32.mrf.mxu0
      %4691 = vmatprep.mubr.bf16.mxu0 0
      %4692 = vmatmul.mubr.bf16.gmra.mxu0 %v4487
      %v4693 = vpop.f32.mrf.mxu0
      %v4694 = vadd.f32 0.0, %v4693
      %v4695 = vpop.f32.mrf.mxu0
      %v4696 = vpop.f32.mrf.mxu0
      %v4697 = vadd.f32 0.0, %v4696
      %v4698 = vpop.f32.mrf.mxu0
      %4699 = vmatprep.mubr.bf16.mxu0 0
      %4700 = vmatmul.mubr.bf16.gmra.mxu0 %v4490
      %v4701 = vpop.f32.mrf.mxu0
      %v4702 = vadd.f32 0.0, %v4701
      %v4703 = vpop.f32.mrf.mxu0
      %v4704 = vpop.f32.mrf.mxu0
      %v4705 = vadd.f32 0.0, %v4704
      %v4706 = vpop.f32.mrf.mxu0
      %4707 = vmatprep.mubr.bf16.mxu0 0
      %4708 = vmatmul.mubr.bf16.gmra.mxu0 %v4493
      %v4709 = vpop.f32.mrf.mxu0
      %v4710 = vadd.f32 0.0, %v4709
      %v4711 = vpop.f32.mrf.mxu0
      %v4712 = vpop.f32.mrf.mxu0
      %v4713 = vadd.f32 0.0, %v4712
      %v4714 = vpop.f32.mrf.mxu0
      %4715 = vmatprep.mubr.bf16.mxu0 0
      %4716 = vmatmul.mubr.bf16.gmra.mxu0 %v4496
      %v4717 = vpop.f32.mrf.mxu0
      %v4718 = vadd.f32 0.0, %v4717
      %v4719 = vpop.f32.mrf.mxu0
      %v4720 = vpop.f32.mrf.mxu0
      %v4721 = vadd.f32 0.0, %v4720
      %v4722 = vpop.f32.mrf.mxu0
      %4723 = vmatprep.mubr.bf16.mxu0 0
      %4724 = vmatmul.mubr.bf16.gmra.mxu0 %v4499
      %v4725 = vpop.f32.mrf.mxu0
      %v4726 = vadd.f32 0.0, %v4725
      %v4727 = vpop.f32.mrf.mxu0
      %v4728 = vpop.f32.mrf.mxu0
      %v4729 = vadd.f32 0.0, %v4728
      %v4730 = vpop.f32.mrf.mxu0
      %4731 = vmatprep.mubr.bf16.mxu0 0
      %4732 = vmatmul.mubr.bf16.gmra.mxu0 %v4502
      %v4733 = vpop.f32.mrf.mxu0
      %v4734 = vadd.f32 0.0, %v4733
      %v4735 = vpop.f32.mrf.mxu0
      %v4736 = vpop.f32.mrf.mxu0
      %v4737 = vadd.f32 0.0, %v4736
      %v4738 = vpop.f32.mrf.mxu0
      %4739 = vmatprep.mubr.bf16.mxu0 0
      %4740 = vmatmul.mubr.bf16.gmra.mxu0 %v4505
      %v4741 = vpop.f32.mrf.mxu0
      %v4742 = vadd.f32 0.0, %v4741
      %v4743 = vpop.f32.mrf.mxu0
      %v4744 = vpop.f32.mrf.mxu0
      %v4745 = vadd.f32 0.0, %v4744
      %v4746 = vpop.f32.mrf.mxu0
      %4747 = vmatprep.mubr.bf16.mxu0 0
      %4748 = vmatmul.mubr.bf16.gmra.mxu0 %v4508
      %v4749 = vpop.f32.mrf.mxu0
      %v4750 = vadd.f32 0.0, %v4749
      %v4751 = vpop.f32.mrf.mxu0
      %v4752 = vpop.f32.mrf.mxu0
      %v4753 = vadd.f32 0.0, %v4752
      %v4754 = vpop.f32.mrf.mxu0
      %4755 = vmatprep.mubr.bf16.mxu0 0
      %4756 = vmatmul.mubr.bf16.gmra.mxu0 %v4511
      %v4757 = vpop.f32.mrf.mxu0
      %v4758 = vadd.f32 0.0, %v4757
      %v4759 = vpop.f32.mrf.mxu0
      %v4760 = vpop.f32.mrf.mxu0
      %v4761 = vadd.f32 0.0, %v4760
      %v4762 = vpop.f32.mrf.mxu0
      %4763 = vmatprep.mubr.bf16.mxu0 0
      %4764 = vmatmul.mubr.bf16.gmra.mxu0 %v4514
      %v4765 = vpop.f32.mrf.mxu0
      %v4766 = vadd.f32 0.0, %v4765
      %v4767 = vpop.f32.mrf.mxu0
      %v4768 = vpop.f32.mrf.mxu0
      %v4769 = vadd.f32 0.0, %v4768
      %v4770 = vpop.f32.mrf.mxu0
      %4771 = vmatprep.mubr.bf16.mxu0 0
      %4772 = vmatmul.mubr.bf16.gmra.mxu0 %v4517
      %v4773 = vpop.f32.mrf.mxu0
      %v4774 = vadd.f32 0.0, %v4773
      %v4775 = vpop.f32.mrf.mxu0
      %v4776 = vpop.f32.mrf.mxu0
      %v4777 = vadd.f32 0.0, %v4776
      %v4778 = vpop.f32.mrf.mxu0
      %4779 = vmatprep.mubr.bf16.mxu0 0
      %4780 = vmatmul.mubr.bf16.gmra.mxu0 %v4520
      %v4781 = vpop.f32.mrf.mxu0
      %v4782 = vadd.f32 0.0, %v4781
      %v4783 = vpop.f32.mrf.mxu0
      %v4784 = vpop.f32.mrf.mxu0
      %v4785 = vadd.f32 0.0, %v4784
      %v4786 = vpop.f32.mrf.mxu0
      %4787 = vmatprep.mubr.bf16.mxu0 0
      %4788 = vmatmul.mubr.bf16.gmra.mxu0 %v4523
      %v4789 = vpop.f32.mrf.mxu0
      %v4790 = vadd.f32 0.0, %v4789
      %v4791 = vpop.f32.mrf.mxu0
      %v4792 = vpop.f32.mrf.mxu0
      %v4793 = vadd.f32 0.0, %v4792
      %v4794 = vpop.f32.mrf.mxu0
      %4795 = vmatprep.mubr.bf16.mxu0 0
      %4796 = vmatmul.mubr.bf16.gmra.mxu0 %v4526
      %v4797 = vpop.f32.mrf.mxu0
      %v4798 = vadd.f32 0.0, %v4797
      %v4799 = vpop.f32.mrf.mxu0
      %v4800 = vpop.f32.mrf.mxu0
      %v4801 = vadd.f32 0.0, %v4800
      %v4802 = vpop.f32.mrf.mxu0
      %4803 = vmatprep.mubr.bf16.mxu0 0
      %4804 = vmatmul.mubr.bf16.gmra.mxu0 %v4529
      %v4805 = vpop.f32.mrf.mxu0
      %v4806 = vadd.f32 0.0, %v4805
      %v4807 = vpop.f32.mrf.mxu0
      %v4808 = vpop.f32.mrf.mxu0
      %v4809 = vadd.f32 0.0, %v4808
      %v4810 = vpop.f32.mrf.mxu0
      %4811 = vmatprep.mubr.bf16.mxu0 0
      %4812 = vmatmul.mubr.bf16.gmra.mxu0 %v4532
      %v4813 = vpop.f32.mrf.mxu0
      %v4814 = vadd.f32 0.0, %v4813
      %v4815 = vpop.f32.mrf.mxu0
      %v4816 = vpop.f32.mrf.mxu0
      %v4817 = vadd.f32 0.0, %v4816
      %v4818 = vpop.f32.mrf.mxu0
      %4819 = vmatprep.mubr.bf16.mxu0 0
      %4820 = vmatmul.mubr.bf16.gmra.mxu0 %v4535
      %v4821 = vpop.f32.mrf.mxu0
      %v4822 = vadd.f32 0.0, %v4821
      %v4823 = vpop.f32.mrf.mxu0
      %v4824 = vpop.f32.mrf.mxu0
      %v4825 = vadd.f32 0.0, %v4824
      %v4826 = vpop.f32.mrf.mxu0
      %4827 = vmatprep.mubr.bf16.mxu0 0
      %4828 = vmatmul.mubr.bf16.gmra.mxu0 %v4538
      %v4829 = vpop.f32.mrf.mxu0
      %v4830 = vadd.f32 0.0, %v4829
      %v4831 = vpop.f32.mrf.mxu0
      %v4832 = vpop.f32.mrf.mxu0
      %v4833 = vadd.f32 0.0, %v4832
      %v4834 = vpop.f32.mrf.mxu0
      %4835 = vmatprep.mubr.bf16.mxu0 0
      %4836 = vmatmul.mubr.bf16.gmra.mxu0 %v4541
      %v4837 = vpop.f32.mrf.mxu0
      %v4838 = vadd.f32 0.0, %v4837
      %v4839 = vpop.f32.mrf.mxu0
      %v4840 = vpop.f32.mrf.mxu0
      %v4841 = vadd.f32 0.0, %v4840
      %v4842 = vpop.f32.mrf.mxu0
      %4843 = vmatprep.mubr.bf16.mxu0 0
      %4844 = vmatmul.mubr.bf16.gmra.mxu0 %v4544
      %v4845 = vpop.f32.mrf.mxu0
      %v4846 = vadd.f32 0.0, %v4845
      %v4847 = vpop.f32.mrf.mxu0
      %v4848 = vpop.f32.mrf.mxu0
      %v4849 = vadd.f32 0.0, %v4848
      %v4850 = vpop.f32.mrf.mxu0
      %4851 = vmatprep.mubr.bf16.mxu0 0
      %4852 = vmatmul.mubr.bf16.gmra.mxu0 %v4547
      %v4853 = vpop.f32.mrf.mxu0
      %v4854 = vadd.f32 0.0, %v4853
      %v4855 = vpop.f32.mrf.mxu0
      %v4856 = vpop.f32.mrf.mxu0
      %v4857 = vadd.f32 0.0, %v4856
      %v4858 = vpop.f32.mrf.mxu0
      %4859 = vmatprep.mubr.bf16.mxu0 0
      %4860 = vmatmul.mubr.bf16.gmra.mxu0 %v4550
      %v4861 = vpop.f32.mrf.mxu0
      %v4862 = vadd.f32 0.0, %v4861
      %v4863 = vpop.f32.mrf.mxu0
      %v4864 = vpop.f32.mrf.mxu0
      %v4865 = vadd.f32 0.0, %v4864
      %v4866 = vpop.f32.mrf.mxu0
      %4867 = vmatprep.mubr.bf16.mxu0 0
      %4868 = vmatmul.mubr.bf16.gmra.mxu0 %v4553
      %v4869 = vpop.f32.mrf.mxu0
      %v4870 = vadd.f32 0.0, %v4869
      %v4871 = vpop.f32.mrf.mxu0
      %v4872 = vpop.f32.mrf.mxu0
      %v4873 = vadd.f32 0.0, %v4872
      %v4874 = vpop.f32.mrf.mxu0
      %4875 = vdwg.mxu0
      %v4876 = vpack.c.bf16 %v4215, %v4214
      %v4877 = vpack.c.bf16 %v4217, %v4216
      %v4878 = vpack.c.bf16 %v4219, %v4218
      %v4879 = vpack.c.bf16 %v4221, %v4220
      %4880 = vmatprep.subr.bf16.mxu0 0
      %4881 = vmatpush1.bf16.msra.mxu0 %v736
      %4882 = vmatprep.subr.bf16.mxu0 0
      %4883 = vmatpush1.bf16.msra.mxu0 %v735
      %4884 = vmatprep.subr.bf16.mxu0 0
      %4885 = vmatpush1.bf16.msra.mxu0 %v734
      %4886 = vmatprep.subr.bf16.mxu0 0
      %4887 = vmatpush1.bf16.msra.mxu0 %v733
      %4888 = vmatprep.subr.bf16.mxu0 0
      %4889 = vmatpush1.bf16.msra.mxu0 %v732
      %4890 = vmatprep.subr.bf16.mxu0 0
      %4891 = vmatpush1.bf16.msra.mxu0 %v731
      %4892 = vmatprep.subr.bf16.mxu0 0
      %4893 = vmatpush1.bf16.msra.mxu0 %v730
      %4894 = vmatprep.subr.bf16.mxu0 0
      %4895 = vmatpush1.bf16.msra.mxu0 %v729
      %4896 = vmatprep.subr.bf16.mxu0 0
      %4897 = vmatpush2.bf16.msra.mxu0 0
      %4898 = vmatprep.subr.bf16.mxu0 0
      %4899 = vmatpush2.bf16.msra.mxu0 0
      %4900 = vmatprep.subr.bf16.mxu0 0
      %4901 = vmatpush2.bf16.msra.mxu0 0
      %4902 = vmatprep.subr.bf16.mxu0 0
      %4903 = vmatpush2.bf16.msra.mxu0 0
      %4904 = vmatprep.subr.bf16.mxu0 0
      %4905 = vmatpush2.bf16.msra.mxu0 0
      %4906 = vmatprep.subr.bf16.mxu0 0
      %4907 = vmatpush2.bf16.msra.mxu0 0
      %4908 = vmatprep.subr.bf16.mxu0 0
      %4909 = vmatpush2.bf16.msra.mxu0 0
      %4910 = vmatprep.subr.bf16.mxu0 0
      %4911 = vmatpush2.bf16.msra.mxu0 0
      %4912 = vmatprep.mubr.bf16.mxu0 0
      %4913 = vmatmul.mubr.bf16.gmra.mxu0 %v4876
      %v4914 = vpop.f32.mrf.mxu0
      %v4915 = vadd.f32 0.0, %v4914
      %v4916 = vpop.f32.mrf.mxu0
      %v4917 = vpop.f32.mrf.mxu0
      %v4918 = vadd.f32 0.0, %v4917
      %v4919 = vpop.f32.mrf.mxu0
      %4920 = vmatprep.mubr.bf16.mxu0 0
      %4921 = vmatmul.mubr.bf16.gmra.mxu0 %v4877
      %v4922 = vpop.f32.mrf.mxu0
      %v4923 = vadd.f32 0.0, %v4922
      %v4924 = vpop.f32.mrf.mxu0
      %v4925 = vpop.f32.mrf.mxu0
      %v4926 = vadd.f32 0.0, %v4925
      %v4927 = vpop.f32.mrf.mxu0
      %4928 = vmatprep.mubr.bf16.mxu0 0
      %4929 = vmatmul.mubr.bf16.gmra.mxu0 %v4878
      %v4930 = vpop.f32.mrf.mxu0
      %v4931 = vadd.f32 0.0, %v4930
      %v4932 = vpop.f32.mrf.mxu0
      %v4933 = vpop.f32.mrf.mxu0
      %v4934 = vadd.f32 0.0, %v4933
      %v4935 = vpop.f32.mrf.mxu0
      %4936 = vmatprep.mubr.bf16.mxu0 0
      %4937 = vmatmul.mubr.bf16.gmra.mxu0 %v4879
      %v4938 = vpop.f32.mrf.mxu0
      %v4939 = vadd.f32 0.0, %v4938
      %v4940 = vpop.f32.mrf.mxu0
      %v4941 = vpop.f32.mrf.mxu0
      %v4942 = vadd.f32 0.0, %v4941
      %v4943 = vpop.f32.mrf.mxu0
      %4944 = vdwg.mxu0
      %4945 = vmatprep.subr.bf16.mxu0 0
      %4946 = vmatpush1.bf16.msra.mxu0 %v761
      %4947 = vmatprep.subr.bf16.mxu0 0
      %4948 = vmatpush1.bf16.msra.mxu0 %v760
      %4949 = vmatprep.subr.bf16.mxu0 0
      %4950 = vmatpush1.bf16.msra.mxu0 %v759
      %4951 = vmatprep.subr.bf16.mxu0 0
      %4952 = vmatpush1.bf16.msra.mxu0 %v758
      %4953 = vmatprep.subr.bf16.mxu0 0
      %4954 = vmatpush1.bf16.msra.mxu0 %v757
      %4955 = vmatprep.subr.bf16.mxu0 0
      %4956 = vmatpush1.bf16.msra.mxu0 %v756
      %4957 = vmatprep.subr.bf16.mxu0 0
      %4958 = vmatpush1.bf16.msra.mxu0 %v755
      %4959 = vmatprep.subr.bf16.mxu0 0
      %4960 = vmatpush1.bf16.msra.mxu0 %v754
      %4961 = vmatprep.subr.bf16.mxu0 0
      %4962 = vmatpush2.bf16.msra.mxu0 0
      %4963 = vmatprep.subr.bf16.mxu0 0
      %4964 = vmatpush2.bf16.msra.mxu0 0
      %4965 = vmatprep.subr.bf16.mxu0 0
      %4966 = vmatpush2.bf16.msra.mxu0 0
      %4967 = vmatprep.subr.bf16.mxu0 0
      %4968 = vmatpush2.bf16.msra.mxu0 0
      %4969 = vmatprep.subr.bf16.mxu0 0
      %4970 = vmatpush2.bf16.msra.mxu0 0
      %4971 = vmatprep.subr.bf16.mxu0 0
      %4972 = vmatpush2.bf16.msra.mxu0 0
      %4973 = vmatprep.subr.bf16.mxu0 0
      %4974 = vmatpush2.bf16.msra.mxu0 0
      %4975 = vmatprep.subr.bf16.mxu0 0
      %4976 = vmatpush2.bf16.msra.mxu0 0
      %4977 = vmatprep.mubr.bf16.mxu0 0
      %4978 = vmatmul.mubr.bf16.gmra.mxu0 %v4876
      %v4979 = vpop.f32.mrf.mxu0
      %v4980 = vadd.f32 0.0, %v4979
      %v4981 = vpop.f32.mrf.mxu0
      %v4982 = vpop.f32.mrf.mxu0
      %v4983 = vadd.f32 0.0, %v4982
      %v4984 = vpop.f32.mrf.mxu0
      %4985 = vmatprep.mubr.bf16.mxu0 0
      %4986 = vmatmul.mubr.bf16.gmra.mxu0 %v4877
      %v4987 = vpop.f32.mrf.mxu0
      %v4988 = vadd.f32 0.0, %v4987
      %v4989 = vpop.f32.mrf.mxu0
      %v4990 = vpop.f32.mrf.mxu0
      %v4991 = vadd.f32 0.0, %v4990
      %v4992 = vpop.f32.mrf.mxu0
      %4993 = vmatprep.mubr.bf16.mxu0 0
      %4994 = vmatmul.mubr.bf16.gmra.mxu0 %v4878
      %v4995 = vpop.f32.mrf.mxu0
      %v4996 = vadd.f32 0.0, %v4995
      %v4997 = vpop.f32.mrf.mxu0
      %v4998 = vpop.f32.mrf.mxu0
      %v4999 = vadd.f32 0.0, %v4998
      %v5000 = vpop.f32.mrf.mxu0
      %5001 = vmatprep.mubr.bf16.mxu0 0
      %5002 = vmatmul.mubr.bf16.gmra.mxu0 %v4879
      %v5003 = vpop.f32.mrf.mxu0
      %v5004 = vadd.f32 0.0, %v5003
      %v5005 = vpop.f32.mrf.mxu0
      %v5006 = vpop.f32.mrf.mxu0
      %v5007 = vadd.f32 0.0, %v5006
      %v5008 = vpop.f32.mrf.mxu0
      %5009 = vdwg.mxu0
      %5010 = vmatprep.subr.bf16.mxu0 0
      %5011 = vmatpush1.bf16.msra.mxu0 %v786
      %5012 = vmatprep.subr.bf16.mxu0 0
      %5013 = vmatpush1.bf16.msra.mxu0 %v785
      %5014 = vmatprep.subr.bf16.mxu0 0
      %5015 = vmatpush1.bf16.msra.mxu0 %v784
      %5016 = vmatprep.subr.bf16.mxu0 0
      %5017 = vmatpush1.bf16.msra.mxu0 %v783
      %5018 = vmatprep.subr.bf16.mxu0 0
      %5019 = vmatpush1.bf16.msra.mxu0 %v782
      %5020 = vmatprep.subr.bf16.mxu0 0
      %5021 = vmatpush1.bf16.msra.mxu0 %v781
      %5022 = vmatprep.subr.bf16.mxu0 0
      %5023 = vmatpush1.bf16.msra.mxu0 %v780
      %5024 = vmatprep.subr.bf16.mxu0 0
      %5025 = vmatpush1.bf16.msra.mxu0 %v779
      %5026 = vmatprep.subr.bf16.mxu0 0
      %5027 = vmatpush2.bf16.msra.mxu0 0
      %5028 = vmatprep.subr.bf16.mxu0 0
      %5029 = vmatpush2.bf16.msra.mxu0 0
      %5030 = vmatprep.subr.bf16.mxu0 0
      %5031 = vmatpush2.bf16.msra.mxu0 0
      %5032 = vmatprep.subr.bf16.mxu0 0
      %5033 = vmatpush2.bf16.msra.mxu0 0
      %5034 = vmatprep.subr.bf16.mxu0 0
      %5035 = vmatpush2.bf16.msra.mxu0 0
      %5036 = vmatprep.subr.bf16.mxu0 0
      %5037 = vmatpush2.bf16.msra.mxu0 0
      %5038 = vmatprep.subr.bf16.mxu0 0
      %5039 = vmatpush2.bf16.msra.mxu0 0
      %5040 = vmatprep.subr.bf16.mxu0 0
      %5041 = vmatpush2.bf16.msra.mxu0 0
      %5042 = vmatprep.mubr.bf16.mxu0 0
      %5043 = vmatmul.mubr.bf16.gmra.mxu0 %v4876
      %v5044 = vpop.f32.mrf.mxu0
      %v5045 = vadd.f32 0.0, %v5044
      %v5046 = vpop.f32.mrf.mxu0
      %v5047 = vpop.f32.mrf.mxu0
      %v5048 = vadd.f32 0.0, %v5047
      %v5049 = vpop.f32.mrf.mxu0
      %5050 = vmatprep.mubr.bf16.mxu0 0
      %5051 = vmatmul.mubr.bf16.gmra.mxu0 %v4877
      %v5052 = vpop.f32.mrf.mxu0
      %v5053 = vadd.f32 0.0, %v5052
      %v5054 = vpop.f32.mrf.mxu0
      %v5055 = vpop.f32.mrf.mxu0
      %v5056 = vadd.f32 0.0, %v5055
      %v5057 = vpop.f32.mrf.mxu0
      %5058 = vmatprep.mubr.bf16.mxu0 0
      %5059 = vmatmul.mubr.bf16.gmra.mxu0 %v4878
      %v5060 = vpop.f32.mrf.mxu0
      %v5061 = vadd.f32 0.0, %v5060
      %v5062 = vpop.f32.mrf.mxu0
      %v5063 = vpop.f32.mrf.mxu0
      %v5064 = vadd.f32 0.0, %v5063
      %v5065 = vpop.f32.mrf.mxu0
      %5066 = vmatprep.mubr.bf16.mxu0 0
      %5067 = vmatmul.mubr.bf16.gmra.mxu0 %v4879
      %v5068 = vpop.f32.mrf.mxu0
      %v5069 = vadd.f32 0.0, %v5068
      %v5070 = vpop.f32.mrf.mxu0
      %v5071 = vpop.f32.mrf.mxu0
      %v5072 = vadd.f32 0.0, %v5071
      %v5073 = vpop.f32.mrf.mxu0
      %5074 = vdwg.mxu0
      %5075 = vmatprep.subr.bf16.mxu0 0
      %5076 = vmatpush1.bf16.msra.mxu0 %v811
      %5077 = vmatprep.subr.bf16.mxu0 0
      %5078 = vmatpush1.bf16.msra.mxu0 %v810
      %5079 = vmatprep.subr.bf16.mxu0 0
      %5080 = vmatpush1.bf16.msra.mxu0 %v809
      %5081 = vmatprep.subr.bf16.mxu0 0
      %5082 = vmatpush1.bf16.msra.mxu0 %v808
      %5083 = vmatprep.subr.bf16.mxu0 0
      %5084 = vmatpush1.bf16.msra.mxu0 %v807
      %5085 = vmatprep.subr.bf16.mxu0 0
      %5086 = vmatpush1.bf16.msra.mxu0 %v806
      %5087 = vmatprep.subr.bf16.mxu0 0
      %5088 = vmatpush1.bf16.msra.mxu0 %v805
      %5089 = vmatprep.subr.bf16.mxu0 0
      %5090 = vmatpush1.bf16.msra.mxu0 %v804
      %5091 = vmatprep.subr.bf16.mxu0 0
      %5092 = vmatpush2.bf16.msra.mxu0 0
      %5093 = vmatprep.subr.bf16.mxu0 0
      %5094 = vmatpush2.bf16.msra.mxu0 0
      %5095 = vmatprep.subr.bf16.mxu0 0
      %5096 = vmatpush2.bf16.msra.mxu0 0
      %5097 = vmatprep.subr.bf16.mxu0 0
      %5098 = vmatpush2.bf16.msra.mxu0 0
      %5099 = vmatprep.subr.bf16.mxu0 0
      %5100 = vmatpush2.bf16.msra.mxu0 0
      %5101 = vmatprep.subr.bf16.mxu0 0
      %5102 = vmatpush2.bf16.msra.mxu0 0
      %5103 = vmatprep.subr.bf16.mxu0 0
      %5104 = vmatpush2.bf16.msra.mxu0 0
      %5105 = vmatprep.subr.bf16.mxu0 0
      %5106 = vmatpush2.bf16.msra.mxu0 0
      %5107 = vmatprep.mubr.bf16.mxu0 0
      %5108 = vmatmul.mubr.bf16.gmra.mxu0 %v4876
      %v5109 = vpop.f32.mrf.mxu0
      %v5110 = vadd.f32 0.0, %v5109
      %v5111 = vpop.f32.mrf.mxu0
      %v5112 = vpop.f32.mrf.mxu0
      %v5113 = vadd.f32 0.0, %v5112
      %v5114 = vpop.f32.mrf.mxu0
      %5115 = vmatprep.mubr.bf16.mxu0 0
      %5116 = vmatmul.mubr.bf16.gmra.mxu0 %v4877
      %v5117 = vpop.f32.mrf.mxu0
      %v5118 = vadd.f32 0.0, %v5117
      %v5119 = vpop.f32.mrf.mxu0
      %v5120 = vpop.f32.mrf.mxu0
      %v5121 = vadd.f32 0.0, %v5120
      %v5122 = vpop.f32.mrf.mxu0
      %5123 = vmatprep.mubr.bf16.mxu0 0
      %5124 = vmatmul.mubr.bf16.gmra.mxu0 %v4878
      %v5125 = vpop.f32.mrf.mxu0
      %v5126 = vadd.f32 0.0, %v5125
      %v5127 = vpop.f32.mrf.mxu0
      %v5128 = vpop.f32.mrf.mxu0
      %v5129 = vadd.f32 0.0, %v5128
      %v5130 = vpop.f32.mrf.mxu0
      %5131 = vmatprep.mubr.bf16.mxu0 0
      %5132 = vmatmul.mubr.bf16.gmra.mxu0 %v4879
      %v5133 = vpop.f32.mrf.mxu0
      %v5134 = vadd.f32 0.0, %v5133
      %v5135 = vpop.f32.mrf.mxu0
      %v5136 = vpop.f32.mrf.mxu0
      %v5137 = vadd.f32 0.0, %v5136
      %v5138 = vpop.f32.mrf.mxu0
      %5139 = vdwg.mxu0
      %5140 = vmatprep.subr.bf16.mxu0 0
      %5141 = vmatpush1.bf16.msra.mxu0 %v836
      %5142 = vmatprep.subr.bf16.mxu0 0
      %5143 = vmatpush1.bf16.msra.mxu0 %v835
      %5144 = vmatprep.subr.bf16.mxu0 0
      %5145 = vmatpush1.bf16.msra.mxu0 %v834
      %5146 = vmatprep.subr.bf16.mxu0 0
      %5147 = vmatpush1.bf16.msra.mxu0 %v833
      %5148 = vmatprep.subr.bf16.mxu0 0
      %5149 = vmatpush1.bf16.msra.mxu0 %v832
      %5150 = vmatprep.subr.bf16.mxu0 0
      %5151 = vmatpush1.bf16.msra.mxu0 %v831
      %5152 = vmatprep.subr.bf16.mxu0 0
      %5153 = vmatpush1.bf16.msra.mxu0 %v830
      %5154 = vmatprep.subr.bf16.mxu0 0
      %5155 = vmatpush1.bf16.msra.mxu0 %v829
      %5156 = vmatprep.subr.bf16.mxu0 0
      %5157 = vmatpush2.bf16.msra.mxu0 0
      %5158 = vmatprep.subr.bf16.mxu0 0
      %5159 = vmatpush2.bf16.msra.mxu0 0
      %5160 = vmatprep.subr.bf16.mxu0 0
      %5161 = vmatpush2.bf16.msra.mxu0 0
      %5162 = vmatprep.subr.bf16.mxu0 0
      %5163 = vmatpush2.bf16.msra.mxu0 0
      %5164 = vmatprep.subr.bf16.mxu0 0
      %5165 = vmatpush2.bf16.msra.mxu0 0
      %5166 = vmatprep.subr.bf16.mxu0 0
      %5167 = vmatpush2.bf16.msra.mxu0 0
      %5168 = vmatprep.subr.bf16.mxu0 0
      %5169 = vmatpush2.bf16.msra.mxu0 0
      %5170 = vmatprep.subr.bf16.mxu0 0
      %5171 = vmatpush2.bf16.msra.mxu0 0
      %5172 = vmatprep.mubr.bf16.mxu0 0
      %5173 = vmatmul.mubr.bf16.gmra.mxu0 %v4876
      %v5174 = vpop.f32.mrf.mxu0
      %v5175 = vadd.f32 0.0, %v5174
      %v5176 = vpop.f32.mrf.mxu0
      %v5177 = vpop.f32.mrf.mxu0
      %v5178 = vadd.f32 0.0, %v5177
      %v5179 = vpop.f32.mrf.mxu0
      %5180 = vmatprep.mubr.bf16.mxu0 0
      %5181 = vmatmul.mubr.bf16.gmra.mxu0 %v4877
      %v5182 = vpop.f32.mrf.mxu0
      %v5183 = vadd.f32 0.0, %v5182
      %v5184 = vpop.f32.mrf.mxu0
      %v5185 = vpop.f32.mrf.mxu0
      %v5186 = vadd.f32 0.0, %v5185
      %v5187 = vpop.f32.mrf.mxu0
      %5188 = vmatprep.mubr.bf16.mxu0 0
      %5189 = vmatmul.mubr.bf16.gmra.mxu0 %v4878
      %v5190 = vpop.f32.mrf.mxu0
      %v5191 = vadd.f32 0.0, %v5190
      %v5192 = vpop.f32.mrf.mxu0
      %v5193 = vpop.f32.mrf.mxu0
      %v5194 = vadd.f32 0.0, %v5193
      %v5195 = vpop.f32.mrf.mxu0
      %5196 = vmatprep.mubr.bf16.mxu0 0
      %5197 = vmatmul.mubr.bf16.gmra.mxu0 %v4879
      %v5198 = vpop.f32.mrf.mxu0
      %v5199 = vadd.f32 0.0, %v5198
      %v5200 = vpop.f32.mrf.mxu0
      %v5201 = vpop.f32.mrf.mxu0
      %v5202 = vadd.f32 0.0, %v5201
      %v5203 = vpop.f32.mrf.mxu0
      %5204 = vdwg.mxu0
      %5205 = vmatprep.subr.bf16.mxu0 0
      %5206 = vmatpush1.bf16.msra.mxu0 %v861
      %5207 = vmatprep.subr.bf16.mxu0 0
      %5208 = vmatpush1.bf16.msra.mxu0 %v860
      %5209 = vmatprep.subr.bf16.mxu0 0
      %5210 = vmatpush1.bf16.msra.mxu0 %v859
      %5211 = vmatprep.subr.bf16.mxu0 0
      %5212 = vmatpush1.bf16.msra.mxu0 %v858
      %5213 = vmatprep.subr.bf16.mxu0 0
      %5214 = vmatpush1.bf16.msra.mxu0 %v857
      %5215 = vmatprep.subr.bf16.mxu0 0
      %5216 = vmatpush1.bf16.msra.mxu0 %v856
      %5217 = vmatprep.subr.bf16.mxu0 0
      %5218 = vmatpush1.bf16.msra.mxu0 %v855
      %5219 = vmatprep.subr.bf16.mxu0 0
      %5220 = vmatpush1.bf16.msra.mxu0 %v854
      %5221 = vmatprep.subr.bf16.mxu0 0
      %5222 = vmatpush2.bf16.msra.mxu0 0
      %5223 = vmatprep.subr.bf16.mxu0 0
      %5224 = vmatpush2.bf16.msra.mxu0 0
      %5225 = vmatprep.subr.bf16.mxu0 0
      %5226 = vmatpush2.bf16.msra.mxu0 0
      %5227 = vmatprep.subr.bf16.mxu0 0
      %5228 = vmatpush2.bf16.msra.mxu0 0
      %5229 = vmatprep.subr.bf16.mxu0 0
      %5230 = vmatpush2.bf16.msra.mxu0 0
      %5231 = vmatprep.subr.bf16.mxu0 0
      %5232 = vmatpush2.bf16.msra.mxu0 0
      %5233 = vmatprep.subr.bf16.mxu0 0
      %5234 = vmatpush2.bf16.msra.mxu0 0
      %5235 = vmatprep.subr.bf16.mxu0 0
      %5236 = vmatpush2.bf16.msra.mxu0 0
      %5237 = vmatprep.mubr.bf16.mxu0 0
      %5238 = vmatmul.mubr.bf16.gmra.mxu0 %v4876
      %v5239 = vpop.f32.mrf.mxu0
      %v5240 = vadd.f32 0.0, %v5239
      %v5241 = vpop.f32.mrf.mxu0
      %v5242 = vpop.f32.mrf.mxu0
      %v5243 = vadd.f32 0.0, %v5242
      %v5244 = vpop.f32.mrf.mxu0
      %5245 = vmatprep.mubr.bf16.mxu0 0
      %5246 = vmatmul.mubr.bf16.gmra.mxu0 %v4877
      %v5247 = vpop.f32.mrf.mxu0
      %v5248 = vadd.f32 0.0, %v5247
      %v5249 = vpop.f32.mrf.mxu0
      %v5250 = vpop.f32.mrf.mxu0
      %v5251 = vadd.f32 0.0, %v5250
      %v5252 = vpop.f32.mrf.mxu0
      %5253 = vmatprep.mubr.bf16.mxu0 0
      %5254 = vmatmul.mubr.bf16.gmra.mxu0 %v4878
      %v5255 = vpop.f32.mrf.mxu0
      %v5256 = vadd.f32 0.0, %v5255
      %v5257 = vpop.f32.mrf.mxu0
      %v5258 = vpop.f32.mrf.mxu0
      %v5259 = vadd.f32 0.0, %v5258
      %v5260 = vpop.f32.mrf.mxu0
      %5261 = vmatprep.mubr.bf16.mxu0 0
      %5262 = vmatmul.mubr.bf16.gmra.mxu0 %v4879
      %v5263 = vpop.f32.mrf.mxu0
      %v5264 = vadd.f32 0.0, %v5263
      %v5265 = vpop.f32.mrf.mxu0
      %v5266 = vpop.f32.mrf.mxu0
      %v5267 = vadd.f32 0.0, %v5266
      %v5268 = vpop.f32.mrf.mxu0
      %5269 = vdwg.mxu0
      %5270 = vmatprep.subr.bf16.mxu0 0
      %5271 = vmatpush1.bf16.msra.mxu0 %v886
      %5272 = vmatprep.subr.bf16.mxu0 0
      %5273 = vmatpush1.bf16.msra.mxu0 %v885
      %5274 = vmatprep.subr.bf16.mxu0 0
      %5275 = vmatpush1.bf16.msra.mxu0 %v884
      %5276 = vmatprep.subr.bf16.mxu0 0
      %5277 = vmatpush1.bf16.msra.mxu0 %v883
      %5278 = vmatprep.subr.bf16.mxu0 0
      %5279 = vmatpush1.bf16.msra.mxu0 %v882
      %5280 = vmatprep.subr.bf16.mxu0 0
      %5281 = vmatpush1.bf16.msra.mxu0 %v881
      %5282 = vmatprep.subr.bf16.mxu0 0
      %5283 = vmatpush1.bf16.msra.mxu0 %v880
      %5284 = vmatprep.subr.bf16.mxu0 0
      %5285 = vmatpush1.bf16.msra.mxu0 %v879
      %5286 = vmatprep.subr.bf16.mxu0 0
      %5287 = vmatpush2.bf16.msra.mxu0 0
      %5288 = vmatprep.subr.bf16.mxu0 0
      %5289 = vmatpush2.bf16.msra.mxu0 0
      %5290 = vmatprep.subr.bf16.mxu0 0
      %5291 = vmatpush2.bf16.msra.mxu0 0
      %5292 = vmatprep.subr.bf16.mxu0 0
      %5293 = vmatpush2.bf16.msra.mxu0 0
      %5294 = vmatprep.subr.bf16.mxu0 0
      %5295 = vmatpush2.bf16.msra.mxu0 0
      %5296 = vmatprep.subr.bf16.mxu0 0
      %5297 = vmatpush2.bf16.msra.mxu0 0
      %5298 = vmatprep.subr.bf16.mxu0 0
      %5299 = vmatpush2.bf16.msra.mxu0 0
      %5300 = vmatprep.subr.bf16.mxu0 0
      %5301 = vmatpush2.bf16.msra.mxu0 0
      %5302 = vmatprep.mubr.bf16.mxu0 0
      %5303 = vmatmul.mubr.bf16.gmra.mxu0 %v4876
      %v5304 = vpop.f32.mrf.mxu0
      %v5305 = vadd.f32 0.0, %v5304
      %v5306 = vpop.f32.mrf.mxu0
      %v5307 = vpop.f32.mrf.mxu0
      %v5308 = vadd.f32 0.0, %v5307
      %v5309 = vpop.f32.mrf.mxu0
      %5310 = vmatprep.mubr.bf16.mxu0 0
      %5311 = vmatmul.mubr.bf16.gmra.mxu0 %v4877
      %v5312 = vpop.f32.mrf.mxu0
      %v5313 = vadd.f32 0.0, %v5312
      %v5314 = vpop.f32.mrf.mxu0
      %v5315 = vpop.f32.mrf.mxu0
      %v5316 = vadd.f32 0.0, %v5315
      %v5317 = vpop.f32.mrf.mxu0
      %5318 = vmatprep.mubr.bf16.mxu0 0
      %5319 = vmatmul.mubr.bf16.gmra.mxu0 %v4878
      %v5320 = vpop.f32.mrf.mxu0
      %v5321 = vadd.f32 0.0, %v5320
      %v5322 = vpop.f32.mrf.mxu0
      %v5323 = vpop.f32.mrf.mxu0
      %v5324 = vadd.f32 0.0, %v5323
      %v5325 = vpop.f32.mrf.mxu0
      %5326 = vmatprep.mubr.bf16.mxu0 0
      %5327 = vmatmul.mubr.bf16.gmra.mxu0 %v4879
      %v5328 = vpop.f32.mrf.mxu0
      %v5329 = vadd.f32 0.0, %v5328
      %v5330 = vpop.f32.mrf.mxu0
      %v5331 = vpop.f32.mrf.mxu0
      %v5332 = vadd.f32 0.0, %v5331
      %v5333 = vpop.f32.mrf.mxu0
      %5334 = vdwg.mxu0
      %5335 = vmatprep.subr.bf16.mxu0 0
      %5336 = vmatpush1.bf16.msra.mxu0 %v911
      %5337 = vmatprep.subr.bf16.mxu0 0
      %5338 = vmatpush1.bf16.msra.mxu0 %v910
      %5339 = vmatprep.subr.bf16.mxu0 0
      %5340 = vmatpush1.bf16.msra.mxu0 %v909
      %5341 = vmatprep.subr.bf16.mxu0 0
      %5342 = vmatpush1.bf16.msra.mxu0 %v908
      %5343 = vmatprep.subr.bf16.mxu0 0
      %5344 = vmatpush1.bf16.msra.mxu0 %v907
      %5345 = vmatprep.subr.bf16.mxu0 0
      %5346 = vmatpush1.bf16.msra.mxu0 %v906
      %5347 = vmatprep.subr.bf16.mxu0 0
      %5348 = vmatpush1.bf16.msra.mxu0 %v905
      %5349 = vmatprep.subr.bf16.mxu0 0
      %5350 = vmatpush1.bf16.msra.mxu0 %v904
      %5351 = vmatprep.subr.bf16.mxu0 0
      %5352 = vmatpush2.bf16.msra.mxu0 0
      %5353 = vmatprep.subr.bf16.mxu0 0
      %5354 = vmatpush2.bf16.msra.mxu0 0
      %5355 = vmatprep.subr.bf16.mxu0 0
      %5356 = vmatpush2.bf16.msra.mxu0 0
      %5357 = vmatprep.subr.bf16.mxu0 0
      %5358 = vmatpush2.bf16.msra.mxu0 0
      %5359 = vmatprep.subr.bf16.mxu0 0
      %5360 = vmatpush2.bf16.msra.mxu0 0
      %5361 = vmatprep.subr.bf16.mxu0 0
      %5362 = vmatpush2.bf16.msra.mxu0 0
      %5363 = vmatprep.subr.bf16.mxu0 0
      %5364 = vmatpush2.bf16.msra.mxu0 0
      %5365 = vmatprep.subr.bf16.mxu0 0
      %5366 = vmatpush2.bf16.msra.mxu0 0
      %5367 = vmatprep.mubr.bf16.mxu0 0
      %5368 = vmatmul.mubr.bf16.gmra.mxu0 %v4876
      %v5369 = vpop.f32.mrf.mxu0
      %v5370 = vadd.f32 0.0, %v5369
      %v5371 = vpop.f32.mrf.mxu0
      %v5372 = vpop.f32.mrf.mxu0
      %v5373 = vadd.f32 0.0, %v5372
      %v5374 = vpop.f32.mrf.mxu0
      %5375 = vmatprep.mubr.bf16.mxu0 0
      %5376 = vmatmul.mubr.bf16.gmra.mxu0 %v4877
      %v5377 = vpop.f32.mrf.mxu0
      %v5378 = vadd.f32 0.0, %v5377
      %v5379 = vpop.f32.mrf.mxu0
      %v5380 = vpop.f32.mrf.mxu0
      %v5381 = vadd.f32 0.0, %v5380
      %v5382 = vpop.f32.mrf.mxu0
      %5383 = vmatprep.mubr.bf16.mxu0 0
      %5384 = vmatmul.mubr.bf16.gmra.mxu0 %v4878
      %v5385 = vpop.f32.mrf.mxu0
      %v5386 = vadd.f32 0.0, %v5385
      %v5387 = vpop.f32.mrf.mxu0
      %v5388 = vpop.f32.mrf.mxu0
      %v5389 = vadd.f32 0.0, %v5388
      %v5390 = vpop.f32.mrf.mxu0
      %5391 = vmatprep.mubr.bf16.mxu0 0
      %5392 = vmatmul.mubr.bf16.gmra.mxu0 %v4879
      %v5393 = vpop.f32.mrf.mxu0
      %v5394 = vadd.f32 0.0, %v5393
      %v5395 = vpop.f32.mrf.mxu0
      %v5396 = vpop.f32.mrf.mxu0
      %v5397 = vadd.f32 0.0, %v5396
      %v5398 = vpop.f32.mrf.mxu0
      %5399 = vdwg.mxu0
      %5400 = vmatprep.subr.bf16.mxu0 0
      %5401 = vmatpush1.bf16.msra.mxu0 %v936
      %5402 = vmatprep.subr.bf16.mxu0 0
      %5403 = vmatpush1.bf16.msra.mxu0 %v935
      %5404 = vmatprep.subr.bf16.mxu0 0
      %5405 = vmatpush1.bf16.msra.mxu0 %v934
      %5406 = vmatprep.subr.bf16.mxu0 0
      %5407 = vmatpush1.bf16.msra.mxu0 %v933
      %5408 = vmatprep.subr.bf16.mxu0 0
      %5409 = vmatpush1.bf16.msra.mxu0 %v932
      %5410 = vmatprep.subr.bf16.mxu0 0
      %5411 = vmatpush1.bf16.msra.mxu0 %v931
      %5412 = vmatprep.subr.bf16.mxu0 0
      %5413 = vmatpush1.bf16.msra.mxu0 %v930
      %5414 = vmatprep.subr.bf16.mxu0 0
      %5415 = vmatpush1.bf16.msra.mxu0 %v929
      %5416 = vmatprep.subr.bf16.mxu0 0
      %5417 = vmatpush2.bf16.msra.mxu0 0
      %5418 = vmatprep.subr.bf16.mxu0 0
      %5419 = vmatpush2.bf16.msra.mxu0 0
      %5420 = vmatprep.subr.bf16.mxu0 0
      %5421 = vmatpush2.bf16.msra.mxu0 0
      %5422 = vmatprep.subr.bf16.mxu0 0
      %5423 = vmatpush2.bf16.msra.mxu0 0
      %5424 = vmatprep.subr.bf16.mxu0 0
      %5425 = vmatpush2.bf16.msra.mxu0 0
      %5426 = vmatprep.subr.bf16.mxu0 0
      %5427 = vmatpush2.bf16.msra.mxu0 0
      %5428 = vmatprep.subr.bf16.mxu0 0
      %5429 = vmatpush2.bf16.msra.mxu0 0
      %5430 = vmatprep.subr.bf16.mxu0 0
      %5431 = vmatpush2.bf16.msra.mxu0 0
      %5432 = vmatprep.mubr.bf16.mxu0 0
      %5433 = vmatmul.mubr.bf16.gmra.mxu0 %v4876
      %v5434 = vpop.f32.mrf.mxu0
      %v5435 = vadd.f32 0.0, %v5434
      %v5436 = vpop.f32.mrf.mxu0
      %v5437 = vpop.f32.mrf.mxu0
      %v5438 = vadd.f32 0.0, %v5437
      %v5439 = vpop.f32.mrf.mxu0
      %5440 = vmatprep.mubr.bf16.mxu0 0
      %5441 = vmatmul.mubr.bf16.gmra.mxu0 %v4877
      %v5442 = vpop.f32.mrf.mxu0
      %v5443 = vadd.f32 0.0, %v5442
      %v5444 = vpop.f32.mrf.mxu0
      %v5445 = vpop.f32.mrf.mxu0
      %v5446 = vadd.f32 0.0, %v5445
      %v5447 = vpop.f32.mrf.mxu0
      %5448 = vmatprep.mubr.bf16.mxu0 0
      %5449 = vmatmul.mubr.bf16.gmra.mxu0 %v4878
      %v5450 = vpop.f32.mrf.mxu0
      %v5451 = vadd.f32 0.0, %v5450
      %v5452 = vpop.f32.mrf.mxu0
      %v5453 = vpop.f32.mrf.mxu0
      %v5454 = vadd.f32 0.0, %v5453
      %v5455 = vpop.f32.mrf.mxu0
      %5456 = vmatprep.mubr.bf16.mxu0 0
      %5457 = vmatmul.mubr.bf16.gmra.mxu0 %v4879
      %v5458 = vpop.f32.mrf.mxu0
      %v5459 = vadd.f32 0.0, %v5458
      %v5460 = vpop.f32.mrf.mxu0
      %v5461 = vpop.f32.mrf.mxu0
      %v5462 = vadd.f32 0.0, %v5461
      %v5463 = vpop.f32.mrf.mxu0
      %5464 = vdwg.mxu0
      %5466 = vset.pattern.permute.xlu0 0
      %5467 = vperm.xlu0 %5466, %v4590
      %v5468 = vpop.permute.xlu0 %5467
      %5471 = vset.pattern.permute.xlu0 0
      %5472 = vperm.xlu0 %5471, %v4593
      %v5473 = vpop.permute.xlu0 %5472
      %5476 = vset.pattern.permute.xlu0 0
      %5477 = vperm.xlu0 %5476, %v4598
      %v5478 = vpop.permute.xlu0 %5477
      %5481 = vset.pattern.permute.xlu0 0
      %5482 = vperm.xlu0 %5481, %v4601
      %v5483 = vpop.permute.xlu0 %5482
      %5486 = vset.pattern.permute.xlu0 0
      %5487 = vperm.xlu0 %5486, %v4606
      %v5488 = vpop.permute.xlu0 %5487
      %5491 = vset.pattern.permute.xlu0 0
      %5492 = vperm.xlu0 %5491, %v4609
      %v5493 = vpop.permute.xlu0 %5492
      %5496 = vset.pattern.permute.xlu0 0
      %5497 = vperm.xlu0 %5496, %v4614
      %v5498 = vpop.permute.xlu0 %5497
      %5501 = vset.pattern.permute.xlu0 0
      %5502 = vperm.xlu0 %5501, %v4617
      %v5503 = vpop.permute.xlu0 %5502
      %v5505 = vmul.f32 %v5468, %v4915
      %v5506 = vmul.f32 %v5473, %v4918
      %v5507 = vmul.f32 %v5478, %v4923
      %v5508 = vmul.f32 %v5483, %v4926
      %v5509 = vmul.f32 %v5488, %v4931
      %v5510 = vmul.f32 %v5493, %v4934
      %v5511 = vmul.f32 %v5498, %v4939
      %v5512 = vmul.f32 %v5503, %v4942
      %v5513 = vadd.f32 %v5505, 0.0
      %v5514 = vadd.f32 %v5506, 0.0
      %v5515 = vadd.f32 %v5507, 0.0
      %v5516 = vadd.f32 %v5508, 0.0
      %v5517 = vadd.f32 %v5509, 0.0
      %v5518 = vadd.f32 %v5510, 0.0
      %v5519 = vadd.f32 %v5511, 0.0
      %v5520 = vadd.f32 %v5512, 0.0
      %5521 = vset.pattern.permute.xlu0 1
      %5522 = vperm.xlu0 %5521, %v4590
      %v5523 = vpop.permute.xlu0 %5522
      %5525 = vset.pattern.permute.xlu0 1
      %5526 = vperm.xlu0 %5525, %v4593
      %v5527 = vpop.permute.xlu0 %5526
      %5529 = vset.pattern.permute.xlu0 1
      %5530 = vperm.xlu0 %5529, %v4598
      %v5531 = vpop.permute.xlu0 %5530
      %5533 = vset.pattern.permute.xlu0 1
      %5534 = vperm.xlu0 %5533, %v4601
      %v5535 = vpop.permute.xlu0 %5534
      %5537 = vset.pattern.permute.xlu0 1
      %5538 = vperm.xlu0 %5537, %v4606
      %v5539 = vpop.permute.xlu0 %5538
      %5541 = vset.pattern.permute.xlu0 1
      %5542 = vperm.xlu0 %5541, %v4609
      %v5543 = vpop.permute.xlu0 %5542
      %5545 = vset.pattern.permute.xlu0 1
      %5546 = vperm.xlu0 %5545, %v4614
      %v5547 = vpop.permute.xlu0 %5546
      %5549 = vset.pattern.permute.xlu0 1
      %5550 = vperm.xlu0 %5549, %v4617
      %v5551 = vpop.permute.xlu0 %5550
      %v5553 = vmul.f32 %v5523, %v4915
      %v5554 = vmul.f32 %v5527, %v4918
      %v5555 = vmul.f32 %v5531, %v4923
      %v5556 = vmul.f32 %v5535, %v4926
      %v5557 = vmul.f32 %v5539, %v4931
      %v5558 = vmul.f32 %v5543, %v4934
      %v5559 = vmul.f32 %v5547, %v4939
      %v5560 = vmul.f32 %v5551, %v4942
      %v5561 = vadd.f32 %v5553, 0.0
      %v5562 = vadd.f32 %v5554, 0.0
      %v5563 = vadd.f32 %v5555, 0.0
      %v5564 = vadd.f32 %v5556, 0.0
      %v5565 = vadd.f32 %v5557, 0.0
      %v5566 = vadd.f32 %v5558, 0.0
      %v5567 = vadd.f32 %v5559, 0.0
      %v5568 = vadd.f32 %v5560, 0.0
      %5570 = vset.pattern.permute.xlu0 0
      %5571 = vperm.xlu0 %5570, %v4622
      %v5572 = vpop.permute.xlu0 %5571
      %5575 = vset.pattern.permute.xlu0 0
      %5576 = vperm.xlu0 %5575, %v4625
      %v5577 = vpop.permute.xlu0 %5576
      %5580 = vset.pattern.permute.xlu0 0
      %5581 = vperm.xlu0 %5580, %v4630
      %v5582 = vpop.permute.xlu0 %5581
      %5585 = vset.pattern.permute.xlu0 0
      %5586 = vperm.xlu0 %5585, %v4633
      %v5587 = vpop.permute.xlu0 %5586
      %5590 = vset.pattern.permute.xlu0 0
      %5591 = vperm.xlu0 %5590, %v4638
      %v5592 = vpop.permute.xlu0 %5591
      %5595 = vset.pattern.permute.xlu0 0
      %5596 = vperm.xlu0 %5595, %v4641
      %v5597 = vpop.permute.xlu0 %5596
      %5600 = vset.pattern.permute.xlu0 0
      %5601 = vperm.xlu0 %5600, %v4646
      %v5602 = vpop.permute.xlu0 %5601
      %5605 = vset.pattern.permute.xlu0 0
      %5606 = vperm.xlu0 %5605, %v4649
      %v5607 = vpop.permute.xlu0 %5606
      %v5609 = vmul.f32 %v5572, %v4980
      %v5610 = vmul.f32 %v5577, %v4983
      %v5611 = vmul.f32 %v5582, %v4988
      %v5612 = vmul.f32 %v5587, %v4991
      %v5613 = vmul.f32 %v5592, %v4996
      %v5614 = vmul.f32 %v5597, %v4999
      %v5615 = vmul.f32 %v5602, %v5004
      %v5616 = vmul.f32 %v5607, %v5007
      %v5617 = vadd.f32 %v5513, %v5609
      %v5618 = vadd.f32 %v5514, %v5610
      %v5619 = vadd.f32 %v5515, %v5611
      %v5620 = vadd.f32 %v5516, %v5612
      %v5621 = vadd.f32 %v5517, %v5613
      %v5622 = vadd.f32 %v5518, %v5614
      %v5623 = vadd.f32 %v5519, %v5615
      %v5624 = vadd.f32 %v5520, %v5616
      %5625 = vset.pattern.permute.xlu0 1
      %5626 = vperm.xlu0 %5625, %v4622
      %v5627 = vpop.permute.xlu0 %5626
      %5629 = vset.pattern.permute.xlu0 1
      %5630 = vperm.xlu0 %5629, %v4625
      %v5631 = vpop.permute.xlu0 %5630
      %5633 = vset.pattern.permute.xlu0 1
      %5634 = vperm.xlu0 %5633, %v4630
      %v5635 = vpop.permute.xlu0 %5634
      %5637 = vset.pattern.permute.xlu0 1
      %5638 = vperm.xlu0 %5637, %v4633
      %v5639 = vpop.permute.xlu0 %5638
      %5641 = vset.pattern.permute.xlu0 1
      %5642 = vperm.xlu0 %5641, %v4638
      %v5643 = vpop.permute.xlu0 %5642
      %5645 = vset.pattern.permute.xlu0 1
      %5646 = vperm.xlu0 %5645, %v4641
      %v5647 = vpop.permute.xlu0 %5646
      %5649 = vset.pattern.permute.xlu0 1
      %5650 = vperm.xlu0 %5649, %v4646
      %v5651 = vpop.permute.xlu0 %5650
      %5653 = vset.pattern.permute.xlu0 1
      %5654 = vperm.xlu0 %5653, %v4649
      %v5655 = vpop.permute.xlu0 %5654
      %v5657 = vmul.f32 %v5627, %v4980
      %v5658 = vmul.f32 %v5631, %v4983
      %v5659 = vmul.f32 %v5635, %v4988
      %v5660 = vmul.f32 %v5639, %v4991
      %v5661 = vmul.f32 %v5643, %v4996
      %v5662 = vmul.f32 %v5647, %v4999
      %v5663 = vmul.f32 %v5651, %v5004
      %v5664 = vmul.f32 %v5655, %v5007
      %v5665 = vadd.f32 %v5561, %v5657
      %v5666 = vadd.f32 %v5562, %v5658
      %v5667 = vadd.f32 %v5563, %v5659
      %v5668 = vadd.f32 %v5564, %v5660
      %v5669 = vadd.f32 %v5565, %v5661
      %v5670 = vadd.f32 %v5566, %v5662
      %v5671 = vadd.f32 %v5567, %v5663
      %v5672 = vadd.f32 %v5568, %v5664
      %5674 = vset.pattern.permute.xlu0 0
      %5675 = vperm.xlu0 %5674, %v4654
      %v5676 = vpop.permute.xlu0 %5675
      %5679 = vset.pattern.permute.xlu0 0
      %5680 = vperm.xlu0 %5679, %v4657
      %v5681 = vpop.permute.xlu0 %5680
      %5684 = vset.pattern.permute.xlu0 0
      %5685 = vperm.xlu0 %5684, %v4662
      %v5686 = vpop.permute.xlu0 %5685
      %5689 = vset.pattern.permute.xlu0 0
      %5690 = vperm.xlu0 %5689, %v4665
      %v5691 = vpop.permute.xlu0 %5690
      %5694 = vset.pattern.permute.xlu0 0
      %5695 = vperm.xlu0 %5694, %v4670
      %v5696 = vpop.permute.xlu0 %5695
      %5699 = vset.pattern.permute.xlu0 0
      %5700 = vperm.xlu0 %5699, %v4673
      %v5701 = vpop.permute.xlu0 %5700
      %5704 = vset.pattern.permute.xlu0 0
      %5705 = vperm.xlu0 %5704, %v4678
      %v5706 = vpop.permute.xlu0 %5705
      %5709 = vset.pattern.permute.xlu0 0
      %5710 = vperm.xlu0 %5709, %v4681
      %v5711 = vpop.permute.xlu0 %5710
      %v5713 = vmul.f32 %v5676, %v5045
      %v5714 = vmul.f32 %v5681, %v5048
      %v5715 = vmul.f32 %v5686, %v5053
      %v5716 = vmul.f32 %v5691, %v5056
      %v5717 = vmul.f32 %v5696, %v5061
      %v5718 = vmul.f32 %v5701, %v5064
      %v5719 = vmul.f32 %v5706, %v5069
      %v5720 = vmul.f32 %v5711, %v5072
      %v5721 = vadd.f32 %v5617, %v5713
      %v5722 = vadd.f32 %v5618, %v5714
      %v5723 = vadd.f32 %v5619, %v5715
      %v5724 = vadd.f32 %v5620, %v5716
      %v5725 = vadd.f32 %v5621, %v5717
      %v5726 = vadd.f32 %v5622, %v5718
      %v5727 = vadd.f32 %v5623, %v5719
      %v5728 = vadd.f32 %v5624, %v5720
      %5729 = vset.pattern.permute.xlu0 1
      %5730 = vperm.xlu0 %5729, %v4654
      %v5731 = vpop.permute.xlu0 %5730
      %5733 = vset.pattern.permute.xlu0 1
      %5734 = vperm.xlu0 %5733, %v4657
      %v5735 = vpop.permute.xlu0 %5734
      %5737 = vset.pattern.permute.xlu0 1
      %5738 = vperm.xlu0 %5737, %v4662
      %v5739 = vpop.permute.xlu0 %5738
      %5741 = vset.pattern.permute.xlu0 1
      %5742 = vperm.xlu0 %5741, %v4665
      %v5743 = vpop.permute.xlu0 %5742
      %5745 = vset.pattern.permute.xlu0 1
      %5746 = vperm.xlu0 %5745, %v4670
      %v5747 = vpop.permute.xlu0 %5746
      %5749 = vset.pattern.permute.xlu0 1
      %5750 = vperm.xlu0 %5749, %v4673
      %v5751 = vpop.permute.xlu0 %5750
      %5753 = vset.pattern.permute.xlu0 1
      %5754 = vperm.xlu0 %5753, %v4678
      %v5755 = vpop.permute.xlu0 %5754
      %5757 = vset.pattern.permute.xlu0 1
      %5758 = vperm.xlu0 %5757, %v4681
      %v5759 = vpop.permute.xlu0 %5758
      %v5761 = vmul.f32 %v5731, %v5045
      %v5762 = vmul.f32 %v5735, %v5048
      %v5763 = vmul.f32 %v5739, %v5053
      %v5764 = vmul.f32 %v5743, %v5056
      %v5765 = vmul.f32 %v5747, %v5061
      %v5766 = vmul.f32 %v5751, %v5064
      %v5767 = vmul.f32 %v5755, %v5069
      %v5768 = vmul.f32 %v5759, %v5072
      %v5769 = vadd.f32 %v5665, %v5761
      %v5770 = vadd.f32 %v5666, %v5762
      %v5771 = vadd.f32 %v5667, %v5763
      %v5772 = vadd.f32 %v5668, %v5764
      %v5773 = vadd.f32 %v5669, %v5765
      %v5774 = vadd.f32 %v5670, %v5766
      %v5775 = vadd.f32 %v5671, %v5767
      %v5776 = vadd.f32 %v5672, %v5768
      %5778 = vset.pattern.permute.xlu0 0
      %5779 = vperm.xlu0 %5778, %v4686
      %v5780 = vpop.permute.xlu0 %5779
      %5783 = vset.pattern.permute.xlu0 0
      %5784 = vperm.xlu0 %5783, %v4689
      %v5785 = vpop.permute.xlu0 %5784
      %5788 = vset.pattern.permute.xlu0 0
      %5789 = vperm.xlu0 %5788, %v4694
      %v5790 = vpop.permute.xlu0 %5789
      %5793 = vset.pattern.permute.xlu0 0
      %5794 = vperm.xlu0 %5793, %v4697
      %v5795 = vpop.permute.xlu0 %5794
      %5798 = vset.pattern.permute.xlu0 0
      %5799 = vperm.xlu0 %5798, %v4702
      %v5800 = vpop.permute.xlu0 %5799
      %5803 = vset.pattern.permute.xlu0 0
      %5804 = vperm.xlu0 %5803, %v4705
      %v5805 = vpop.permute.xlu0 %5804
      %5808 = vset.pattern.permute.xlu0 0
      %5809 = vperm.xlu0 %5808, %v4710
      %v5810 = vpop.permute.xlu0 %5809
      %5813 = vset.pattern.permute.xlu0 0
      %5814 = vperm.xlu0 %5813, %v4713
      %v5815 = vpop.permute.xlu0 %5814
      %v5817 = vmul.f32 %v5780, %v5110
      %v5818 = vmul.f32 %v5785, %v5113
      %v5819 = vmul.f32 %v5790, %v5118
      %v5820 = vmul.f32 %v5795, %v5121
      %v5821 = vmul.f32 %v5800, %v5126
      %v5822 = vmul.f32 %v5805, %v5129
      %v5823 = vmul.f32 %v5810, %v5134
      %v5824 = vmul.f32 %v5815, %v5137
      %v5825 = vadd.f32 %v5721, %v5817
      %v5826 = vadd.f32 %v5722, %v5818
      %v5827 = vadd.f32 %v5723, %v5819
      %v5828 = vadd.f32 %v5724, %v5820
      %v5829 = vadd.f32 %v5725, %v5821
      %v5830 = vadd.f32 %v5726, %v5822
      %v5831 = vadd.f32 %v5727, %v5823
      %v5832 = vadd.f32 %v5728, %v5824
      %5833 = vset.pattern.permute.xlu0 1
      %5834 = vperm.xlu0 %5833, %v4686
      %v5835 = vpop.permute.xlu0 %5834
      %5837 = vset.pattern.permute.xlu0 1
      %5838 = vperm.xlu0 %5837, %v4689
      %v5839 = vpop.permute.xlu0 %5838
      %5841 = vset.pattern.permute.xlu0 1
      %5842 = vperm.xlu0 %5841, %v4694
      %v5843 = vpop.permute.xlu0 %5842
      %5845 = vset.pattern.permute.xlu0 1
      %5846 = vperm.xlu0 %5845, %v4697
      %v5847 = vpop.permute.xlu0 %5846
      %5849 = vset.pattern.permute.xlu0 1
      %5850 = vperm.xlu0 %5849, %v4702
      %v5851 = vpop.permute.xlu0 %5850
      %5853 = vset.pattern.permute.xlu0 1
      %5854 = vperm.xlu0 %5853, %v4705
      %v5855 = vpop.permute.xlu0 %5854
      %5857 = vset.pattern.permute.xlu0 1
      %5858 = vperm.xlu0 %5857, %v4710
      %v5859 = vpop.permute.xlu0 %5858
      %5861 = vset.pattern.permute.xlu0 1
      %5862 = vperm.xlu0 %5861, %v4713
      %v5863 = vpop.permute.xlu0 %5862
      %v5865 = vmul.f32 %v5835, %v5110
      %v5866 = vmul.f32 %v5839, %v5113
      %v5867 = vmul.f32 %v5843, %v5118
      %v5868 = vmul.f32 %v5847, %v5121
      %v5869 = vmul.f32 %v5851, %v5126
      %v5870 = vmul.f32 %v5855, %v5129
      %v5871 = vmul.f32 %v5859, %v5134
      %v5872 = vmul.f32 %v5863, %v5137
      %v5873 = vadd.f32 %v5769, %v5865
      %v5874 = vadd.f32 %v5770, %v5866
      %v5875 = vadd.f32 %v5771, %v5867
      %v5876 = vadd.f32 %v5772, %v5868
      %v5877 = vadd.f32 %v5773, %v5869
      %v5878 = vadd.f32 %v5774, %v5870
      %v5879 = vadd.f32 %v5775, %v5871
      %v5880 = vadd.f32 %v5776, %v5872
      %5882 = vset.pattern.permute.xlu0 0
      %5883 = vperm.xlu0 %5882, %v4718
      %v5884 = vpop.permute.xlu0 %5883
      %5887 = vset.pattern.permute.xlu0 0
      %5888 = vperm.xlu0 %5887, %v4721
      %v5889 = vpop.permute.xlu0 %5888
      %5892 = vset.pattern.permute.xlu0 0
      %5893 = vperm.xlu0 %5892, %v4726
      %v5894 = vpop.permute.xlu0 %5893
      %5897 = vset.pattern.permute.xlu0 0
      %5898 = vperm.xlu0 %5897, %v4729
      %v5899 = vpop.permute.xlu0 %5898
      %5902 = vset.pattern.permute.xlu0 0
      %5903 = vperm.xlu0 %5902, %v4734
      %v5904 = vpop.permute.xlu0 %5903
      %5907 = vset.pattern.permute.xlu0 0
      %5908 = vperm.xlu0 %5907, %v4737
      %v5909 = vpop.permute.xlu0 %5908
      %5912 = vset.pattern.permute.xlu0 0
      %5913 = vperm.xlu0 %5912, %v4742
      %v5914 = vpop.permute.xlu0 %5913
      %5917 = vset.pattern.permute.xlu0 0
      %5918 = vperm.xlu0 %5917, %v4745
      %v5919 = vpop.permute.xlu0 %5918
      %v5921 = vmul.f32 %v5884, %v5175
      %v5922 = vmul.f32 %v5889, %v5178
      %v5923 = vmul.f32 %v5894, %v5183
      %v5924 = vmul.f32 %v5899, %v5186
      %v5925 = vmul.f32 %v5904, %v5191
      %v5926 = vmul.f32 %v5909, %v5194
      %v5927 = vmul.f32 %v5914, %v5199
      %v5928 = vmul.f32 %v5919, %v5202
      %v5929 = vadd.f32 %v5825, %v5921
      %v5930 = vadd.f32 %v5826, %v5922
      %v5931 = vadd.f32 %v5827, %v5923
      %v5932 = vadd.f32 %v5828, %v5924
      %v5933 = vadd.f32 %v5829, %v5925
      %v5934 = vadd.f32 %v5830, %v5926
      %v5935 = vadd.f32 %v5831, %v5927
      %v5936 = vadd.f32 %v5832, %v5928
      %5937 = vset.pattern.permute.xlu0 1
      %5938 = vperm.xlu0 %5937, %v4718
      %v5939 = vpop.permute.xlu0 %5938
      %5941 = vset.pattern.permute.xlu0 1
      %5942 = vperm.xlu0 %5941, %v4721
      %v5943 = vpop.permute.xlu0 %5942
      %5945 = vset.pattern.permute.xlu0 1
      %5946 = vperm.xlu0 %5945, %v4726
      %v5947 = vpop.permute.xlu0 %5946
      %5949 = vset.pattern.permute.xlu0 1
      %5950 = vperm.xlu0 %5949, %v4729
      %v5951 = vpop.permute.xlu0 %5950
      %5953 = vset.pattern.permute.xlu0 1
      %5954 = vperm.xlu0 %5953, %v4734
      %v5955 = vpop.permute.xlu0 %5954
      %5957 = vset.pattern.permute.xlu0 1
      %5958 = vperm.xlu0 %5957, %v4737
      %v5959 = vpop.permute.xlu0 %5958
      %5961 = vset.pattern.permute.xlu0 1
      %5962 = vperm.xlu0 %5961, %v4742
      %v5963 = vpop.permute.xlu0 %5962
      %5965 = vset.pattern.permute.xlu0 1
      %5966 = vperm.xlu0 %5965, %v4745
      %v5967 = vpop.permute.xlu0 %5966
      %v5969 = vmul.f32 %v5939, %v5175
      %v5970 = vmul.f32 %v5943, %v5178
      %v5971 = vmul.f32 %v5947, %v5183
      %v5972 = vmul.f32 %v5951, %v5186
      %v5973 = vmul.f32 %v5955, %v5191
      %v5974 = vmul.f32 %v5959, %v5194
      %v5975 = vmul.f32 %v5963, %v5199
      %v5976 = vmul.f32 %v5967, %v5202
      %v5977 = vadd.f32 %v5873, %v5969
      %v5978 = vadd.f32 %v5874, %v5970
      %v5979 = vadd.f32 %v5875, %v5971
      %v5980 = vadd.f32 %v5876, %v5972
      %v5981 = vadd.f32 %v5877, %v5973
      %v5982 = vadd.f32 %v5878, %v5974
      %v5983 = vadd.f32 %v5879, %v5975
      %v5984 = vadd.f32 %v5880, %v5976
      %5986 = vset.pattern.permute.xlu0 0
      %5987 = vperm.xlu0 %5986, %v4750
      %v5988 = vpop.permute.xlu0 %5987
      %5991 = vset.pattern.permute.xlu0 0
      %5992 = vperm.xlu0 %5991, %v4753
      %v5993 = vpop.permute.xlu0 %5992
      %5996 = vset.pattern.permute.xlu0 0
      %5997 = vperm.xlu0 %5996, %v4758
      %v5998 = vpop.permute.xlu0 %5997
      %6001 = vset.pattern.permute.xlu0 0
      %6002 = vperm.xlu0 %6001, %v4761
      %v6003 = vpop.permute.xlu0 %6002
      %6006 = vset.pattern.permute.xlu0 0
      %6007 = vperm.xlu0 %6006, %v4766
      %v6008 = vpop.permute.xlu0 %6007
      %6011 = vset.pattern.permute.xlu0 0
      %6012 = vperm.xlu0 %6011, %v4769
      %v6013 = vpop.permute.xlu0 %6012
      %6016 = vset.pattern.permute.xlu0 0
      %6017 = vperm.xlu0 %6016, %v4774
      %v6018 = vpop.permute.xlu0 %6017
      %6021 = vset.pattern.permute.xlu0 0
      %6022 = vperm.xlu0 %6021, %v4777
      %v6023 = vpop.permute.xlu0 %6022
      %v6025 = vmul.f32 %v5988, %v5240
      %v6026 = vmul.f32 %v5993, %v5243
      %v6027 = vmul.f32 %v5998, %v5248
      %v6028 = vmul.f32 %v6003, %v5251
      %v6029 = vmul.f32 %v6008, %v5256
      %v6030 = vmul.f32 %v6013, %v5259
      %v6031 = vmul.f32 %v6018, %v5264
      %v6032 = vmul.f32 %v6023, %v5267
      %v6033 = vadd.f32 %v5929, %v6025
      %v6034 = vadd.f32 %v5930, %v6026
      %v6035 = vadd.f32 %v5931, %v6027
      %v6036 = vadd.f32 %v5932, %v6028
      %v6037 = vadd.f32 %v5933, %v6029
      %v6038 = vadd.f32 %v5934, %v6030
      %v6039 = vadd.f32 %v5935, %v6031
      %v6040 = vadd.f32 %v5936, %v6032
      %6041 = vset.pattern.permute.xlu0 1
      %6042 = vperm.xlu0 %6041, %v4750
      %v6043 = vpop.permute.xlu0 %6042
      %6045 = vset.pattern.permute.xlu0 1
      %6046 = vperm.xlu0 %6045, %v4753
      %v6047 = vpop.permute.xlu0 %6046
      %6049 = vset.pattern.permute.xlu0 1
      %6050 = vperm.xlu0 %6049, %v4758
      %v6051 = vpop.permute.xlu0 %6050
      %6053 = vset.pattern.permute.xlu0 1
      %6054 = vperm.xlu0 %6053, %v4761
      %v6055 = vpop.permute.xlu0 %6054
      %6057 = vset.pattern.permute.xlu0 1
      %6058 = vperm.xlu0 %6057, %v4766
      %v6059 = vpop.permute.xlu0 %6058
      %6061 = vset.pattern.permute.xlu0 1
      %6062 = vperm.xlu0 %6061, %v4769
      %v6063 = vpop.permute.xlu0 %6062
      %6065 = vset.pattern.permute.xlu0 1
      %6066 = vperm.xlu0 %6065, %v4774
      %v6067 = vpop.permute.xlu0 %6066
      %6069 = vset.pattern.permute.xlu0 1
      %6070 = vperm.xlu0 %6069, %v4777
      %v6071 = vpop.permute.xlu0 %6070
      %v6073 = vmul.f32 %v6043, %v5240
      %v6074 = vmul.f32 %v6047, %v5243
      %v6075 = vmul.f32 %v6051, %v5248
      %v6076 = vmul.f32 %v6055, %v5251
      %v6077 = vmul.f32 %v6059, %v5256
      %v6078 = vmul.f32 %v6063, %v5259
      %v6079 = vmul.f32 %v6067, %v5264
      %v6080 = vmul.f32 %v6071, %v5267
      %v6081 = vadd.f32 %v5977, %v6073
      %v6082 = vadd.f32 %v5978, %v6074
      %v6083 = vadd.f32 %v5979, %v6075
      %v6084 = vadd.f32 %v5980, %v6076
      %v6085 = vadd.f32 %v5981, %v6077
      %v6086 = vadd.f32 %v5982, %v6078
      %v6087 = vadd.f32 %v5983, %v6079
      %v6088 = vadd.f32 %v5984, %v6080
      %6090 = vset.pattern.permute.xlu0 0
      %6091 = vperm.xlu0 %6090, %v4782
      %v6092 = vpop.permute.xlu0 %6091
      %6095 = vset.pattern.permute.xlu0 0
      %6096 = vperm.xlu0 %6095, %v4785
      %v6097 = vpop.permute.xlu0 %6096
      %6100 = vset.pattern.permute.xlu0 0
      %6101 = vperm.xlu0 %6100, %v4790
      %v6102 = vpop.permute.xlu0 %6101
      %6105 = vset.pattern.permute.xlu0 0
      %6106 = vperm.xlu0 %6105, %v4793
      %v6107 = vpop.permute.xlu0 %6106
      %6110 = vset.pattern.permute.xlu0 0
      %6111 = vperm.xlu0 %6110, %v4798
      %v6112 = vpop.permute.xlu0 %6111
      %6115 = vset.pattern.permute.xlu0 0
      %6116 = vperm.xlu0 %6115, %v4801
      %v6117 = vpop.permute.xlu0 %6116
      %6120 = vset.pattern.permute.xlu0 0
      %6121 = vperm.xlu0 %6120, %v4806
      %v6122 = vpop.permute.xlu0 %6121
      %6125 = vset.pattern.permute.xlu0 0
      %6126 = vperm.xlu0 %6125, %v4809
      %v6127 = vpop.permute.xlu0 %6126
      %v6129 = vmul.f32 %v6092, %v5305
      %v6130 = vmul.f32 %v6097, %v5308
      %v6131 = vmul.f32 %v6102, %v5313
      %v6132 = vmul.f32 %v6107, %v5316
      %v6133 = vmul.f32 %v6112, %v5321
      %v6134 = vmul.f32 %v6117, %v5324
      %v6135 = vmul.f32 %v6122, %v5329
      %v6136 = vmul.f32 %v6127, %v5332
      %v6137 = vadd.f32 %v6033, %v6129
      %v6138 = vadd.f32 %v6034, %v6130
      %v6139 = vadd.f32 %v6035, %v6131
      %v6140 = vadd.f32 %v6036, %v6132
      %v6141 = vadd.f32 %v6037, %v6133
      %v6142 = vadd.f32 %v6038, %v6134
      %v6143 = vadd.f32 %v6039, %v6135
      %v6144 = vadd.f32 %v6040, %v6136
      %6145 = vset.pattern.permute.xlu0 1
      %6146 = vperm.xlu0 %6145, %v4782
      %v6147 = vpop.permute.xlu0 %6146
      %6149 = vset.pattern.permute.xlu0 1
      %6150 = vperm.xlu0 %6149, %v4785
      %v6151 = vpop.permute.xlu0 %6150
      %6153 = vset.pattern.permute.xlu0 1
      %6154 = vperm.xlu0 %6153, %v4790
      %v6155 = vpop.permute.xlu0 %6154
      %6157 = vset.pattern.permute.xlu0 1
      %6158 = vperm.xlu0 %6157, %v4793
      %v6159 = vpop.permute.xlu0 %6158
      %6161 = vset.pattern.permute.xlu0 1
      %6162 = vperm.xlu0 %6161, %v4798
      %v6163 = vpop.permute.xlu0 %6162
      %6165 = vset.pattern.permute.xlu0 1
      %6166 = vperm.xlu0 %6165, %v4801
      %v6167 = vpop.permute.xlu0 %6166
      %6169 = vset.pattern.permute.xlu0 1
      %6170 = vperm.xlu0 %6169, %v4806
      %v6171 = vpop.permute.xlu0 %6170
      %6173 = vset.pattern.permute.xlu0 1
      %6174 = vperm.xlu0 %6173, %v4809
      %v6175 = vpop.permute.xlu0 %6174
      %v6177 = vmul.f32 %v6147, %v5305
      %v6178 = vmul.f32 %v6151, %v5308
      %v6179 = vmul.f32 %v6155, %v5313
      %v6180 = vmul.f32 %v6159, %v5316
      %v6181 = vmul.f32 %v6163, %v5321
      %v6182 = vmul.f32 %v6167, %v5324
      %v6183 = vmul.f32 %v6171, %v5329
      %v6184 = vmul.f32 %v6175, %v5332
      %v6185 = vadd.f32 %v6081, %v6177
      %v6186 = vadd.f32 %v6082, %v6178
      %v6187 = vadd.f32 %v6083, %v6179
      %v6188 = vadd.f32 %v6084, %v6180
      %v6189 = vadd.f32 %v6085, %v6181
      %v6190 = vadd.f32 %v6086, %v6182
      %v6191 = vadd.f32 %v6087, %v6183
      %v6192 = vadd.f32 %v6088, %v6184
      %6194 = vset.pattern.permute.xlu0 0
      %6195 = vperm.xlu0 %6194, %v4814
      %v6196 = vpop.permute.xlu0 %6195
      %6199 = vset.pattern.permute.xlu0 0
      %6200 = vperm.xlu0 %6199, %v4817
      %v6201 = vpop.permute.xlu0 %6200
      %6204 = vset.pattern.permute.xlu0 0
      %6205 = vperm.xlu0 %6204, %v4822
      %v6206 = vpop.permute.xlu0 %6205
      %6209 = vset.pattern.permute.xlu0 0
      %6210 = vperm.xlu0 %6209, %v4825
      %v6211 = vpop.permute.xlu0 %6210
      %6214 = vset.pattern.permute.xlu0 0
      %6215 = vperm.xlu0 %6214, %v4830
      %v6216 = vpop.permute.xlu0 %6215
      %6219 = vset.pattern.permute.xlu0 0
      %6220 = vperm.xlu0 %6219, %v4833
      %v6221 = vpop.permute.xlu0 %6220
      %6224 = vset.pattern.permute.xlu0 0
      %6225 = vperm.xlu0 %6224, %v4838
      %v6226 = vpop.permute.xlu0 %6225
      %6229 = vset.pattern.permute.xlu0 0
      %6230 = vperm.xlu0 %6229, %v4841
      %v6231 = vpop.permute.xlu0 %6230
      %v6233 = vmul.f32 %v6196, %v5370
      %v6234 = vmul.f32 %v6201, %v5373
      %v6235 = vmul.f32 %v6206, %v5378
      %v6236 = vmul.f32 %v6211, %v5381
      %v6237 = vmul.f32 %v6216, %v5386
      %v6238 = vmul.f32 %v6221, %v5389
      %v6239 = vmul.f32 %v6226, %v5394
      %v6240 = vmul.f32 %v6231, %v5397
      %v6241 = vadd.f32 %v6137, %v6233
      %v6242 = vadd.f32 %v6138, %v6234
      %v6243 = vadd.f32 %v6139, %v6235
      %v6244 = vadd.f32 %v6140, %v6236
      %v6245 = vadd.f32 %v6141, %v6237
      %v6246 = vadd.f32 %v6142, %v6238
      %v6247 = vadd.f32 %v6143, %v6239
      %v6248 = vadd.f32 %v6144, %v6240
      %6249 = vset.pattern.permute.xlu0 1
      %6250 = vperm.xlu0 %6249, %v4814
      %v6251 = vpop.permute.xlu0 %6250
      %6253 = vset.pattern.permute.xlu0 1
      %6254 = vperm.xlu0 %6253, %v4817
      %v6255 = vpop.permute.xlu0 %6254
      %6257 = vset.pattern.permute.xlu0 1
      %6258 = vperm.xlu0 %6257, %v4822
      %v6259 = vpop.permute.xlu0 %6258
      %6261 = vset.pattern.permute.xlu0 1
      %6262 = vperm.xlu0 %6261, %v4825
      %v6263 = vpop.permute.xlu0 %6262
      %6265 = vset.pattern.permute.xlu0 1
      %6266 = vperm.xlu0 %6265, %v4830
      %v6267 = vpop.permute.xlu0 %6266
      %6269 = vset.pattern.permute.xlu0 1
      %6270 = vperm.xlu0 %6269, %v4833
      %v6271 = vpop.permute.xlu0 %6270
      %6273 = vset.pattern.permute.xlu0 1
      %6274 = vperm.xlu0 %6273, %v4838
      %v6275 = vpop.permute.xlu0 %6274
      %6277 = vset.pattern.permute.xlu0 1
      %6278 = vperm.xlu0 %6277, %v4841
      %v6279 = vpop.permute.xlu0 %6278
      %v6281 = vmul.f32 %v6251, %v5370
      %v6282 = vmul.f32 %v6255, %v5373
      %v6283 = vmul.f32 %v6259, %v5378
      %v6284 = vmul.f32 %v6263, %v5381
      %v6285 = vmul.f32 %v6267, %v5386
      %v6286 = vmul.f32 %v6271, %v5389
      %v6287 = vmul.f32 %v6275, %v5394
      %v6288 = vmul.f32 %v6279, %v5397
      %v6289 = vadd.f32 %v6185, %v6281
      %v6290 = vadd.f32 %v6186, %v6282
      %v6291 = vadd.f32 %v6187, %v6283
      %v6292 = vadd.f32 %v6188, %v6284
      %v6293 = vadd.f32 %v6189, %v6285
      %v6294 = vadd.f32 %v6190, %v6286
      %v6295 = vadd.f32 %v6191, %v6287
      %v6296 = vadd.f32 %v6192, %v6288
      %6298 = vset.pattern.permute.xlu0 0
      %6299 = vperm.xlu0 %6298, %v4846
      %v6300 = vpop.permute.xlu0 %6299
      %6303 = vset.pattern.permute.xlu0 0
      %6304 = vperm.xlu0 %6303, %v4849
      %v6305 = vpop.permute.xlu0 %6304
      %6308 = vset.pattern.permute.xlu0 0
      %6309 = vperm.xlu0 %6308, %v4854
      %v6310 = vpop.permute.xlu0 %6309
      %6313 = vset.pattern.permute.xlu0 0
      %6314 = vperm.xlu0 %6313, %v4857
      %v6315 = vpop.permute.xlu0 %6314
      %6318 = vset.pattern.permute.xlu0 0
      %6319 = vperm.xlu0 %6318, %v4862
      %v6320 = vpop.permute.xlu0 %6319
      %6323 = vset.pattern.permute.xlu0 0
      %6324 = vperm.xlu0 %6323, %v4865
      %v6325 = vpop.permute.xlu0 %6324
      %6328 = vset.pattern.permute.xlu0 0
      %6329 = vperm.xlu0 %6328, %v4870
      %v6330 = vpop.permute.xlu0 %6329
      %6333 = vset.pattern.permute.xlu0 0
      %6334 = vperm.xlu0 %6333, %v4873
      %v6335 = vpop.permute.xlu0 %6334
      %v6337 = vmul.f32 %v6300, %v5435
      %v6338 = vmul.f32 %v6305, %v5438
      %v6339 = vmul.f32 %v6310, %v5443
      %v6340 = vmul.f32 %v6315, %v5446
      %v6341 = vmul.f32 %v6320, %v5451
      %v6342 = vmul.f32 %v6325, %v5454
      %v6343 = vmul.f32 %v6330, %v5459
      %v6344 = vmul.f32 %v6335, %v5462
      %v6345 = vadd.f32 %v6241, %v6337
      %v6346 = vadd.f32 %v6242, %v6338
      %v6347 = vadd.f32 %v6243, %v6339
      %v6348 = vadd.f32 %v6244, %v6340
      %v6349 = vadd.f32 %v6245, %v6341
      %v6350 = vadd.f32 %v6246, %v6342
      %v6351 = vadd.f32 %v6247, %v6343
      %v6352 = vadd.f32 %v6248, %v6344
      %6353 = vset.pattern.permute.xlu0 1
      %6354 = vperm.xlu0 %6353, %v4846
      %v6355 = vpop.permute.xlu0 %6354
      %6357 = vset.pattern.permute.xlu0 1
      %6358 = vperm.xlu0 %6357, %v4849
      %v6359 = vpop.permute.xlu0 %6358
      %6361 = vset.pattern.permute.xlu0 1
      %6362 = vperm.xlu0 %6361, %v4854
      %v6363 = vpop.permute.xlu0 %6362
      %6365 = vset.pattern.permute.xlu0 1
      %6366 = vperm.xlu0 %6365, %v4857
      %v6367 = vpop.permute.xlu0 %6366
      %6369 = vset.pattern.permute.xlu0 1
      %6370 = vperm.xlu0 %6369, %v4862
      %v6371 = vpop.permute.xlu0 %6370
      %6373 = vset.pattern.permute.xlu0 1
      %6374 = vperm.xlu0 %6373, %v4865
      %v6375 = vpop.permute.xlu0 %6374
      %6377 = vset.pattern.permute.xlu0 1
      %6378 = vperm.xlu0 %6377, %v4870
      %v6379 = vpop.permute.xlu0 %6378
      %6381 = vset.pattern.permute.xlu0 1
      %6382 = vperm.xlu0 %6381, %v4873
      %v6383 = vpop.permute.xlu0 %6382
      %v6385 = vmul.f32 %v6355, %v5435
      %v6386 = vmul.f32 %v6359, %v5438
      %v6387 = vmul.f32 %v6363, %v5443
      %v6388 = vmul.f32 %v6367, %v5446
      %v6389 = vmul.f32 %v6371, %v5451
      %v6390 = vmul.f32 %v6375, %v5454
      %v6391 = vmul.f32 %v6379, %v5459
      %v6392 = vmul.f32 %v6383, %v5462
      %v6393 = vadd.f32 %v6289, %v6385
      %v6394 = vadd.f32 %v6290, %v6386
      %v6395 = vadd.f32 %v6291, %v6387
      %v6396 = vadd.f32 %v6292, %v6388
      %v6397 = vadd.f32 %v6293, %v6389
      %v6398 = vadd.f32 %v6294, %v6390
      %v6399 = vadd.f32 %v6295, %v6391
      %v6400 = vadd.f32 %v6296, %v6392
      %v6401 = vsel %vm953, %v6345, %v6393
      %v6402 = vsel %vm953, %v6346, %v6394
      %v6403 = vsel %vm953, %v6347, %v6395
      %v6404 = vsel %vm953, %v6348, %v6396
      %v6405 = vsel %vm953, %v6349, %v6397
      %v6406 = vsel %vm953, %v6350, %v6398
      %v6407 = vsel %vm953, %v6351, %v6399
      %v6408 = vsel %vm953, %v6352, %v6400
      %vm6409 = vcmp.ge.f32.partialorder %v6401, 0.0
      %vm6410 = vcmp.ge.f32.partialorder %v6402, 0.0
      %vm6411 = vcmp.ge.f32.partialorder %v6403, 0.0
      %vm6412 = vcmp.ge.f32.partialorder %v6404, 0.0
      %vm6413 = vcmp.ge.f32.partialorder %v6405, 0.0
      %vm6414 = vcmp.ge.f32.partialorder %v6406, 0.0
      %vm6415 = vcmp.ge.f32.partialorder %v6407, 0.0
      %vm6416 = vcmp.ge.f32.partialorder %v6408, 0.0
      %v6417 = vmul.f32 %v6401, 0.1
      %v6418 = vmul.f32 %v6402, 0.1
      %v6419 = vmul.f32 %v6403, 0.1
      %v6420 = vmul.f32 %v6404, 0.1
      %v6421 = vmul.f32 %v6405, 0.1
      %v6422 = vmul.f32 %v6406, 0.1
      %v6423 = vmul.f32 %v6407, 0.1
      %v6424 = vmul.f32 %v6408, 0.1
      %v6425 = vsel %vm6409, %v6401, %v6417
      %v6426 = vsel %vm6410, %v6402, %v6418
      %v6427 = vsel %vm6411, %v6403, %v6419
      %v6428 = vsel %vm6412, %v6404, %v6420
      %v6429 = vsel %vm6413, %v6405, %v6421
      %v6430 = vsel %vm6414, %v6406, %v6422
      %v6431 = vsel %vm6415, %v6407, %v6423
      %v6432 = vsel %vm6416, %v6408, %v6424
      %v6433 = vld [vmem:[%s652] sm:$0x1]
      %v6434 = vpack.c.bf16 %v6433, %v6433
      %v6435 = vld [vmem:[%s655] sm:$0x1]
      %6437 = vset.pattern.permute.xlu0 0
      %6438 = vperm.xlu0 %6437, %v6435
      %v6439 = vpop.permute.xlu0 %6438
      %v6441 = vlaneseq
      %v6442 = vshrl.u32 %v6441, 7
      %v6443 = vsub.s32 0, %v6442
      %v6444 = vrot.slane %v6439, %v6443
      %v6446 = vsel %vm953, %v6434, 0
      %6448 = vmatprep.subr.bf16.mxu0 0
      %6449 = vmatpush1.bf16.msra.mxu0 0
      %6450 = vmatprep.subr.bf16.mxu0 0
      %6451 = vmatpush1.bf16.msra.mxu0 0
      %6452 = vmatprep.subr.bf16.mxu0 0
      %6453 = vmatpush1.bf16.msra.mxu0 0
      %6454 = vmatprep.subr.bf16.mxu0 0
      %6455 = vmatpush1.bf16.msra.mxu0 0
      %6456 = vmatprep.subr.bf16.mxu0 0
      %6457 = vmatpush1.bf16.msra.mxu0 %v4879
      %6458 = vmatprep.subr.bf16.mxu0 0
      %6459 = vmatpush1.bf16.msra.mxu0 %v4878
      %6460 = vmatprep.subr.bf16.mxu0 0
      %6461 = vmatpush1.bf16.msra.mxu0 %v4877
      %6462 = vmatprep.subr.bf16.mxu0 0
      %6463 = vmatpush1.bf16.msra.mxu0 %v4876
      %6464 = vmatprep.subr.bf16.mxu0 0
      %6465 = vmatpush2.bf16.msra.mxu0 0
      %6466 = vmatprep.subr.bf16.mxu0 0
      %6467 = vmatpush2.bf16.msra.mxu0 0
      %6468 = vmatprep.subr.bf16.mxu0 0
      %6469 = vmatpush2.bf16.msra.mxu0 0
      %6470 = vmatprep.subr.bf16.mxu0 0
      %6471 = vmatpush2.bf16.msra.mxu0 0
      %6472 = vmatprep.subr.bf16.mxu0 0
      %6473 = vmatpush2.bf16.msra.mxu0 0
      %6474 = vmatprep.subr.bf16.mxu0 0
      %6475 = vmatpush2.bf16.msra.mxu0 0
      %6476 = vmatprep.subr.bf16.mxu0 0
      %6477 = vmatpush2.bf16.msra.mxu0 0
      %6478 = vmatprep.subr.bf16.mxu0 0
      %6479 = vmatpush2.bf16.msra.mxu0 0
      %6480 = vmatprep.mubr.bf16.mxu0 0
      %6481 = vmatmul.mubr.bf16.gmra.mxu0 %v6446
      %v6482 = vpop.f32.mrf.mxu0
      %v6483 = vadd.f32 %v6444, %v6482
      %v6484 = vpop.f32.mrf.mxu0
      %v6485 = vpop.f32.mrf.mxu0
      %v6486 = vpop.f32.mrf.mxu0
      %6487 = vdwg.mxu0
      %v6488 = vxor.u32 %v6483, 2147483648
      %v6489 = vmul.f32 %v6488, 1.442695
      %v6490 = vpow.pop %v6489
      %v6491 = vadd.f32 %v6490, 1.0
      %v6492 = vrcp.pop %v6491
      %v6493 = vmul.f32 1.0, %v6492
      %v6494 = vlaneseq
      %v6495 = vshrl.u32 %v6494, 7
      %v6496 = vsub.s32 0, %v6495
      %v6497 = vrot.slane %v6493, %v6496
      %v6498 = vmul.f32 %v6425, %v6497
      %v6499 = vmul.f32 %v6426, %v6497
      %v6500 = vmul.f32 %v6427, %v6497
      %v6501 = vmul.f32 %v6428, %v6497
      %v6502 = vmul.f32 %v6429, %v6497
      %v6503 = vmul.f32 %v6430, %v6497
      %v6504 = vmul.f32 %v6431, %v6497
      %v6505 = vmul.f32 %v6432, %v6497
      %v6506 = vadd.f32 %v6498, %v4214
      %v6507 = vadd.f32 %v6499, %v4215
      %v6508 = vadd.f32 %v6500, %v4216
      %v6509 = vadd.f32 %v6501, %v4217
      %v6510 = vadd.f32 %v6502, %v4218
      %v6511 = vadd.f32 %v6503, %v4219
      %v6512 = vadd.f32 %v6504, %v4220
      %v6513 = vadd.f32 %v6505, %v4221
      %vm6514 = vcmp.ge.f32.partialorder %v6506, 0.0
      %vm6515 = vcmp.ge.f32.partialorder %v6507, 0.0
      %vm6516 = vcmp.ge.f32.partialorder %v6508, 0.0
      %vm6517 = vcmp.ge.f32.partialorder %v6509, 0.0
      %vm6518 = vcmp.ge.f32.partialorder %v6510, 0.0
      %vm6519 = vcmp.ge.f32.partialorder %v6511, 0.0
      %vm6520 = vcmp.ge.f32.partialorder %v6512, 0.0
      %vm6521 = vcmp.ge.f32.partialorder %v6513, 0.0
      %v6522 = vmul.f32 %v6506, 0.1
      %v6523 = vmul.f32 %v6507, 0.1
      %v6524 = vmul.f32 %v6508, 0.1
      %v6525 = vmul.f32 %v6509, 0.1
      %v6526 = vmul.f32 %v6510, 0.1
      %v6527 = vmul.f32 %v6511, 0.1
      %v6528 = vmul.f32 %v6512, 0.1
      %v6529 = vmul.f32 %v6513, 0.1
      %v6530 = vsel %vm6514, %v6506, %v6522
      %v6531 = vsel %vm6515, %v6507, %v6523
      %v6532 = vsel %vm6516, %v6508, %v6524
      %v6533 = vsel %vm6517, %v6509, %v6525
      %v6534 = vsel %vm6518, %v6510, %v6526
      %v6535 = vsel %vm6519, %v6511, %v6527
      %v6536 = vsel %vm6520, %v6512, %v6528
      %v6537 = vsel %vm6521, %v6513, %v6529
      %v6538 = vpack.c.bf16 %v6531, %v6530
      %v6539 = vpack.c.bf16 %v6533, %v6532
      %v6540 = vpack.c.bf16 %v6535, %v6534
      %v6541 = vpack.c.bf16 %v6537, %v6536
      %6542 = vmatprep.subr.bf16.mxu0 0
      %6543 = vmatpush1.bf16.msra.mxu0 %v736
      %6544 = vmatprep.subr.bf16.mxu0 0
      %6545 = vmatpush1.bf16.msra.mxu0 %v735
      %6546 = vmatprep.subr.bf16.mxu0 0
      %6547 = vmatpush1.bf16.msra.mxu0 %v734
      %6548 = vmatprep.subr.bf16.mxu0 0
      %6549 = vmatpush1.bf16.msra.mxu0 %v733
      %6550 = vmatprep.subr.bf16.mxu0 0
      %6551 = vmatpush1.bf16.msra.mxu0 %v732
      %6552 = vmatprep.subr.bf16.mxu0 0
      %6553 = vmatpush1.bf16.msra.mxu0 %v731
      %6554 = vmatprep.subr.bf16.mxu0 0
      %6555 = vmatpush1.bf16.msra.mxu0 %v730
      %6556 = vmatprep.subr.bf16.mxu0 0
      %6557 = vmatpush1.bf16.msra.mxu0 %v729
      %6558 = vmatprep.subr.bf16.mxu0 0
      %6559 = vmatpush2.bf16.msra.mxu0 0
      %6560 = vmatprep.subr.bf16.mxu0 0
      %6561 = vmatpush2.bf16.msra.mxu0 0
      %6562 = vmatprep.subr.bf16.mxu0 0
      %6563 = vmatpush2.bf16.msra.mxu0 0
      %6564 = vmatprep.subr.bf16.mxu0 0
      %6565 = vmatpush2.bf16.msra.mxu0 0
      %6566 = vmatprep.subr.bf16.mxu0 0
      %6567 = vmatpush2.bf16.msra.mxu0 0
      %6568 = vmatprep.subr.bf16.mxu0 0
      %6569 = vmatpush2.bf16.msra.mxu0 0
      %6570 = vmatprep.subr.bf16.mxu0 0
      %6571 = vmatpush2.bf16.msra.mxu0 0
      %6572 = vmatprep.subr.bf16.mxu0 0
      %6573 = vmatpush2.bf16.msra.mxu0 0
      %6574 = vmatprep.mubr.bf16.mxu0 0
      %6575 = vmatmul.mubr.bf16.gmra.mxu0 %v6538
      %v6576 = vpop.f32.mrf.mxu0
      %v6577 = vadd.f32 0.0, %v6576
      %v6578 = vpop.f32.mrf.mxu0
      %v6579 = vpop.f32.mrf.mxu0
      %v6580 = vadd.f32 0.0, %v6579
      %v6581 = vpop.f32.mrf.mxu0
      %6582 = vmatprep.mubr.bf16.mxu0 0
      %6583 = vmatmul.mubr.bf16.gmra.mxu0 %v6539
      %v6584 = vpop.f32.mrf.mxu0
      %v6585 = vadd.f32 0.0, %v6584
      %v6586 = vpop.f32.mrf.mxu0
      %v6587 = vpop.f32.mrf.mxu0
      %v6588 = vadd.f32 0.0, %v6587
      %v6589 = vpop.f32.mrf.mxu0
      %6590 = vmatprep.mubr.bf16.mxu0 0
      %6591 = vmatmul.mubr.bf16.gmra.mxu0 %v6540
      %v6592 = vpop.f32.mrf.mxu0
      %v6593 = vadd.f32 0.0, %v6592
      %v6594 = vpop.f32.mrf.mxu0
      %v6595 = vpop.f32.mrf.mxu0
      %v6596 = vadd.f32 0.0, %v6595
      %v6597 = vpop.f32.mrf.mxu0
      %6598 = vmatprep.mubr.bf16.mxu0 0
      %6599 = vmatmul.mubr.bf16.gmra.mxu0 %v6541
      %v6600 = vpop.f32.mrf.mxu0
      %v6601 = vadd.f32 0.0, %v6600
      %v6602 = vpop.f32.mrf.mxu0
      %v6603 = vpop.f32.mrf.mxu0
      %v6604 = vadd.f32 0.0, %v6603
      %v6605 = vpop.f32.mrf.mxu0
      %6606 = vdwg.mxu0
      %6607 = vmatprep.subr.bf16.mxu0 0
      %6608 = vmatpush1.bf16.msra.mxu0 %v761
      %6609 = vmatprep.subr.bf16.mxu0 0
      %6610 = vmatpush1.bf16.msra.mxu0 %v760
      %6611 = vmatprep.subr.bf16.mxu0 0
      %6612 = vmatpush1.bf16.msra.mxu0 %v759
      %6613 = vmatprep.subr.bf16.mxu0 0
      %6614 = vmatpush1.bf16.msra.mxu0 %v758
      %6615 = vmatprep.subr.bf16.mxu0 0
      %6616 = vmatpush1.bf16.msra.mxu0 %v757
      %6617 = vmatprep.subr.bf16.mxu0 0
      %6618 = vmatpush1.bf16.msra.mxu0 %v756
      %6619 = vmatprep.subr.bf16.mxu0 0
      %6620 = vmatpush1.bf16.msra.mxu0 %v755
      %6621 = vmatprep.subr.bf16.mxu0 0
      %6622 = vmatpush1.bf16.msra.mxu0 %v754
      %6623 = vmatprep.subr.bf16.mxu0 0
      %6624 = vmatpush2.bf16.msra.mxu0 0
      %6625 = vmatprep.subr.bf16.mxu0 0
      %6626 = vmatpush2.bf16.msra.mxu0 0
      %6627 = vmatprep.subr.bf16.mxu0 0
      %6628 = vmatpush2.bf16.msra.mxu0 0
      %6629 = vmatprep.subr.bf16.mxu0 0
      %6630 = vmatpush2.bf16.msra.mxu0 0
      %6631 = vmatprep.subr.bf16.mxu0 0
      %6632 = vmatpush2.bf16.msra.mxu0 0
      %6633 = vmatprep.subr.bf16.mxu0 0
      %6634 = vmatpush2.bf16.msra.mxu0 0
      %6635 = vmatprep.subr.bf16.mxu0 0
      %6636 = vmatpush2.bf16.msra.mxu0 0
      %6637 = vmatprep.subr.bf16.mxu0 0
      %6638 = vmatpush2.bf16.msra.mxu0 0
      %6639 = vmatprep.mubr.bf16.mxu0 0
      %6640 = vmatmul.mubr.bf16.gmra.mxu0 %v6538
      %v6641 = vpop.f32.mrf.mxu0
      %v6642 = vadd.f32 0.0, %v6641
      %v6643 = vpop.f32.mrf.mxu0
      %v6644 = vpop.f32.mrf.mxu0
      %v6645 = vadd.f32 0.0, %v6644
      %v6646 = vpop.f32.mrf.mxu0
      %6647 = vmatprep.mubr.bf16.mxu0 0
      %6648 = vmatmul.mubr.bf16.gmra.mxu0 %v6539
      %v6649 = vpop.f32.mrf.mxu0
      %v6650 = vadd.f32 0.0, %v6649
      %v6651 = vpop.f32.mrf.mxu0
      %v6652 = vpop.f32.mrf.mxu0
      %v6653 = vadd.f32 0.0, %v6652
      %v6654 = vpop.f32.mrf.mxu0
      %6655 = vmatprep.mubr.bf16.mxu0 0
      %6656 = vmatmul.mubr.bf16.gmra.mxu0 %v6540
      %v6657 = vpop.f32.mrf.mxu0
      %v6658 = vadd.f32 0.0, %v6657
      %v6659 = vpop.f32.mrf.mxu0
      %v6660 = vpop.f32.mrf.mxu0
      %v6661 = vadd.f32 0.0, %v6660
      %v6662 = vpop.f32.mrf.mxu0
      %6663 = vmatprep.mubr.bf16.mxu0 0
      %6664 = vmatmul.mubr.bf16.gmra.mxu0 %v6541
      %v6665 = vpop.f32.mrf.mxu0
      %v6666 = vadd.f32 0.0, %v6665
      %v6667 = vpop.f32.mrf.mxu0
      %v6668 = vpop.f32.mrf.mxu0
      %v6669 = vadd.f32 0.0, %v6668
      %v6670 = vpop.f32.mrf.mxu0
      %6671 = vdwg.mxu0
      %6672 = vmatprep.subr.bf16.mxu0 0
      %6673 = vmatpush1.bf16.msra.mxu0 %v786
      %6674 = vmatprep.subr.bf16.mxu0 0
      %6675 = vmatpush1.bf16.msra.mxu0 %v785
      %6676 = vmatprep.subr.bf16.mxu0 0
      %6677 = vmatpush1.bf16.msra.mxu0 %v784
      %6678 = vmatprep.subr.bf16.mxu0 0
      %6679 = vmatpush1.bf16.msra.mxu0 %v783
      %6680 = vmatprep.subr.bf16.mxu0 0
      %6681 = vmatpush1.bf16.msra.mxu0 %v782
      %6682 = vmatprep.subr.bf16.mxu0 0
      %6683 = vmatpush1.bf16.msra.mxu0 %v781
      %6684 = vmatprep.subr.bf16.mxu0 0
      %6685 = vmatpush1.bf16.msra.mxu0 %v780
      %6686 = vmatprep.subr.bf16.mxu0 0
      %6687 = vmatpush1.bf16.msra.mxu0 %v779
      %6688 = vmatprep.subr.bf16.mxu0 0
      %6689 = vmatpush2.bf16.msra.mxu0 0
      %6690 = vmatprep.subr.bf16.mxu0 0
      %6691 = vmatpush2.bf16.msra.mxu0 0
      %6692 = vmatprep.subr.bf16.mxu0 0
      %6693 = vmatpush2.bf16.msra.mxu0 0
      %6694 = vmatprep.subr.bf16.mxu0 0
      %6695 = vmatpush2.bf16.msra.mxu0 0
      %6696 = vmatprep.subr.bf16.mxu0 0
      %6697 = vmatpush2.bf16.msra.mxu0 0
      %6698 = vmatprep.subr.bf16.mxu0 0
      %6699 = vmatpush2.bf16.msra.mxu0 0
      %6700 = vmatprep.subr.bf16.mxu0 0
      %6701 = vmatpush2.bf16.msra.mxu0 0
      %6702 = vmatprep.subr.bf16.mxu0 0
      %6703 = vmatpush2.bf16.msra.mxu0 0
      %6704 = vmatprep.mubr.bf16.mxu0 0
      %6705 = vmatmul.mubr.bf16.gmra.mxu0 %v6538
      %v6706 = vpop.f32.mrf.mxu0
      %v6707 = vadd.f32 0.0, %v6706
      %v6708 = vpop.f32.mrf.mxu0
      %v6709 = vpop.f32.mrf.mxu0
      %v6710 = vadd.f32 0.0, %v6709
      %v6711 = vpop.f32.mrf.mxu0
      %6712 = vmatprep.mubr.bf16.mxu0 0
      %6713 = vmatmul.mubr.bf16.gmra.mxu0 %v6539
      %v6714 = vpop.f32.mrf.mxu0
      %v6715 = vadd.f32 0.0, %v6714
      %v6716 = vpop.f32.mrf.mxu0
      %v6717 = vpop.f32.mrf.mxu0
      %v6718 = vadd.f32 0.0, %v6717
      %v6719 = vpop.f32.mrf.mxu0
      %6720 = vmatprep.mubr.bf16.mxu0 0
      %6721 = vmatmul.mubr.bf16.gmra.mxu0 %v6540
      %v6722 = vpop.f32.mrf.mxu0
      %v6723 = vadd.f32 0.0, %v6722
      %v6724 = vpop.f32.mrf.mxu0
      %v6725 = vpop.f32.mrf.mxu0
      %v6726 = vadd.f32 0.0, %v6725
      %v6727 = vpop.f32.mrf.mxu0
      %6728 = vmatprep.mubr.bf16.mxu0 0
      %6729 = vmatmul.mubr.bf16.gmra.mxu0 %v6541
      %v6730 = vpop.f32.mrf.mxu0
      %v6731 = vadd.f32 0.0, %v6730
      %v6732 = vpop.f32.mrf.mxu0
      %v6733 = vpop.f32.mrf.mxu0
      %v6734 = vadd.f32 0.0, %v6733
      %v6735 = vpop.f32.mrf.mxu0
      %6736 = vdwg.mxu0
      %6737 = vmatprep.subr.bf16.mxu0 0
      %6738 = vmatpush1.bf16.msra.mxu0 %v811
      %6739 = vmatprep.subr.bf16.mxu0 0
      %6740 = vmatpush1.bf16.msra.mxu0 %v810
      %6741 = vmatprep.subr.bf16.mxu0 0
      %6742 = vmatpush1.bf16.msra.mxu0 %v809
      %6743 = vmatprep.subr.bf16.mxu0 0
      %6744 = vmatpush1.bf16.msra.mxu0 %v808
      %6745 = vmatprep.subr.bf16.mxu0 0
      %6746 = vmatpush1.bf16.msra.mxu0 %v807
      %6747 = vmatprep.subr.bf16.mxu0 0
      %6748 = vmatpush1.bf16.msra.mxu0 %v806
      %6749 = vmatprep.subr.bf16.mxu0 0
      %6750 = vmatpush1.bf16.msra.mxu0 %v805
      %6751 = vmatprep.subr.bf16.mxu0 0
      %6752 = vmatpush1.bf16.msra.mxu0 %v804
      %6753 = vmatprep.subr.bf16.mxu0 0
      %6754 = vmatpush2.bf16.msra.mxu0 0
      %6755 = vmatprep.subr.bf16.mxu0 0
      %6756 = vmatpush2.bf16.msra.mxu0 0
      %6757 = vmatprep.subr.bf16.mxu0 0
      %6758 = vmatpush2.bf16.msra.mxu0 0
      %6759 = vmatprep.subr.bf16.mxu0 0
      %6760 = vmatpush2.bf16.msra.mxu0 0
      %6761 = vmatprep.subr.bf16.mxu0 0
      %6762 = vmatpush2.bf16.msra.mxu0 0
      %6763 = vmatprep.subr.bf16.mxu0 0
      %6764 = vmatpush2.bf16.msra.mxu0 0
      %6765 = vmatprep.subr.bf16.mxu0 0
      %6766 = vmatpush2.bf16.msra.mxu0 0
      %6767 = vmatprep.subr.bf16.mxu0 0
      %6768 = vmatpush2.bf16.msra.mxu0 0
      %6769 = vmatprep.mubr.bf16.mxu0 0
      %6770 = vmatmul.mubr.bf16.gmra.mxu0 %v6538
      %v6771 = vpop.f32.mrf.mxu0
      %v6772 = vadd.f32 0.0, %v6771
      %v6773 = vpop.f32.mrf.mxu0
      %v6774 = vpop.f32.mrf.mxu0
      %v6775 = vadd.f32 0.0, %v6774
      %v6776 = vpop.f32.mrf.mxu0
      %6777 = vmatprep.mubr.bf16.mxu0 0
      %6778 = vmatmul.mubr.bf16.gmra.mxu0 %v6539
      %v6779 = vpop.f32.mrf.mxu0
      %v6780 = vadd.f32 0.0, %v6779
      %v6781 = vpop.f32.mrf.mxu0
      %v6782 = vpop.f32.mrf.mxu0
      %v6783 = vadd.f32 0.0, %v6782
      %v6784 = vpop.f32.mrf.mxu0
      %6785 = vmatprep.mubr.bf16.mxu0 0
      %6786 = vmatmul.mubr.bf16.gmra.mxu0 %v6540
      %v6787 = vpop.f32.mrf.mxu0
      %v6788 = vadd.f32 0.0, %v6787
      %v6789 = vpop.f32.mrf.mxu0
      %v6790 = vpop.f32.mrf.mxu0
      %v6791 = vadd.f32 0.0, %v6790
      %v6792 = vpop.f32.mrf.mxu0
      %6793 = vmatprep.mubr.bf16.mxu0 0
      %6794 = vmatmul.mubr.bf16.gmra.mxu0 %v6541
      %v6795 = vpop.f32.mrf.mxu0
      %v6796 = vadd.f32 0.0, %v6795
      %v6797 = vpop.f32.mrf.mxu0
      %v6798 = vpop.f32.mrf.mxu0
      %v6799 = vadd.f32 0.0, %v6798
      %v6800 = vpop.f32.mrf.mxu0
      %6801 = vdwg.mxu0
      %6802 = vmatprep.subr.bf16.mxu0 0
      %6803 = vmatpush1.bf16.msra.mxu0 %v836
      %6804 = vmatprep.subr.bf16.mxu0 0
      %6805 = vmatpush1.bf16.msra.mxu0 %v835
      %6806 = vmatprep.subr.bf16.mxu0 0
      %6807 = vmatpush1.bf16.msra.mxu0 %v834
      %6808 = vmatprep.subr.bf16.mxu0 0
      %6809 = vmatpush1.bf16.msra.mxu0 %v833
      %6810 = vmatprep.subr.bf16.mxu0 0
      %6811 = vmatpush1.bf16.msra.mxu0 %v832
      %6812 = vmatprep.subr.bf16.mxu0 0
      %6813 = vmatpush1.bf16.msra.mxu0 %v831
      %6814 = vmatprep.subr.bf16.mxu0 0
      %6815 = vmatpush1.bf16.msra.mxu0 %v830
      %6816 = vmatprep.subr.bf16.mxu0 0
      %6817 = vmatpush1.bf16.msra.mxu0 %v829
      %6818 = vmatprep.subr.bf16.mxu0 0
      %6819 = vmatpush2.bf16.msra.mxu0 0
      %6820 = vmatprep.subr.bf16.mxu0 0
      %6821 = vmatpush2.bf16.msra.mxu0 0
      %6822 = vmatprep.subr.bf16.mxu0 0
      %6823 = vmatpush2.bf16.msra.mxu0 0
      %6824 = vmatprep.subr.bf16.mxu0 0
      %6825 = vmatpush2.bf16.msra.mxu0 0
      %6826 = vmatprep.subr.bf16.mxu0 0
      %6827 = vmatpush2.bf16.msra.mxu0 0
      %6828 = vmatprep.subr.bf16.mxu0 0
      %6829 = vmatpush2.bf16.msra.mxu0 0
      %6830 = vmatprep.subr.bf16.mxu0 0
      %6831 = vmatpush2.bf16.msra.mxu0 0
      %6832 = vmatprep.subr.bf16.mxu0 0
      %6833 = vmatpush2.bf16.msra.mxu0 0
      %6834 = vmatprep.mubr.bf16.mxu0 0
      %6835 = vmatmul.mubr.bf16.gmra.mxu0 %v6538
      %v6836 = vpop.f32.mrf.mxu0
      %v6837 = vadd.f32 0.0, %v6836
      %v6838 = vpop.f32.mrf.mxu0
      %v6839 = vpop.f32.mrf.mxu0
      %v6840 = vadd.f32 0.0, %v6839
      %v6841 = vpop.f32.mrf.mxu0
      %6842 = vmatprep.mubr.bf16.mxu0 0
      %6843 = vmatmul.mubr.bf16.gmra.mxu0 %v6539
      %v6844 = vpop.f32.mrf.mxu0
      %v6845 = vadd.f32 0.0, %v6844
      %v6846 = vpop.f32.mrf.mxu0
      %v6847 = vpop.f32.mrf.mxu0
      %v6848 = vadd.f32 0.0, %v6847
      %v6849 = vpop.f32.mrf.mxu0
      %6850 = vmatprep.mubr.bf16.mxu0 0
      %6851 = vmatmul.mubr.bf16.gmra.mxu0 %v6540
      %v6852 = vpop.f32.mrf.mxu0
      %v6853 = vadd.f32 0.0, %v6852
      %v6854 = vpop.f32.mrf.mxu0
      %v6855 = vpop.f32.mrf.mxu0
      %v6856 = vadd.f32 0.0, %v6855
      %v6857 = vpop.f32.mrf.mxu0
      %6858 = vmatprep.mubr.bf16.mxu0 0
      %6859 = vmatmul.mubr.bf16.gmra.mxu0 %v6541
      %v6860 = vpop.f32.mrf.mxu0
      %v6861 = vadd.f32 0.0, %v6860
      %v6862 = vpop.f32.mrf.mxu0
      %v6863 = vpop.f32.mrf.mxu0
      %v6864 = vadd.f32 0.0, %v6863
      %v6865 = vpop.f32.mrf.mxu0
      %6866 = vdwg.mxu0
      %6867 = vmatprep.subr.bf16.mxu0 0
      %6868 = vmatpush1.bf16.msra.mxu0 %v861
      %6869 = vmatprep.subr.bf16.mxu0 0
      %6870 = vmatpush1.bf16.msra.mxu0 %v860
      %6871 = vmatprep.subr.bf16.mxu0 0
      %6872 = vmatpush1.bf16.msra.mxu0 %v859
      %6873 = vmatprep.subr.bf16.mxu0 0
      %6874 = vmatpush1.bf16.msra.mxu0 %v858
      %6875 = vmatprep.subr.bf16.mxu0 0
      %6876 = vmatpush1.bf16.msra.mxu0 %v857
      %6877 = vmatprep.subr.bf16.mxu0 0
      %6878 = vmatpush1.bf16.msra.mxu0 %v856
      %6879 = vmatprep.subr.bf16.mxu0 0
      %6880 = vmatpush1.bf16.msra.mxu0 %v855
      %6881 = vmatprep.subr.bf16.mxu0 0
      %6882 = vmatpush1.bf16.msra.mxu0 %v854
      %6883 = vmatprep.subr.bf16.mxu0 0
      %6884 = vmatpush2.bf16.msra.mxu0 0
      %6885 = vmatprep.subr.bf16.mxu0 0
      %6886 = vmatpush2.bf16.msra.mxu0 0
      %6887 = vmatprep.subr.bf16.mxu0 0
      %6888 = vmatpush2.bf16.msra.mxu0 0
      %6889 = vmatprep.subr.bf16.mxu0 0
      %6890 = vmatpush2.bf16.msra.mxu0 0
      %6891 = vmatprep.subr.bf16.mxu0 0
      %6892 = vmatpush2.bf16.msra.mxu0 0
      %6893 = vmatprep.subr.bf16.mxu0 0
      %6894 = vmatpush2.bf16.msra.mxu0 0
      %6895 = vmatprep.subr.bf16.mxu0 0
      %6896 = vmatpush2.bf16.msra.mxu0 0
      %6897 = vmatprep.subr.bf16.mxu0 0
      %6898 = vmatpush2.bf16.msra.mxu0 0
      %6899 = vmatprep.mubr.bf16.mxu0 0
      %6900 = vmatmul.mubr.bf16.gmra.mxu0 %v6538
      %v6901 = vpop.f32.mrf.mxu0
      %v6902 = vadd.f32 0.0, %v6901
      %v6903 = vpop.f32.mrf.mxu0
      %v6904 = vpop.f32.mrf.mxu0
      %v6905 = vadd.f32 0.0, %v6904
      %v6906 = vpop.f32.mrf.mxu0
      %6907 = vmatprep.mubr.bf16.mxu0 0
      %6908 = vmatmul.mubr.bf16.gmra.mxu0 %v6539
      %v6909 = vpop.f32.mrf.mxu0
      %v6910 = vadd.f32 0.0, %v6909
      %v6911 = vpop.f32.mrf.mxu0
      %v6912 = vpop.f32.mrf.mxu0
      %v6913 = vadd.f32 0.0, %v6912
      %v6914 = vpop.f32.mrf.mxu0
      %6915 = vmatprep.mubr.bf16.mxu0 0
      %6916 = vmatmul.mubr.bf16.gmra.mxu0 %v6540
      %v6917 = vpop.f32.mrf.mxu0
      %v6918 = vadd.f32 0.0, %v6917
      %v6919 = vpop.f32.mrf.mxu0
      %v6920 = vpop.f32.mrf.mxu0
      %v6921 = vadd.f32 0.0, %v6920
      %v6922 = vpop.f32.mrf.mxu0
      %6923 = vmatprep.mubr.bf16.mxu0 0
      %6924 = vmatmul.mubr.bf16.gmra.mxu0 %v6541
      %v6925 = vpop.f32.mrf.mxu0
      %v6926 = vadd.f32 0.0, %v6925
      %v6927 = vpop.f32.mrf.mxu0
      %v6928 = vpop.f32.mrf.mxu0
      %v6929 = vadd.f32 0.0, %v6928
      %v6930 = vpop.f32.mrf.mxu0
      %6931 = vdwg.mxu0
      %6932 = vmatprep.subr.bf16.mxu0 0
      %6933 = vmatpush1.bf16.msra.mxu0 %v886
      %6934 = vmatprep.subr.bf16.mxu0 0
      %6935 = vmatpush1.bf16.msra.mxu0 %v885
      %6936 = vmatprep.subr.bf16.mxu0 0
      %6937 = vmatpush1.bf16.msra.mxu0 %v884
      %6938 = vmatprep.subr.bf16.mxu0 0
      %6939 = vmatpush1.bf16.msra.mxu0 %v883
      %6940 = vmatprep.subr.bf16.mxu0 0
      %6941 = vmatpush1.bf16.msra.mxu0 %v882
      %6942 = vmatprep.subr.bf16.mxu0 0
      %6943 = vmatpush1.bf16.msra.mxu0 %v881
      %6944 = vmatprep.subr.bf16.mxu0 0
      %6945 = vmatpush1.bf16.msra.mxu0 %v880
      %6946 = vmatprep.subr.bf16.mxu0 0
      %6947 = vmatpush1.bf16.msra.mxu0 %v879
      %6948 = vmatprep.subr.bf16.mxu0 0
      %6949 = vmatpush2.bf16.msra.mxu0 0
      %6950 = vmatprep.subr.bf16.mxu0 0
      %6951 = vmatpush2.bf16.msra.mxu0 0
      %6952 = vmatprep.subr.bf16.mxu0 0
      %6953 = vmatpush2.bf16.msra.mxu0 0
      %6954 = vmatprep.subr.bf16.mxu0 0
      %6955 = vmatpush2.bf16.msra.mxu0 0
      %6956 = vmatprep.subr.bf16.mxu0 0
      %6957 = vmatpush2.bf16.msra.mxu0 0
      %6958 = vmatprep.subr.bf16.mxu0 0
      %6959 = vmatpush2.bf16.msra.mxu0 0
      %6960 = vmatprep.subr.bf16.mxu0 0
      %6961 = vmatpush2.bf16.msra.mxu0 0
      %6962 = vmatprep.subr.bf16.mxu0 0
      %6963 = vmatpush2.bf16.msra.mxu0 0
      %6964 = vmatprep.mubr.bf16.mxu0 0
      %6965 = vmatmul.mubr.bf16.gmra.mxu0 %v6538
      %v6966 = vpop.f32.mrf.mxu0
      %v6967 = vadd.f32 0.0, %v6966
      %v6968 = vpop.f32.mrf.mxu0
      %v6969 = vpop.f32.mrf.mxu0
      %v6970 = vadd.f32 0.0, %v6969
      %v6971 = vpop.f32.mrf.mxu0
      %6972 = vmatprep.mubr.bf16.mxu0 0
      %6973 = vmatmul.mubr.bf16.gmra.mxu0 %v6539
      %v6974 = vpop.f32.mrf.mxu0
      %v6975 = vadd.f32 0.0, %v6974
      %v6976 = vpop.f32.mrf.mxu0
      %v6977 = vpop.f32.mrf.mxu0
      %v6978 = vadd.f32 0.0, %v6977
      %v6979 = vpop.f32.mrf.mxu0
      %6980 = vmatprep.mubr.bf16.mxu0 0
      %6981 = vmatmul.mubr.bf16.gmra.mxu0 %v6540
      %v6982 = vpop.f32.mrf.mxu0
      %v6983 = vadd.f32 0.0, %v6982
      %v6984 = vpop.f32.mrf.mxu0
      %v6985 = vpop.f32.mrf.mxu0
      %v6986 = vadd.f32 0.0, %v6985
      %v6987 = vpop.f32.mrf.mxu0
      %6988 = vmatprep.mubr.bf16.mxu0 0
      %6989 = vmatmul.mubr.bf16.gmra.mxu0 %v6541
      %v6990 = vpop.f32.mrf.mxu0
      %v6991 = vadd.f32 0.0, %v6990
      %v6992 = vpop.f32.mrf.mxu0
      %v6993 = vpop.f32.mrf.mxu0
      %v6994 = vadd.f32 0.0, %v6993
      %v6995 = vpop.f32.mrf.mxu0
      %6996 = vdwg.mxu0
      %6997 = vmatprep.subr.bf16.mxu0 0
      %6998 = vmatpush1.bf16.msra.mxu0 %v911
      %6999 = vmatprep.subr.bf16.mxu0 0
      %7000 = vmatpush1.bf16.msra.mxu0 %v910
      %7001 = vmatprep.subr.bf16.mxu0 0
      %7002 = vmatpush1.bf16.msra.mxu0 %v909
      %7003 = vmatprep.subr.bf16.mxu0 0
      %7004 = vmatpush1.bf16.msra.mxu0 %v908
      %7005 = vmatprep.subr.bf16.mxu0 0
      %7006 = vmatpush1.bf16.msra.mxu0 %v907
      %7007 = vmatprep.subr.bf16.mxu0 0
      %7008 = vmatpush1.bf16.msra.mxu0 %v906
      %7009 = vmatprep.subr.bf16.mxu0 0
      %7010 = vmatpush1.bf16.msra.mxu0 %v905
      %7011 = vmatprep.subr.bf16.mxu0 0
      %7012 = vmatpush1.bf16.msra.mxu0 %v904
      %7013 = vmatprep.subr.bf16.mxu0 0
      %7014 = vmatpush2.bf16.msra.mxu0 0
      %7015 = vmatprep.subr.bf16.mxu0 0
      %7016 = vmatpush2.bf16.msra.mxu0 0
      %7017 = vmatprep.subr.bf16.mxu0 0
      %7018 = vmatpush2.bf16.msra.mxu0 0
      %7019 = vmatprep.subr.bf16.mxu0 0
      %7020 = vmatpush2.bf16.msra.mxu0 0
      %7021 = vmatprep.subr.bf16.mxu0 0
      %7022 = vmatpush2.bf16.msra.mxu0 0
      %7023 = vmatprep.subr.bf16.mxu0 0
      %7024 = vmatpush2.bf16.msra.mxu0 0
      %7025 = vmatprep.subr.bf16.mxu0 0
      %7026 = vmatpush2.bf16.msra.mxu0 0
      %7027 = vmatprep.subr.bf16.mxu0 0
      %7028 = vmatpush2.bf16.msra.mxu0 0
      %7029 = vmatprep.mubr.bf16.mxu0 0
      %7030 = vmatmul.mubr.bf16.gmra.mxu0 %v6538
      %v7031 = vpop.f32.mrf.mxu0
      %v7032 = vadd.f32 0.0, %v7031
      %v7033 = vpop.f32.mrf.mxu0
      %v7034 = vpop.f32.mrf.mxu0
      %v7035 = vadd.f32 0.0, %v7034
      %v7036 = vpop.f32.mrf.mxu0
      %7037 = vmatprep.mubr.bf16.mxu0 0
      %7038 = vmatmul.mubr.bf16.gmra.mxu0 %v6539
      %v7039 = vpop.f32.mrf.mxu0
      %v7040 = vadd.f32 0.0, %v7039
      %v7041 = vpop.f32.mrf.mxu0
      %v7042 = vpop.f32.mrf.mxu0
      %v7043 = vadd.f32 0.0, %v7042
      %v7044 = vpop.f32.mrf.mxu0
      %7045 = vmatprep.mubr.bf16.mxu0 0
      %7046 = vmatmul.mubr.bf16.gmra.mxu0 %v6540
      %v7047 = vpop.f32.mrf.mxu0
      %v7048 = vadd.f32 0.0, %v7047
      %v7049 = vpop.f32.mrf.mxu0
      %v7050 = vpop.f32.mrf.mxu0
      %v7051 = vadd.f32 0.0, %v7050
      %v7052 = vpop.f32.mrf.mxu0
      %7053 = vmatprep.mubr.bf16.mxu0 0
      %7054 = vmatmul.mubr.bf16.gmra.mxu0 %v6541
      %v7055 = vpop.f32.mrf.mxu0
      %v7056 = vadd.f32 0.0, %v7055
      %v7057 = vpop.f32.mrf.mxu0
      %v7058 = vpop.f32.mrf.mxu0
      %v7059 = vadd.f32 0.0, %v7058
      %v7060 = vpop.f32.mrf.mxu0
      %7061 = vdwg.mxu0
      %7062 = vmatprep.subr.bf16.mxu0 0
      %7063 = vmatpush1.bf16.msra.mxu0 %v936
      %7064 = vmatprep.subr.bf16.mxu0 0
      %7065 = vmatpush1.bf16.msra.mxu0 %v935
      %7066 = vmatprep.subr.bf16.mxu0 0
      %7067 = vmatpush1.bf16.msra.mxu0 %v934
      %7068 = vmatprep.subr.bf16.mxu0 0
      %7069 = vmatpush1.bf16.msra.mxu0 %v933
      %7070 = vmatprep.subr.bf16.mxu0 0
      %7071 = vmatpush1.bf16.msra.mxu0 %v932
      %7072 = vmatprep.subr.bf16.mxu0 0
      %7073 = vmatpush1.bf16.msra.mxu0 %v931
      %7074 = vmatprep.subr.bf16.mxu0 0
      %7075 = vmatpush1.bf16.msra.mxu0 %v930
      %7076 = vmatprep.subr.bf16.mxu0 0
      %7077 = vmatpush1.bf16.msra.mxu0 %v929
      %7078 = vmatprep.subr.bf16.mxu0 0
      %7079 = vmatpush2.bf16.msra.mxu0 0
      %7080 = vmatprep.subr.bf16.mxu0 0
      %7081 = vmatpush2.bf16.msra.mxu0 0
      %7082 = vmatprep.subr.bf16.mxu0 0
      %7083 = vmatpush2.bf16.msra.mxu0 0
      %7084 = vmatprep.subr.bf16.mxu0 0
      %7085 = vmatpush2.bf16.msra.mxu0 0
      %7086 = vmatprep.subr.bf16.mxu0 0
      %7087 = vmatpush2.bf16.msra.mxu0 0
      %7088 = vmatprep.subr.bf16.mxu0 0
      %7089 = vmatpush2.bf16.msra.mxu0 0
      %7090 = vmatprep.subr.bf16.mxu0 0
      %7091 = vmatpush2.bf16.msra.mxu0 0
      %7092 = vmatprep.subr.bf16.mxu0 0
      %7093 = vmatpush2.bf16.msra.mxu0 0
      %7094 = vmatprep.mubr.bf16.mxu0 0
      %7095 = vmatmul.mubr.bf16.gmra.mxu0 %v6538
      %v7096 = vpop.f32.mrf.mxu0
      %v7097 = vadd.f32 0.0, %v7096
      %v7098 = vpop.f32.mrf.mxu0
      %v7099 = vpop.f32.mrf.mxu0
      %v7100 = vadd.f32 0.0, %v7099
      %v7101 = vpop.f32.mrf.mxu0
      %7102 = vmatprep.mubr.bf16.mxu0 0
      %7103 = vmatmul.mubr.bf16.gmra.mxu0 %v6539
      %v7104 = vpop.f32.mrf.mxu0
      %v7105 = vadd.f32 0.0, %v7104
      %v7106 = vpop.f32.mrf.mxu0
      %v7107 = vpop.f32.mrf.mxu0
      %v7108 = vadd.f32 0.0, %v7107
      %v7109 = vpop.f32.mrf.mxu0
      %7110 = vmatprep.mubr.bf16.mxu0 0
      %7111 = vmatmul.mubr.bf16.gmra.mxu0 %v6540
      %v7112 = vpop.f32.mrf.mxu0
      %v7113 = vadd.f32 0.0, %v7112
      %v7114 = vpop.f32.mrf.mxu0
      %v7115 = vpop.f32.mrf.mxu0
      %v7116 = vadd.f32 0.0, %v7115
      %v7117 = vpop.f32.mrf.mxu0
      %7118 = vmatprep.mubr.bf16.mxu0 0
      %7119 = vmatmul.mubr.bf16.gmra.mxu0 %v6541
      %v7120 = vpop.f32.mrf.mxu0
      %v7121 = vadd.f32 0.0, %v7120
      %v7122 = vpop.f32.mrf.mxu0
      %v7123 = vpop.f32.mrf.mxu0
      %v7124 = vadd.f32 0.0, %v7123
      %v7125 = vpop.f32.mrf.mxu0
      %7126 = vdwg.mxu0
      %v7127 = vld [vmem:[%s670] sm:$0xff]
      %v7128 = vld [vmem:[%s670 + $0x8] sm:$0xff]
      %v7129 = vld [vmem:[%s670 + $0x10] sm:$0xff]
      %v7130 = vld [vmem:[%s670 + $0x18] sm:$0xff]
      %v7131 = vld [vmem:[%s670 + $0x20] sm:$0xff]
      %v7132 = vld [vmem:[%s670 + $0x28] sm:$0xff]
      %v7133 = vld [vmem:[%s670 + $0x30] sm:$0xff]
      %v7134 = vld [vmem:[%s670 + $0x38] sm:$0xff]
      %v7135 = vld [vmem:[%s670 + $0x40] sm:$0xff]
      %v7136 = vld [vmem:[%s670 + $0x48] sm:$0xff]
      %v7137 = vld [vmem:[%s670 + $0x50] sm:$0xff]
      %v7138 = vld [vmem:[%s670 + $0x58] sm:$0xff]
      %v7139 = vld [vmem:[%s670 + $0x60] sm:$0xff]
      %v7140 = vld [vmem:[%s670 + $0x68] sm:$0xff]
      %v7141 = vld [vmem:[%s670 + $0x70] sm:$0xff]
      %v7142 = vld [vmem:[%s670 + $0x78] sm:$0xff]
      %v7143 = vld [vmem:[%s670 + $0x80] sm:$0xff]
      %v7144 = vld [vmem:[%s670 + $0x88] sm:$0xff]
      %v7145 = vld [vmem:[%s670 + $0x90] sm:$0xff]
      %v7146 = vld [vmem:[%s670 + $0x98] sm:$0xff]
      %v7147 = vld [vmem:[%s670 + $0xa0] sm:$0xff]
      %v7148 = vld [vmem:[%s670 + $0xa8] sm:$0xff]
      %v7149 = vld [vmem:[%s670 + $0xb0] sm:$0xff]
      %v7150 = vld [vmem:[%s670 + $0xb8] sm:$0xff]
      %v7151 = vld [vmem:[%s670 + $0xc0] sm:$0xff]
      %v7152 = vld [vmem:[%s670 + $0xc8] sm:$0xff]
      %v7153 = vld [vmem:[%s670 + $0xd0] sm:$0xff]
      %v7154 = vld [vmem:[%s670 + $0xd8] sm:$0xff]
      %v7155 = vld [vmem:[%s670 + $0xe0] sm:$0xff]
      %v7156 = vld [vmem:[%s670 + $0xe8] sm:$0xff]
      %v7157 = vld [vmem:[%s670 + $0xf0] sm:$0xff]
      %v7158 = vld [vmem:[%s670 + $0xf8] sm:$0xff]
      %v7159 = vld [vmem:[%s670 + $0x100] sm:$0xff]
      %v7160 = vld [vmem:[%s670 + $0x108] sm:$0xff]
      %v7161 = vld [vmem:[%s670 + $0x110] sm:$0xff]
      %v7162 = vld [vmem:[%s670 + $0x118] sm:$0xff]
      %v7163 = vld [vmem:[%s670 + $0x120] sm:$0xff]
      %v7164 = vld [vmem:[%s670 + $0x128] sm:$0xff]
      %v7165 = vld [vmem:[%s670 + $0x130] sm:$0xff]
      %v7166 = vld [vmem:[%s670 + $0x138] sm:$0xff]
      %v7167 = vpack.c.bf16 %v7132, %v7127
      %v7168 = vpack.c.bf16 %v7133, %v7128
      %v7169 = vpack.c.bf16 %v7134, %v7129
      %v7170 = vpack.c.bf16 %v7135, %v7130
      %v7171 = vpack.c.bf16 %v7136, %v7131
      %v7172 = vpack.c.bf16 %v7142, %v7137
      %v7173 = vpack.c.bf16 %v7143, %v7138
      %v7174 = vpack.c.bf16 %v7144, %v7139
      %v7175 = vpack.c.bf16 %v7145, %v7140
      %v7176 = vpack.c.bf16 %v7146, %v7141
      %v7177 = vpack.c.bf16 %v7152, %v7147
      %v7178 = vpack.c.bf16 %v7153, %v7148
      %v7179 = vpack.c.bf16 %v7154, %v7149
      %v7180 = vpack.c.bf16 %v7155, %v7150
      %v7181 = vpack.c.bf16 %v7156, %v7151
      %v7182 = vpack.c.bf16 %v7162, %v7157
      %v7183 = vpack.c.bf16 %v7163, %v7158
      %v7184 = vpack.c.bf16 %v7164, %v7159
      %v7185 = vpack.c.bf16 %v7165, %v7160
      %v7186 = vpack.c.bf16 %v7166, %v7161
      %v7187 = vpack.c.bf16 %v6580, %v6577
      %v7188 = vpack.c.bf16 %v6588, %v6585
      %v7189 = vpack.c.bf16 %v6596, %v6593
      %v7190 = vpack.c.bf16 %v6604, %v6601
      %v7191 = vpack.c.bf16 %v6645, %v6642
      %v7192 = vpack.c.bf16 %v6653, %v6650
      %v7193 = vpack.c.bf16 %v6661, %v6658
      %v7194 = vpack.c.bf16 %v6669, %v6666
      %v7195 = vpack.c.bf16 %v6710, %v6707
      %v7196 = vpack.c.bf16 %v6718, %v6715
      %v7197 = vpack.c.bf16 %v6726, %v6723
      %v7198 = vpack.c.bf16 %v6734, %v6731
      %v7199 = vpack.c.bf16 %v6775, %v6772
      %v7200 = vpack.c.bf16 %v6783, %v6780
      %v7201 = vpack.c.bf16 %v6791, %v6788
      %v7202 = vpack.c.bf16 %v6799, %v6796
      %v7203 = vpack.c.bf16 %v6840, %v6837
      %v7204 = vpack.c.bf16 %v6848, %v6845
      %v7205 = vpack.c.bf16 %v6856, %v6853
      %v7206 = vpack.c.bf16 %v6864, %v6861
      %v7207 = vpack.c.bf16 %v6905, %v6902
      %v7208 = vpack.c.bf16 %v6913, %v6910
      %v7209 = vpack.c.bf16 %v6921, %v6918
      %v7210 = vpack.c.bf16 %v6929, %v6926
      %v7211 = vpack.c.bf16 %v6970, %v6967
      %v7212 = vpack.c.bf16 %v6978, %v6975
      %v7213 = vpack.c.bf16 %v6986, %v6983
      %v7214 = vpack.c.bf16 %v6994, %v6991
      %v7215 = vpack.c.bf16 %v7035, %v7032
      %v7216 = vpack.c.bf16 %v7043, %v7040
      %v7217 = vpack.c.bf16 %v7051, %v7048
      %v7218 = vpack.c.bf16 %v7059, %v7056
      %v7219 = vpack.c.bf16 %v7100, %v7097
      %v7220 = vpack.c.bf16 %v7108, %v7105
      %v7221 = vpack.c.bf16 %v7116, %v7113
      %v7222 = vpack.c.bf16 %v7124, %v7121
      %v7223 = vld [vmem:[%s675] sm:$0xff]
      %v7224 = vld [vmem:[%s675 + $0x8] sm:$0xff]
      %v7225 = vld [vmem:[%s675 + $0x10] sm:$0xff]
      %v7226 = vld [vmem:[%s675 + $0x18] sm:$0xff]
      %v7227 = vld [vmem:[%s675 + $0x20] sm:$0xff]
      %v7228 = vld [vmem:[%s675 + $0x28] sm:$0xff]
      %v7229 = vld [vmem:[%s675 + $0x30] sm:$0xff]
      %v7230 = vld [vmem:[%s675 + $0x38] sm:$0xff]
      %7232 = vset.pattern.permute.xlu0 0
      %7233 = vperm.xlu0 %7232, %v7223
      %v7234 = vpop.permute.xlu0 %7233
      %7237 = vset.pattern.permute.xlu0 0
      %7238 = vperm.xlu0 %7237, %v7224
      %v7239 = vpop.permute.xlu0 %7238
      %7242 = vset.pattern.permute.xlu0 0
      %7243 = vperm.xlu0 %7242, %v7225
      %v7244 = vpop.permute.xlu0 %7243
      %7247 = vset.pattern.permute.xlu0 0
      %7248 = vperm.xlu0 %7247, %v7226
      %v7249 = vpop.permute.xlu0 %7248
      %7252 = vset.pattern.permute.xlu0 0
      %7253 = vperm.xlu0 %7252, %v7227
      %v7254 = vpop.permute.xlu0 %7253
      %7257 = vset.pattern.permute.xlu0 0
      %7258 = vperm.xlu0 %7257, %v7228
      %v7259 = vpop.permute.xlu0 %7258
      %7262 = vset.pattern.permute.xlu0 0
      %7263 = vperm.xlu0 %7262, %v7229
      %v7264 = vpop.permute.xlu0 %7263
      %7267 = vset.pattern.permute.xlu0 0
      %7268 = vperm.xlu0 %7267, %v7230
      %v7269 = vpop.permute.xlu0 %7268
      %v7272 = vsel %vm953, %v7171, 0
      %v7275 = vsel %vm953, %v7176, 0
      %v7278 = vsel %vm953, %v7181, 0
      %v7281 = vsel %vm953, %v7186, 0
      %7283 = vmatprep.subr.bf16.mxu0 0
      %7284 = vmatpush1.bf16.msra.mxu0 %v7194
      %7285 = vmatprep.subr.bf16.mxu0 0
      %7286 = vmatpush1.bf16.msra.mxu0 %v7193
      %7287 = vmatprep.subr.bf16.mxu0 0
      %7288 = vmatpush1.bf16.msra.mxu0 %v7192
      %7289 = vmatprep.subr.bf16.mxu0 0
      %7290 = vmatpush1.bf16.msra.mxu0 %v7191
      %7291 = vmatprep.subr.bf16.mxu0 0
      %7292 = vmatpush1.bf16.msra.mxu0 %v7190
      %7293 = vmatprep.subr.bf16.mxu0 0
      %7294 = vmatpush1.bf16.msra.mxu0 %v7189
      %7295 = vmatprep.subr.bf16.mxu0 0
      %7296 = vmatpush1.bf16.msra.mxu0 %v7188
      %7297 = vmatprep.subr.bf16.mxu0 0
      %7298 = vmatpush1.bf16.msra.mxu0 %v7187
      %7299 = vmatprep.subr.bf16.mxu0 0
      %7300 = vmatpush2.bf16.msra.mxu0 %v7202
      %7301 = vmatprep.subr.bf16.mxu0 0
      %7302 = vmatpush2.bf16.msra.mxu0 %v7201
      %7303 = vmatprep.subr.bf16.mxu0 0
      %7304 = vmatpush2.bf16.msra.mxu0 %v7200
      %7305 = vmatprep.subr.bf16.mxu0 0
      %7306 = vmatpush2.bf16.msra.mxu0 %v7199
      %7307 = vmatprep.subr.bf16.mxu0 0
      %7308 = vmatpush2.bf16.msra.mxu0 %v7198
      %7309 = vmatprep.subr.bf16.mxu0 0
      %7310 = vmatpush2.bf16.msra.mxu0 %v7197
      %7311 = vmatprep.subr.bf16.mxu0 0
      %7312 = vmatpush2.bf16.msra.mxu0 %v7196
      %7313 = vmatprep.subr.bf16.mxu0 0
      %7314 = vmatpush2.bf16.msra.mxu0 %v7195
      %7315 = vmatprep.mubr.bf16.mxu0 %v7168
      %7316 = vmatmul.mubr.bf16.gmra.mxu0 %v7167
      %v7317 = vpop.f32.mrf.mxu0
      %v7318 = vadd.f32 %v7234, %v7317
      %v7319 = vpop.f32.mrf.mxu0
      %v7320 = vpop.f32.mrf.mxu0
      %v7321 = vadd.f32 %v7239, %v7320
      %v7322 = vpop.f32.mrf.mxu0
      %7323 = vmatprep.mubr.bf16.mxu0 %v7173
      %7324 = vmatmul.mubr.bf16.gmra.mxu0 %v7172
      %v7325 = vpop.f32.mrf.mxu0
      %v7326 = vadd.f32 %v7244, %v7325
      %v7327 = vpop.f32.mrf.mxu0
      %v7328 = vpop.f32.mrf.mxu0
      %v7329 = vadd.f32 %v7249, %v7328
      %v7330 = vpop.f32.mrf.mxu0
      %7331 = vmatprep.mubr.bf16.mxu0 %v7178
      %7332 = vmatmul.mubr.bf16.gmra.mxu0 %v7177
      %v7333 = vpop.f32.mrf.mxu0
      %v7334 = vadd.f32 %v7254, %v7333
      %v7335 = vpop.f32.mrf.mxu0
      %v7336 = vpop.f32.mrf.mxu0
      %v7337 = vadd.f32 %v7259, %v7336
      %v7338 = vpop.f32.mrf.mxu0
      %7339 = vmatprep.mubr.bf16.mxu0 %v7183
      %7340 = vmatmul.mubr.bf16.gmra.mxu0 %v7182
      %v7341 = vpop.f32.mrf.mxu0
      %v7342 = vadd.f32 %v7264, %v7341
      %v7343 = vpop.f32.mrf.mxu0
      %v7344 = vpop.f32.mrf.mxu0
      %v7345 = vadd.f32 %v7269, %v7344
      %v7346 = vpop.f32.mrf.mxu0
      %7347 = vdwg.mxu0
      %7348 = vmatprep.subr.bf16.mxu0 0
      %7349 = vmatpush1.bf16.msra.mxu0 %v7210
      %7350 = vmatprep.subr.bf16.mxu0 0
      %7351 = vmatpush1.bf16.msra.mxu0 %v7209
      %7352 = vmatprep.subr.bf16.mxu0 0
      %7353 = vmatpush1.bf16.msra.mxu0 %v7208
      %7354 = vmatprep.subr.bf16.mxu0 0
      %7355 = vmatpush1.bf16.msra.mxu0 %v7207
      %7356 = vmatprep.subr.bf16.mxu0 0
      %7357 = vmatpush1.bf16.msra.mxu0 %v7206
      %7358 = vmatprep.subr.bf16.mxu0 0
      %7359 = vmatpush1.bf16.msra.mxu0 %v7205
      %7360 = vmatprep.subr.bf16.mxu0 0
      %7361 = vmatpush1.bf16.msra.mxu0 %v7204
      %7362 = vmatprep.subr.bf16.mxu0 0
      %7363 = vmatpush1.bf16.msra.mxu0 %v7203
      %7364 = vmatprep.subr.bf16.mxu0 0
      %7365 = vmatpush2.bf16.msra.mxu0 %v7218
      %7366 = vmatprep.subr.bf16.mxu0 0
      %7367 = vmatpush2.bf16.msra.mxu0 %v7217
      %7368 = vmatprep.subr.bf16.mxu0 0
      %7369 = vmatpush2.bf16.msra.mxu0 %v7216
      %7370 = vmatprep.subr.bf16.mxu0 0
      %7371 = vmatpush2.bf16.msra.mxu0 %v7215
      %7372 = vmatprep.subr.bf16.mxu0 0
      %7373 = vmatpush2.bf16.msra.mxu0 %v7214
      %7374 = vmatprep.subr.bf16.mxu0 0
      %7375 = vmatpush2.bf16.msra.mxu0 %v7213
      %7376 = vmatprep.subr.bf16.mxu0 0
      %7377 = vmatpush2.bf16.msra.mxu0 %v7212
      %7378 = vmatprep.subr.bf16.mxu0 0
      %7379 = vmatpush2.bf16.msra.mxu0 %v7211
      %7380 = vmatprep.mubr.bf16.mxu0 %v7170
      %7381 = vmatmul.mubr.bf16.gmra.mxu0 %v7169
      %v7382 = vpop.f32.mrf.mxu0
      %v7383 = vadd.f32 %v7318, %v7382
      %v7384 = vpop.f32.mrf.mxu0
      %v7385 = vpop.f32.mrf.mxu0
      %v7386 = vadd.f32 %v7321, %v7385
      %v7387 = vpop.f32.mrf.mxu0
      %7388 = vmatprep.mubr.bf16.mxu0 %v7175
      %7389 = vmatmul.mubr.bf16.gmra.mxu0 %v7174
      %v7390 = vpop.f32.mrf.mxu0
      %v7391 = vadd.f32 %v7326, %v7390
      %v7392 = vpop.f32.mrf.mxu0
      %v7393 = vpop.f32.mrf.mxu0
      %v7394 = vadd.f32 %v7329, %v7393
      %v7395 = vpop.f32.mrf.mxu0
      %7396 = vmatprep.mubr.bf16.mxu0 %v7180
      %7397 = vmatmul.mubr.bf16.gmra.mxu0 %v7179
      %v7398 = vpop.f32.mrf.mxu0
      %v7399 = vadd.f32 %v7334, %v7398
      %v7400 = vpop.f32.mrf.mxu0
      %v7401 = vpop.f32.mrf.mxu0
      %v7402 = vadd.f32 %v7337, %v7401
      %v7403 = vpop.f32.mrf.mxu0
      %7404 = vmatprep.mubr.bf16.mxu0 %v7185
      %7405 = vmatmul.mubr.bf16.gmra.mxu0 %v7184
      %v7406 = vpop.f32.mrf.mxu0
      %v7407 = vadd.f32 %v7342, %v7406
      %v7408 = vpop.f32.mrf.mxu0
      %v7409 = vpop.f32.mrf.mxu0
      %v7410 = vadd.f32 %v7345, %v7409
      %v7411 = vpop.f32.mrf.mxu0
      %7412 = vdwg.mxu0
      %7413 = vmatprep.subr.bf16.mxu0 0
      %7414 = vmatpush1.bf16.msra.mxu0 0
      %7415 = vmatprep.subr.bf16.mxu0 0
      %7416 = vmatpush1.bf16.msra.mxu0 0
      %7417 = vmatprep.subr.bf16.mxu0 0
      %7418 = vmatpush1.bf16.msra.mxu0 0
      %7419 = vmatprep.subr.bf16.mxu0 0
      %7420 = vmatpush1.bf16.msra.mxu0 0
      %7421 = vmatprep.subr.bf16.mxu0 0
      %7422 = vmatpush1.bf16.msra.mxu0 %v7222
      %7423 = vmatprep.subr.bf16.mxu0 0
      %7424 = vmatpush1.bf16.msra.mxu0 %v7221
      %7425 = vmatprep.subr.bf16.mxu0 0
      %7426 = vmatpush1.bf16.msra.mxu0 %v7220
      %7427 = vmatprep.subr.bf16.mxu0 0
      %7428 = vmatpush1.bf16.msra.mxu0 %v7219
      %7429 = vmatprep.subr.bf16.mxu0 0
      %7430 = vmatpush2.bf16.msra.mxu0 0
      %7431 = vmatprep.subr.bf16.mxu0 0
      %7432 = vmatpush2.bf16.msra.mxu0 0
      %7433 = vmatprep.subr.bf16.mxu0 0
      %7434 = vmatpush2.bf16.msra.mxu0 0
      %7435 = vmatprep.subr.bf16.mxu0 0
      %7436 = vmatpush2.bf16.msra.mxu0 0
      %7437 = vmatprep.subr.bf16.mxu0 0
      %7438 = vmatpush2.bf16.msra.mxu0 0
      %7439 = vmatprep.subr.bf16.mxu0 0
      %7440 = vmatpush2.bf16.msra.mxu0 0
      %7441 = vmatprep.subr.bf16.mxu0 0
      %7442 = vmatpush2.bf16.msra.mxu0 0
      %7443 = vmatprep.subr.bf16.mxu0 0
      %7444 = vmatpush2.bf16.msra.mxu0 0
      %7445 = vmatprep.mubr.bf16.mxu0 0
      %7446 = vmatmul.mubr.bf16.gmra.mxu0 %v7272
      %v7447 = vpop.f32.mrf.mxu0
      %v7448 = vadd.f32 %v7383, %v7447
      %v7449 = vpop.f32.mrf.mxu0
      %v7450 = vpop.f32.mrf.mxu0
      %v7451 = vadd.f32 %v7386, %v7450
      %v7452 = vpop.f32.mrf.mxu0
      %7453 = vmatprep.mubr.bf16.mxu0 0
      %7454 = vmatmul.mubr.bf16.gmra.mxu0 %v7275
      %v7455 = vpop.f32.mrf.mxu0
      %v7456 = vadd.f32 %v7391, %v7455
      %v7457 = vpop.f32.mrf.mxu0
      %v7458 = vpop.f32.mrf.mxu0
      %v7459 = vadd.f32 %v7394, %v7458
      %v7460 = vpop.f32.mrf.mxu0
      %7461 = vmatprep.mubr.bf16.mxu0 0
      %7462 = vmatmul.mubr.bf16.gmra.mxu0 %v7278
      %v7463 = vpop.f32.mrf.mxu0
      %v7464 = vadd.f32 %v7399, %v7463
      %v7465 = vpop.f32.mrf.mxu0
      %v7466 = vpop.f32.mrf.mxu0
      %v7467 = vadd.f32 %v7402, %v7466
      %v7468 = vpop.f32.mrf.mxu0
      %7469 = vmatprep.mubr.bf16.mxu0 0
      %7470 = vmatmul.mubr.bf16.gmra.mxu0 %v7281
      %v7471 = vpop.f32.mrf.mxu0
      %v7472 = vadd.f32 %v7407, %v7471
      %v7473 = vpop.f32.mrf.mxu0
      %v7474 = vpop.f32.mrf.mxu0
      %v7475 = vadd.f32 %v7410, %v7474
      %v7476 = vpop.f32.mrf.mxu0
      %7477 = vdwg.mxu0
      %v7478 = vadd.f32 %v7448, %v697
      %v7479 = vadd.f32 %v7451, %v698
      %v7480 = vadd.f32 %v7456, %v699
      %v7481 = vadd.f32 %v7459, %v700
      %v7482 = vadd.f32 %v7464, %v701
      %v7483 = vadd.f32 %v7467, %v702
      %v7484 = vadd.f32 %v7472, %v703
      %v7485 = vadd.f32 %v7475, %v704
      %7486 = vst [vmem:[#allocation2] sm:$0xff] %v7478
      %7487 = vst [vmem:[#allocation2 + $0x8] sm:$0xff] %v7479
      %7488 = vst [vmem:[#allocation2 + $0x10] sm:$0xff] %v7480
      %7489 = vst [vmem:[#allocation2 + $0x18] sm:$0xff] %v7481
      %7490 = vst [vmem:[#allocation2 + $0x20] sm:$0xff] %v7482
      %7491 = vst [vmem:[#allocation2 + $0x28] sm:$0xff] %v7483
      %7492 = vst [vmem:[#allocation2 + $0x30] sm:$0xff] %v7484
      %7493 = vst [vmem:[#allocation2 + $0x38] sm:$0xff] %v7485
      %p7494 = scmp.eq.s32.totalorder %s26, 1
      // Predicated region
      $region85: #{rdag_forward.1} parent=79 // pred_check
        %p7495 = pneg %p7494
      $region86: #{rdag_forward.1} parent=79 // pred_check_branch
        %7497 = sbr.rel (%p7495) target = $region88
      $region87: #{rdag_forward.1} parent=79 // pred_region
        %7498 = vst [vmem:[%s15] sm:$0xff] %v7478
        %7499 = vst [vmem:[%s15 + $0x8] sm:$0xff] %v7479
        %7500 = vst [vmem:[%s15 + $0x10] sm:$0xff] %v7480
        %7501 = vst [vmem:[%s15 + $0x18] sm:$0xff] %v7481
        %7502 = vst [vmem:[%s15 + $0x20] sm:$0xff] %v7482
        %7503 = vst [vmem:[%s15 + $0x28] sm:$0xff] %v7483
        %7504 = vst [vmem:[%s15 + $0x30] sm:$0xff] %v7484
        %7505 = vst [vmem:[%s15 + $0x38] sm:$0xff] %v7485
      $region88: #{rdag_forward.1} parent=79 // pred_fallthru
        _
      // Predicated region
      $region89: #{rdag_forward.1} parent=79 // pred_check
        %p7506 = pneg %p414
      $region90: #{rdag_forward.1} parent=79 // pred_check_branch
        %7508 = sbr.rel (%p7506) target = $region92
      $region91: #{rdag_forward.1} parent=79 // pred_region
        _
      $region92: #{rdag_forward.1} parent=79 // pred_fallthru
        _
      // Predicated region
      $region93: #{rdag_forward.1} parent=79 // pred_check
        %p7509 = pneg %p414
      $region94: #{rdag_forward.1} parent=79 // pred_check_branch
        %7511 = sbr.rel (%p7509) target = $region96
      $region95: #{rdag_forward.1} parent=79 // pred_region
        _
      $region96: #{rdag_forward.1} parent=79 // pred_fallthru
        _
    $region80: #{rdag_forward.1} parent=5 // pred_fallthru
      _
    %p7512 = scmp.le.s32.totalorder 2, %s21
    // Predicated region
    $region97: #{rdag_forward.1} parent=5 // pred_check
      %p7513 = pneg %p7512
    $region98: #{rdag_forward.1} parent=5 // pred_check_branch
      %7515 = sbr.rel (%p7513) target = $region100
    $region99: #{rdag_forward.1} parent=5 // pred_region
      %s7516 = ssub.s32 %s21, 2
    $region100: #{rdag_forward.1} parent=5 // pred_fallthru
      _
  $region6: #{rdag_forward.1} parent=0 // loop_footer
    %s25 = sadd.s32 1, %s21
  $region7: #{rdag_forward.1} parent=0 // loop_footer_branch
    %20 = sbr.rel target = $region3
  $region8: #{rdag_forward.1} parent=0 // loop_exit
    _

</llo_original>
